<compile_context>
chip_gen: v7x
topology: tpu7x:2x2x1
jax: 0.10.0
libtpu: 0.0.40
codegen_flags: <defaults>
</compile_context>

<pallas_src>
import jax
import jax.numpy as jnp
import numpy as np
from jax.experimental import pallas as pl
from jax.experimental.pallas import tpu as pltpu

LANE = 128      # TPU lane width; all feature dims padded to multiples of this
TB = 128        # batch-tile rows (multiple of the 8-row f32 sublane)
LAT_PAD = 128   # padded latent width: mu | logvar each occupy one full 128-lane group


def _round_up(x, m):
    return ((x + m - 1) // m) * m


def _pad2(a, rows, cols):
    return jnp.pad(a, ((0, rows - a.shape[0]), (0, cols - a.shape[1])))


def _vae_kernel(x_ref, eps_ref,
                w1_ref, b1_ref, w2_ref, b2_ref, wh_ref, bh_ref,
                wd1_ref, bd1_ref, wd2_ref, bd2_ref, wd3_ref, bd3_ref,
                recon_ref, heads_ref):
    """Fused VAE forward for one (TB, input_dim_padded) batch tile.

    All matmuls run on the MXU with f32 accumulation; ReLU / exp / sigmoid are
    VPU/EUP elementwise ops on the same lane-dense VMEM-resident tiles.
    """
    x = x_ref[...]

    # ---- encoder ----
    h = jnp.dot(x, w1_ref[...], preferred_element_type=jnp.float32) + b1_ref[...]
    h = jnp.maximum(h, 0.0)
    h = jnp.dot(h, w2_ref[...], preferred_element_type=jnp.float32) + b2_ref[...]
    h = jnp.maximum(h, 0.0)

    # ---- fused latent heads: [mu | logvar] packed along 2*LAT_PAD lanes ----
    heads = jnp.dot(h, wh_ref[...], preferred_element_type=jnp.float32) + bh_ref[...]
    heads_ref[...] = heads.astype(heads_ref.dtype)   # one lane-dense store
    half = heads.shape[-1] // 2                       # static (= LAT_PAD)
    mu = heads[:, :half]
    lv = heads[:, half:]

    # ---- reparameterization trick: z = eps * exp(0.5 * logvar) + mu ----
    # Padded lanes: eps = 0 and mu = 0  =>  z = 0 there (and the matching
    # wd1 rows are zero anyway), so padding is numerically exact.
    z = eps_ref[...] * jnp.exp(0.5 * lv) + mu

    # ---- decoder ----
    g = jnp.dot(z, wd1_ref[...], preferred_element_type=jnp.float32) + bd1_ref[...]
    g = jnp.maximum(g, 0.0)
    g = jnp.dot(g, wd2_ref[...], preferred_element_type=jnp.float32) + bd2_ref[...]
    g = jnp.maximum(g, 0.0)
    logits = jnp.dot(g, wd3_ref[...], preferred_element_type=jnp.float32) + bd3_ref[...]
    recon_ref[...] = jax.nn.sigmoid(logits).astype(recon_ref.dtype)


def init_vae_params(key, input_dim, latent_dim):
    """Deterministic init mirroring nn.Linear default (uniform +-1/sqrt(fan_in)).

    Weights are stored transposed: (in_features, out_features).
    Biases are stored as (1, out_features) so they live as 2-D VMEM tiles.
    """
    d1 = (input_dim + latent_dim) // 6
    d2 = (d1 + latent_dim) // 2
    dims = [
        ("w1", input_dim, d1), ("w2", d1, d2),
        ("wmu", d2, latent_dim), ("wlv", d2, latent_dim),
        ("wd1", latent_dim, d2), ("wd2", d2, d1), ("wd3", d1, input_dim),
    ]
    params = {}
    for name, fan_in, fan_out in dims:
        key, kw, kb = jax.random.split(key, 3)
        bound = 1.0 / np.sqrt(fan_in)
        params[name] = jax.random.uniform(
            kw, (fan_in, fan_out), jnp.float32, -bound, bound)
        params["b" + name[1:]] = jax.random.uniform(
            kb, (1, fan_out), jnp.float32, -bound, bound)
    return params, d1, d2


def _pack_params(params, input_dim, latent_dim, d1, d2):
    """Zero-pad every dim to a multiple of 128 lanes and fuse the latent heads.

    Weights stay f32 here (exact vs. the reference and v5e-friendly); casting
    the packed weights to bf16 would halve DMA/VMEM bytes on v6e/v7x.
    """
    idp = _round_up(input_dim, LANE)
    d1p = _round_up(d1, LANE)
    d2p = _round_up(d2, LANE)

    wh = jnp.zeros((d2p, 2 * LAT_PAD), jnp.float32)
    wh = wh.at[:d2, :latent_dim].set(params["wmu"])
    wh = wh.at[:d2, LAT_PAD:LAT_PAD + latent_dim].set(params["wlv"])
    bh = jnp.zeros((1, 2 * LAT_PAD), jnp.float32)
    bh = bh.at[:, :latent_dim].set(params["bmu"])
    bh = bh.at[:, LAT_PAD:LAT_PAD + latent_dim].set(params["blv"])

    packed = [
        _pad2(params["w1"], input_dim, d1p), _pad2(params["b1"], 1, d1p),
        _pad2(params["w2"], d1p, d2p),       _pad2(params["b2"], 1, d2p),
        wh, bh,
        _pad2(params["wd1"], LAT_PAD, d2p),  _pad2(params["bd1"], 1, d2p),
        _pad2(params["wd2"], d2p, d1p),      _pad2(params["bd2"], 1, d1p),
        _pad2(params["wd3"], d1p, idp),      _pad2(params["bd3"], 1, idp),
    ]
    # First weight also needs its rows padded if input_dim is not lane-aligned.
    packed[0] = _pad2(packed[0], idp, d1p)
    return packed, idp, d1p, d2p


def vae_forward(x, eps, params, input_dim, latent_dim, tb=TB):
    """Runs the fused Pallas VAE kernel.  x: (B, C, H, W) or (B, input_dim)."""
    x2d = x.reshape(-1, input_dim).astype(jnp.float32)
    B = x2d.shape[0]
    d1 = params["w1"].shape[1]
    d2 = params["w2"].shape[1]
    packed, idp, d1p, d2p = _pack_params(params, input_dim, latent_dim, d1, d2)

    n_tiles = -(-B // tb)          # cdiv
    Bp = n_tiles * tb              # zero-pad batch; padded rows sliced off below
    x_p = _pad2(x2d, Bp, idp)
    eps_p = _pad2(eps.astype(jnp.float32), Bp, LAT_PAD)

    def batch_spec(shape):
        return pl.BlockSpec(shape, lambda i: (i, 0))

    out_shapes = (
        jax.ShapeDtypeStruct((Bp, idp), jnp.float32),          # reconstruction
        jax.ShapeDtypeStruct((Bp, 2 * LAT_PAD), jnp.float32),  # mu | logvar (lane-packed)
    )
    out_specs = [batch_spec((tb, idp)), batch_spec((tb, 2 * LAT_PAD))]

    def run(weight_pipeline_mode):
        if weight_pipeline_mode is None:
            def wspec(arr):
                return pl.BlockSpec(arr.shape, lambda i: (0, 0))
        else:
            def wspec(arr):
                return pl.BlockSpec(arr.shape, lambda i: (0, 0),
                                    pipeline_mode=weight_pipeline_mode)
        in_specs = [batch_spec((tb, idp)), batch_spec((tb, LAT_PAD))]
        in_specs += [wspec(w) for w in packed]
        return pl.pallas_call(
            _vae_kernel,
            out_shape=out_shapes,
            grid_spec=pltpu.PrefetchScalarGridSpec(
                num_scalar_prefetch=0,
                grid=(n_tiles,),
                in_specs=in_specs,
                out_specs=out_specs,
            ),
            compiler_params=pltpu.CompilerParams(
                dimension_semantics=("parallel",)),
        )(x_p, eps_p, *packed)

    try:
        # Weights are grid-invariant (constant index_map) -> one VMEM buffer.
        recon_p, heads_p = run(pl.Buffered(1))
    except Exception:
        # Fallback if this jax version rejects single-buffered BlockSpecs;
        # default double-buffered weights only cost ~1 MiB extra VMEM here.
        recon_p, heads_p = run(None)

    recon = recon_p[:B, :input_dim]
    mu = heads_p[:B, :latent_dim]
    logvar = heads_p[:B, LAT_PAD:LAT_PAD + latent_dim]
    return recon, mu, logvar


def vae_forward_ref(x, eps, params, input_dim):
    """Pure-JAX reference of the same forward pass (for correctness check)."""
    h = x.reshape(-1, input_dim).astype(jnp.float32)
    h = jnp.maximum(h @ params["w1"] + params["b1"], 0.0)
    h = jnp.maximum(h @ params["w2"] + params["b2"], 0.0)
    mu = h @ params["wmu"] + params["bmu"]
    lv = h @ params["wlv"] + params["blv"]
    z = eps * jnp.exp(0.5 * lv) + mu
    g = jnp.maximum(z @ params["wd1"] + params["bd1"], 0.0)
    g = jnp.maximum(g @ params["wd2"] + params["bd2"], 0.0)
    recon = jax.nn.sigmoid(g @ params["wd3"] + params["bd3"])
    return recon, mu, lv


if __name__ == "__main__":
    # Image (B, C, H, W) flattened to (B, input_dim) with input_dim = C*H*W.
    # B = 256 gives a 2-step batch grid (TB = 128) so the pipeline / megacore
    # path is actually exercised; shapes stay tiny (x is 768 KiB of f32).
    B, C, H, W = 256, 3, 16, 16
    input_dim = C * H * W          # 768 -> d1 = 128, d2 = 65 (padded to 128)
    latent_dim = 2

    key = jax.random.PRNGKey(0)
    kx, keps, kp = jax.random.split(key, 3)

    params, d1, d2 = init_vae_params(kp, input_dim, latent_dim)
    x = jax.random.normal(kx, (B, C, H, W), jnp.float32)
    # torch.randn_like noise for the reparameterization trick, sampled
    # host-side so the kernel stays deterministic given (x, eps, params).
    eps = jax.random.normal(keps, (B, latent_dim), jnp.float32)

    recon, mu, logvar = vae_forward(x, eps, params, input_dim, latent_dim)
    jax.block_until_ready((recon, mu, logvar))

    r_ref, mu_ref, lv_ref = vae_forward_ref(x, eps, params, input_dim)
    assert recon.shape == (B, input_dim) and mu.shape == (B, latent_dim)
    assert logvar.shape == (B, latent_dim)
    np.testing.assert_allclose(np.asarray(recon), np.asarray(r_ref), rtol=2e-5, atol=2e-5)
    np.testing.assert_allclose(np.asarray(mu), np.asarray(mu_ref), rtol=2e-5, atol=2e-5)
    np.testing.assert_allclose(np.asarray(logvar), np.asarray(lv_ref), rtol=2e-5, atol=2e-5)

    print("KERNEL_OK")
</pallas_src>

<mosaic_0001>
module attributes {stable_mosaic.version = 11 : i64} {
  func.func @_vae_kernel(%arg0: i32, %arg1: memref<128x768xf32, #tpu.memory_space<vmem>>, %arg2: memref<128x128xf32, #tpu.memory_space<vmem>>, %arg3: memref<768x128xf32, #tpu.memory_space<vmem>>, %arg4: memref<1x128xf32, #tpu.memory_space<vmem>>, %arg5: memref<128x128xf32, #tpu.memory_space<vmem>>, %arg6: memref<1x128xf32, #tpu.memory_space<vmem>>, %arg7: memref<128x256xf32, #tpu.memory_space<vmem>>, %arg8: memref<1x256xf32, #tpu.memory_space<vmem>>, %arg9: memref<128x128xf32, #tpu.memory_space<vmem>>, %arg10: memref<1x128xf32, #tpu.memory_space<vmem>>, %arg11: memref<128x128xf32, #tpu.memory_space<vmem>>, %arg12: memref<1x128xf32, #tpu.memory_space<vmem>>, %arg13: memref<128x768xf32, #tpu.memory_space<vmem>>, %arg14: memref<1x768xf32, #tpu.memory_space<vmem>>, %arg15: memref<128x768xf32, #tpu.memory_space<vmem>>, %arg16: memref<128x256xf32, #tpu.memory_space<vmem>>) attributes {dimension_semantics = [#tpu.dimension_semantics<parallel>], iteration_bounds = array<i64: 2>, scalar_prefetch = 0 : i64, scratch_operands = 0 : i64, tpu.core_type = #tpu.core_type<tc>, window_params = [{transform_indices = @transform_0, window_bounds = array<i64: 128, 768>}, {transform_indices = @transform_1, window_bounds = array<i64: 128, 128>}, {pipeline_mode = #tpu.pipeline_mode<synchronous>, transform_indices = @transform_2, window_bounds = array<i64: 768, 128>}, {pipeline_mode = #tpu.pipeline_mode<synchronous>, transform_indices = @transform_3, window_bounds = array<i64: 1, 128>}, {pipeline_mode = #tpu.pipeline_mode<synchronous>, transform_indices = @transform_4, window_bounds = array<i64: 128, 128>}, {pipeline_mode = #tpu.pipeline_mode<synchronous>, transform_indices = @transform_5, window_bounds = array<i64: 1, 128>}, {pipeline_mode = #tpu.pipeline_mode<synchronous>, transform_indices = @transform_6, window_bounds = array<i64: 128, 256>}, {pipeline_mode = #tpu.pipeline_mode<synchronous>, transform_indices = @transform_7, window_bounds = array<i64: 1, 256>}, {pipeline_mode = #tpu.pipeline_mode<synchronous>, transform_indices = @transform_8, window_bounds = array<i64: 128, 128>}, {pipeline_mode = #tpu.pipeline_mode<synchronous>, transform_indices = @transform_9, window_bounds = array<i64: 1, 128>}, {pipeline_mode = #tpu.pipeline_mode<synchronous>, transform_indices = @transform_10, window_bounds = array<i64: 128, 128>}, {pipeline_mode = #tpu.pipeline_mode<synchronous>, transform_indices = @transform_11, window_bounds = array<i64: 1, 128>}, {pipeline_mode = #tpu.pipeline_mode<synchronous>, transform_indices = @transform_12, window_bounds = array<i64: 128, 768>}, {pipeline_mode = #tpu.pipeline_mode<synchronous>, transform_indices = @transform_13, window_bounds = array<i64: 1, 768>}, {transform_indices = @transform_14, window_bounds = array<i64: 128, 768>}, {transform_indices = @transform_15, window_bounds = array<i64: 128, 256>}]} {
    %c0 = arith.constant 0 : index
    %c0_0 = arith.constant 0 : index
    %0 = vector.load %arg1[%c0, %c0_0] : memref<128x768xf32, #tpu.memory_space<vmem>>, vector<128x768xf32>
    %c0_1 = arith.constant 0 : index
    %c0_2 = arith.constant 0 : index
    %1 = vector.load %arg3[%c0_1, %c0_2] : memref<768x128xf32, #tpu.memory_space<vmem>>, vector<768x128xf32>
    %cst = arith.constant dense<0.000000e+00> : vector<128x128xf32>
    %2 = tpu.matmul %0, %1, %cst {dimension_numbers = #tpu.dot_dimension_numbers<[1], [0], [0], [1], [0, 0, 1, 1], [], []>} : vector<128x768xf32>, vector<768x128xf32>, vector<128x128xf32> -> vector<128x128xf32>
    %c0_3 = arith.constant 0 : index
    %c0_4 = arith.constant 0 : index
    %3 = vector.load %arg4[%c0_3, %c0_4] : memref<1x128xf32, #tpu.memory_space<vmem>>, vector<1x128xf32>
    %4 = vector.broadcast %3 : vector<1x128xf32> to vector<128x128xf32>
    %5 = arith.addf %2, %4 : vector<128x128xf32>
    %cst_5 = arith.constant 0.000000e+00 : f32
    %6 = vector.broadcast %cst_5 : f32 to vector<128x128xf32>
    %7 = arith.maximumf %5, %6 : vector<128x128xf32>
    %c0_6 = arith.constant 0 : index
    %c0_7 = arith.constant 0 : index
    %8 = vector.load %arg5[%c0_6, %c0_7] : memref<128x128xf32, #tpu.memory_space<vmem>>, vector<128x128xf32>
    %cst_8 = arith.constant dense<0.000000e+00> : vector<128x128xf32>
    %9 = tpu.matmul %7, %8, %cst_8 {dimension_numbers = #tpu.dot_dimension_numbers<[1], [0], [0], [1], [0, 0, 1, 1], [], []>} : vector<128x128xf32>, vector<128x128xf32>, vector<128x128xf32> -> vector<128x128xf32>
    %c0_9 = arith.constant 0 : index
    %c0_10 = arith.constant 0 : index
    %10 = vector.load %arg6[%c0_9, %c0_10] : memref<1x128xf32, #tpu.memory_space<vmem>>, vector<1x128xf32>
    %11 = vector.broadcast %10 : vector<1x128xf32> to vector<128x128xf32>
    %12 = arith.addf %9, %11 : vector<128x128xf32>
    %cst_11 = arith.constant 0.000000e+00 : f32
    %13 = vector.broadcast %cst_11 : f32 to vector<128x128xf32>
    %14 = arith.maximumf %12, %13 : vector<128x128xf32>
    %c0_12 = arith.constant 0 : index
    %c0_13 = arith.constant 0 : index
    %15 = vector.load %arg7[%c0_12, %c0_13] : memref<128x256xf32, #tpu.memory_space<vmem>>, vector<128x256xf32>
    %cst_14 = arith.constant dense<0.000000e+00> : vector<128x256xf32>
    %16 = tpu.matmul %14, %15, %cst_14 {dimension_numbers = #tpu.dot_dimension_numbers<[1], [0], [0], [1], [0, 0, 1, 1], [], []>} : vector<128x128xf32>, vector<128x256xf32>, vector<128x256xf32> -> vector<128x256xf32>
    %c0_15 = arith.constant 0 : index
    %c0_16 = arith.constant 0 : index
    %17 = vector.load %arg8[%c0_15, %c0_16] : memref<1x256xf32, #tpu.memory_space<vmem>>, vector<1x256xf32>
    %18 = vector.broadcast %17 : vector<1x256xf32> to vector<128x256xf32>
    %19 = arith.addf %16, %18 : vector<128x256xf32>
    %c0_17 = arith.constant 0 : index
    %c0_18 = arith.constant 0 : index
    %20 = vector.load %arg16[%c0_17, %c0_18] : memref<128x256xf32, #tpu.memory_space<vmem>>, vector<128x256xf32>
    tpu.vector_store %arg16[%c0_17, %c0_18], %19 {strides = array<i32>} : memref<128x256xf32, #tpu.memory_space<vmem>>, vector<128x256xf32>,
    %21 = vector.extract_strided_slice %19 {offsets = [0, 0], sizes = [128, 128], strides = [1, 1]} : vector<128x256xf32> to vector<128x128xf32>
    %22 = vector.extract_strided_slice %19 {offsets = [0, 128], sizes = [128, 128], strides = [1, 1]} : vector<128x256xf32> to vector<128x128xf32>
    %c0_19 = arith.constant 0 : index
    %c0_20 = arith.constant 0 : index
    %23 = vector.load %arg2[%c0_19, %c0_20] : memref<128x128xf32, #tpu.memory_space<vmem>>, vector<128x128xf32>
    %cst_21 = arith.constant 5.000000e-01 : f32
    %24 = vector.broadcast %cst_21 : f32 to vector<128x128xf32>
    %25 = arith.mulf %24, %22 : vector<128x128xf32>
    %26 = math.exp %25 : vector<128x128xf32>
    %27 = arith.mulf %23, %26 : vector<128x128xf32>
    %28 = arith.addf %27, %21 : vector<128x128xf32>
    %c0_22 = arith.constant 0 : index
    %c0_23 = arith.constant 0 : index
    %29 = vector.load %arg9[%c0_22, %c0_23] : memref<128x128xf32, #tpu.memory_space<vmem>>, vector<128x128xf32>
    %cst_24 = arith.constant dense<0.000000e+00> : vector<128x128xf32>
    %30 = tpu.matmul %28, %29, %cst_24 {dimension_numbers = #tpu.dot_dimension_numbers<[1], [0], [0], [1], [0, 0, 1, 1], [], []>} : vector<128x128xf32>, vector<128x128xf32>, vector<128x128xf32> -> vector<128x128xf32>
    %c0_25 = arith.constant 0 : index
    %c0_26 = arith.constant 0 : index
    %31 = vector.load %arg10[%c0_25, %c0_26] : memref<1x128xf32, #tpu.memory_space<vmem>>, vector<1x128xf32>
    %32 = vector.broadcast %31 : vector<1x128xf32> to vector<128x128xf32>
    %33 = arith.addf %30, %32 : vector<128x128xf32>
    %cst_27 = arith.constant 0.000000e+00 : f32
    %34 = vector.broadcast %cst_27 : f32 to vector<128x128xf32>
    %35 = arith.maximumf %33, %34 : vector<128x128xf32>
    %c0_28 = arith.constant 0 : index
    %c0_29 = arith.constant 0 : index
    %36 = vector.load %arg11[%c0_28, %c0_29] : memref<128x128xf32, #tpu.memory_space<vmem>>, vector<128x128xf32>
    %cst_30 = arith.constant dense<0.000000e+00> : vector<128x128xf32>
    %37 = tpu.matmul %35, %36, %cst_30 {dimension_numbers = #tpu.dot_dimension_numbers<[1], [0], [0], [1], [0, 0, 1, 1], [], []>} : vector<128x128xf32>, vector<128x128xf32>, vector<128x128xf32> -> vector<128x128xf32>
    %c0_31 = arith.constant 0 : index
    %c0_32 = arith.constant 0 : index
    %38 = vector.load %arg12[%c0_31, %c0_32] : memref<1x128xf32, #tpu.memory_space<vmem>>, vector<1x128xf32>
    %39 = vector.broadcast %38 : vector<1x128xf32> to vector<128x128xf32>
    %40 = arith.addf %37, %39 : vector<128x128xf32>
    %cst_33 = arith.constant 0.000000e+00 : f32
    %41 = vector.broadcast %cst_33 : f32 to vector<128x128xf32>
    %42 = arith.maximumf %40, %41 : vector<128x128xf32>
    %c0_34 = arith.constant 0 : index
    %c0_35 = arith.constant 0 : index
    %43 = vector.load %arg13[%c0_34, %c0_35] : memref<128x768xf32, #tpu.memory_space<vmem>>, vector<128x768xf32>
    %cst_36 = arith.constant dense<0.000000e+00> : vector<128x768xf32>
    %44 = tpu.matmul %42, %43, %cst_36 {dimension_numbers = #tpu.dot_dimension_numbers<[1], [0], [0], [1], [0, 0, 1, 1], [], []>} : vector<128x128xf32>, vector<128x768xf32>, vector<128x768xf32> -> vector<128x768xf32>
    %c0_37 = arith.constant 0 : index
    %c0_38 = arith.constant 0 : index
    %45 = vector.load %arg14[%c0_37, %c0_38] : memref<1x768xf32, #tpu.memory_space<vmem>>, vector<1x768xf32>
    %46 = vector.broadcast %45 : vector<1x768xf32> to vector<128x768xf32>
    %47 = arith.addf %44, %46 : vector<128x768xf32>
    %48 = arith.negf %47 : vector<128x768xf32>
    %49 = math.exp %48 : vector<128x768xf32>
    %cst_39 = arith.constant 1.000000e+00 : f32
    %50 = vector.broadcast %cst_39 : f32 to vector<128x768xf32>
    %51 = arith.addf %50, %49 : vector<128x768xf32>
    %52 = arith.divf %50, %51 : vector<128x768xf32>
    %c0_40 = arith.constant 0 : index
    %c0_41 = arith.constant 0 : index
    %53 = vector.load %arg15[%c0_40, %c0_41] : memref<128x768xf32, #tpu.memory_space<vmem>>, vector<128x768xf32>
    tpu.vector_store %arg15[%c0_40, %c0_41], %52 {strides = array<i32>} : memref<128x768xf32, #tpu.memory_space<vmem>>, vector<128x768xf32>,
    return
  }
  func.func @transform_0(%arg0: i32) -> (i32, i32) {
    %c0_i32 = arith.constant 0 : i32
    %c0_i32_0 = arith.constant 0 : i32
    return %arg0, %c0_i32 : i32, i32
  }
  func.func @transform_1(%arg0: i32) -> (i32, i32) {
    %c0_i32 = arith.constant 0 : i32
    %c0_i32_0 = arith.constant 0 : i32
    return %arg0, %c0_i32 : i32, i32
  }
  func.func @transform_2(%arg0: i32) -> (i32, i32) {
    %c0_i32 = arith.constant 0 : i32
    %c0_i32_0 = arith.constant 0 : i32
    %c0_i32_1 = arith.constant 0 : i32
    return %c0_i32, %c0_i32_0 : i32, i32
  }
  func.func @transform_3(%arg0: i32) -> (i32, i32) {
    %c0_i32 = arith.constant 0 : i32
    %c0_i32_0 = arith.constant 0 : i32
    %c0_i32_1 = arith.constant 0 : i32
    return %c0_i32, %c0_i32_0 : i32, i32
  }
  func.func @transform_4(%arg0: i32) -> (i32, i32) {
    %c0_i32 = arith.constant 0 : i32
    %c0_i32_0 = arith.constant 0 : i32
    %c0_i32_1 = arith.constant 0 : i32
    return %c0_i32, %c0_i32_0 : i32, i32
  }
  func.func @transform_5(%arg0: i32) -> (i32, i32) {
    %c0_i32 = arith.constant 0 : i32
    %c0_i32_0 = arith.constant 0 : i32
    %c0_i32_1 = arith.constant 0 : i32
    return %c0_i32, %c0_i32_0 : i32, i32
  }
  func.func @transform_6(%arg0: i32) -> (i32, i32) {
    %c0_i32 = arith.constant 0 : i32
    %c0_i32_0 = arith.constant 0 : i32
    %c0_i32_1 = arith.constant 0 : i32
    return %c0_i32, %c0_i32_0 : i32, i32
  }
  func.func @transform_7(%arg0: i32) -> (i32, i32) {
    %c0_i32 = arith.constant 0 : i32
    %c0_i32_0 = arith.constant 0 : i32
    %c0_i32_1 = arith.constant 0 : i32
    return %c0_i32, %c0_i32_0 : i32, i32
  }
  func.func @transform_8(%arg0: i32) -> (i32, i32) {
    %c0_i32 = arith.constant 0 : i32
    %c0_i32_0 = arith.constant 0 : i32
    %c0_i32_1 = arith.constant 0 : i32
    return %c0_i32, %c0_i32_0 : i32, i32
  }
  func.func @transform_9(%arg0: i32) -> (i32, i32) {
    %c0_i32 = arith.constant 0 : i32
    %c0_i32_0 = arith.constant 0 : i32
    %c0_i32_1 = arith.constant 0 : i32
    return %c0_i32, %c0_i32_0 : i32, i32
  }
  func.func @transform_10(%arg0: i32) -> (i32, i32) {
    %c0_i32 = arith.constant 0 : i32
    %c0_i32_0 = arith.constant 0 : i32
    %c0_i32_1 = arith.constant 0 : i32
    return %c0_i32, %c0_i32_0 : i32, i32
  }
  func.func @transform_11(%arg0: i32) -> (i32, i32) {
    %c0_i32 = arith.constant 0 : i32
    %c0_i32_0 = arith.constant 0 : i32
    %c0_i32_1 = arith.constant 0 : i32
    return %c0_i32, %c0_i32_0 : i32, i32
  }
  func.func @transform_12(%arg0: i32) -> (i32, i32) {
    %c0_i32 = arith.constant 0 : i32
    %c0_i32_0 = arith.constant 0 : i32
    %c0_i32_1 = arith.constant 0 : i32
    return %c0_i32, %c0_i32_0 : i32, i32
  }
  func.func @transform_13(%arg0: i32) -> (i32, i32) {
    %c0_i32 = arith.constant 0 : i32
    %c0_i32_0 = arith.constant 0 : i32
    %c0_i32_1 = arith.constant 0 : i32
    return %c0_i32, %c0_i32_0 : i32, i32
  }
  func.func @transform_14(%arg0: i32) -> (i32, i32) {
    %c0_i32 = arith.constant 0 : i32
    %c0_i32_0 = arith.constant 0 : i32
    return %arg0, %c0_i32 : i32, i32
  }
  func.func @transform_15(%arg0: i32) -> (i32, i32) {
    %c0_i32 = arith.constant 0 : i32
    %c0_i32_0 = arith.constant 0 : i32
    return %arg0, %c0_i32 : i32, i32
  }
}

module attributes {stable_mosaic.version = 11 : i64} {
  func.func @_vae_kernel(%arg0: i32, %arg1: memref<128x768xf32, #tpu.memory_space<vmem>>, %arg2: memref<128x128xf32, #tpu.memory_space<vmem>>, %arg3: memref<768x128xf32, #tpu.memory_space<vmem>>, %arg4: memref<1x128xf32, #tpu.memory_space<vmem>>, %arg5: memref<128x128xf32, #tpu.memory_space<vmem>>, %arg6: memref<1x128xf32, #tpu.memory_space<vmem>>, %arg7: memref<128x256xf32, #tpu.memory_space<vmem>>, %arg8: memref<1x256xf32, #tpu.memory_space<vmem>>, %arg9: memref<128x128xf32, #tpu.memory_space<vmem>>, %arg10: memref<1x128xf32, #tpu.memory_space<vmem>>, %arg11: memref<128x128xf32, #tpu.memory_space<vmem>>, %arg12: memref<1x128xf32, #tpu.memory_space<vmem>>, %arg13: memref<128x768xf32, #tpu.memory_space<vmem>>, %arg14: memref<1x768xf32, #tpu.memory_space<vmem>>, %arg15: memref<128x768xf32, #tpu.memory_space<vmem>>, %arg16: memref<128x256xf32, #tpu.memory_space<vmem>>) attributes {dimension_semantics = [#tpu.dimension_semantics<parallel>], iteration_bounds = array<i64: 2>, scalar_prefetch = 0 : i64, scratch_operands = 0 : i64, tpu.core_type = #tpu.core_type<tc>, window_params = [{transform_indices = @transform_0, window_bounds = array<i64: 128, 768>}, {transform_indices = @transform_1, window_bounds = array<i64: 128, 128>}, {pipeline_mode = #tpu.pipeline_mode<synchronous>, transform_indices = @transform_2, window_bounds = array<i64: 768, 128>}, {pipeline_mode = #tpu.pipeline_mode<synchronous>, transform_indices = @transform_3, window_bounds = array<i64: 1, 128>}, {pipeline_mode = #tpu.pipeline_mode<synchronous>, transform_indices = @transform_4, window_bounds = array<i64: 128, 128>}, {pipeline_mode = #tpu.pipeline_mode<synchronous>, transform_indices = @transform_5, window_bounds = array<i64: 1, 128>}, {pipeline_mode = #tpu.pipeline_mode<synchronous>, transform_indices = @transform_6, window_bounds = array<i64: 128, 256>}, {pipeline_mode = #tpu.pipeline_mode<synchronous>, transform_indices = @transform_7, window_bounds = array<i64: 1, 256>}, {pipeline_mode = #tpu.pipeline_mode<synchronous>, transform_indices = @transform_8, window_bounds = array<i64: 128, 128>}, {pipeline_mode = #tpu.pipeline_mode<synchronous>, transform_indices = @transform_9, window_bounds = array<i64: 1, 128>}, {pipeline_mode = #tpu.pipeline_mode<synchronous>, transform_indices = @transform_10, window_bounds = array<i64: 128, 128>}, {pipeline_mode = #tpu.pipeline_mode<synchronous>, transform_indices = @transform_11, window_bounds = array<i64: 1, 128>}, {pipeline_mode = #tpu.pipeline_mode<synchronous>, transform_indices = @transform_12, window_bounds = array<i64: 128, 768>}, {pipeline_mode = #tpu.pipeline_mode<synchronous>, transform_indices = @transform_13, window_bounds = array<i64: 1, 768>}, {transform_indices = @transform_14, window_bounds = array<i64: 128, 768>}, {transform_indices = @transform_15, window_bounds = array<i64: 128, 256>}]} {
    %c0 = arith.constant 0 : index
    %c0_0 = arith.constant 0 : index
    %0 = vector.load %arg1[%c0, %c0_0] : memref<128x768xf32, #tpu.memory_space<vmem>>, vector<128x768xf32>
    %c0_1 = arith.constant 0 : index
    %c0_2 = arith.constant 0 : index
    %1 = vector.load %arg3[%c0_1, %c0_2] : memref<768x128xf32, #tpu.memory_space<vmem>>, vector<768x128xf32>
    %cst = arith.constant dense<0.000000e+00> : vector<128x128xf32>
    %2 = tpu.matmul %0, %1, %cst {dimension_numbers = #tpu.dot_dimension_numbers<[1], [0], [0], [1], [0, 0, 1, 1], [], []>} : vector<128x768xf32>, vector<768x128xf32>, vector<128x128xf32> -> vector<128x128xf32>
    %c0_3 = arith.constant 0 : index
    %c0_4 = arith.constant 0 : index
    %3 = vector.load %arg4[%c0_3, %c0_4] : memref<1x128xf32, #tpu.memory_space<vmem>>, vector<1x128xf32>
    %4 = vector.broadcast %3 : vector<1x128xf32> to vector<128x128xf32>
    %5 = arith.addf %2, %4 : vector<128x128xf32>
    %cst_5 = arith.constant 0.000000e+00 : f32
    %6 = vector.broadcast %cst_5 : f32 to vector<128x128xf32>
    %7 = arith.maximumf %5, %6 : vector<128x128xf32>
    %c0_6 = arith.constant 0 : index
    %c0_7 = arith.constant 0 : index
    %8 = vector.load %arg5[%c0_6, %c0_7] : memref<128x128xf32, #tpu.memory_space<vmem>>, vector<128x128xf32>
    %cst_8 = arith.constant dense<0.000000e+00> : vector<128x128xf32>
    %9 = tpu.matmul %7, %8, %cst_8 {dimension_numbers = #tpu.dot_dimension_numbers<[1], [0], [0], [1], [0, 0, 1, 1], [], []>} : vector<128x128xf32>, vector<128x128xf32>, vector<128x128xf32> -> vector<128x128xf32>
    %c0_9 = arith.constant 0 : index
    %c0_10 = arith.constant 0 : index
    %10 = vector.load %arg6[%c0_9, %c0_10] : memref<1x128xf32, #tpu.memory_space<vmem>>, vector<1x128xf32>
    %11 = vector.broadcast %10 : vector<1x128xf32> to vector<128x128xf32>
    %12 = arith.addf %9, %11 : vector<128x128xf32>
    %cst_11 = arith.constant 0.000000e+00 : f32
    %13 = vector.broadcast %cst_11 : f32 to vector<128x128xf32>
    %14 = arith.maximumf %12, %13 : vector<128x128xf32>
    %c0_12 = arith.constant 0 : index
    %c0_13 = arith.constant 0 : index
    %15 = vector.load %arg7[%c0_12, %c0_13] : memref<128x256xf32, #tpu.memory_space<vmem>>, vector<128x256xf32>
    %cst_14 = arith.constant dense<0.000000e+00> : vector<128x256xf32>
    %16 = tpu.matmul %14, %15, %cst_14 {dimension_numbers = #tpu.dot_dimension_numbers<[1], [0], [0], [1], [0, 0, 1, 1], [], []>} : vector<128x128xf32>, vector<128x256xf32>, vector<128x256xf32> -> vector<128x256xf32>
    %c0_15 = arith.constant 0 : index
    %c0_16 = arith.constant 0 : index
    %17 = vector.load %arg8[%c0_15, %c0_16] : memref<1x256xf32, #tpu.memory_space<vmem>>, vector<1x256xf32>
    %18 = vector.broadcast %17 : vector<1x256xf32> to vector<128x256xf32>
    %19 = arith.addf %16, %18 : vector<128x256xf32>
    %c0_17 = arith.constant 0 : index
    %c0_18 = arith.constant 0 : index
    %20 = vector.load %arg16[%c0_17, %c0_18] : memref<128x256xf32, #tpu.memory_space<vmem>>, vector<128x256xf32>
    tpu.vector_store %arg16[%c0_17, %c0_18], %19 {strides = array<i32>} : memref<128x256xf32, #tpu.memory_space<vmem>>, vector<128x256xf32>,
    %21 = vector.extract_strided_slice %19 {offsets = [0, 0], sizes = [128, 128], strides = [1, 1]} : vector<128x256xf32> to vector<128x128xf32>
    %22 = vector.extract_strided_slice %19 {offsets = [0, 128], sizes = [128, 128], strides = [1, 1]} : vector<128x256xf32> to vector<128x128xf32>
    %c0_19 = arith.constant 0 : index
    %c0_20 = arith.constant 0 : index
    %23 = vector.load %arg2[%c0_19, %c0_20] : memref<128x128xf32, #tpu.memory_space<vmem>>, vector<128x128xf32>
    %cst_21 = arith.constant 5.000000e-01 : f32
    %24 = vector.broadcast %cst_21 : f32 to vector<128x128xf32>
    %25 = arith.mulf %24, %22 : vector<128x128xf32>
    %26 = math.exp %25 : vector<128x128xf32>
    %27 = arith.mulf %23, %26 : vector<128x128xf32>
    %28 = arith.addf %27, %21 : vector<128x128xf32>
    %c0_22 = arith.constant 0 : index
    %c0_23 = arith.constant 0 : index
    %29 = vector.load %arg9[%c0_22, %c0_23] : memref<128x128xf32, #tpu.memory_space<vmem>>, vector<128x128xf32>
    %cst_24 = arith.constant dense<0.000000e+00> : vector<128x128xf32>
    %30 = tpu.matmul %28, %29, %cst_24 {dimension_numbers = #tpu.dot_dimension_numbers<[1], [0], [0], [1], [0, 0, 1, 1], [], []>} : vector<128x128xf32>, vector<128x128xf32>, vector<128x128xf32> -> vector<128x128xf32>
    %c0_25 = arith.constant 0 : index
    %c0_26 = arith.constant 0 : index
    %31 = vector.load %arg10[%c0_25, %c0_26] : memref<1x128xf32, #tpu.memory_space<vmem>>, vector<1x128xf32>
    %32 = vector.broadcast %31 : vector<1x128xf32> to vector<128x128xf32>
    %33 = arith.addf %30, %32 : vector<128x128xf32>
    %cst_27 = arith.constant 0.000000e+00 : f32
    %34 = vector.broadcast %cst_27 : f32 to vector<128x128xf32>
    %35 = arith.maximumf %33, %34 : vector<128x128xf32>
    %c0_28 = arith.constant 0 : index
    %c0_29 = arith.constant 0 : index
    %36 = vector.load %arg11[%c0_28, %c0_29] : memref<128x128xf32, #tpu.memory_space<vmem>>, vector<128x128xf32>
    %cst_30 = arith.constant dense<0.000000e+00> : vector<128x128xf32>
    %37 = tpu.matmul %35, %36, %cst_30 {dimension_numbers = #tpu.dot_dimension_numbers<[1], [0], [0], [1], [0, 0, 1, 1], [], []>} : vector<128x128xf32>, vector<128x128xf32>, vector<128x128xf32> -> vector<128x128xf32>
    %c0_31 = arith.constant 0 : index
    %c0_32 = arith.constant 0 : index
    %38 = vector.load %arg12[%c0_31, %c0_32] : memref<1x128xf32, #tpu.memory_space<vmem>>, vector<1x128xf32>
    %39 = vector.broadcast %38 : vector<1x128xf32> to vector<128x128xf32>
    %40 = arith.addf %37, %39 : vector<128x128xf32>
    %cst_33 = arith.constant 0.000000e+00 : f32
    %41 = vector.broadcast %cst_33 : f32 to vector<128x128xf32>
    %42 = arith.maximumf %40, %41 : vector<128x128xf32>
    %c0_34 = arith.constant 0 : index
    %c0_35 = arith.constant 0 : index
    %43 = vector.load %arg13[%c0_34, %c0_35] : memref<128x768xf32, #tpu.memory_space<vmem>>, vector<128x768xf32>
    %cst_36 = arith.constant dense<0.000000e+00> : vector<128x768xf32>
    %44 = tpu.matmul %42, %43, %cst_36 {dimension_numbers = #tpu.dot_dimension_numbers<[1], [0], [0], [1], [0, 0, 1, 1], [], []>} : vector<128x128xf32>, vector<128x768xf32>, vector<128x768xf32> -> vector<128x768xf32>
    %c0_37 = arith.constant 0 : index
    %c0_38 = arith.constant 0 : index
    %45 = vector.load %arg14[%c0_37, %c0_38] : memref<1x768xf32, #tpu.memory_space<vmem>>, vector<1x768xf32>
    %46 = vector.broadcast %45 : vector<1x768xf32> to vector<128x768xf32>
    %47 = arith.addf %44, %46 : vector<128x768xf32>
    %48 = arith.negf %47 : vector<128x768xf32>
    %49 = math.exp %48 : vector<128x768xf32>
    %cst_39 = arith.constant 1.000000e+00 : f32
    %50 = vector.broadcast %cst_39 : f32 to vector<128x768xf32>
    %51 = arith.addf %50, %49 : vector<128x768xf32>
    %52 = arith.divf %50, %51 : vector<128x768xf32>
    %c0_40 = arith.constant 0 : index
    %c0_41 = arith.constant 0 : index
    %53 = vector.load %arg15[%c0_40, %c0_41] : memref<128x768xf32, #tpu.memory_space<vmem>>, vector<128x768xf32>
    tpu.vector_store %arg15[%c0_40, %c0_41], %52 {strides = array<i32>} : memref<128x768xf32, #tpu.memory_space<vmem>>, vector<128x768xf32>,
    return
  }
  func.func @transform_0(%arg0: i32) -> (i32, i32) {
    %c0_i32 = arith.constant 0 : i32
    %c0_i32_0 = arith.constant 0 : i32
    return %arg0, %c0_i32 : i32, i32
  }
  func.func @transform_1(%arg0: i32) -> (i32, i32) {
    %c0_i32 = arith.constant 0 : i32
    %c0_i32_0 = arith.constant 0 : i32
    return %arg0, %c0_i32 : i32, i32
  }
  func.func @transform_2(%arg0: i32) -> (i32, i32) {
    %c0_i32 = arith.constant 0 : i32
    %c0_i32_0 = arith.constant 0 : i32
    %c0_i32_1 = arith.constant 0 : i32
    return %c0_i32, %c0_i32_0 : i32, i32
  }
  func.func @transform_3(%arg0: i32) -> (i32, i32) {
    %c0_i32 = arith.constant 0 : i32
    %c0_i32_0 = arith.constant 0 : i32
    %c0_i32_1 = arith.constant 0 : i32
    return %c0_i32, %c0_i32_0 : i32, i32
  }
  func.func @transform_4(%arg0: i32) -> (i32, i32) {
    %c0_i32 = arith.constant 0 : i32
    %c0_i32_0 = arith.constant 0 : i32
    %c0_i32_1 = arith.constant 0 : i32
    return %c0_i32, %c0_i32_0 : i32, i32
  }
  func.func @transform_5(%arg0: i32) -> (i32, i32) {
    %c0_i32 = arith.constant 0 : i32
    %c0_i32_0 = arith.constant 0 : i32
    %c0_i32_1 = arith.constant 0 : i32
    return %c0_i32, %c0_i32_0 : i32, i32
  }
  func.func @transform_6(%arg0: i32) -> (i32, i32) {
    %c0_i32 = arith.constant 0 : i32
    %c0_i32_0 = arith.constant 0 : i32
    %c0_i32_1 = arith.constant 0 : i32
    return %c0_i32, %c0_i32_0 : i32, i32
  }
  func.func @transform_7(%arg0: i32) -> (i32, i32) {
    %c0_i32 = arith.constant 0 : i32
    %c0_i32_0 = arith.constant 0 : i32
    %c0_i32_1 = arith.constant 0 : i32
    return %c0_i32, %c0_i32_0 : i32, i32
  }
  func.func @transform_8(%arg0: i32) -> (i32, i32) {
    %c0_i32 = arith.constant 0 : i32
    %c0_i32_0 = arith.constant 0 : i32
    %c0_i32_1 = arith.constant 0 : i32
    return %c0_i32, %c0_i32_0 : i32, i32
  }
  func.func @transform_9(%arg0: i32) -> (i32, i32) {
    %c0_i32 = arith.constant 0 : i32
    %c0_i32_0 = arith.constant 0 : i32
    %c0_i32_1 = arith.constant 0 : i32
    return %c0_i32, %c0_i32_0 : i32, i32
  }
  func.func @transform_10(%arg0: i32) -> (i32, i32) {
    %c0_i32 = arith.constant 0 : i32
    %c0_i32_0 = arith.constant 0 : i32
    %c0_i32_1 = arith.constant 0 : i32
    return %c0_i32, %c0_i32_0 : i32, i32
  }
  func.func @transform_11(%arg0: i32) -> (i32, i32) {
    %c0_i32 = arith.constant 0 : i32
    %c0_i32_0 = arith.constant 0 : i32
    %c0_i32_1 = arith.constant 0 : i32
    return %c0_i32, %c0_i32_0 : i32, i32
  }
  func.func @transform_12(%arg0: i32) -> (i32, i32) {
    %c0_i32 = arith.constant 0 : i32
    %c0_i32_0 = arith.constant 0 : i32
    %c0_i32_1 = arith.constant 0 : i32
    return %c0_i32, %c0_i32_0 : i32, i32
  }
  func.func @transform_13(%arg0: i32) -> (i32, i32) {
    %c0_i32 = arith.constant 0 : i32
    %c0_i32_0 = arith.constant 0 : i32
    %c0_i32_1 = arith.constant 0 : i32
    return %c0_i32, %c0_i32_0 : i32, i32
  }
  func.func @transform_14(%arg0: i32) -> (i32, i32) {
    %c0_i32 = arith.constant 0 : i32
    %c0_i32_0 = arith.constant 0 : i32
    return %arg0, %c0_i32 : i32, i32
  }
  func.func @transform_15(%arg0: i32) -> (i32, i32) {
    %c0_i32 = arith.constant 0 : i32
    %c0_i32_0 = arith.constant 0 : i32
    return %arg0, %c0_i32 : i32, i32
  }
}

</mosaic_0001>

<llo_original>
// kernel: tpu_custom_call.1
$region0: #{tpu_custom_call.1}
  #allocation0 [shape = 'u32[]', space=smem, size = 0x4, offset = 0x4, fixed_abs, tag = 'smem constant byte address 0x4 - core index']
  #allocation1 [shape = 'u32[144,128]{1,0:T(1,128)}', space=vmem, size = 0x12000, scoped, tag = 'internal scratch']
  %s0 = inlined_call_operand.hbm [shape: f32[256,768], index: 0, kind: input, shape index: {}]
  %s1 = inlined_call_operand.hbm [shape: f32[256,128], index: 1, kind: input, shape index: {}]
  %s2 = inlined_call_operand.hbm [shape: f32[768,128], index: 2, kind: input, shape index: {}]
  %s3 = inlined_call_operand.vmem [shape: f32[1,128], index: 3, kind: input, shape index: {}]
  %s4 = inlined_call_operand.hbm [shape: f32[128,128], index: 4, kind: input, shape index: {}]
  %s5 = inlined_call_operand.vmem [shape: f32[1,128], index: 5, kind: input, shape index: {}]
  %s6 = inlined_call_operand.hbm [shape: f32[128,256], index: 6, kind: input, shape index: {}]
  %s7 = inlined_call_operand.vmem [shape: f32[1,256], index: 7, kind: input, shape index: {}]
  %s8 = inlined_call_operand.hbm [shape: f32[128,128], index: 8, kind: input, shape index: {}]
  %s9 = inlined_call_operand.vmem [shape: f32[1,128], index: 9, kind: input, shape index: {}]
  %s10 = inlined_call_operand.hbm [shape: f32[128,128], index: 10, kind: input, shape index: {}]
  %s11 = inlined_call_operand.vmem [shape: f32[1,128], index: 11, kind: input, shape index: {}]
  %s12 = inlined_call_operand.hbm [shape: f32[128,768], index: 12, kind: input, shape index: {}]
  %s13 = inlined_call_operand.vmem [shape: f32[1,768], index: 13, kind: input, shape index: {}]
  %s14 = inlined_call_operand.hbm [shape: f32[256,768], index: 14, kind: output, shape index: {0}]
  %s15 = inlined_call_operand.hbm [shape: f32[256,256], index: 15, kind: output, shape index: {1}]
  %16 = xla_tuple %s14, %s15
  %s17 = sld [smem:[#allocation0]]
  $region129: #{tpu_custom_call.1} parent=0
    _
  %s19 = ssub.s32 1, %s17
  %s20 = scalar_select 0, %s19, %s17
  $region1: #{tpu_custom_call.1} parent=0
    #allocation2 [shape = 'u8[786432]{0}', space=vmem, size = 0xc0000, scoped, tag = 'input window, operand 0']
    #allocation3 [shape = 's32[2]{0}', space=sflag, size = 0x8, scoped, tag = 'scoped memory for tpu_custom_call.1']
    #allocation4 [shape = 's32[2]{0}', space=sflag, size = 0x8, scoped, tag = 'scoped memory for tpu_custom_call.1']
    #allocation5 [shape = 'u8[131072]{0}', space=vmem, size = 0x20000, scoped, tag = 'input window, operand 1']
    #allocation6 [shape = 's32[2]{0}', space=sflag, size = 0x8, scoped, tag = 'scoped memory for tpu_custom_call.1']
    #allocation7 [shape = 'u8[393216]{0}', space=vmem, size = 0x60000, scoped, tag = 'input window, operand 2, single buffered']
    #allocation8 [shape = 'u8[65536]{0}', space=vmem, size = 0x10000, scoped, tag = 'input window, operand 4, single buffered']
    #allocation9 [shape = 's32[1]{0}', space=sflag, size = 0x4, scoped, tag = 'scoped memory for tpu_custom_call.1']
    #allocation10 [shape = 'u8[131072]{0}', space=vmem, size = 0x20000, scoped, tag = 'input window, operand 6, single buffered']
    #allocation11 [shape = 'u8[65536]{0}', space=vmem, size = 0x10000, scoped, tag = 'input window, operand 8, single buffered']
    #allocation12 [shape = 's32[1]{0}', space=sflag, size = 0x4, scoped, tag = 'scoped memory for tpu_custom_call.1']
    #allocation13 [shape = 'u8[65536]{0}', space=vmem, size = 0x10000, scoped, tag = 'input window, operand 10, single buffered']
    #allocation14 [shape = 'u8[393216]{0}', space=vmem, size = 0x60000, scoped, tag = 'input window, operand 12, single buffered']
    #allocation15 [shape = 's32[1]{0}', space=sflag, size = 0x4, scoped, tag = 'scoped memory for tpu_custom_call.1']
    #allocation16 [shape = 'u8[786432]{0}', space=vmem, size = 0xc0000, scoped, tag = 'output window, operand 0']
    #allocation17 [shape = 'u8[262144]{0}', space=vmem, size = 0x40000, scoped, tag = 'output window, operand 1']
    #allocation18 [shape = 's32[2]{0}', space=sflag, size = 0x8, scoped, tag = 'scoped memory for tpu_custom_call.1']
    %21 = vsyncpa [#allocation3], 0
    %s22 = scalar_lea.sflag [#allocation3], 1
    %23 = vsyncpa %s22, 0
    %24 = vsyncpa [#allocation6], 0
    %s25 = scalar_lea.sflag [#allocation6], 1
    %26 = vsyncpa %s25, 0
    %27 = vsyncpa [#allocation9], 0
    %28 = vsyncpa [#allocation12], 0
    %29 = vsyncpa [#allocation15], 0
    %30 = vsyncpa [#allocation4], 0
    %s31 = scalar_lea.sflag [#allocation4], 1
    %32 = vsyncpa %s31, 0
    %33 = vsyncpa [#allocation18], 0
    %s34 = scalar_lea.sflag [#allocation18], 1
    %35 = vsyncpa %s34, 0
    loop: start=0, step=1, limit=4
    $region2: #{tpu_custom_call.1} parent=1 // loop_pre_header
      _
    $region3: #{tpu_custom_call.1} parent=1 // loop_header
      %s37 = sphi 0, %s41
      %p38 = scmp.ge.s32.totalorder %s37, 4
      %s47 = sphi 0, %s49
      %s50 = sphi 0, %s47
      %s51 = sphi 0, %s50
      %s67 = sphi 0, %s51
      %s73 = sphi 0, %s75
      %s76 = sphi 0, %s73
      %s77 = sphi 0, %s76
      %s93 = sphi 0, %s77
      %s97 = sphi 0, %s97
      %s99 = sphi 0, %s97
      %s100 = sphi 0, %s99
      %s114 = sphi 0, %s100
      %s118 = sphi 0, %s118
      %s120 = sphi 0, %s118
      %s121 = sphi 0, %s120
      %s135 = sphi 0, %s121
      %s139 = sphi 0, %s139
      %s141 = sphi 0, %s139
      %s142 = sphi 0, %s141
      %s156 = sphi 0, %s142
      %s160 = sphi 0, %s160
      %s162 = sphi 0, %s160
      %s163 = sphi 0, %s162
      %s177 = sphi 0, %s163
      %s181 = sphi 0, %s181
      %s183 = sphi 0, %s181
      %s184 = sphi 0, %s183
      %s198 = sphi 0, %s184
      %s202 = sphi 0, %s202
      %s204 = sphi 0, %s202
      %s205 = sphi 0, %s204
      %s219 = sphi 0, %s205
      %s223 = sphi 0, %s223
      %s225 = sphi 0, %s223
      %s226 = sphi 0, %s225
      %s240 = sphi 0, %s226
      %s244 = sphi 0, %s244
      %s246 = sphi 0, %s244
      %s247 = sphi 0, %s246
      %s261 = sphi 0, %s247
      %s265 = sphi 0, %s265
      %s267 = sphi 0, %s265
      %s268 = sphi 0, %s267
      %s282 = sphi 0, %s268
      %s286 = sphi 0, %s286
      %s288 = sphi 0, %s286
      %s289 = sphi 0, %s288
      %s303 = sphi 0, %s289
      %s307 = sphi 0, %s307
      %s309 = sphi 0, %s307
      %s310 = sphi 0, %s309
      %s324 = sphi 0, %s310
      %s328 = sphi 0, %s328
      %s330 = sphi 0, %s328
      %s331 = sphi 0, %s330
      %s345 = sphi 0, %s331
      %s351 = sphi 0, %s353
      %s354 = sphi 0, %s351
      %s355 = sphi 0, %s354
      %s371 = sphi 0, %s355
      %s377 = sphi 0, %s379
      %s380 = sphi 0, %s377
      %s381 = sphi 0, %s380
      %s397 = sphi 0, %s381
    $region4: #{tpu_custom_call.1} parent=1 // loop_header_branch
      %40 = sbr.rel (%p38) target = $region8
    $region5: #{tpu_custom_call.1} parent=1 // loop_body
      %s42 = ssub.s32 %s37, 1
      %s43 = ssub.s32 %s37, 2
      %s44 = sadd.s32 %s37, 1
      %s45 = ssub.s32 %s37, %s44
      %p46 = scmp.eq.s32.totalorder %s45, 0
      %s48 = sadd.s32 %s47, 1
      %s49 = scalar_select %p46, %s47, %s48
      %p52 = pneg %p46
      %p53 = scmp.eq.s32.totalorder %s37, 1
      %p54 = por %p52, %p53
      %p55 = scmp.ne.s32.totalorder %s47, %s50
      %p56 = scmp.eq.s32.totalorder %s37, 0
      %p57 = por %p55, %p56
      %p58 = scmp.ne.s32.totalorder %s47, %s50
      %p59 = scmp.eq.s32.totalorder %s42, 1
      %p60 = por %p58, %p59
      %p61 = scmp.ne.s32.totalorder %s50, %s51
      %p62 = scmp.eq.s32.totalorder %s42, 0
      %p63 = por %p61, %p62
      %p64 = scmp.ne.s32.totalorder %s50, %s51
      %p65 = scmp.eq.s32.totalorder %s43, 1
      %p66 = por %p64, %p65
      %p68 = scmp.ne.s32.totalorder %s51, %s67
      %p69 = scmp.eq.s32.totalorder %s43, 0
      %p70 = por %p68, %p69
      %s71 = ssub.s32 %s37, %s44
      %p72 = scmp.eq.s32.totalorder %s71, 0
      %s74 = sadd.s32 %s73, 1
      %s75 = scalar_select %p72, %s73, %s74
      %p78 = pneg %p72
      %p79 = scmp.eq.s32.totalorder %s37, 1
      %p80 = por %p78, %p79
      %p81 = scmp.ne.s32.totalorder %s73, %s76
      %p82 = scmp.eq.s32.totalorder %s37, 0
      %p83 = por %p81, %p82
      %p84 = scmp.ne.s32.totalorder %s73, %s76
      %p85 = scmp.eq.s32.totalorder %s42, 1
      %p86 = por %p84, %p85
      %p87 = scmp.ne.s32.totalorder %s76, %s77
      %p88 = scmp.eq.s32.totalorder %s42, 0
      %p89 = por %p87, %p88
      %p90 = scmp.ne.s32.totalorder %s76, %s77
      %p91 = scmp.eq.s32.totalorder %s43, 1
      %p92 = por %p90, %p91
      %p94 = scmp.ne.s32.totalorder %s77, %s93
      %p95 = scmp.eq.s32.totalorder %s43, 0
      %p96 = por %p94, %p95
      %s98 = sadd.s32 %s97, 1
      %p101 = scmp.eq.s32.totalorder %s37, 1
      %p102 = scmp.ne.s32.totalorder %s97, %s99
      %p103 = scmp.eq.s32.totalorder %s37, 0
      %p104 = por %p102, %p103
      %p105 = scmp.ne.s32.totalorder %s97, %s99
      %p106 = scmp.eq.s32.totalorder %s42, 1
      %p107 = por %p105, %p106
      %p108 = scmp.ne.s32.totalorder %s99, %s100
      %p109 = scmp.eq.s32.totalorder %s42, 0
      %p110 = por %p108, %p109
      %p111 = scmp.ne.s32.totalorder %s99, %s100
      %p112 = scmp.eq.s32.totalorder %s43, 1
      %p113 = por %p111, %p112
      %p115 = scmp.ne.s32.totalorder %s100, %s114
      %p116 = scmp.eq.s32.totalorder %s43, 0
      %p117 = por %p115, %p116
      %s119 = sadd.s32 %s118, 1
      %p122 = scmp.eq.s32.totalorder %s37, 1
      %p123 = scmp.ne.s32.totalorder %s118, %s120
      %p124 = scmp.eq.s32.totalorder %s37, 0
      %p125 = por %p123, %p124
      %p126 = scmp.ne.s32.totalorder %s118, %s120
      %p127 = scmp.eq.s32.totalorder %s42, 1
      %p128 = por %p126, %p127
      %p129 = scmp.ne.s32.totalorder %s120, %s121
      %p130 = scmp.eq.s32.totalorder %s42, 0
      %p131 = por %p129, %p130
      %p132 = scmp.ne.s32.totalorder %s120, %s121
      %p133 = scmp.eq.s32.totalorder %s43, 1
      %p134 = por %p132, %p133
      %p136 = scmp.ne.s32.totalorder %s121, %s135
      %p137 = scmp.eq.s32.totalorder %s43, 0
      %p138 = por %p136, %p137
      %s140 = sadd.s32 %s139, 1
      %p143 = scmp.eq.s32.totalorder %s37, 1
      %p144 = scmp.ne.s32.totalorder %s139, %s141
      %p145 = scmp.eq.s32.totalorder %s37, 0
      %p146 = por %p144, %p145
      %p147 = scmp.ne.s32.totalorder %s139, %s141
      %p148 = scmp.eq.s32.totalorder %s42, 1
      %p149 = por %p147, %p148
      %p150 = scmp.ne.s32.totalorder %s141, %s142
      %p151 = scmp.eq.s32.totalorder %s42, 0
      %p152 = por %p150, %p151
      %p153 = scmp.ne.s32.totalorder %s141, %s142
      %p154 = scmp.eq.s32.totalorder %s43, 1
      %p155 = por %p153, %p154
      %p157 = scmp.ne.s32.totalorder %s142, %s156
      %p158 = scmp.eq.s32.totalorder %s43, 0
      %p159 = por %p157, %p158
      %s161 = sadd.s32 %s160, 1
      %p164 = scmp.eq.s32.totalorder %s37, 1
      %p165 = scmp.ne.s32.totalorder %s160, %s162
      %p166 = scmp.eq.s32.totalorder %s37, 0
      %p167 = por %p165, %p166
      %p168 = scmp.ne.s32.totalorder %s160, %s162
      %p169 = scmp.eq.s32.totalorder %s42, 1
      %p170 = por %p168, %p169
      %p171 = scmp.ne.s32.totalorder %s162, %s163
      %p172 = scmp.eq.s32.totalorder %s42, 0
      %p173 = por %p171, %p172
      %p174 = scmp.ne.s32.totalorder %s162, %s163
      %p175 = scmp.eq.s32.totalorder %s43, 1
      %p176 = por %p174, %p175
      %p178 = scmp.ne.s32.totalorder %s163, %s177
      %p179 = scmp.eq.s32.totalorder %s43, 0
      %p180 = por %p178, %p179
      %s182 = sadd.s32 %s181, 1
      %p185 = scmp.eq.s32.totalorder %s37, 1
      %p186 = scmp.ne.s32.totalorder %s181, %s183
      %p187 = scmp.eq.s32.totalorder %s37, 0
      %p188 = por %p186, %p187
      %p189 = scmp.ne.s32.totalorder %s181, %s183
      %p190 = scmp.eq.s32.totalorder %s42, 1
      %p191 = por %p189, %p190
      %p192 = scmp.ne.s32.totalorder %s183, %s184
      %p193 = scmp.eq.s32.totalorder %s42, 0
      %p194 = por %p192, %p193
      %p195 = scmp.ne.s32.totalorder %s183, %s184
      %p196 = scmp.eq.s32.totalorder %s43, 1
      %p197 = por %p195, %p196
      %p199 = scmp.ne.s32.totalorder %s184, %s198
      %p200 = scmp.eq.s32.totalorder %s43, 0
      %p201 = por %p199, %p200
      %s203 = sadd.s32 %s202, 1
      %p206 = scmp.eq.s32.totalorder %s37, 1
      %p207 = scmp.ne.s32.totalorder %s202, %s204
      %p208 = scmp.eq.s32.totalorder %s37, 0
      %p209 = por %p207, %p208
      %p210 = scmp.ne.s32.totalorder %s202, %s204
      %p211 = scmp.eq.s32.totalorder %s42, 1
      %p212 = por %p210, %p211
      %p213 = scmp.ne.s32.totalorder %s204, %s205
      %p214 = scmp.eq.s32.totalorder %s42, 0
      %p215 = por %p213, %p214
      %p216 = scmp.ne.s32.totalorder %s204, %s205
      %p217 = scmp.eq.s32.totalorder %s43, 1
      %p218 = por %p216, %p217
      %p220 = scmp.ne.s32.totalorder %s205, %s219
      %p221 = scmp.eq.s32.totalorder %s43, 0
      %p222 = por %p220, %p221
      %s224 = sadd.s32 %s223, 1
      %p227 = scmp.eq.s32.totalorder %s37, 1
      %p228 = scmp.ne.s32.totalorder %s223, %s225
      %p229 = scmp.eq.s32.totalorder %s37, 0
      %p230 = por %p228, %p229
      %p231 = scmp.ne.s32.totalorder %s223, %s225
      %p232 = scmp.eq.s32.totalorder %s42, 1
      %p233 = por %p231, %p232
      %p234 = scmp.ne.s32.totalorder %s225, %s226
      %p235 = scmp.eq.s32.totalorder %s42, 0
      %p236 = por %p234, %p235
      %p237 = scmp.ne.s32.totalorder %s225, %s226
      %p238 = scmp.eq.s32.totalorder %s43, 1
      %p239 = por %p237, %p238
      %p241 = scmp.ne.s32.totalorder %s226, %s240
      %p242 = scmp.eq.s32.totalorder %s43, 0
      %p243 = por %p241, %p242
      %s245 = sadd.s32 %s244, 1
      %p248 = scmp.eq.s32.totalorder %s37, 1
      %p249 = scmp.ne.s32.totalorder %s244, %s246
      %p250 = scmp.eq.s32.totalorder %s37, 0
      %p251 = por %p249, %p250
      %p252 = scmp.ne.s32.totalorder %s244, %s246
      %p253 = scmp.eq.s32.totalorder %s42, 1
      %p254 = por %p252, %p253
      %p255 = scmp.ne.s32.totalorder %s246, %s247
      %p256 = scmp.eq.s32.totalorder %s42, 0
      %p257 = por %p255, %p256
      %p258 = scmp.ne.s32.totalorder %s246, %s247
      %p259 = scmp.eq.s32.totalorder %s43, 1
      %p260 = por %p258, %p259
      %p262 = scmp.ne.s32.totalorder %s247, %s261
      %p263 = scmp.eq.s32.totalorder %s43, 0
      %p264 = por %p262, %p263
      %s266 = sadd.s32 %s265, 1
      %p269 = scmp.eq.s32.totalorder %s37, 1
      %p270 = scmp.ne.s32.totalorder %s265, %s267
      %p271 = scmp.eq.s32.totalorder %s37, 0
      %p272 = por %p270, %p271
      %p273 = scmp.ne.s32.totalorder %s265, %s267
      %p274 = scmp.eq.s32.totalorder %s42, 1
      %p275 = por %p273, %p274
      %p276 = scmp.ne.s32.totalorder %s267, %s268
      %p277 = scmp.eq.s32.totalorder %s42, 0
      %p278 = por %p276, %p277
      %p279 = scmp.ne.s32.totalorder %s267, %s268
      %p280 = scmp.eq.s32.totalorder %s43, 1
      %p281 = por %p279, %p280
      %p283 = scmp.ne.s32.totalorder %s268, %s282
      %p284 = scmp.eq.s32.totalorder %s43, 0
      %p285 = por %p283, %p284
      %s287 = sadd.s32 %s286, 1
      %p290 = scmp.eq.s32.totalorder %s37, 1
      %p291 = scmp.ne.s32.totalorder %s286, %s288
      %p292 = scmp.eq.s32.totalorder %s37, 0
      %p293 = por %p291, %p292
      %p294 = scmp.ne.s32.totalorder %s286, %s288
      %p295 = scmp.eq.s32.totalorder %s42, 1
      %p296 = por %p294, %p295
      %p297 = scmp.ne.s32.totalorder %s288, %s289
      %p298 = scmp.eq.s32.totalorder %s42, 0
      %p299 = por %p297, %p298
      %p300 = scmp.ne.s32.totalorder %s288, %s289
      %p301 = scmp.eq.s32.totalorder %s43, 1
      %p302 = por %p300, %p301
      %p304 = scmp.ne.s32.totalorder %s289, %s303
      %p305 = scmp.eq.s32.totalorder %s43, 0
      %p306 = por %p304, %p305
      %s308 = sadd.s32 %s307, 1
      %p311 = scmp.eq.s32.totalorder %s37, 1
      %p312 = scmp.ne.s32.totalorder %s307, %s309
      %p313 = scmp.eq.s32.totalorder %s37, 0
      %p314 = por %p312, %p313
      %p315 = scmp.ne.s32.totalorder %s307, %s309
      %p316 = scmp.eq.s32.totalorder %s42, 1
      %p317 = por %p315, %p316
      %p318 = scmp.ne.s32.totalorder %s309, %s310
      %p319 = scmp.eq.s32.totalorder %s42, 0
      %p320 = por %p318, %p319
      %p321 = scmp.ne.s32.totalorder %s309, %s310
      %p322 = scmp.eq.s32.totalorder %s43, 1
      %p323 = por %p321, %p322
      %p325 = scmp.ne.s32.totalorder %s310, %s324
      %p326 = scmp.eq.s32.totalorder %s43, 0
      %p327 = por %p325, %p326
      %s329 = sadd.s32 %s328, 1
      %p332 = scmp.eq.s32.totalorder %s37, 1
      %p333 = scmp.ne.s32.totalorder %s328, %s330
      %p334 = scmp.eq.s32.totalorder %s37, 0
      %p335 = por %p333, %p334
      %p336 = scmp.ne.s32.totalorder %s328, %s330
      %p337 = scmp.eq.s32.totalorder %s42, 1
      %p338 = por %p336, %p337
      %p339 = scmp.ne.s32.totalorder %s330, %s331
      %p340 = scmp.eq.s32.totalorder %s42, 0
      %p341 = por %p339, %p340
      %p342 = scmp.ne.s32.totalorder %s330, %s331
      %p343 = scmp.eq.s32.totalorder %s43, 1
      %p344 = por %p342, %p343
      %p346 = scmp.ne.s32.totalorder %s331, %s345
      %p347 = scmp.eq.s32.totalorder %s43, 0
      %p348 = por %p346, %p347
      %s349 = ssub.s32 %s37, %s44
      %p350 = scmp.eq.s32.totalorder %s349, 0
      %s352 = sadd.s32 %s351, 1
      %s353 = scalar_select %p350, %s351, %s352
      %p356 = pneg %p350
      %p357 = scmp.eq.s32.totalorder %s37, 1
      %p358 = por %p356, %p357
      %p359 = scmp.ne.s32.totalorder %s351, %s354
      %p360 = scmp.eq.s32.totalorder %s37, 0
      %p361 = por %p359, %p360
      %p362 = scmp.ne.s32.totalorder %s351, %s354
      %p363 = scmp.eq.s32.totalorder %s42, 1
      %p364 = por %p362, %p363
      %p365 = scmp.ne.s32.totalorder %s354, %s355
      %p366 = scmp.eq.s32.totalorder %s42, 0
      %p367 = por %p365, %p366
      %p368 = scmp.ne.s32.totalorder %s354, %s355
      %p369 = scmp.eq.s32.totalorder %s43, 1
      %p370 = por %p368, %p369
      %p372 = scmp.ne.s32.totalorder %s355, %s371
      %p373 = scmp.eq.s32.totalorder %s43, 0
      %p374 = por %p372, %p373
      %s375 = ssub.s32 %s37, %s44
      %p376 = scmp.eq.s32.totalorder %s375, 0
      %s378 = sadd.s32 %s377, 1
      %s379 = scalar_select %p376, %s377, %s378
      %p382 = pneg %p376
      %p383 = scmp.eq.s32.totalorder %s37, 1
      %p384 = por %p382, %p383
      %p385 = scmp.ne.s32.totalorder %s377, %s380
      %p386 = scmp.eq.s32.totalorder %s37, 0
      %p387 = por %p385, %p386
      %p388 = scmp.ne.s32.totalorder %s377, %s380
      %p389 = scmp.eq.s32.totalorder %s42, 1
      %p390 = por %p388, %p389
      %p391 = scmp.ne.s32.totalorder %s380, %s381
      %p392 = scmp.eq.s32.totalorder %s42, 0
      %p393 = por %p391, %p392
      %p394 = scmp.ne.s32.totalorder %s380, %s381
      %p395 = scmp.eq.s32.totalorder %s43, 1
      %p396 = por %p394, %p395
      %p398 = scmp.ne.s32.totalorder %s381, %s397
      %p399 = scmp.eq.s32.totalorder %s43, 0
      %p400 = por %p398, %p399
      %p401 = scmp.le.s32.totalorder 1, %s37
      %p402 = scmp.lt.s32.totalorder %s37, 3
      %p403 = pnand %p401, %p402
      %p404 = pneg %p403
      // Predicated region
      $region9: #{tpu_custom_call.1} parent=5 // pred_check
        _
      $region10: #{tpu_custom_call.1} parent=5 // pred_check_branch
        %406 = sbr.rel (%p403) target = $region12
      $region11: #{tpu_custom_call.1} parent=5 // pred_region
        %s407 = ssub.s32 %s37, 1
        // Predicated region
        $region13: #{tpu_custom_call.1} parent=11 // pred_check
          %p408 = pneg %p110
        $region14: #{tpu_custom_call.1} parent=11 // pred_check_branch
          %410 = sbr.rel (%p408) target = $region16
        $region15: #{tpu_custom_call.1} parent=11 // pred_region
          %s412 = ssub.s32 12288, 12288
          %413 = vsyncadd [#allocation6], %s412
          %s414 = sshll.u32 [#allocation7], 4
          %s415 = int_to_ptr.vmem [resolvable:$true] %s414
          %420 = dma.hbm_to_vmem [thread:$0]  %s2, 12288, %s415, [#allocation6], 128, 128, 8
        $region16: #{tpu_custom_call.1} parent=11 // pred_fallthru
          _
        // Predicated region
        $region17: #{tpu_custom_call.1} parent=11 // pred_check
          %p421 = pneg %p131
        $region18: #{tpu_custom_call.1} parent=11 // pred_check_branch
          %423 = sbr.rel (%p421) target = $region20
        $region19: #{tpu_custom_call.1} parent=11 // pred_region
          _
        $region20: #{tpu_custom_call.1} parent=11 // pred_fallthru
          _
        // Predicated region
        $region21: #{tpu_custom_call.1} parent=11 // pred_check
          %p424 = pneg %p152
        $region22: #{tpu_custom_call.1} parent=11 // pred_check_branch
          %426 = sbr.rel (%p424) target = $region24
        $region23: #{tpu_custom_call.1} parent=11 // pred_region
          %s428 = ssub.s32 2048, 2048
          %429 = vsyncadd [#allocation9], %s428
          %s430 = sshll.u32 [#allocation8], 4
          %s431 = int_to_ptr.vmem [resolvable:$true] %s430
          %436 = dma.hbm_to_vmem [thread:$0]  %s4, 2048, %s431, [#allocation9], 128, 128, 8
        $region24: #{tpu_custom_call.1} parent=11 // pred_fallthru
          _
        // Predicated region
        $region25: #{tpu_custom_call.1} parent=11 // pred_check
          %p437 = pneg %p173
        $region26: #{tpu_custom_call.1} parent=11 // pred_check_branch
          %439 = sbr.rel (%p437) target = $region28
        $region27: #{tpu_custom_call.1} parent=11 // pred_region
          _
        $region28: #{tpu_custom_call.1} parent=11 // pred_fallthru
          _
        // Predicated region
        $region29: #{tpu_custom_call.1} parent=11 // pred_check
          %p440 = pneg %p194
        $region30: #{tpu_custom_call.1} parent=11 // pred_check_branch
          %442 = sbr.rel (%p440) target = $region32
        $region31: #{tpu_custom_call.1} parent=11 // pred_region
          %s444 = ssub.s32 4096, 4096
          %445 = vsyncadd [#allocation9], %s444
          %s446 = sshll.u32 [#allocation10], 4
          %s447 = int_to_ptr.vmem [resolvable:$true] %s446
          %452 = dma.hbm_to_vmem [thread:$0]  %s6, 4096, %s447, [#allocation9], 256, 256, 16
        $region32: #{tpu_custom_call.1} parent=11 // pred_fallthru
          _
        // Predicated region
        $region33: #{tpu_custom_call.1} parent=11 // pred_check
          %p453 = pneg %p215
        $region34: #{tpu_custom_call.1} parent=11 // pred_check_branch
          %455 = sbr.rel (%p453) target = $region36
        $region35: #{tpu_custom_call.1} parent=11 // pred_region
          _
        $region36: #{tpu_custom_call.1} parent=11 // pred_fallthru
          _
        // Predicated region
        $region37: #{tpu_custom_call.1} parent=11 // pred_check
          %p456 = pneg %p236
        $region38: #{tpu_custom_call.1} parent=11 // pred_check_branch
          %458 = sbr.rel (%p456) target = $region40
        $region39: #{tpu_custom_call.1} parent=11 // pred_region
          %s460 = ssub.s32 2048, 2048
          %461 = vsyncadd [#allocation12], %s460
          %s462 = sshll.u32 [#allocation11], 4
          %s463 = int_to_ptr.vmem [resolvable:$true] %s462
          %468 = dma.hbm_to_vmem [thread:$0]  %s8, 2048, %s463, [#allocation12], 128, 128, 8
        $region40: #{tpu_custom_call.1} parent=11 // pred_fallthru
          _
        // Predicated region
        $region41: #{tpu_custom_call.1} parent=11 // pred_check
          %p469 = pneg %p257
        $region42: #{tpu_custom_call.1} parent=11 // pred_check_branch
          %471 = sbr.rel (%p469) target = $region44
        $region43: #{tpu_custom_call.1} parent=11 // pred_region
          _
        $region44: #{tpu_custom_call.1} parent=11 // pred_fallthru
          _
        // Predicated region
        $region45: #{tpu_custom_call.1} parent=11 // pred_check
          %p472 = pneg %p278
        $region46: #{tpu_custom_call.1} parent=11 // pred_check_branch
          %474 = sbr.rel (%p472) target = $region48
        $region47: #{tpu_custom_call.1} parent=11 // pred_region
          %s476 = ssub.s32 2048, 2048
          %477 = vsyncadd [#allocation12], %s476
          %s478 = sshll.u32 [#allocation13], 4
          %s479 = int_to_ptr.vmem [resolvable:$true] %s478
          %484 = dma.hbm_to_vmem [thread:$0]  %s10, 2048, %s479, [#allocation12], 128, 128, 8
        $region48: #{tpu_custom_call.1} parent=11 // pred_fallthru
          _
        // Predicated region
        $region49: #{tpu_custom_call.1} parent=11 // pred_check
          %p485 = pneg %p299
        $region50: #{tpu_custom_call.1} parent=11 // pred_check_branch
          %487 = sbr.rel (%p485) target = $region52
        $region51: #{tpu_custom_call.1} parent=11 // pred_region
          _
        $region52: #{tpu_custom_call.1} parent=11 // pred_fallthru
          _
        // Predicated region
        $region53: #{tpu_custom_call.1} parent=11 // pred_check
          %p488 = pneg %p320
        $region54: #{tpu_custom_call.1} parent=11 // pred_check_branch
          %490 = sbr.rel (%p488) target = $region56
        $region55: #{tpu_custom_call.1} parent=11 // pred_region
          %s492 = ssub.s32 12288, 12288
          %493 = vsyncadd [#allocation15], %s492
          %s494 = sshll.u32 [#allocation14], 4
          %s495 = int_to_ptr.vmem [resolvable:$true] %s494
          %500 = dma.hbm_to_vmem [thread:$0]  %s12, 12288, %s495, [#allocation15], 768, 768, 48
        $region56: #{tpu_custom_call.1} parent=11 // pred_fallthru
          _
        // Predicated region
        $region57: #{tpu_custom_call.1} parent=11 // pred_check
          %p501 = pneg %p341
        $region58: #{tpu_custom_call.1} parent=11 // pred_check_branch
          %503 = sbr.rel (%p501) target = $region60
        $region59: #{tpu_custom_call.1} parent=11 // pred_region
          _
        $region60: #{tpu_custom_call.1} parent=11 // pred_fallthru
          _
      $region12: #{tpu_custom_call.1} parent=5 // pred_fallthru
        _
      %p504 = scmp.lt.s32.totalorder %s37, 2
      // Predicated region
      $region61: #{tpu_custom_call.1} parent=5 // pred_check
        %p505 = pneg %p504
      $region62: #{tpu_custom_call.1} parent=5 // pred_check_branch
        %507 = sbr.rel (%p505) target = $region64
      $region63: #{tpu_custom_call.1} parent=5 // pred_region
        // Predicated region
        $region65: #{tpu_custom_call.1} parent=63 // pred_check
          %p508 = pneg %p57
        $region66: #{tpu_custom_call.1} parent=63 // pred_check_branch
          %510 = sbr.rel (%p508) target = $region68
        $region67: #{tpu_custom_call.1} parent=63 // pred_region
          %s511 = sand.u32 %s47, 1
          %s512 = scalar_lea.sflag [#allocation3], %s511
          %s513 = sand.u32 %s47, 1
          %s514 = smul.addr %s513, 768
          %s515 = scalar_lea.vmem [#allocation2], %s514
          %s516 = smul.u32 16, %s37
          %s518 = ssub.s32 12288, 12288
          %519 = vsyncadd %s512, %s518
          %s520 = smul.addr %s516, 6
          %s521 = smul.addr %s520, 128
          %s522 = scalar_lea.hbm %s0, %s521
          %s523 = sshll.u32 %s515, 4
          %s524 = int_to_ptr.vmem [resolvable:$true] %s523
          %529 = dma.hbm_to_vmem [thread:$0]  %s522, 12288, %s524, %s512, 768, 768, 48
        $region68: #{tpu_custom_call.1} parent=63 // pred_fallthru
          _
        // Predicated region
        $region69: #{tpu_custom_call.1} parent=63 // pred_check
          %p530 = pneg %p83
        $region70: #{tpu_custom_call.1} parent=63 // pred_check_branch
          %532 = sbr.rel (%p530) target = $region72
        $region71: #{tpu_custom_call.1} parent=63 // pred_region
          %s533 = sand.u32 %s37, 1
          %s534 = scalar_lea.sflag [#allocation6], %s533
          %s535 = sand.u32 %s73, 1
          %s536 = smul.addr %s535, 128
          %s537 = scalar_lea.vmem [#allocation5], %s536
          %s538 = smul.u32 16, %s37
          %s540 = ssub.s32 2048, 2048
          %541 = vsyncadd %s534, %s540
          %s542 = smul.addr %s538, 128
          %s543 = scalar_lea.hbm %s1, %s542
          %s544 = sshll.u32 %s537, 4
          %s545 = int_to_ptr.vmem [resolvable:$true] %s544
          %550 = dma.hbm_to_vmem [thread:$0]  %s543, 2048, %s545, %s534, 128, 128, 8
        $region72: #{tpu_custom_call.1} parent=63 // pred_fallthru
          _
      $region64: #{tpu_custom_call.1} parent=5 // pred_fallthru
        _
      %p551 = scmp.le.s32.totalorder 1, %s37
      %p552 = scmp.lt.s32.totalorder %s37, 3
      %p553 = pnand %p551, %p552
      %p554 = pneg %p553
      // Predicated region
      $region73: #{tpu_custom_call.1} parent=5 // pred_check
        _
      $region74: #{tpu_custom_call.1} parent=5 // pred_check_branch
        %556 = sbr.rel (%p553) target = $region76
      $region75: #{tpu_custom_call.1} parent=5 // pred_region
        %s557 = ssub.s32 %s37, 1
        %s558 = sand.u32 %s50, 1
        %s559 = scalar_lea.sflag [#allocation3], %s558
        %s560 = sand.u32 %s50, 1
        %s561 = smul.addr %s560, 768
        %s562 = scalar_lea.vmem [#allocation2], %s561
        // Predicated region
        $region77: #{tpu_custom_call.1} parent=75 // pred_check
          %p563 = pneg %p63
        $region78: #{tpu_custom_call.1} parent=75 // pred_check_branch
          %565 = sbr.rel (%p563) target = $region80
        $region79: #{tpu_custom_call.1} parent=75 // pred_region
          %566 = dma.done %s559, 12288
        $region80: #{tpu_custom_call.1} parent=75 // pred_fallthru
          _
        %s567 = sand.u32 %s42, 1
        %s568 = scalar_lea.sflag [#allocation6], %s567
        %s569 = sand.u32 %s76, 1
        %s570 = smul.addr %s569, 128
        %s571 = scalar_lea.vmem [#allocation5], %s570
        // Predicated region
        $region81: #{tpu_custom_call.1} parent=75 // pred_check
          %p572 = pneg %p89
        $region82: #{tpu_custom_call.1} parent=75 // pred_check_branch
          %574 = sbr.rel (%p572) target = $region84
        $region83: #{tpu_custom_call.1} parent=75 // pred_region
          %575 = dma.done %s568, 2048
        $region84: #{tpu_custom_call.1} parent=75 // pred_fallthru
          _
        // Predicated region
        $region85: #{tpu_custom_call.1} parent=75 // pred_check
          %p576 = pneg %p110
        $region86: #{tpu_custom_call.1} parent=75 // pred_check_branch
          %578 = sbr.rel (%p576) target = $region88
        $region87: #{tpu_custom_call.1} parent=75 // pred_region
          %579 = dma.done [#allocation6], 12288
        $region88: #{tpu_custom_call.1} parent=75 // pred_fallthru
          _
        // Predicated region
        $region89: #{tpu_custom_call.1} parent=75 // pred_check
          %p580 = pneg %p152
        $region90: #{tpu_custom_call.1} parent=75 // pred_check_branch
          %582 = sbr.rel (%p580) target = $region92
        $region91: #{tpu_custom_call.1} parent=75 // pred_region
          %583 = dma.done [#allocation9], 2048
        $region92: #{tpu_custom_call.1} parent=75 // pred_fallthru
          _
        // Predicated region
        $region93: #{tpu_custom_call.1} parent=75 // pred_check
          %p584 = pneg %p194
        $region94: #{tpu_custom_call.1} parent=75 // pred_check_branch
          %586 = sbr.rel (%p584) target = $region96
        $region95: #{tpu_custom_call.1} parent=75 // pred_region
          %587 = dma.done [#allocation9], 4096
        $region96: #{tpu_custom_call.1} parent=75 // pred_fallthru
          _
        // Predicated region
        $region97: #{tpu_custom_call.1} parent=75 // pred_check
          %p588 = pneg %p236
        $region98: #{tpu_custom_call.1} parent=75 // pred_check_branch
          %590 = sbr.rel (%p588) target = $region100
        $region99: #{tpu_custom_call.1} parent=75 // pred_region
          %591 = dma.done [#allocation12], 2048
        $region100: #{tpu_custom_call.1} parent=75 // pred_fallthru
          _
        // Predicated region
        $region101: #{tpu_custom_call.1} parent=75 // pred_check
          %p592 = pneg %p278
        $region102: #{tpu_custom_call.1} parent=75 // pred_check_branch
          %594 = sbr.rel (%p592) target = $region104
        $region103: #{tpu_custom_call.1} parent=75 // pred_region
          %595 = dma.done [#allocation12], 2048
        $region104: #{tpu_custom_call.1} parent=75 // pred_fallthru
          _
        // Predicated region
        $region105: #{tpu_custom_call.1} parent=75 // pred_check
          %p596 = pneg %p320
        $region106: #{tpu_custom_call.1} parent=75 // pred_check_branch
          %598 = sbr.rel (%p596) target = $region108
        $region107: #{tpu_custom_call.1} parent=75 // pred_region
          %599 = dma.done [#allocation15], 12288
        $region108: #{tpu_custom_call.1} parent=75 // pred_fallthru
          _
        %s600 = sand.u32 %s50, 1
        %s601 = scalar_lea.sflag [#allocation3], %s600
        %s602 = sand.u32 %s50, 1
        %s603 = smul.addr %s602, 768
        %s604 = scalar_lea.vmem [#allocation2], %s603
        %p605 = pneg %p63
        %p606 = pneg %p60
        %s607 = sand.u32 %s42, 1
        %s608 = scalar_lea.sflag [#allocation6], %s607
        %s609 = sand.u32 %s76, 1
        %s610 = smul.addr %s609, 128
        %s611 = scalar_lea.vmem [#allocation5], %s610
        %p612 = pneg %p89
        %p613 = pneg %p86
        %p614 = pneg %p110
        %p615 = pneg %p107
        %p616 = pneg %p131
        %p617 = pneg %p128
        %p618 = pneg %p152
        %p619 = pneg %p149
        %p620 = pneg %p173
        %p621 = pneg %p170
        %p622 = pneg %p194
        %p623 = pneg %p191
        %p624 = pneg %p215
        %p625 = pneg %p212
        %p626 = pneg %p236
        %p627 = pneg %p233
        %p628 = pneg %p257
        %p629 = pneg %p254
        %p630 = pneg %p278
        %p631 = pneg %p275
        %p632 = pneg %p299
        %p633 = pneg %p296
        %p634 = pneg %p320
        %p635 = pneg %p317
        %p636 = pneg %p341
        %p637 = pneg %p338
        %p638 = pneg %p367
        %p639 = pneg %p364
        %s640 = sand.u32 %s354, 1
        %s641 = scalar_lea.sflag [#allocation4], %s640
        %s642 = sand.u32 %s354, 1
        %s643 = smul.addr %s642, 768
        %s644 = scalar_lea.vmem [#allocation16], %s643
        %p645 = pneg %p393
        %p646 = pneg %p390
        %s647 = sand.u32 %s380, 1
        %s648 = scalar_lea.sflag [#allocation18], %s647
        %s649 = sand.u32 %s380, 1
        %s650 = smul.addr %s649, 256
        %s651 = scalar_lea.vmem [#allocation17], %s650
        %s652 = smul.u32 16, %s42
        %s653 = smul.u32 16, %s42
        %s654 = smul.u32 16, %s42
        %s655 = smul.u32 16, %s42
        %v656 = vld [vmem:[%s562] sm:$0xff]
        %v657 = vld [vmem:[%s562 + $0x8] sm:$0xff]
        %v658 = vld [vmem:[%s562 + $0x10] sm:$0xff]
        %v659 = vld [vmem:[%s562 + $0x18] sm:$0xff]
        %v660 = vld [vmem:[%s562 + $0x20] sm:$0xff]
        %v661 = vld [vmem:[%s562 + $0x28] sm:$0xff]
        %v662 = vld [vmem:[%s562 + $0x30] sm:$0xff]
        %v663 = vld [vmem:[%s562 + $0x38] sm:$0xff]
        %v664 = vld [vmem:[%s562 + $0x40] sm:$0xff]
        %v665 = vld [vmem:[%s562 + $0x48] sm:$0xff]
        %v666 = vld [vmem:[%s562 + $0x50] sm:$0xff]
        %v667 = vld [vmem:[%s562 + $0x58] sm:$0xff]
        %v668 = vld [vmem:[%s562 + $0x60] sm:$0xff]
        %v669 = vld [vmem:[%s562 + $0x68] sm:$0xff]
        %v670 = vld [vmem:[%s562 + $0x70] sm:$0xff]
        %v671 = vld [vmem:[%s562 + $0x78] sm:$0xff]
        %v672 = vld [vmem:[%s562 + $0x80] sm:$0xff]
        %v673 = vld [vmem:[%s562 + $0x88] sm:$0xff]
        %v674 = vld [vmem:[%s562 + $0x90] sm:$0xff]
        %v675 = vld [vmem:[%s562 + $0x98] sm:$0xff]
        %v676 = vld [vmem:[%s562 + $0xa0] sm:$0xff]
        %v677 = vld [vmem:[%s562 + $0xa8] sm:$0xff]
        %v678 = vld [vmem:[%s562 + $0xb0] sm:$0xff]
        %v679 = vld [vmem:[%s562 + $0xb8] sm:$0xff]
        %v680 = vld [vmem:[%s562 + $0xc0] sm:$0xff]
        %v681 = vld [vmem:[%s562 + $0xc8] sm:$0xff]
        %v682 = vld [vmem:[%s562 + $0xd0] sm:$0xff]
        %v683 = vld [vmem:[%s562 + $0xd8] sm:$0xff]
        %v684 = vld [vmem:[%s562 + $0xe0] sm:$0xff]
        %v685 = vld [vmem:[%s562 + $0xe8] sm:$0xff]
        %v686 = vld [vmem:[%s562 + $0xf0] sm:$0xff]
        %v687 = vld [vmem:[%s562 + $0xf8] sm:$0xff]
        %v688 = vld [vmem:[%s562 + $0x100] sm:$0xff]
        %v689 = vld [vmem:[%s562 + $0x108] sm:$0xff]
        %v690 = vld [vmem:[%s562 + $0x110] sm:$0xff]
        %v691 = vld [vmem:[%s562 + $0x118] sm:$0xff]
        %v692 = vld [vmem:[%s562 + $0x120] sm:$0xff]
        %v693 = vld [vmem:[%s562 + $0x128] sm:$0xff]
        %v694 = vld [vmem:[%s562 + $0x130] sm:$0xff]
        %v695 = vld [vmem:[%s562 + $0x138] sm:$0xff]
        %v696 = vld [vmem:[%s562 + $0x140] sm:$0xff]
        %v697 = vld [vmem:[%s562 + $0x148] sm:$0xff]
        %v698 = vld [vmem:[%s562 + $0x150] sm:$0xff]
        %v699 = vld [vmem:[%s562 + $0x158] sm:$0xff]
        %v700 = vld [vmem:[%s562 + $0x160] sm:$0xff]
        %v701 = vld [vmem:[%s562 + $0x168] sm:$0xff]
        %v702 = vld [vmem:[%s562 + $0x170] sm:$0xff]
        %v703 = vld [vmem:[%s562 + $0x178] sm:$0xff]
        %v704 = vld [vmem:[%s562 + $0x180] sm:$0xff]
        %v705 = vld [vmem:[%s562 + $0x188] sm:$0xff]
        %v706 = vld [vmem:[%s562 + $0x190] sm:$0xff]
        %v707 = vld [vmem:[%s562 + $0x198] sm:$0xff]
        %v708 = vld [vmem:[%s562 + $0x1a0] sm:$0xff]
        %v709 = vld [vmem:[%s562 + $0x1a8] sm:$0xff]
        %v710 = vld [vmem:[%s562 + $0x1b0] sm:$0xff]
        %v711 = vld [vmem:[%s562 + $0x1b8] sm:$0xff]
        %v712 = vld [vmem:[%s562 + $0x1c0] sm:$0xff]
        %v713 = vld [vmem:[%s562 + $0x1c8] sm:$0xff]
        %v714 = vld [vmem:[%s562 + $0x1d0] sm:$0xff]
        %v715 = vld [vmem:[%s562 + $0x1d8] sm:$0xff]
        %v716 = vld [vmem:[%s562 + $0x1e0] sm:$0xff]
        %v717 = vld [vmem:[%s562 + $0x1e8] sm:$0xff]
        %v718 = vld [vmem:[%s562 + $0x1f0] sm:$0xff]
        %v719 = vld [vmem:[%s562 + $0x1f8] sm:$0xff]
        %v720 = vld [vmem:[%s562 + $0x200] sm:$0xff]
        %v721 = vld [vmem:[%s562 + $0x208] sm:$0xff]
        %v722 = vld [vmem:[%s562 + $0x210] sm:$0xff]
        %v723 = vld [vmem:[%s562 + $0x218] sm:$0xff]
        %v724 = vld [vmem:[%s562 + $0x220] sm:$0xff]
        %v725 = vld [vmem:[%s562 + $0x228] sm:$0xff]
        %v726 = vld [vmem:[%s562 + $0x230] sm:$0xff]
        %v727 = vld [vmem:[%s562 + $0x238] sm:$0xff]
        %v728 = vld [vmem:[%s562 + $0x240] sm:$0xff]
        %v729 = vld [vmem:[%s562 + $0x248] sm:$0xff]
        %v730 = vld [vmem:[%s562 + $0x250] sm:$0xff]
        %v731 = vld [vmem:[%s562 + $0x258] sm:$0xff]
        %v732 = vld [vmem:[%s562 + $0x260] sm:$0xff]
        %v733 = vld [vmem:[%s562 + $0x268] sm:$0xff]
        %v734 = vld [vmem:[%s562 + $0x270] sm:$0xff]
        %v735 = vld [vmem:[%s562 + $0x278] sm:$0xff]
        %v736 = vld [vmem:[%s562 + $0x280] sm:$0xff]
        %v737 = vld [vmem:[%s562 + $0x288] sm:$0xff]
        %v738 = vld [vmem:[%s562 + $0x290] sm:$0xff]
        %v739 = vld [vmem:[%s562 + $0x298] sm:$0xff]
        %v740 = vld [vmem:[%s562 + $0x2a0] sm:$0xff]
        %v741 = vld [vmem:[%s562 + $0x2a8] sm:$0xff]
        %v742 = vld [vmem:[%s562 + $0x2b0] sm:$0xff]
        %v743 = vld [vmem:[%s562 + $0x2b8] sm:$0xff]
        %v744 = vld [vmem:[%s562 + $0x2c0] sm:$0xff]
        %v745 = vld [vmem:[%s562 + $0x2c8] sm:$0xff]
        %v746 = vld [vmem:[%s562 + $0x2d0] sm:$0xff]
        %v747 = vld [vmem:[%s562 + $0x2d8] sm:$0xff]
        %v748 = vld [vmem:[%s562 + $0x2e0] sm:$0xff]
        %v749 = vld [vmem:[%s562 + $0x2e8] sm:$0xff]
        %v750 = vld [vmem:[%s562 + $0x2f0] sm:$0xff]
        %v751 = vld [vmem:[%s562 + $0x2f8] sm:$0xff]
        %v752 = vld [vmem:[#allocation7] sm:$0xff]
        %v753 = vld [vmem:[#allocation7 + $0x8] sm:$0xff]
        %v754 = vld [vmem:[#allocation7 + $0x10] sm:$0xff]
        %v755 = vld [vmem:[#allocation7 + $0x18] sm:$0xff]
        %v756 = vld [vmem:[#allocation7 + $0x20] sm:$0xff]
        %v757 = vld [vmem:[#allocation7 + $0x28] sm:$0xff]
        %v758 = vld [vmem:[#allocation7 + $0x30] sm:$0xff]
        %v759 = vld [vmem:[#allocation7 + $0x38] sm:$0xff]
        %v760 = vld [vmem:[#allocation7 + $0x40] sm:$0xff]
        %v761 = vld [vmem:[#allocation7 + $0x48] sm:$0xff]
        %v762 = vld [vmem:[#allocation7 + $0x50] sm:$0xff]
        %v763 = vld [vmem:[#allocation7 + $0x58] sm:$0xff]
        %v764 = vld [vmem:[#allocation7 + $0x60] sm:$0xff]
        %v765 = vld [vmem:[#allocation7 + $0x68] sm:$0xff]
        %v766 = vld [vmem:[#allocation7 + $0x70] sm:$0xff]
        %v767 = vld [vmem:[#allocation7 + $0x78] sm:$0xff]
        %v768 = vld [vmem:[#allocation7 + $0x80] sm:$0xff]
        %v769 = vld [vmem:[#allocation7 + $0x88] sm:$0xff]
        %v770 = vld [vmem:[#allocation7 + $0x90] sm:$0xff]
        %v771 = vld [vmem:[#allocation7 + $0x98] sm:$0xff]
        %v772 = vld [vmem:[#allocation7 + $0xa0] sm:$0xff]
        %v773 = vld [vmem:[#allocation7 + $0xa8] sm:$0xff]
        %v774 = vld [vmem:[#allocation7 + $0xb0] sm:$0xff]
        %v775 = vld [vmem:[#allocation7 + $0xb8] sm:$0xff]
        %v776 = vld [vmem:[#allocation7 + $0xc0] sm:$0xff]
        %v777 = vld [vmem:[#allocation7 + $0xc8] sm:$0xff]
        %v778 = vld [vmem:[#allocation7 + $0xd0] sm:$0xff]
        %v779 = vld [vmem:[#allocation7 + $0xd8] sm:$0xff]
        %v780 = vld [vmem:[#allocation7 + $0xe0] sm:$0xff]
        %v781 = vld [vmem:[#allocation7 + $0xe8] sm:$0xff]
        %v782 = vld [vmem:[#allocation7 + $0xf0] sm:$0xff]
        %v783 = vld [vmem:[#allocation7 + $0xf8] sm:$0xff]
        %v784 = vld [vmem:[#allocation7 + $0x100] sm:$0xff]
        %v785 = vld [vmem:[#allocation7 + $0x108] sm:$0xff]
        %v786 = vld [vmem:[#allocation7 + $0x110] sm:$0xff]
        %v787 = vld [vmem:[#allocation7 + $0x118] sm:$0xff]
        %v788 = vld [vmem:[#allocation7 + $0x120] sm:$0xff]
        %v789 = vld [vmem:[#allocation7 + $0x128] sm:$0xff]
        %v790 = vld [vmem:[#allocation7 + $0x130] sm:$0xff]
        %v791 = vld [vmem:[#allocation7 + $0x138] sm:$0xff]
        %v792 = vld [vmem:[#allocation7 + $0x140] sm:$0xff]
        %v793 = vld [vmem:[#allocation7 + $0x148] sm:$0xff]
        %v794 = vld [vmem:[#allocation7 + $0x150] sm:$0xff]
        %v795 = vld [vmem:[#allocation7 + $0x158] sm:$0xff]
        %v796 = vld [vmem:[#allocation7 + $0x160] sm:$0xff]
        %v797 = vld [vmem:[#allocation7 + $0x168] sm:$0xff]
        %v798 = vld [vmem:[#allocation7 + $0x170] sm:$0xff]
        %v799 = vld [vmem:[#allocation7 + $0x178] sm:$0xff]
        %v800 = vld [vmem:[#allocation7 + $0x180] sm:$0xff]
        %v801 = vld [vmem:[#allocation7 + $0x188] sm:$0xff]
        %v802 = vld [vmem:[#allocation7 + $0x190] sm:$0xff]
        %v803 = vld [vmem:[#allocation7 + $0x198] sm:$0xff]
        %v804 = vld [vmem:[#allocation7 + $0x1a0] sm:$0xff]
        %v805 = vld [vmem:[#allocation7 + $0x1a8] sm:$0xff]
        %v806 = vld [vmem:[#allocation7 + $0x1b0] sm:$0xff]
        %v807 = vld [vmem:[#allocation7 + $0x1b8] sm:$0xff]
        %v808 = vld [vmem:[#allocation7 + $0x1c0] sm:$0xff]
        %v809 = vld [vmem:[#allocation7 + $0x1c8] sm:$0xff]
        %v810 = vld [vmem:[#allocation7 + $0x1d0] sm:$0xff]
        %v811 = vld [vmem:[#allocation7 + $0x1d8] sm:$0xff]
        %v812 = vld [vmem:[#allocation7 + $0x1e0] sm:$0xff]
        %v813 = vld [vmem:[#allocation7 + $0x1e8] sm:$0xff]
        %v814 = vld [vmem:[#allocation7 + $0x1f0] sm:$0xff]
        %v815 = vld [vmem:[#allocation7 + $0x1f8] sm:$0xff]
        %v816 = vld [vmem:[#allocation7 + $0x200] sm:$0xff]
        %v817 = vld [vmem:[#allocation7 + $0x208] sm:$0xff]
        %v818 = vld [vmem:[#allocation7 + $0x210] sm:$0xff]
        %v819 = vld [vmem:[#allocation7 + $0x218] sm:$0xff]
        %v820 = vld [vmem:[#allocation7 + $0x220] sm:$0xff]
        %v821 = vld [vmem:[#allocation7 + $0x228] sm:$0xff]
        %v822 = vld [vmem:[#allocation7 + $0x230] sm:$0xff]
        %v823 = vld [vmem:[#allocation7 + $0x238] sm:$0xff]
        %v824 = vld [vmem:[#allocation7 + $0x240] sm:$0xff]
        %v825 = vld [vmem:[#allocation7 + $0x248] sm:$0xff]
        %v826 = vld [vmem:[#allocation7 + $0x250] sm:$0xff]
        %v827 = vld [vmem:[#allocation7 + $0x258] sm:$0xff]
        %v828 = vld [vmem:[#allocation7 + $0x260] sm:$0xff]
        %v829 = vld [vmem:[#allocation7 + $0x268] sm:$0xff]
        %v830 = vld [vmem:[#allocation7 + $0x270] sm:$0xff]
        %v831 = vld [vmem:[#allocation7 + $0x278] sm:$0xff]
        %v832 = vld [vmem:[#allocation7 + $0x280] sm:$0xff]
        %v833 = vld [vmem:[#allocation7 + $0x288] sm:$0xff]
        %v834 = vld [vmem:[#allocation7 + $0x290] sm:$0xff]
        %v835 = vld [vmem:[#allocation7 + $0x298] sm:$0xff]
        %v836 = vld [vmem:[#allocation7 + $0x2a0] sm:$0xff]
        %v837 = vld [vmem:[#allocation7 + $0x2a8] sm:$0xff]
        %v838 = vld [vmem:[#allocation7 + $0x2b0] sm:$0xff]
        %v839 = vld [vmem:[#allocation7 + $0x2b8] sm:$0xff]
        %v840 = vld [vmem:[#allocation7 + $0x2c0] sm:$0xff]
        %v841 = vld [vmem:[#allocation7 + $0x2c8] sm:$0xff]
        %v842 = vld [vmem:[#allocation7 + $0x2d0] sm:$0xff]
        %v843 = vld [vmem:[#allocation7 + $0x2d8] sm:$0xff]
        %v844 = vld [vmem:[#allocation7 + $0x2e0] sm:$0xff]
        %v845 = vld [vmem:[#allocation7 + $0x2e8] sm:$0xff]
        %v846 = vld [vmem:[#allocation7 + $0x2f0] sm:$0xff]
        %v847 = vld [vmem:[#allocation7 + $0x2f8] sm:$0xff]
        %v848 = vld [vmem:[%s3] sm:$0x1]
        %v850 = vlaneseq
        %v851 = vshrl.u32 %v850, 7
        %v852 = vsub.s32 0, %v851
        %v853 = vrot.slane %v848, %v852
        %855 = vmatprep.subr.mxu0 0.0
        %856 = vmatpush1.msra.mxu0 %v752
        %857 = vmatprep.subr.mxu0 0.0
        %858 = vmatpush1.msra.mxu0 %v753
        %859 = vmatprep.subr.mxu0 0.0
        %860 = vmatpush1.msra.mxu0 %v754
        %861 = vmatprep.subr.mxu0 0.0
        %862 = vmatpush1.msra.mxu0 %v755
        %863 = vmatprep.subr.mxu0 0.0
        %864 = vmatpush1.msra.mxu0 %v756
        %865 = vmatprep.subr.mxu0 0.0
        %866 = vmatpush1.msra.mxu0 %v757
        %867 = vmatprep.subr.mxu0 0.0
        %868 = vmatpush1.msra.mxu0 %v758
        %869 = vmatprep.subr.mxu0 0.0
        %870 = vmatpush1.msra.mxu0 %v759
        %871 = vmatprep.subr.mxu0 0.0
        %872 = vmatpush1.msra.mxu0 %v760
        %873 = vmatprep.subr.mxu0 0.0
        %874 = vmatpush1.msra.mxu0 %v761
        %875 = vmatprep.subr.mxu0 0.0
        %876 = vmatpush1.msra.mxu0 %v762
        %877 = vmatprep.subr.mxu0 0.0
        %878 = vmatpush1.msra.mxu0 %v763
        %879 = vmatprep.subr.mxu0 0.0
        %880 = vmatpush1.msra.mxu0 %v764
        %881 = vmatprep.subr.mxu0 0.0
        %882 = vmatpush1.msra.mxu0 %v765
        %883 = vmatprep.subr.mxu0 0.0
        %884 = vmatpush1.msra.mxu0 %v766
        %885 = vmatprep.subr.mxu0 0.0
        %886 = vmatpush1.msra.mxu0 %v767
        %887 = vmatprep.subr.mxu0 0.0
        %888 = vmatpush1.msra.mxu0 %v768
        %889 = vmatprep.subr.mxu0 0.0
        %890 = vmatpush1.msra.mxu0 %v769
        %891 = vmatprep.subr.mxu0 0.0
        %892 = vmatpush1.msra.mxu0 %v770
        %893 = vmatprep.subr.mxu0 0.0
        %894 = vmatpush1.msra.mxu0 %v771
        %895 = vmatprep.subr.mxu0 0.0
        %896 = vmatpush1.msra.mxu0 %v772
        %897 = vmatprep.subr.mxu0 0.0
        %898 = vmatpush1.msra.mxu0 %v773
        %899 = vmatprep.subr.mxu0 0.0
        %900 = vmatpush1.msra.mxu0 %v774
        %901 = vmatprep.subr.mxu0 0.0
        %902 = vmatpush1.msra.mxu0 %v775
        %903 = vmatprep.subr.mxu0 0.0
        %904 = vmatpush1.msra.mxu0 %v776
        %905 = vmatprep.subr.mxu0 0.0
        %906 = vmatpush1.msra.mxu0 %v777
        %907 = vmatprep.subr.mxu0 0.0
        %908 = vmatpush1.msra.mxu0 %v778
        %909 = vmatprep.subr.mxu0 0.0
        %910 = vmatpush1.msra.mxu0 %v779
        %911 = vmatprep.subr.mxu0 0.0
        %912 = vmatpush1.msra.mxu0 %v780
        %913 = vmatprep.subr.mxu0 0.0
        %914 = vmatpush1.msra.mxu0 %v781
        %915 = vmatprep.subr.mxu0 0.0
        %916 = vmatpush1.msra.mxu0 %v782
        %917 = vmatprep.subr.mxu0 0.0
        %918 = vmatpush1.msra.mxu0 %v783
        %919 = vmatprep.mubr.f32.mxu0 %v657
        %920 = vmatmul.mubr.f32.gmra.mrb[0].mxu0 %v656
        %v921 = vpop.f32.mrb[0].mxu0
        %v922 = vadd.f32 %v853, %v921
        %v923 = vpop.f32.mrb[0].mxu0
        %924 = vmatprep.mubr.f32.mxu0 %v663
        %925 = vmatmul.mubr.f32.gmra.mrb[0].mxu0 %v662
        %v926 = vpop.f32.mrb[0].mxu0
        %v927 = vadd.f32 %v853, %v926
        %v928 = vpop.f32.mrb[0].mxu0
        %929 = vmatprep.mubr.f32.mxu0 %v669
        %930 = vmatmul.mubr.f32.gmra.mrb[0].mxu0 %v668
        %v931 = vpop.f32.mrb[0].mxu0
        %v932 = vadd.f32 %v853, %v931
        %v933 = vpop.f32.mrb[0].mxu0
        %934 = vmatprep.mubr.f32.mxu0 %v675
        %935 = vmatmul.mubr.f32.gmra.mrb[0].mxu0 %v674
        %v936 = vpop.f32.mrb[0].mxu0
        %v937 = vadd.f32 %v853, %v936
        %v938 = vpop.f32.mrb[0].mxu0
        %939 = vmatprep.mubr.f32.mxu0 %v681
        %940 = vmatmul.mubr.f32.gmra.mrb[0].mxu0 %v680
        %v941 = vpop.f32.mrb[0].mxu0
        %v942 = vadd.f32 %v853, %v941
        %v943 = vpop.f32.mrb[0].mxu0
        %944 = vmatprep.mubr.f32.mxu0 %v687
        %945 = vmatmul.mubr.f32.gmra.mrb[0].mxu0 %v686
        %v946 = vpop.f32.mrb[0].mxu0
        %v947 = vadd.f32 %v853, %v946
        %v948 = vpop.f32.mrb[0].mxu0
        %949 = vmatprep.mubr.f32.mxu0 %v693
        %950 = vmatmul.mubr.f32.gmra.mrb[0].mxu0 %v692
        %v951 = vpop.f32.mrb[0].mxu0
        %v952 = vadd.f32 %v853, %v951
        %v953 = vpop.f32.mrb[0].mxu0
        %954 = vmatprep.mubr.f32.mxu0 %v699
        %955 = vmatmul.mubr.f32.gmra.mrb[0].mxu0 %v698
        %v956 = vpop.f32.mrb[0].mxu0
        %v957 = vadd.f32 %v853, %v956
        %v958 = vpop.f32.mrb[0].mxu0
        %959 = vmatprep.mubr.f32.mxu0 %v705
        %960 = vmatmul.mubr.f32.gmra.mrb[0].mxu0 %v704
        %v961 = vpop.f32.mrb[0].mxu0
        %v962 = vadd.f32 %v853, %v961
        %v963 = vpop.f32.mrb[0].mxu0
        %964 = vmatprep.mubr.f32.mxu0 %v711
        %965 = vmatmul.mubr.f32.gmra.mrb[0].mxu0 %v710
        %v966 = vpop.f32.mrb[0].mxu0
        %v967 = vadd.f32 %v853, %v966
        %v968 = vpop.f32.mrb[0].mxu0
        %969 = vmatprep.mubr.f32.mxu0 %v717
        %970 = vmatmul.mubr.f32.gmra.mrb[0].mxu0 %v716
        %v971 = vpop.f32.mrb[0].mxu0
        %v972 = vadd.f32 %v853, %v971
        %v973 = vpop.f32.mrb[0].mxu0
        %974 = vmatprep.mubr.f32.mxu0 %v723
        %975 = vmatmul.mubr.f32.gmra.mrb[0].mxu0 %v722
        %v976 = vpop.f32.mrb[0].mxu0
        %v977 = vadd.f32 %v853, %v976
        %v978 = vpop.f32.mrb[0].mxu0
        %979 = vmatprep.mubr.f32.mxu0 %v729
        %980 = vmatmul.mubr.f32.gmra.mrb[0].mxu0 %v728
        %v981 = vpop.f32.mrb[0].mxu0
        %v982 = vadd.f32 %v853, %v981
        %v983 = vpop.f32.mrb[0].mxu0
        %984 = vmatprep.mubr.f32.mxu0 %v735
        %985 = vmatmul.mubr.f32.gmra.mrb[0].mxu0 %v734
        %v986 = vpop.f32.mrb[0].mxu0
        %v987 = vadd.f32 %v853, %v986
        %v988 = vpop.f32.mrb[0].mxu0
        %989 = vmatprep.mubr.f32.mxu0 %v741
        %990 = vmatmul.mubr.f32.gmra.mrb[0].mxu0 %v740
        %v991 = vpop.f32.mrb[0].mxu0
        %v992 = vadd.f32 %v853, %v991
        %v993 = vpop.f32.mrb[0].mxu0
        %994 = vmatprep.mubr.f32.mxu0 %v747
        %995 = vmatmul.mubr.f32.gmra.mrb[0].mxu0 %v746
        %v996 = vpop.f32.mrb[0].mxu0
        %v997 = vadd.f32 %v853, %v996
        %v998 = vpop.f32.mrb[0].mxu0
        %999 = vdwg.mxu0
        %1000 = vmatprep.subr.mxu0 0.0
        %1001 = vmatpush1.msra.mxu0 %v784
        %1002 = vmatprep.subr.mxu0 0.0
        %1003 = vmatpush1.msra.mxu0 %v785
        %1004 = vmatprep.subr.mxu0 0.0
        %1005 = vmatpush1.msra.mxu0 %v786
        %1006 = vmatprep.subr.mxu0 0.0
        %1007 = vmatpush1.msra.mxu0 %v787
        %1008 = vmatprep.subr.mxu0 0.0
        %1009 = vmatpush1.msra.mxu0 %v788
        %1010 = vmatprep.subr.mxu0 0.0
        %1011 = vmatpush1.msra.mxu0 %v789
        %1012 = vmatprep.subr.mxu0 0.0
        %1013 = vmatpush1.msra.mxu0 %v790
        %1014 = vmatprep.subr.mxu0 0.0
        %1015 = vmatpush1.msra.mxu0 %v791
        %1016 = vmatprep.subr.mxu0 0.0
        %1017 = vmatpush1.msra.mxu0 %v792
        %1018 = vmatprep.subr.mxu0 0.0
        %1019 = vmatpush1.msra.mxu0 %v793
        %1020 = vmatprep.subr.mxu0 0.0
        %1021 = vmatpush1.msra.mxu0 %v794
        %1022 = vmatprep.subr.mxu0 0.0
        %1023 = vmatpush1.msra.mxu0 %v795
        %1024 = vmatprep.subr.mxu0 0.0
        %1025 = vmatpush1.msra.mxu0 %v796
        %1026 = vmatprep.subr.mxu0 0.0
        %1027 = vmatpush1.msra.mxu0 %v797
        %1028 = vmatprep.subr.mxu0 0.0
        %1029 = vmatpush1.msra.mxu0 %v798
        %1030 = vmatprep.subr.mxu0 0.0
        %1031 = vmatpush1.msra.mxu0 %v799
        %1032 = vmatprep.subr.mxu0 0.0
        %1033 = vmatpush1.msra.mxu0 %v800
        %1034 = vmatprep.subr.mxu0 0.0
        %1035 = vmatpush1.msra.mxu0 %v801
        %1036 = vmatprep.subr.mxu0 0.0
        %1037 = vmatpush1.msra.mxu0 %v802
        %1038 = vmatprep.subr.mxu0 0.0
        %1039 = vmatpush1.msra.mxu0 %v803
        %1040 = vmatprep.subr.mxu0 0.0
        %1041 = vmatpush1.msra.mxu0 %v804
        %1042 = vmatprep.subr.mxu0 0.0
        %1043 = vmatpush1.msra.mxu0 %v805
        %1044 = vmatprep.subr.mxu0 0.0
        %1045 = vmatpush1.msra.mxu0 %v806
        %1046 = vmatprep.subr.mxu0 0.0
        %1047 = vmatpush1.msra.mxu0 %v807
        %1048 = vmatprep.subr.mxu0 0.0
        %1049 = vmatpush1.msra.mxu0 %v808
        %1050 = vmatprep.subr.mxu0 0.0
        %1051 = vmatpush1.msra.mxu0 %v809
        %1052 = vmatprep.subr.mxu0 0.0
        %1053 = vmatpush1.msra.mxu0 %v810
        %1054 = vmatprep.subr.mxu0 0.0
        %1055 = vmatpush1.msra.mxu0 %v811
        %1056 = vmatprep.subr.mxu0 0.0
        %1057 = vmatpush1.msra.mxu0 %v812
        %1058 = vmatprep.subr.mxu0 0.0
        %1059 = vmatpush1.msra.mxu0 %v813
        %1060 = vmatprep.subr.mxu0 0.0
        %1061 = vmatpush1.msra.mxu0 %v814
        %1062 = vmatprep.subr.mxu0 0.0
        %1063 = vmatpush1.msra.mxu0 %v815
        %1064 = vmatprep.mubr.f32.mxu0 %v659
        %1065 = vmatmul.mubr.f32.gmra.mrb[0].mxu0 %v658
        %v1066 = vpop.f32.mrb[0].mxu0
        %v1067 = vadd.f32 %v922, %v1066
        %v1068 = vpop.f32.mrb[0].mxu0
        %1069 = vmatprep.mubr.f32.mxu0 %v665
        %1070 = vmatmul.mubr.f32.gmra.mrb[0].mxu0 %v664
        %v1071 = vpop.f32.mrb[0].mxu0
        %v1072 = vadd.f32 %v927, %v1071
        %v1073 = vpop.f32.mrb[0].mxu0
        %1074 = vmatprep.mubr.f32.mxu0 %v671
        %1075 = vmatmul.mubr.f32.gmra.mrb[0].mxu0 %v670
        %v1076 = vpop.f32.mrb[0].mxu0
        %v1077 = vadd.f32 %v932, %v1076
        %v1078 = vpop.f32.mrb[0].mxu0
        %1079 = vmatprep.mubr.f32.mxu0 %v677
        %1080 = vmatmul.mubr.f32.gmra.mrb[0].mxu0 %v676
        %v1081 = vpop.f32.mrb[0].mxu0
        %v1082 = vadd.f32 %v937, %v1081
        %v1083 = vpop.f32.mrb[0].mxu0
        %1084 = vmatprep.mubr.f32.mxu0 %v683
        %1085 = vmatmul.mubr.f32.gmra.mrb[0].mxu0 %v682
        %v1086 = vpop.f32.mrb[0].mxu0
        %v1087 = vadd.f32 %v942, %v1086
        %v1088 = vpop.f32.mrb[0].mxu0
        %1089 = vmatprep.mubr.f32.mxu0 %v689
        %1090 = vmatmul.mubr.f32.gmra.mrb[0].mxu0 %v688
        %v1091 = vpop.f32.mrb[0].mxu0
        %v1092 = vadd.f32 %v947, %v1091
        %v1093 = vpop.f32.mrb[0].mxu0
        %1094 = vmatprep.mubr.f32.mxu0 %v695
        %1095 = vmatmul.mubr.f32.gmra.mrb[0].mxu0 %v694
        %v1096 = vpop.f32.mrb[0].mxu0
        %v1097 = vadd.f32 %v952, %v1096
        %v1098 = vpop.f32.mrb[0].mxu0
        %1099 = vmatprep.mubr.f32.mxu0 %v701
        %1100 = vmatmul.mubr.f32.gmra.mrb[0].mxu0 %v700
        %v1101 = vpop.f32.mrb[0].mxu0
        %v1102 = vadd.f32 %v957, %v1101
        %v1103 = vpop.f32.mrb[0].mxu0
        %1104 = vmatprep.mubr.f32.mxu0 %v707
        %1105 = vmatmul.mubr.f32.gmra.mrb[0].mxu0 %v706
        %v1106 = vpop.f32.mrb[0].mxu0
        %v1107 = vadd.f32 %v962, %v1106
        %v1108 = vpop.f32.mrb[0].mxu0
        %1109 = vmatprep.mubr.f32.mxu0 %v713
        %1110 = vmatmul.mubr.f32.gmra.mrb[0].mxu0 %v712
        %v1111 = vpop.f32.mrb[0].mxu0
        %v1112 = vadd.f32 %v967, %v1111
        %v1113 = vpop.f32.mrb[0].mxu0
        %1114 = vmatprep.mubr.f32.mxu0 %v719
        %1115 = vmatmul.mubr.f32.gmra.mrb[0].mxu0 %v718
        %v1116 = vpop.f32.mrb[0].mxu0
        %v1117 = vadd.f32 %v972, %v1116
        %v1118 = vpop.f32.mrb[0].mxu0
        %1119 = vmatprep.mubr.f32.mxu0 %v725
        %1120 = vmatmul.mubr.f32.gmra.mrb[0].mxu0 %v724
        %v1121 = vpop.f32.mrb[0].mxu0
        %v1122 = vadd.f32 %v977, %v1121
        %v1123 = vpop.f32.mrb[0].mxu0
        %1124 = vmatprep.mubr.f32.mxu0 %v731
        %1125 = vmatmul.mubr.f32.gmra.mrb[0].mxu0 %v730
        %v1126 = vpop.f32.mrb[0].mxu0
        %v1127 = vadd.f32 %v982, %v1126
        %v1128 = vpop.f32.mrb[0].mxu0
        %1129 = vmatprep.mubr.f32.mxu0 %v737
        %1130 = vmatmul.mubr.f32.gmra.mrb[0].mxu0 %v736
        %v1131 = vpop.f32.mrb[0].mxu0
        %v1132 = vadd.f32 %v987, %v1131
        %v1133 = vpop.f32.mrb[0].mxu0
        %1134 = vmatprep.mubr.f32.mxu0 %v743
        %1135 = vmatmul.mubr.f32.gmra.mrb[0].mxu0 %v742
        %v1136 = vpop.f32.mrb[0].mxu0
        %v1137 = vadd.f32 %v992, %v1136
        %v1138 = vpop.f32.mrb[0].mxu0
        %1139 = vmatprep.mubr.f32.mxu0 %v749
        %1140 = vmatmul.mubr.f32.gmra.mrb[0].mxu0 %v748
        %v1141 = vpop.f32.mrb[0].mxu0
        %v1142 = vadd.f32 %v997, %v1141
        %v1143 = vpop.f32.mrb[0].mxu0
        %1144 = vdwg.mxu0
        %1145 = vmatprep.subr.mxu0 0.0
        %1146 = vmatpush1.msra.mxu0 %v816
        %1147 = vmatprep.subr.mxu0 0.0
        %1148 = vmatpush1.msra.mxu0 %v817
        %1149 = vmatprep.subr.mxu0 0.0
        %1150 = vmatpush1.msra.mxu0 %v818
        %1151 = vmatprep.subr.mxu0 0.0
        %1152 = vmatpush1.msra.mxu0 %v819
        %1153 = vmatprep.subr.mxu0 0.0
        %1154 = vmatpush1.msra.mxu0 %v820
        %1155 = vmatprep.subr.mxu0 0.0
        %1156 = vmatpush1.msra.mxu0 %v821
        %1157 = vmatprep.subr.mxu0 0.0
        %1158 = vmatpush1.msra.mxu0 %v822
        %1159 = vmatprep.subr.mxu0 0.0
        %1160 = vmatpush1.msra.mxu0 %v823
        %1161 = vmatprep.subr.mxu0 0.0
        %1162 = vmatpush1.msra.mxu0 %v824
        %1163 = vmatprep.subr.mxu0 0.0
        %1164 = vmatpush1.msra.mxu0 %v825
        %1165 = vmatprep.subr.mxu0 0.0
        %1166 = vmatpush1.msra.mxu0 %v826
        %1167 = vmatprep.subr.mxu0 0.0
        %1168 = vmatpush1.msra.mxu0 %v827
        %1169 = vmatprep.subr.mxu0 0.0
        %1170 = vmatpush1.msra.mxu0 %v828
        %1171 = vmatprep.subr.mxu0 0.0
        %1172 = vmatpush1.msra.mxu0 %v829
        %1173 = vmatprep.subr.mxu0 0.0
        %1174 = vmatpush1.msra.mxu0 %v830
        %1175 = vmatprep.subr.mxu0 0.0
        %1176 = vmatpush1.msra.mxu0 %v831
        %1177 = vmatprep.subr.mxu0 0.0
        %1178 = vmatpush1.msra.mxu0 %v832
        %1179 = vmatprep.subr.mxu0 0.0
        %1180 = vmatpush1.msra.mxu0 %v833
        %1181 = vmatprep.subr.mxu0 0.0
        %1182 = vmatpush1.msra.mxu0 %v834
        %1183 = vmatprep.subr.mxu0 0.0
        %1184 = vmatpush1.msra.mxu0 %v835
        %1185 = vmatprep.subr.mxu0 0.0
        %1186 = vmatpush1.msra.mxu0 %v836
        %1187 = vmatprep.subr.mxu0 0.0
        %1188 = vmatpush1.msra.mxu0 %v837
        %1189 = vmatprep.subr.mxu0 0.0
        %1190 = vmatpush1.msra.mxu0 %v838
        %1191 = vmatprep.subr.mxu0 0.0
        %1192 = vmatpush1.msra.mxu0 %v839
        %1193 = vmatprep.subr.mxu0 0.0
        %1194 = vmatpush1.msra.mxu0 %v840
        %1195 = vmatprep.subr.mxu0 0.0
        %1196 = vmatpush1.msra.mxu0 %v841
        %1197 = vmatprep.subr.mxu0 0.0
        %1198 = vmatpush1.msra.mxu0 %v842
        %1199 = vmatprep.subr.mxu0 0.0
        %1200 = vmatpush1.msra.mxu0 %v843
        %1201 = vmatprep.subr.mxu0 0.0
        %1202 = vmatpush1.msra.mxu0 %v844
        %1203 = vmatprep.subr.mxu0 0.0
        %1204 = vmatpush1.msra.mxu0 %v845
        %1205 = vmatprep.subr.mxu0 0.0
        %1206 = vmatpush1.msra.mxu0 %v846
        %1207 = vmatprep.subr.mxu0 0.0
        %1208 = vmatpush1.msra.mxu0 %v847
        %1209 = vmatprep.mubr.f32.mxu0 %v661
        %1210 = vmatmul.mubr.f32.gmra.mrb[0].mxu0 %v660
        %v1211 = vpop.f32.mrb[0].mxu0
        %v1212 = vadd.f32 %v1067, %v1211
        %v1213 = vpop.f32.mrb[0].mxu0
        %1214 = vmatprep.mubr.f32.mxu0 %v667
        %1215 = vmatmul.mubr.f32.gmra.mrb[0].mxu0 %v666
        %v1216 = vpop.f32.mrb[0].mxu0
        %v1217 = vadd.f32 %v1072, %v1216
        %v1218 = vpop.f32.mrb[0].mxu0
        %1219 = vmatprep.mubr.f32.mxu0 %v673
        %1220 = vmatmul.mubr.f32.gmra.mrb[0].mxu0 %v672
        %v1221 = vpop.f32.mrb[0].mxu0
        %v1222 = vadd.f32 %v1077, %v1221
        %v1223 = vpop.f32.mrb[0].mxu0
        %1224 = vmatprep.mubr.f32.mxu0 %v679
        %1225 = vmatmul.mubr.f32.gmra.mrb[0].mxu0 %v678
        %v1226 = vpop.f32.mrb[0].mxu0
        %v1227 = vadd.f32 %v1082, %v1226
        %v1228 = vpop.f32.mrb[0].mxu0
        %1229 = vmatprep.mubr.f32.mxu0 %v685
        %1230 = vmatmul.mubr.f32.gmra.mrb[0].mxu0 %v684
        %v1231 = vpop.f32.mrb[0].mxu0
        %v1232 = vadd.f32 %v1087, %v1231
        %v1233 = vpop.f32.mrb[0].mxu0
        %1234 = vmatprep.mubr.f32.mxu0 %v691
        %1235 = vmatmul.mubr.f32.gmra.mrb[0].mxu0 %v690
        %v1236 = vpop.f32.mrb[0].mxu0
        %v1237 = vadd.f32 %v1092, %v1236
        %v1238 = vpop.f32.mrb[0].mxu0
        %1239 = vmatprep.mubr.f32.mxu0 %v697
        %1240 = vmatmul.mubr.f32.gmra.mrb[0].mxu0 %v696
        %v1241 = vpop.f32.mrb[0].mxu0
        %v1242 = vadd.f32 %v1097, %v1241
        %v1243 = vpop.f32.mrb[0].mxu0
        %1244 = vmatprep.mubr.f32.mxu0 %v703
        %1245 = vmatmul.mubr.f32.gmra.mrb[0].mxu0 %v702
        %v1246 = vpop.f32.mrb[0].mxu0
        %v1247 = vadd.f32 %v1102, %v1246
        %v1248 = vpop.f32.mrb[0].mxu0
        %1249 = vmatprep.mubr.f32.mxu0 %v709
        %1250 = vmatmul.mubr.f32.gmra.mrb[0].mxu0 %v708
        %v1251 = vpop.f32.mrb[0].mxu0
        %v1252 = vadd.f32 %v1107, %v1251
        %v1253 = vpop.f32.mrb[0].mxu0
        %1254 = vmatprep.mubr.f32.mxu0 %v715
        %1255 = vmatmul.mubr.f32.gmra.mrb[0].mxu0 %v714
        %v1256 = vpop.f32.mrb[0].mxu0
        %v1257 = vadd.f32 %v1112, %v1256
        %v1258 = vpop.f32.mrb[0].mxu0
        %1259 = vmatprep.mubr.f32.mxu0 %v721
        %1260 = vmatmul.mubr.f32.gmra.mrb[0].mxu0 %v720
        %v1261 = vpop.f32.mrb[0].mxu0
        %v1262 = vadd.f32 %v1117, %v1261
        %v1263 = vpop.f32.mrb[0].mxu0
        %1264 = vmatprep.mubr.f32.mxu0 %v727
        %1265 = vmatmul.mubr.f32.gmra.mrb[0].mxu0 %v726
        %v1266 = vpop.f32.mrb[0].mxu0
        %v1267 = vadd.f32 %v1122, %v1266
        %v1268 = vpop.f32.mrb[0].mxu0
        %1269 = vmatprep.mubr.f32.mxu0 %v733
        %1270 = vmatmul.mubr.f32.gmra.mrb[0].mxu0 %v732
        %v1271 = vpop.f32.mrb[0].mxu0
        %v1272 = vadd.f32 %v1127, %v1271
        %v1273 = vpop.f32.mrb[0].mxu0
        %1274 = vmatprep.mubr.f32.mxu0 %v739
        %1275 = vmatmul.mubr.f32.gmra.mrb[0].mxu0 %v738
        %v1276 = vpop.f32.mrb[0].mxu0
        %v1277 = vadd.f32 %v1132, %v1276
        %v1278 = vpop.f32.mrb[0].mxu0
        %1279 = vmatprep.mubr.f32.mxu0 %v745
        %1280 = vmatmul.mubr.f32.gmra.mrb[0].mxu0 %v744
        %v1281 = vpop.f32.mrb[0].mxu0
        %v1282 = vadd.f32 %v1137, %v1281
        %v1283 = vpop.f32.mrb[0].mxu0
        %1284 = vmatprep.mubr.f32.mxu0 %v751
        %1285 = vmatmul.mubr.f32.gmra.mrb[0].mxu0 %v750
        %v1286 = vpop.f32.mrb[0].mxu0
        %v1287 = vadd.f32 %v1142, %v1286
        %v1288 = vpop.f32.mrb[0].mxu0
        %1289 = vdwg.mxu0
        %v1290 = vmax.f32 %v1212, 0.0
        %v1291 = vmax.f32 %v1217, 0.0
        %v1292 = vmax.f32 %v1222, 0.0
        %v1293 = vmax.f32 %v1227, 0.0
        %v1294 = vmax.f32 %v1232, 0.0
        %v1295 = vmax.f32 %v1237, 0.0
        %v1296 = vmax.f32 %v1242, 0.0
        %v1297 = vmax.f32 %v1247, 0.0
        %v1298 = vmax.f32 %v1252, 0.0
        %v1299 = vmax.f32 %v1257, 0.0
        %v1300 = vmax.f32 %v1262, 0.0
        %v1301 = vmax.f32 %v1267, 0.0
        %v1302 = vmax.f32 %v1272, 0.0
        %v1303 = vmax.f32 %v1277, 0.0
        %v1304 = vmax.f32 %v1282, 0.0
        %v1305 = vmax.f32 %v1287, 0.0
        %v1306 = vld [vmem:[#allocation8] sm:$0xff]
        %v1307 = vld [vmem:[#allocation8 + $0x8] sm:$0xff]
        %v1308 = vld [vmem:[#allocation8 + $0x10] sm:$0xff]
        %v1309 = vld [vmem:[#allocation8 + $0x18] sm:$0xff]
        %v1310 = vld [vmem:[#allocation8 + $0x20] sm:$0xff]
        %v1311 = vld [vmem:[#allocation8 + $0x28] sm:$0xff]
        %v1312 = vld [vmem:[#allocation8 + $0x30] sm:$0xff]
        %v1313 = vld [vmem:[#allocation8 + $0x38] sm:$0xff]
        %v1314 = vld [vmem:[#allocation8 + $0x40] sm:$0xff]
        %v1315 = vld [vmem:[#allocation8 + $0x48] sm:$0xff]
        %v1316 = vld [vmem:[#allocation8 + $0x50] sm:$0xff]
        %v1317 = vld [vmem:[#allocation8 + $0x58] sm:$0xff]
        %v1318 = vld [vmem:[#allocation8 + $0x60] sm:$0xff]
        %v1319 = vld [vmem:[#allocation8 + $0x68] sm:$0xff]
        %v1320 = vld [vmem:[#allocation8 + $0x70] sm:$0xff]
        %v1321 = vld [vmem:[#allocation8 + $0x78] sm:$0xff]
        %v1322 = vld [vmem:[%s5] sm:$0x1]
        %v1324 = vlaneseq
        %v1325 = vshrl.u32 %v1324, 7
        %v1326 = vsub.s32 0, %v1325
        %v1327 = vrot.slane %v1322, %v1326
        %1329 = vmatprep.subr.mxu0 0.0
        %1330 = vmatpush1.msra.mxu0 %v1306
        %1331 = vmatprep.subr.mxu0 0.0
        %1332 = vmatpush1.msra.mxu0 %v1307
        %1333 = vmatprep.subr.mxu0 0.0
        %1334 = vmatpush1.msra.mxu0 %v1308
        %1335 = vmatprep.subr.mxu0 0.0
        %1336 = vmatpush1.msra.mxu0 %v1309
        %1337 = vmatprep.subr.mxu0 0.0
        %1338 = vmatpush1.msra.mxu0 %v1310
        %1339 = vmatprep.subr.mxu0 0.0
        %1340 = vmatpush1.msra.mxu0 %v1311
        %1341 = vmatprep.subr.mxu0 0.0
        %1342 = vmatpush1.msra.mxu0 %v1312
        %1343 = vmatprep.subr.mxu0 0.0
        %1344 = vmatpush1.msra.mxu0 %v1313
        %1345 = vmatprep.subr.mxu0 0.0
        %1346 = vmatpush1.msra.mxu0 %v1314
        %1347 = vmatprep.subr.mxu0 0.0
        %1348 = vmatpush1.msra.mxu0 %v1315
        %1349 = vmatprep.subr.mxu0 0.0
        %1350 = vmatpush1.msra.mxu0 %v1316
        %1351 = vmatprep.subr.mxu0 0.0
        %1352 = vmatpush1.msra.mxu0 %v1317
        %1353 = vmatprep.subr.mxu0 0.0
        %1354 = vmatpush1.msra.mxu0 %v1318
        %1355 = vmatprep.subr.mxu0 0.0
        %1356 = vmatpush1.msra.mxu0 %v1319
        %1357 = vmatprep.subr.mxu0 0.0
        %1358 = vmatpush1.msra.mxu0 %v1320
        %1359 = vmatprep.subr.mxu0 0.0
        %1360 = vmatpush1.msra.mxu0 %v1321
        %1361 = vmatprep.subr.mxu0 0.0
        %1362 = vmatpush1.msra.mxu0 0.0
        %1363 = vmatprep.subr.mxu0 0.0
        %1364 = vmatpush1.msra.mxu0 0.0
        %1365 = vmatprep.subr.mxu0 0.0
        %1366 = vmatpush1.msra.mxu0 0.0
        %1367 = vmatprep.subr.mxu0 0.0
        %1368 = vmatpush1.msra.mxu0 0.0
        %1369 = vmatprep.subr.mxu0 0.0
        %1370 = vmatpush1.msra.mxu0 0.0
        %1371 = vmatprep.subr.mxu0 0.0
        %1372 = vmatpush1.msra.mxu0 0.0
        %1373 = vmatprep.subr.mxu0 0.0
        %1374 = vmatpush1.msra.mxu0 0.0
        %1375 = vmatprep.subr.mxu0 0.0
        %1376 = vmatpush1.msra.mxu0 0.0
        %1377 = vmatprep.subr.mxu0 0.0
        %1378 = vmatpush1.msra.mxu0 0.0
        %1379 = vmatprep.subr.mxu0 0.0
        %1380 = vmatpush1.msra.mxu0 0.0
        %1381 = vmatprep.subr.mxu0 0.0
        %1382 = vmatpush1.msra.mxu0 0.0
        %1383 = vmatprep.subr.mxu0 0.0
        %1384 = vmatpush1.msra.mxu0 0.0
        %1385 = vmatprep.subr.mxu0 0.0
        %1386 = vmatpush1.msra.mxu0 0.0
        %1387 = vmatprep.subr.mxu0 0.0
        %1388 = vmatpush1.msra.mxu0 0.0
        %1389 = vmatprep.subr.mxu0 0.0
        %1390 = vmatpush1.msra.mxu0 0.0
        %1391 = vmatprep.subr.mxu0 0.0
        %1392 = vmatpush1.msra.mxu0 0.0
        %1393 = vmatprep.mubr.f32.mxu0 0.0
        %1394 = vmatmul.mubr.f32.gmra.mrb[0].mxu0 %v1290
        %v1395 = vpop.f32.mrb[0].mxu0
        %v1396 = vadd.f32 %v1327, %v1395
        %v1397 = vpop.f32.mrb[0].mxu0
        %1398 = vmatprep.mubr.f32.mxu0 0.0
        %1399 = vmatmul.mubr.f32.gmra.mrb[0].mxu0 %v1291
        %v1400 = vpop.f32.mrb[0].mxu0
        %v1401 = vadd.f32 %v1327, %v1400
        %v1402 = vpop.f32.mrb[0].mxu0
        %1403 = vmatprep.mubr.f32.mxu0 0.0
        %1404 = vmatmul.mubr.f32.gmra.mrb[0].mxu0 %v1292
        %v1405 = vpop.f32.mrb[0].mxu0
        %v1406 = vadd.f32 %v1327, %v1405
        %v1407 = vpop.f32.mrb[0].mxu0
        %1408 = vmatprep.mubr.f32.mxu0 0.0
        %1409 = vmatmul.mubr.f32.gmra.mrb[0].mxu0 %v1293
        %v1410 = vpop.f32.mrb[0].mxu0
        %v1411 = vadd.f32 %v1327, %v1410
        %v1412 = vpop.f32.mrb[0].mxu0
        %1413 = vmatprep.mubr.f32.mxu0 0.0
        %1414 = vmatmul.mubr.f32.gmra.mrb[0].mxu0 %v1294
        %v1415 = vpop.f32.mrb[0].mxu0
        %v1416 = vadd.f32 %v1327, %v1415
        %v1417 = vpop.f32.mrb[0].mxu0
        %1418 = vmatprep.mubr.f32.mxu0 0.0
        %1419 = vmatmul.mubr.f32.gmra.mrb[0].mxu0 %v1295
        %v1420 = vpop.f32.mrb[0].mxu0
        %v1421 = vadd.f32 %v1327, %v1420
        %v1422 = vpop.f32.mrb[0].mxu0
        %1423 = vmatprep.mubr.f32.mxu0 0.0
        %1424 = vmatmul.mubr.f32.gmra.mrb[0].mxu0 %v1296
        %v1425 = vpop.f32.mrb[0].mxu0
        %v1426 = vadd.f32 %v1327, %v1425
        %v1427 = vpop.f32.mrb[0].mxu0
        %1428 = vmatprep.mubr.f32.mxu0 0.0
        %1429 = vmatmul.mubr.f32.gmra.mrb[0].mxu0 %v1297
        %v1430 = vpop.f32.mrb[0].mxu0
        %v1431 = vadd.f32 %v1327, %v1430
        %v1432 = vpop.f32.mrb[0].mxu0
        %1433 = vmatprep.mubr.f32.mxu0 0.0
        %1434 = vmatmul.mubr.f32.gmra.mrb[0].mxu0 %v1298
        %v1435 = vpop.f32.mrb[0].mxu0
        %v1436 = vadd.f32 %v1327, %v1435
        %v1437 = vpop.f32.mrb[0].mxu0
        %1438 = vmatprep.mubr.f32.mxu0 0.0
        %1439 = vmatmul.mubr.f32.gmra.mrb[0].mxu0 %v1299
        %v1440 = vpop.f32.mrb[0].mxu0
        %v1441 = vadd.f32 %v1327, %v1440
        %v1442 = vpop.f32.mrb[0].mxu0
        %1443 = vmatprep.mubr.f32.mxu0 0.0
        %1444 = vmatmul.mubr.f32.gmra.mrb[0].mxu0 %v1300
        %v1445 = vpop.f32.mrb[0].mxu0
        %v1446 = vadd.f32 %v1327, %v1445
        %v1447 = vpop.f32.mrb[0].mxu0
        %1448 = vmatprep.mubr.f32.mxu0 0.0
        %1449 = vmatmul.mubr.f32.gmra.mrb[0].mxu0 %v1301
        %v1450 = vpop.f32.mrb[0].mxu0
        %v1451 = vadd.f32 %v1327, %v1450
        %v1452 = vpop.f32.mrb[0].mxu0
        %1453 = vmatprep.mubr.f32.mxu0 0.0
        %1454 = vmatmul.mubr.f32.gmra.mrb[0].mxu0 %v1302
        %v1455 = vpop.f32.mrb[0].mxu0
        %v1456 = vadd.f32 %v1327, %v1455
        %v1457 = vpop.f32.mrb[0].mxu0
        %1458 = vmatprep.mubr.f32.mxu0 0.0
        %1459 = vmatmul.mubr.f32.gmra.mrb[0].mxu0 %v1303
        %v1460 = vpop.f32.mrb[0].mxu0
        %v1461 = vadd.f32 %v1327, %v1460
        %v1462 = vpop.f32.mrb[0].mxu0
        %1463 = vmatprep.mubr.f32.mxu0 0.0
        %1464 = vmatmul.mubr.f32.gmra.mrb[0].mxu0 %v1304
        %v1465 = vpop.f32.mrb[0].mxu0
        %v1466 = vadd.f32 %v1327, %v1465
        %v1467 = vpop.f32.mrb[0].mxu0
        %1468 = vmatprep.mubr.f32.mxu0 0.0
        %1469 = vmatmul.mubr.f32.gmra.mrb[0].mxu0 %v1305
        %v1470 = vpop.f32.mrb[0].mxu0
        %v1471 = vadd.f32 %v1327, %v1470
        %v1472 = vpop.f32.mrb[0].mxu0
        %1473 = vdwg.mxu0
        %v1474 = vmax.f32 %v1396, 0.0
        %v1475 = vmax.f32 %v1401, 0.0
        %v1476 = vmax.f32 %v1406, 0.0
        %v1477 = vmax.f32 %v1411, 0.0
        %v1478 = vmax.f32 %v1416, 0.0
        %v1479 = vmax.f32 %v1421, 0.0
        %v1480 = vmax.f32 %v1426, 0.0
        %v1481 = vmax.f32 %v1431, 0.0
        %v1482 = vmax.f32 %v1436, 0.0
        %v1483 = vmax.f32 %v1441, 0.0
        %v1484 = vmax.f32 %v1446, 0.0
        %v1485 = vmax.f32 %v1451, 0.0
        %v1486 = vmax.f32 %v1456, 0.0
        %v1487 = vmax.f32 %v1461, 0.0
        %v1488 = vmax.f32 %v1466, 0.0
        %v1489 = vmax.f32 %v1471, 0.0
        %v1490 = vld [vmem:[#allocation10] sm:$0xff]
        %v1491 = vld [vmem:[#allocation10 + $0x8] sm:$0xff]
        %v1492 = vld [vmem:[#allocation10 + $0x10] sm:$0xff]
        %v1493 = vld [vmem:[#allocation10 + $0x18] sm:$0xff]
        %v1494 = vld [vmem:[#allocation10 + $0x20] sm:$0xff]
        %v1495 = vld [vmem:[#allocation10 + $0x28] sm:$0xff]
        %v1496 = vld [vmem:[#allocation10 + $0x30] sm:$0xff]
        %v1497 = vld [vmem:[#allocation10 + $0x38] sm:$0xff]
        %v1498 = vld [vmem:[#allocation10 + $0x40] sm:$0xff]
        %v1499 = vld [vmem:[#allocation10 + $0x48] sm:$0xff]
        %v1500 = vld [vmem:[#allocation10 + $0x50] sm:$0xff]
        %v1501 = vld [vmem:[#allocation10 + $0x58] sm:$0xff]
        %v1502 = vld [vmem:[#allocation10 + $0x60] sm:$0xff]
        %v1503 = vld [vmem:[#allocation10 + $0x68] sm:$0xff]
        %v1504 = vld [vmem:[#allocation10 + $0x70] sm:$0xff]
        %v1505 = vld [vmem:[#allocation10 + $0x78] sm:$0xff]
        %v1506 = vld [vmem:[#allocation10 + $0x80] sm:$0xff]
        %v1507 = vld [vmem:[#allocation10 + $0x88] sm:$0xff]
        %v1508 = vld [vmem:[#allocation10 + $0x90] sm:$0xff]
        %v1509 = vld [vmem:[#allocation10 + $0x98] sm:$0xff]
        %v1510 = vld [vmem:[#allocation10 + $0xa0] sm:$0xff]
        %v1511 = vld [vmem:[#allocation10 + $0xa8] sm:$0xff]
        %v1512 = vld [vmem:[#allocation10 + $0xb0] sm:$0xff]
        %v1513 = vld [vmem:[#allocation10 + $0xb8] sm:$0xff]
        %v1514 = vld [vmem:[#allocation10 + $0xc0] sm:$0xff]
        %v1515 = vld [vmem:[#allocation10 + $0xc8] sm:$0xff]
        %v1516 = vld [vmem:[#allocation10 + $0xd0] sm:$0xff]
        %v1517 = vld [vmem:[#allocation10 + $0xd8] sm:$0xff]
        %v1518 = vld [vmem:[#allocation10 + $0xe0] sm:$0xff]
        %v1519 = vld [vmem:[#allocation10 + $0xe8] sm:$0xff]
        %v1520 = vld [vmem:[#allocation10 + $0xf0] sm:$0xff]
        %v1521 = vld [vmem:[#allocation10 + $0xf8] sm:$0xff]
        %v1522 = vld [vmem:[%s7] sm:$0x3]
        %v1524 = vlaneseq
        %v1525 = vshrl.u32 %v1524, 7
        %v1526 = vsub.s32 0, %v1525
        %v1527 = vrot.slane %v1522, %v1526
        %v1528 = vlaneseq
        %v1529 = vshrl.u32 %v1528, 7
        %v1530 = vsub.s32 1, %v1529
        %v1531 = vrot.slane %v1522, %v1530
        %1534 = vmatprep.subr.mxu0 %v1491
        %1535 = vmatpush1.msra.mxu0 %v1490
        %1536 = vmatprep.subr.mxu0 %v1493
        %1537 = vmatpush1.msra.mxu0 %v1492
        %1538 = vmatprep.subr.mxu0 %v1495
        %1539 = vmatpush1.msra.mxu0 %v1494
        %1540 = vmatprep.subr.mxu0 %v1497
        %1541 = vmatpush1.msra.mxu0 %v1496
        %1542 = vmatprep.subr.mxu0 %v1499
        %1543 = vmatpush1.msra.mxu0 %v1498
        %1544 = vmatprep.subr.mxu0 %v1501
        %1545 = vmatpush1.msra.mxu0 %v1500
        %1546 = vmatprep.subr.mxu0 %v1503
        %1547 = vmatpush1.msra.mxu0 %v1502
        %1548 = vmatprep.subr.mxu0 %v1505
        %1549 = vmatpush1.msra.mxu0 %v1504
        %1550 = vmatprep.subr.mxu0 %v1507
        %1551 = vmatpush1.msra.mxu0 %v1506
        %1552 = vmatprep.subr.mxu0 %v1509
        %1553 = vmatpush1.msra.mxu0 %v1508
        %1554 = vmatprep.subr.mxu0 %v1511
        %1555 = vmatpush1.msra.mxu0 %v1510
        %1556 = vmatprep.subr.mxu0 %v1513
        %1557 = vmatpush1.msra.mxu0 %v1512
        %1558 = vmatprep.subr.mxu0 %v1515
        %1559 = vmatpush1.msra.mxu0 %v1514
        %1560 = vmatprep.subr.mxu0 %v1517
        %1561 = vmatpush1.msra.mxu0 %v1516
        %1562 = vmatprep.subr.mxu0 %v1519
        %1563 = vmatpush1.msra.mxu0 %v1518
        %1564 = vmatprep.subr.mxu0 %v1521
        %1565 = vmatpush1.msra.mxu0 %v1520
        %1566 = vmatprep.subr.mxu0 0.0
        %1567 = vmatpush1.msra.mxu0 0.0
        %1568 = vmatprep.subr.mxu0 0.0
        %1569 = vmatpush1.msra.mxu0 0.0
        %1570 = vmatprep.subr.mxu0 0.0
        %1571 = vmatpush1.msra.mxu0 0.0
        %1572 = vmatprep.subr.mxu0 0.0
        %1573 = vmatpush1.msra.mxu0 0.0
        %1574 = vmatprep.subr.mxu0 0.0
        %1575 = vmatpush1.msra.mxu0 0.0
        %1576 = vmatprep.subr.mxu0 0.0
        %1577 = vmatpush1.msra.mxu0 0.0
        %1578 = vmatprep.subr.mxu0 0.0
        %1579 = vmatpush1.msra.mxu0 0.0
        %1580 = vmatprep.subr.mxu0 0.0
        %1581 = vmatpush1.msra.mxu0 0.0
        %1582 = vmatprep.subr.mxu0 0.0
        %1583 = vmatpush1.msra.mxu0 0.0
        %1584 = vmatprep.subr.mxu0 0.0
        %1585 = vmatpush1.msra.mxu0 0.0
        %1586 = vmatprep.subr.mxu0 0.0
        %1587 = vmatpush1.msra.mxu0 0.0
        %1588 = vmatprep.subr.mxu0 0.0
        %1589 = vmatpush1.msra.mxu0 0.0
        %1590 = vmatprep.subr.mxu0 0.0
        %1591 = vmatpush1.msra.mxu0 0.0
        %1592 = vmatprep.subr.mxu0 0.0
        %1593 = vmatpush1.msra.mxu0 0.0
        %1594 = vmatprep.subr.mxu0 0.0
        %1595 = vmatpush1.msra.mxu0 0.0
        %1596 = vmatprep.subr.mxu0 0.0
        %1597 = vmatpush1.msra.mxu0 0.0
        %1598 = vmatprep.mubr.f32.mxu0 0.0
        %1599 = vmatmul.mubr.f32.gmra.mrb[0].mxu0 %v1474
        %v1600 = vpop.f32.mrb[0].mxu0
        %v1601 = vadd.f32 %v1527, %v1600
        %v1602 = vpop.f32.mrb[0].mxu0
        %v1603 = vadd.f32 %v1531, %v1602
        %1604 = vmatprep.mubr.f32.mxu0 0.0
        %1605 = vmatmul.mubr.f32.gmra.mrb[0].mxu0 %v1475
        %v1606 = vpop.f32.mrb[0].mxu0
        %v1607 = vadd.f32 %v1527, %v1606
        %v1608 = vpop.f32.mrb[0].mxu0
        %v1609 = vadd.f32 %v1531, %v1608
        %1610 = vmatprep.mubr.f32.mxu0 0.0
        %1611 = vmatmul.mubr.f32.gmra.mrb[0].mxu0 %v1476
        %v1612 = vpop.f32.mrb[0].mxu0
        %v1613 = vadd.f32 %v1527, %v1612
        %v1614 = vpop.f32.mrb[0].mxu0
        %v1615 = vadd.f32 %v1531, %v1614
        %1616 = vmatprep.mubr.f32.mxu0 0.0
        %1617 = vmatmul.mubr.f32.gmra.mrb[0].mxu0 %v1477
        %v1618 = vpop.f32.mrb[0].mxu0
        %v1619 = vadd.f32 %v1527, %v1618
        %v1620 = vpop.f32.mrb[0].mxu0
        %v1621 = vadd.f32 %v1531, %v1620
        %1622 = vmatprep.mubr.f32.mxu0 0.0
        %1623 = vmatmul.mubr.f32.gmra.mrb[0].mxu0 %v1478
        %v1624 = vpop.f32.mrb[0].mxu0
        %v1625 = vadd.f32 %v1527, %v1624
        %v1626 = vpop.f32.mrb[0].mxu0
        %v1627 = vadd.f32 %v1531, %v1626
        %1628 = vmatprep.mubr.f32.mxu0 0.0
        %1629 = vmatmul.mubr.f32.gmra.mrb[0].mxu0 %v1479
        %v1630 = vpop.f32.mrb[0].mxu0
        %v1631 = vadd.f32 %v1527, %v1630
        %v1632 = vpop.f32.mrb[0].mxu0
        %v1633 = vadd.f32 %v1531, %v1632
        %1634 = vmatprep.mubr.f32.mxu0 0.0
        %1635 = vmatmul.mubr.f32.gmra.mrb[0].mxu0 %v1480
        %v1636 = vpop.f32.mrb[0].mxu0
        %v1637 = vadd.f32 %v1527, %v1636
        %v1638 = vpop.f32.mrb[0].mxu0
        %v1639 = vadd.f32 %v1531, %v1638
        %1640 = vmatprep.mubr.f32.mxu0 0.0
        %1641 = vmatmul.mubr.f32.gmra.mrb[0].mxu0 %v1481
        %v1642 = vpop.f32.mrb[0].mxu0
        %v1643 = vadd.f32 %v1527, %v1642
        %v1644 = vpop.f32.mrb[0].mxu0
        %v1645 = vadd.f32 %v1531, %v1644
        %1646 = vmatprep.mubr.f32.mxu0 0.0
        %1647 = vmatmul.mubr.f32.gmra.mrb[0].mxu0 %v1482
        %v1648 = vpop.f32.mrb[0].mxu0
        %v1649 = vadd.f32 %v1527, %v1648
        %v1650 = vpop.f32.mrb[0].mxu0
        %v1651 = vadd.f32 %v1531, %v1650
        %1652 = vmatprep.mubr.f32.mxu0 0.0
        %1653 = vmatmul.mubr.f32.gmra.mrb[0].mxu0 %v1483
        %v1654 = vpop.f32.mrb[0].mxu0
        %v1655 = vadd.f32 %v1527, %v1654
        %v1656 = vpop.f32.mrb[0].mxu0
        %v1657 = vadd.f32 %v1531, %v1656
        %1658 = vmatprep.mubr.f32.mxu0 0.0
        %1659 = vmatmul.mubr.f32.gmra.mrb[0].mxu0 %v1484
        %v1660 = vpop.f32.mrb[0].mxu0
        %v1661 = vadd.f32 %v1527, %v1660
        %v1662 = vpop.f32.mrb[0].mxu0
        %v1663 = vadd.f32 %v1531, %v1662
        %1664 = vmatprep.mubr.f32.mxu0 0.0
        %1665 = vmatmul.mubr.f32.gmra.mrb[0].mxu0 %v1485
        %v1666 = vpop.f32.mrb[0].mxu0
        %v1667 = vadd.f32 %v1527, %v1666
        %v1668 = vpop.f32.mrb[0].mxu0
        %v1669 = vadd.f32 %v1531, %v1668
        %1670 = vmatprep.mubr.f32.mxu0 0.0
        %1671 = vmatmul.mubr.f32.gmra.mrb[0].mxu0 %v1486
        %v1672 = vpop.f32.mrb[0].mxu0
        %v1673 = vadd.f32 %v1527, %v1672
        %v1674 = vpop.f32.mrb[0].mxu0
        %v1675 = vadd.f32 %v1531, %v1674
        %1676 = vmatprep.mubr.f32.mxu0 0.0
        %1677 = vmatmul.mubr.f32.gmra.mrb[0].mxu0 %v1487
        %v1678 = vpop.f32.mrb[0].mxu0
        %v1679 = vadd.f32 %v1527, %v1678
        %v1680 = vpop.f32.mrb[0].mxu0
        %v1681 = vadd.f32 %v1531, %v1680
        %1682 = vmatprep.mubr.f32.mxu0 0.0
        %1683 = vmatmul.mubr.f32.gmra.mrb[0].mxu0 %v1488
        %v1684 = vpop.f32.mrb[0].mxu0
        %v1685 = vadd.f32 %v1527, %v1684
        %v1686 = vpop.f32.mrb[0].mxu0
        %v1687 = vadd.f32 %v1531, %v1686
        %1688 = vmatprep.mubr.f32.mxu0 0.0
        %1689 = vmatmul.mubr.f32.gmra.mrb[0].mxu0 %v1489
        %v1690 = vpop.f32.mrb[0].mxu0
        %v1691 = vadd.f32 %v1527, %v1690
        %v1692 = vpop.f32.mrb[0].mxu0
        %v1693 = vadd.f32 %v1531, %v1692
        %1694 = vdwg.mxu0
        %1695 = vst [vmem:[%s651] sm:$0xff] %v1601
        %1696 = vst [vmem:[%s651 + $0x8] sm:$0xff] %v1603
        %1697 = vst [vmem:[%s651 + $0x10] sm:$0xff] %v1607
        %1698 = vst [vmem:[%s651 + $0x18] sm:$0xff] %v1609
        %1699 = vst [vmem:[%s651 + $0x20] sm:$0xff] %v1613
        %1700 = vst [vmem:[%s651 + $0x28] sm:$0xff] %v1615
        %1701 = vst [vmem:[%s651 + $0x30] sm:$0xff] %v1619
        %1702 = vst [vmem:[%s651 + $0x38] sm:$0xff] %v1621
        %1703 = vst [vmem:[%s651 + $0x40] sm:$0xff] %v1625
        %1704 = vst [vmem:[%s651 + $0x48] sm:$0xff] %v1627
        %1705 = vst [vmem:[%s651 + $0x50] sm:$0xff] %v1631
        %1706 = vst [vmem:[%s651 + $0x58] sm:$0xff] %v1633
        %1707 = vst [vmem:[%s651 + $0x60] sm:$0xff] %v1637
        %1708 = vst [vmem:[%s651 + $0x68] sm:$0xff] %v1639
        %1709 = vst [vmem:[%s651 + $0x70] sm:$0xff] %v1643
        %1710 = vst [vmem:[%s651 + $0x78] sm:$0xff] %v1645
        %1711 = vst [vmem:[%s651 + $0x80] sm:$0xff] %v1649
        %1712 = vst [vmem:[%s651 + $0x88] sm:$0xff] %v1651
        %1713 = vst [vmem:[%s651 + $0x90] sm:$0xff] %v1655
        %1714 = vst [vmem:[%s651 + $0x98] sm:$0xff] %v1657
        %1715 = vst [vmem:[%s651 + $0xa0] sm:$0xff] %v1661
        %1716 = vst [vmem:[%s651 + $0xa8] sm:$0xff] %v1663
        %1717 = vst [vmem:[%s651 + $0xb0] sm:$0xff] %v1667
        %1718 = vst [vmem:[%s651 + $0xb8] sm:$0xff] %v1669
        %1719 = vst [vmem:[%s651 + $0xc0] sm:$0xff] %v1673
        %1720 = vst [vmem:[%s651 + $0xc8] sm:$0xff] %v1675
        %1721 = vst [vmem:[%s651 + $0xd0] sm:$0xff] %v1679
        %1722 = vst [vmem:[%s651 + $0xd8] sm:$0xff] %v1681
        %1723 = vst [vmem:[%s651 + $0xe0] sm:$0xff] %v1685
        %1724 = vst [vmem:[%s651 + $0xe8] sm:$0xff] %v1687
        %1725 = vst [vmem:[%s651 + $0xf0] sm:$0xff] %v1691
        %1726 = vst [vmem:[%s651 + $0xf8] sm:$0xff] %v1693
        %v1727 = vld [vmem:[%s571] sm:$0xff]
        %v1728 = vld [vmem:[%s571 + $0x8] sm:$0xff]
        %v1729 = vld [vmem:[%s571 + $0x10] sm:$0xff]
        %v1730 = vld [vmem:[%s571 + $0x18] sm:$0xff]
        %v1731 = vld [vmem:[%s571 + $0x20] sm:$0xff]
        %v1732 = vld [vmem:[%s571 + $0x28] sm:$0xff]
        %v1733 = vld [vmem:[%s571 + $0x30] sm:$0xff]
        %v1734 = vld [vmem:[%s571 + $0x38] sm:$0xff]
        %v1735 = vld [vmem:[%s571 + $0x40] sm:$0xff]
        %v1736 = vld [vmem:[%s571 + $0x48] sm:$0xff]
        %v1737 = vld [vmem:[%s571 + $0x50] sm:$0xff]
        %v1738 = vld [vmem:[%s571 + $0x58] sm:$0xff]
        %v1739 = vld [vmem:[%s571 + $0x60] sm:$0xff]
        %v1740 = vld [vmem:[%s571 + $0x68] sm:$0xff]
        %v1741 = vld [vmem:[%s571 + $0x70] sm:$0xff]
        %v1742 = vld [vmem:[%s571 + $0x78] sm:$0xff]
        %v1743 = vmul.f32 %v1603, 0.5
        %v1744 = vmul.f32 %v1609, 0.5
        %v1745 = vmul.f32 %v1615, 0.5
        %v1746 = vmul.f32 %v1621, 0.5
        %v1747 = vmul.f32 %v1627, 0.5
        %v1748 = vmul.f32 %v1633, 0.5
        %v1749 = vmul.f32 %v1639, 0.5
        %v1750 = vmul.f32 %v1645, 0.5
        %v1751 = vmul.f32 %v1651, 0.5
        %v1752 = vmul.f32 %v1657, 0.5
        %v1753 = vmul.f32 %v1663, 0.5
        %v1754 = vmul.f32 %v1669, 0.5
        %v1755 = vmul.f32 %v1675, 0.5
        %v1756 = vmul.f32 %v1681, 0.5
        %v1757 = vmul.f32 %v1687, 0.5
        %v1758 = vmul.f32 %v1693, 0.5
        %v1759 = vmul.f32 %v1743, 1.442695
        %v1760 = vpow.pop %v1759
        %v1761 = vmul.f32 %v1744, 1.442695
        %v1762 = vpow.pop %v1761
        %v1763 = vmul.f32 %v1745, 1.442695
        %v1764 = vpow.pop %v1763
        %v1765 = vmul.f32 %v1746, 1.442695
        %v1766 = vpow.pop %v1765
        %v1767 = vmul.f32 %v1747, 1.442695
        %v1768 = vpow.pop %v1767
        %v1769 = vmul.f32 %v1748, 1.442695
        %v1770 = vpow.pop %v1769
        %v1771 = vmul.f32 %v1749, 1.442695
        %v1772 = vpow.pop %v1771
        %v1773 = vmul.f32 %v1750, 1.442695
        %v1774 = vpow.pop %v1773
        %v1775 = vmul.f32 %v1751, 1.442695
        %v1776 = vpow.pop %v1775
        %v1777 = vmul.f32 %v1752, 1.442695
        %v1778 = vpow.pop %v1777
        %v1779 = vmul.f32 %v1753, 1.442695
        %v1780 = vpow.pop %v1779
        %v1781 = vmul.f32 %v1754, 1.442695
        %v1782 = vpow.pop %v1781
        %v1783 = vmul.f32 %v1755, 1.442695
        %v1784 = vpow.pop %v1783
        %v1785 = vmul.f32 %v1756, 1.442695
        %v1786 = vpow.pop %v1785
        %v1787 = vmul.f32 %v1757, 1.442695
        %v1788 = vpow.pop %v1787
        %v1789 = vmul.f32 %v1758, 1.442695
        %v1790 = vpow.pop %v1789
        %v1791 = vmul.f32 %v1727, %v1760
        %v1792 = vmul.f32 %v1728, %v1762
        %v1793 = vmul.f32 %v1729, %v1764
        %v1794 = vmul.f32 %v1730, %v1766
        %v1795 = vmul.f32 %v1731, %v1768
        %v1796 = vmul.f32 %v1732, %v1770
        %v1797 = vmul.f32 %v1733, %v1772
        %v1798 = vmul.f32 %v1734, %v1774
        %v1799 = vmul.f32 %v1735, %v1776
        %v1800 = vmul.f32 %v1736, %v1778
        %v1801 = vmul.f32 %v1737, %v1780
        %v1802 = vmul.f32 %v1738, %v1782
        %v1803 = vmul.f32 %v1739, %v1784
        %v1804 = vmul.f32 %v1740, %v1786
        %v1805 = vmul.f32 %v1741, %v1788
        %v1806 = vmul.f32 %v1742, %v1790
        %v1807 = vadd.f32 %v1791, %v1601
        %v1808 = vadd.f32 %v1792, %v1607
        %v1809 = vadd.f32 %v1793, %v1613
        %v1810 = vadd.f32 %v1794, %v1619
        %v1811 = vadd.f32 %v1795, %v1625
        %v1812 = vadd.f32 %v1796, %v1631
        %v1813 = vadd.f32 %v1797, %v1637
        %v1814 = vadd.f32 %v1798, %v1643
        %v1815 = vadd.f32 %v1799, %v1649
        %v1816 = vadd.f32 %v1800, %v1655
        %v1817 = vadd.f32 %v1801, %v1661
        %v1818 = vadd.f32 %v1802, %v1667
        %v1819 = vadd.f32 %v1803, %v1673
        %v1820 = vadd.f32 %v1804, %v1679
        %v1821 = vadd.f32 %v1805, %v1685
        %v1822 = vadd.f32 %v1806, %v1691
        %v1823 = vld [vmem:[#allocation11] sm:$0xff]
        %v1824 = vld [vmem:[#allocation11 + $0x8] sm:$0xff]
        %v1825 = vld [vmem:[#allocation11 + $0x10] sm:$0xff]
        %v1826 = vld [vmem:[#allocation11 + $0x18] sm:$0xff]
        %v1827 = vld [vmem:[#allocation11 + $0x20] sm:$0xff]
        %v1828 = vld [vmem:[#allocation11 + $0x28] sm:$0xff]
        %v1829 = vld [vmem:[#allocation11 + $0x30] sm:$0xff]
        %v1830 = vld [vmem:[#allocation11 + $0x38] sm:$0xff]
        %v1831 = vld [vmem:[#allocation11 + $0x40] sm:$0xff]
        %v1832 = vld [vmem:[#allocation11 + $0x48] sm:$0xff]
        %v1833 = vld [vmem:[#allocation11 + $0x50] sm:$0xff]
        %v1834 = vld [vmem:[#allocation11 + $0x58] sm:$0xff]
        %v1835 = vld [vmem:[#allocation11 + $0x60] sm:$0xff]
        %v1836 = vld [vmem:[#allocation11 + $0x68] sm:$0xff]
        %v1837 = vld [vmem:[#allocation11 + $0x70] sm:$0xff]
        %v1838 = vld [vmem:[#allocation11 + $0x78] sm:$0xff]
        %v1839 = vld [vmem:[%s9] sm:$0x1]
        %v1841 = vlaneseq
        %v1842 = vshrl.u32 %v1841, 7
        %v1843 = vsub.s32 0, %v1842
        %v1844 = vrot.slane %v1839, %v1843
        %1846 = vmatprep.subr.mxu0 0.0
        %1847 = vmatpush1.msra.mxu0 %v1823
        %1848 = vmatprep.subr.mxu0 0.0
        %1849 = vmatpush1.msra.mxu0 %v1824
        %1850 = vmatprep.subr.mxu0 0.0
        %1851 = vmatpush1.msra.mxu0 %v1825
        %1852 = vmatprep.subr.mxu0 0.0
        %1853 = vmatpush1.msra.mxu0 %v1826
        %1854 = vmatprep.subr.mxu0 0.0
        %1855 = vmatpush1.msra.mxu0 %v1827
        %1856 = vmatprep.subr.mxu0 0.0
        %1857 = vmatpush1.msra.mxu0 %v1828
        %1858 = vmatprep.subr.mxu0 0.0
        %1859 = vmatpush1.msra.mxu0 %v1829
        %1860 = vmatprep.subr.mxu0 0.0
        %1861 = vmatpush1.msra.mxu0 %v1830
        %1862 = vmatprep.subr.mxu0 0.0
        %1863 = vmatpush1.msra.mxu0 %v1831
        %1864 = vmatprep.subr.mxu0 0.0
        %1865 = vmatpush1.msra.mxu0 %v1832
        %1866 = vmatprep.subr.mxu0 0.0
        %1867 = vmatpush1.msra.mxu0 %v1833
        %1868 = vmatprep.subr.mxu0 0.0
        %1869 = vmatpush1.msra.mxu0 %v1834
        %1870 = vmatprep.subr.mxu0 0.0
        %1871 = vmatpush1.msra.mxu0 %v1835
        %1872 = vmatprep.subr.mxu0 0.0
        %1873 = vmatpush1.msra.mxu0 %v1836
        %1874 = vmatprep.subr.mxu0 0.0
        %1875 = vmatpush1.msra.mxu0 %v1837
        %1876 = vmatprep.subr.mxu0 0.0
        %1877 = vmatpush1.msra.mxu0 %v1838
        %1878 = vmatprep.subr.mxu0 0.0
        %1879 = vmatpush1.msra.mxu0 0.0
        %1880 = vmatprep.subr.mxu0 0.0
        %1881 = vmatpush1.msra.mxu0 0.0
        %1882 = vmatprep.subr.mxu0 0.0
        %1883 = vmatpush1.msra.mxu0 0.0
        %1884 = vmatprep.subr.mxu0 0.0
        %1885 = vmatpush1.msra.mxu0 0.0
        %1886 = vmatprep.subr.mxu0 0.0
        %1887 = vmatpush1.msra.mxu0 0.0
        %1888 = vmatprep.subr.mxu0 0.0
        %1889 = vmatpush1.msra.mxu0 0.0
        %1890 = vmatprep.subr.mxu0 0.0
        %1891 = vmatpush1.msra.mxu0 0.0
        %1892 = vmatprep.subr.mxu0 0.0
        %1893 = vmatpush1.msra.mxu0 0.0
        %1894 = vmatprep.subr.mxu0 0.0
        %1895 = vmatpush1.msra.mxu0 0.0
        %1896 = vmatprep.subr.mxu0 0.0
        %1897 = vmatpush1.msra.mxu0 0.0
        %1898 = vmatprep.subr.mxu0 0.0
        %1899 = vmatpush1.msra.mxu0 0.0
        %1900 = vmatprep.subr.mxu0 0.0
        %1901 = vmatpush1.msra.mxu0 0.0
        %1902 = vmatprep.subr.mxu0 0.0
        %1903 = vmatpush1.msra.mxu0 0.0
        %1904 = vmatprep.subr.mxu0 0.0
        %1905 = vmatpush1.msra.mxu0 0.0
        %1906 = vmatprep.subr.mxu0 0.0
        %1907 = vmatpush1.msra.mxu0 0.0
        %1908 = vmatprep.subr.mxu0 0.0
        %1909 = vmatpush1.msra.mxu0 0.0
        %1910 = vmatprep.mubr.f32.mxu0 0.0
        %1911 = vmatmul.mubr.f32.gmra.mrb[0].mxu0 %v1807
        %v1912 = vpop.f32.mrb[0].mxu0
        %v1913 = vadd.f32 %v1844, %v1912
        %v1914 = vpop.f32.mrb[0].mxu0
        %1915 = vmatprep.mubr.f32.mxu0 0.0
        %1916 = vmatmul.mubr.f32.gmra.mrb[0].mxu0 %v1808
        %v1917 = vpop.f32.mrb[0].mxu0
        %v1918 = vadd.f32 %v1844, %v1917
        %v1919 = vpop.f32.mrb[0].mxu0
        %1920 = vmatprep.mubr.f32.mxu0 0.0
        %1921 = vmatmul.mubr.f32.gmra.mrb[0].mxu0 %v1809
        %v1922 = vpop.f32.mrb[0].mxu0
        %v1923 = vadd.f32 %v1844, %v1922
        %v1924 = vpop.f32.mrb[0].mxu0
        %1925 = vmatprep.mubr.f32.mxu0 0.0
        %1926 = vmatmul.mubr.f32.gmra.mrb[0].mxu0 %v1810
        %v1927 = vpop.f32.mrb[0].mxu0
        %v1928 = vadd.f32 %v1844, %v1927
        %v1929 = vpop.f32.mrb[0].mxu0
        %1930 = vmatprep.mubr.f32.mxu0 0.0
        %1931 = vmatmul.mubr.f32.gmra.mrb[0].mxu0 %v1811
        %v1932 = vpop.f32.mrb[0].mxu0
        %v1933 = vadd.f32 %v1844, %v1932
        %v1934 = vpop.f32.mrb[0].mxu0
        %1935 = vmatprep.mubr.f32.mxu0 0.0
        %1936 = vmatmul.mubr.f32.gmra.mrb[0].mxu0 %v1812
        %v1937 = vpop.f32.mrb[0].mxu0
        %v1938 = vadd.f32 %v1844, %v1937
        %v1939 = vpop.f32.mrb[0].mxu0
        %1940 = vmatprep.mubr.f32.mxu0 0.0
        %1941 = vmatmul.mubr.f32.gmra.mrb[0].mxu0 %v1813
        %v1942 = vpop.f32.mrb[0].mxu0
        %v1943 = vadd.f32 %v1844, %v1942
        %v1944 = vpop.f32.mrb[0].mxu0
        %1945 = vmatprep.mubr.f32.mxu0 0.0
        %1946 = vmatmul.mubr.f32.gmra.mrb[0].mxu0 %v1814
        %v1947 = vpop.f32.mrb[0].mxu0
        %v1948 = vadd.f32 %v1844, %v1947
        %v1949 = vpop.f32.mrb[0].mxu0
        %1950 = vmatprep.mubr.f32.mxu0 0.0
        %1951 = vmatmul.mubr.f32.gmra.mrb[0].mxu0 %v1815
        %v1952 = vpop.f32.mrb[0].mxu0
        %v1953 = vadd.f32 %v1844, %v1952
        %v1954 = vpop.f32.mrb[0].mxu0
        %1955 = vmatprep.mubr.f32.mxu0 0.0
        %1956 = vmatmul.mubr.f32.gmra.mrb[0].mxu0 %v1816
        %v1957 = vpop.f32.mrb[0].mxu0
        %v1958 = vadd.f32 %v1844, %v1957
        %v1959 = vpop.f32.mrb[0].mxu0
        %1960 = vmatprep.mubr.f32.mxu0 0.0
        %1961 = vmatmul.mubr.f32.gmra.mrb[0].mxu0 %v1817
        %v1962 = vpop.f32.mrb[0].mxu0
        %v1963 = vadd.f32 %v1844, %v1962
        %v1964 = vpop.f32.mrb[0].mxu0
        %1965 = vmatprep.mubr.f32.mxu0 0.0
        %1966 = vmatmul.mubr.f32.gmra.mrb[0].mxu0 %v1818
        %v1967 = vpop.f32.mrb[0].mxu0
        %v1968 = vadd.f32 %v1844, %v1967
        %v1969 = vpop.f32.mrb[0].mxu0
        %1970 = vmatprep.mubr.f32.mxu0 0.0
        %1971 = vmatmul.mubr.f32.gmra.mrb[0].mxu0 %v1819
        %v1972 = vpop.f32.mrb[0].mxu0
        %v1973 = vadd.f32 %v1844, %v1972
        %v1974 = vpop.f32.mrb[0].mxu0
        %1975 = vmatprep.mubr.f32.mxu0 0.0
        %1976 = vmatmul.mubr.f32.gmra.mrb[0].mxu0 %v1820
        %v1977 = vpop.f32.mrb[0].mxu0
        %v1978 = vadd.f32 %v1844, %v1977
        %v1979 = vpop.f32.mrb[0].mxu0
        %1980 = vmatprep.mubr.f32.mxu0 0.0
        %1981 = vmatmul.mubr.f32.gmra.mrb[0].mxu0 %v1821
        %v1982 = vpop.f32.mrb[0].mxu0
        %v1983 = vadd.f32 %v1844, %v1982
        %v1984 = vpop.f32.mrb[0].mxu0
        %1985 = vmatprep.mubr.f32.mxu0 0.0
        %1986 = vmatmul.mubr.f32.gmra.mrb[0].mxu0 %v1822
        %v1987 = vpop.f32.mrb[0].mxu0
        %v1988 = vadd.f32 %v1844, %v1987
        %v1989 = vpop.f32.mrb[0].mxu0
        %1990 = vdwg.mxu0
        %v1991 = vmax.f32 %v1913, 0.0
        %v1992 = vmax.f32 %v1918, 0.0
        %v1993 = vmax.f32 %v1923, 0.0
        %v1994 = vmax.f32 %v1928, 0.0
        %v1995 = vmax.f32 %v1933, 0.0
        %v1996 = vmax.f32 %v1938, 0.0
        %v1997 = vmax.f32 %v1943, 0.0
        %v1998 = vmax.f32 %v1948, 0.0
        %v1999 = vmax.f32 %v1953, 0.0
        %v2000 = vmax.f32 %v1958, 0.0
        %v2001 = vmax.f32 %v1963, 0.0
        %v2002 = vmax.f32 %v1968, 0.0
        %v2003 = vmax.f32 %v1973, 0.0
        %v2004 = vmax.f32 %v1978, 0.0
        %v2005 = vmax.f32 %v1983, 0.0
        %v2006 = vmax.f32 %v1988, 0.0
        %v2007 = vld [vmem:[#allocation13] sm:$0xff]
        %v2008 = vld [vmem:[#allocation13 + $0x8] sm:$0xff]
        %v2009 = vld [vmem:[#allocation13 + $0x10] sm:$0xff]
        %v2010 = vld [vmem:[#allocation13 + $0x18] sm:$0xff]
        %v2011 = vld [vmem:[#allocation13 + $0x20] sm:$0xff]
        %v2012 = vld [vmem:[#allocation13 + $0x28] sm:$0xff]
        %v2013 = vld [vmem:[#allocation13 + $0x30] sm:$0xff]
        %v2014 = vld [vmem:[#allocation13 + $0x38] sm:$0xff]
        %v2015 = vld [vmem:[#allocation13 + $0x40] sm:$0xff]
        %v2016 = vld [vmem:[#allocation13 + $0x48] sm:$0xff]
        %v2017 = vld [vmem:[#allocation13 + $0x50] sm:$0xff]
        %v2018 = vld [vmem:[#allocation13 + $0x58] sm:$0xff]
        %v2019 = vld [vmem:[#allocation13 + $0x60] sm:$0xff]
        %v2020 = vld [vmem:[#allocation13 + $0x68] sm:$0xff]
        %v2021 = vld [vmem:[#allocation13 + $0x70] sm:$0xff]
        %v2022 = vld [vmem:[#allocation13 + $0x78] sm:$0xff]
        %v2023 = vld [vmem:[%s11] sm:$0x1]
        %v2025 = vlaneseq
        %v2026 = vshrl.u32 %v2025, 7
        %v2027 = vsub.s32 0, %v2026
        %v2028 = vrot.slane %v2023, %v2027
        %2030 = vmatprep.subr.mxu0 0.0
        %2031 = vmatpush1.msra.mxu0 %v2007
        %2032 = vmatprep.subr.mxu0 0.0
        %2033 = vmatpush1.msra.mxu0 %v2008
        %2034 = vmatprep.subr.mxu0 0.0
        %2035 = vmatpush1.msra.mxu0 %v2009
        %2036 = vmatprep.subr.mxu0 0.0
        %2037 = vmatpush1.msra.mxu0 %v2010
        %2038 = vmatprep.subr.mxu0 0.0
        %2039 = vmatpush1.msra.mxu0 %v2011
        %2040 = vmatprep.subr.mxu0 0.0
        %2041 = vmatpush1.msra.mxu0 %v2012
        %2042 = vmatprep.subr.mxu0 0.0
        %2043 = vmatpush1.msra.mxu0 %v2013
        %2044 = vmatprep.subr.mxu0 0.0
        %2045 = vmatpush1.msra.mxu0 %v2014
        %2046 = vmatprep.subr.mxu0 0.0
        %2047 = vmatpush1.msra.mxu0 %v2015
        %2048 = vmatprep.subr.mxu0 0.0
        %2049 = vmatpush1.msra.mxu0 %v2016
        %2050 = vmatprep.subr.mxu0 0.0
        %2051 = vmatpush1.msra.mxu0 %v2017
        %2052 = vmatprep.subr.mxu0 0.0
        %2053 = vmatpush1.msra.mxu0 %v2018
        %2054 = vmatprep.subr.mxu0 0.0
        %2055 = vmatpush1.msra.mxu0 %v2019
        %2056 = vmatprep.subr.mxu0 0.0
        %2057 = vmatpush1.msra.mxu0 %v2020
        %2058 = vmatprep.subr.mxu0 0.0
        %2059 = vmatpush1.msra.mxu0 %v2021
        %2060 = vmatprep.subr.mxu0 0.0
        %2061 = vmatpush1.msra.mxu0 %v2022
        %2062 = vmatprep.subr.mxu0 0.0
        %2063 = vmatpush1.msra.mxu0 0.0
        %2064 = vmatprep.subr.mxu0 0.0
        %2065 = vmatpush1.msra.mxu0 0.0
        %2066 = vmatprep.subr.mxu0 0.0
        %2067 = vmatpush1.msra.mxu0 0.0
        %2068 = vmatprep.subr.mxu0 0.0
        %2069 = vmatpush1.msra.mxu0 0.0
        %2070 = vmatprep.subr.mxu0 0.0
        %2071 = vmatpush1.msra.mxu0 0.0
        %2072 = vmatprep.subr.mxu0 0.0
        %2073 = vmatpush1.msra.mxu0 0.0
        %2074 = vmatprep.subr.mxu0 0.0
        %2075 = vmatpush1.msra.mxu0 0.0
        %2076 = vmatprep.subr.mxu0 0.0
        %2077 = vmatpush1.msra.mxu0 0.0
        %2078 = vmatprep.subr.mxu0 0.0
        %2079 = vmatpush1.msra.mxu0 0.0
        %2080 = vmatprep.subr.mxu0 0.0
        %2081 = vmatpush1.msra.mxu0 0.0
        %2082 = vmatprep.subr.mxu0 0.0
        %2083 = vmatpush1.msra.mxu0 0.0
        %2084 = vmatprep.subr.mxu0 0.0
        %2085 = vmatpush1.msra.mxu0 0.0
        %2086 = vmatprep.subr.mxu0 0.0
        %2087 = vmatpush1.msra.mxu0 0.0
        %2088 = vmatprep.subr.mxu0 0.0
        %2089 = vmatpush1.msra.mxu0 0.0
        %2090 = vmatprep.subr.mxu0 0.0
        %2091 = vmatpush1.msra.mxu0 0.0
        %2092 = vmatprep.subr.mxu0 0.0
        %2093 = vmatpush1.msra.mxu0 0.0
        %2094 = vmatprep.mubr.f32.mxu0 0.0
        %2095 = vmatmul.mubr.f32.gmra.mrb[0].mxu0 %v1991
        %v2096 = vpop.f32.mrb[0].mxu0
        %v2097 = vadd.f32 %v2028, %v2096
        %v2098 = vpop.f32.mrb[0].mxu0
        %2099 = vmatprep.mubr.f32.mxu0 0.0
        %2100 = vmatmul.mubr.f32.gmra.mrb[0].mxu0 %v1992
        %v2101 = vpop.f32.mrb[0].mxu0
        %v2102 = vadd.f32 %v2028, %v2101
        %v2103 = vpop.f32.mrb[0].mxu0
        %2104 = vmatprep.mubr.f32.mxu0 0.0
        %2105 = vmatmul.mubr.f32.gmra.mrb[0].mxu0 %v1993
        %v2106 = vpop.f32.mrb[0].mxu0
        %v2107 = vadd.f32 %v2028, %v2106
        %v2108 = vpop.f32.mrb[0].mxu0
        %2109 = vmatprep.mubr.f32.mxu0 0.0
        %2110 = vmatmul.mubr.f32.gmra.mrb[0].mxu0 %v1994
        %v2111 = vpop.f32.mrb[0].mxu0
        %v2112 = vadd.f32 %v2028, %v2111
        %v2113 = vpop.f32.mrb[0].mxu0
        %2114 = vmatprep.mubr.f32.mxu0 0.0
        %2115 = vmatmul.mubr.f32.gmra.mrb[0].mxu0 %v1995
        %v2116 = vpop.f32.mrb[0].mxu0
        %v2117 = vadd.f32 %v2028, %v2116
        %v2118 = vpop.f32.mrb[0].mxu0
        %2119 = vmatprep.mubr.f32.mxu0 0.0
        %2120 = vmatmul.mubr.f32.gmra.mrb[0].mxu0 %v1996
        %v2121 = vpop.f32.mrb[0].mxu0
        %v2122 = vadd.f32 %v2028, %v2121
        %v2123 = vpop.f32.mrb[0].mxu0
        %2124 = vmatprep.mubr.f32.mxu0 0.0
        %2125 = vmatmul.mubr.f32.gmra.mrb[0].mxu0 %v1997
        %v2126 = vpop.f32.mrb[0].mxu0
        %v2127 = vadd.f32 %v2028, %v2126
        %v2128 = vpop.f32.mrb[0].mxu0
        %2129 = vmatprep.mubr.f32.mxu0 0.0
        %2130 = vmatmul.mubr.f32.gmra.mrb[0].mxu0 %v1998
        %v2131 = vpop.f32.mrb[0].mxu0
        %v2132 = vadd.f32 %v2028, %v2131
        %v2133 = vpop.f32.mrb[0].mxu0
        %2134 = vmatprep.mubr.f32.mxu0 0.0
        %2135 = vmatmul.mubr.f32.gmra.mrb[0].mxu0 %v1999
        %v2136 = vpop.f32.mrb[0].mxu0
        %v2137 = vadd.f32 %v2028, %v2136
        %v2138 = vpop.f32.mrb[0].mxu0
        %2139 = vmatprep.mubr.f32.mxu0 0.0
        %2140 = vmatmul.mubr.f32.gmra.mrb[0].mxu0 %v2000
        %v2141 = vpop.f32.mrb[0].mxu0
        %v2142 = vadd.f32 %v2028, %v2141
        %v2143 = vpop.f32.mrb[0].mxu0
        %2144 = vmatprep.mubr.f32.mxu0 0.0
        %2145 = vmatmul.mubr.f32.gmra.mrb[0].mxu0 %v2001
        %v2146 = vpop.f32.mrb[0].mxu0
        %v2147 = vadd.f32 %v2028, %v2146
        %v2148 = vpop.f32.mrb[0].mxu0
        %2149 = vmatprep.mubr.f32.mxu0 0.0
        %2150 = vmatmul.mubr.f32.gmra.mrb[0].mxu0 %v2002
        %v2151 = vpop.f32.mrb[0].mxu0
        %v2152 = vadd.f32 %v2028, %v2151
        %v2153 = vpop.f32.mrb[0].mxu0
        %2154 = vmatprep.mubr.f32.mxu0 0.0
        %2155 = vmatmul.mubr.f32.gmra.mrb[0].mxu0 %v2003
        %v2156 = vpop.f32.mrb[0].mxu0
        %v2157 = vadd.f32 %v2028, %v2156
        %v2158 = vpop.f32.mrb[0].mxu0
        %2159 = vmatprep.mubr.f32.mxu0 0.0
        %2160 = vmatmul.mubr.f32.gmra.mrb[0].mxu0 %v2004
        %v2161 = vpop.f32.mrb[0].mxu0
        %v2162 = vadd.f32 %v2028, %v2161
        %v2163 = vpop.f32.mrb[0].mxu0
        %2164 = vmatprep.mubr.f32.mxu0 0.0
        %2165 = vmatmul.mubr.f32.gmra.mrb[0].mxu0 %v2005
        %v2166 = vpop.f32.mrb[0].mxu0
        %v2167 = vadd.f32 %v2028, %v2166
        %v2168 = vpop.f32.mrb[0].mxu0
        %2169 = vmatprep.mubr.f32.mxu0 0.0
        %2170 = vmatmul.mubr.f32.gmra.mrb[0].mxu0 %v2006
        %v2171 = vpop.f32.mrb[0].mxu0
        %v2172 = vadd.f32 %v2028, %v2171
        %v2173 = vpop.f32.mrb[0].mxu0
        %2174 = vdwg.mxu0
        %v2175 = vmax.f32 %v2097, 0.0
        %v2176 = vmax.f32 %v2102, 0.0
        %v2177 = vmax.f32 %v2107, 0.0
        %v2178 = vmax.f32 %v2112, 0.0
        %v2179 = vmax.f32 %v2117, 0.0
        %v2180 = vmax.f32 %v2122, 0.0
        %v2181 = vmax.f32 %v2127, 0.0
        %v2182 = vmax.f32 %v2132, 0.0
        %v2183 = vmax.f32 %v2137, 0.0
        %v2184 = vmax.f32 %v2142, 0.0
        %v2185 = vmax.f32 %v2147, 0.0
        %v2186 = vmax.f32 %v2152, 0.0
        %v2187 = vmax.f32 %v2157, 0.0
        %v2188 = vmax.f32 %v2162, 0.0
        %v2189 = vmax.f32 %v2167, 0.0
        %v2190 = vmax.f32 %v2172, 0.0
        %v2191 = vld [vmem:[#allocation14] sm:$0xff]
        %v2192 = vld [vmem:[#allocation14 + $0x8] sm:$0xff]
        %v2193 = vld [vmem:[#allocation14 + $0x10] sm:$0xff]
        %v2194 = vld [vmem:[#allocation14 + $0x18] sm:$0xff]
        %v2195 = vld [vmem:[#allocation14 + $0x20] sm:$0xff]
        %v2196 = vld [vmem:[#allocation14 + $0x28] sm:$0xff]
        %v2197 = vld [vmem:[#allocation14 + $0x30] sm:$0xff]
        %v2198 = vld [vmem:[#allocation14 + $0x38] sm:$0xff]
        %v2199 = vld [vmem:[#allocation14 + $0x40] sm:$0xff]
        %v2200 = vld [vmem:[#allocation14 + $0x48] sm:$0xff]
        %v2201 = vld [vmem:[#allocation14 + $0x50] sm:$0xff]
        %v2202 = vld [vmem:[#allocation14 + $0x58] sm:$0xff]
        %v2203 = vld [vmem:[#allocation14 + $0x60] sm:$0xff]
        %v2204 = vld [vmem:[#allocation14 + $0x68] sm:$0xff]
        %v2205 = vld [vmem:[#allocation14 + $0x70] sm:$0xff]
        %v2206 = vld [vmem:[#allocation14 + $0x78] sm:$0xff]
        %v2207 = vld [vmem:[#allocation14 + $0x80] sm:$0xff]
        %v2208 = vld [vmem:[#allocation14 + $0x88] sm:$0xff]
        %v2209 = vld [vmem:[#allocation14 + $0x90] sm:$0xff]
        %v2210 = vld [vmem:[#allocation14 + $0x98] sm:$0xff]
        %v2211 = vld [vmem:[#allocation14 + $0xa0] sm:$0xff]
        %v2212 = vld [vmem:[#allocation14 + $0xa8] sm:$0xff]
        %v2213 = vld [vmem:[#allocation14 + $0xb0] sm:$0xff]
        %v2214 = vld [vmem:[#allocation14 + $0xb8] sm:$0xff]
        %v2215 = vld [vmem:[#allocation14 + $0xc0] sm:$0xff]
        %v2216 = vld [vmem:[#allocation14 + $0xc8] sm:$0xff]
        %v2217 = vld [vmem:[#allocation14 + $0xd0] sm:$0xff]
        %v2218 = vld [vmem:[#allocation14 + $0xd8] sm:$0xff]
        %v2219 = vld [vmem:[#allocation14 + $0xe0] sm:$0xff]
        %v2220 = vld [vmem:[#allocation14 + $0xe8] sm:$0xff]
        %v2221 = vld [vmem:[#allocation14 + $0xf0] sm:$0xff]
        %v2222 = vld [vmem:[#allocation14 + $0xf8] sm:$0xff]
        %v2223 = vld [vmem:[#allocation14 + $0x100] sm:$0xff]
        %v2224 = vld [vmem:[#allocation14 + $0x108] sm:$0xff]
        %v2225 = vld [vmem:[#allocation14 + $0x110] sm:$0xff]
        %v2226 = vld [vmem:[#allocation14 + $0x118] sm:$0xff]
        %v2227 = vld [vmem:[#allocation14 + $0x120] sm:$0xff]
        %v2228 = vld [vmem:[#allocation14 + $0x128] sm:$0xff]
        %v2229 = vld [vmem:[#allocation14 + $0x130] sm:$0xff]
        %v2230 = vld [vmem:[#allocation14 + $0x138] sm:$0xff]
        %v2231 = vld [vmem:[#allocation14 + $0x140] sm:$0xff]
        %v2232 = vld [vmem:[#allocation14 + $0x148] sm:$0xff]
        %v2233 = vld [vmem:[#allocation14 + $0x150] sm:$0xff]
        %v2234 = vld [vmem:[#allocation14 + $0x158] sm:$0xff]
        %v2235 = vld [vmem:[#allocation14 + $0x160] sm:$0xff]
        %v2236 = vld [vmem:[#allocation14 + $0x168] sm:$0xff]
        %v2237 = vld [vmem:[#allocation14 + $0x170] sm:$0xff]
        %v2238 = vld [vmem:[#allocation14 + $0x178] sm:$0xff]
        %v2239 = vld [vmem:[#allocation14 + $0x180] sm:$0xff]
        %v2240 = vld [vmem:[#allocation14 + $0x188] sm:$0xff]
        %v2241 = vld [vmem:[#allocation14 + $0x190] sm:$0xff]
        %v2242 = vld [vmem:[#allocation14 + $0x198] sm:$0xff]
        %v2243 = vld [vmem:[#allocation14 + $0x1a0] sm:$0xff]
        %v2244 = vld [vmem:[#allocation14 + $0x1a8] sm:$0xff]
        %v2245 = vld [vmem:[#allocation14 + $0x1b0] sm:$0xff]
        %v2246 = vld [vmem:[#allocation14 + $0x1b8] sm:$0xff]
        %v2247 = vld [vmem:[#allocation14 + $0x1c0] sm:$0xff]
        %v2248 = vld [vmem:[#allocation14 + $0x1c8] sm:$0xff]
        %v2249 = vld [vmem:[#allocation14 + $0x1d0] sm:$0xff]
        %v2250 = vld [vmem:[#allocation14 + $0x1d8] sm:$0xff]
        %v2251 = vld [vmem:[#allocation14 + $0x1e0] sm:$0xff]
        %v2252 = vld [vmem:[#allocation14 + $0x1e8] sm:$0xff]
        %v2253 = vld [vmem:[#allocation14 + $0x1f0] sm:$0xff]
        %v2254 = vld [vmem:[#allocation14 + $0x1f8] sm:$0xff]
        %v2255 = vld [vmem:[#allocation14 + $0x200] sm:$0xff]
        %v2256 = vld [vmem:[#allocation14 + $0x208] sm:$0xff]
        %v2257 = vld [vmem:[#allocation14 + $0x210] sm:$0xff]
        %v2258 = vld [vmem:[#allocation14 + $0x218] sm:$0xff]
        %v2259 = vld [vmem:[#allocation14 + $0x220] sm:$0xff]
        %v2260 = vld [vmem:[#allocation14 + $0x228] sm:$0xff]
        %v2261 = vld [vmem:[#allocation14 + $0x230] sm:$0xff]
        %v2262 = vld [vmem:[#allocation14 + $0x238] sm:$0xff]
        %v2263 = vld [vmem:[#allocation14 + $0x240] sm:$0xff]
        %v2264 = vld [vmem:[#allocation14 + $0x248] sm:$0xff]
        %v2265 = vld [vmem:[#allocation14 + $0x250] sm:$0xff]
        %v2266 = vld [vmem:[#allocation14 + $0x258] sm:$0xff]
        %v2267 = vld [vmem:[#allocation14 + $0x260] sm:$0xff]
        %v2268 = vld [vmem:[#allocation14 + $0x268] sm:$0xff]
        %v2269 = vld [vmem:[#allocation14 + $0x270] sm:$0xff]
        %v2270 = vld [vmem:[#allocation14 + $0x278] sm:$0xff]
        %v2271 = vld [vmem:[#allocation14 + $0x280] sm:$0xff]
        %v2272 = vld [vmem:[#allocation14 + $0x288] sm:$0xff]
        %v2273 = vld [vmem:[#allocation14 + $0x290] sm:$0xff]
        %v2274 = vld [vmem:[#allocation14 + $0x298] sm:$0xff]
        %v2275 = vld [vmem:[#allocation14 + $0x2a0] sm:$0xff]
        %v2276 = vld [vmem:[#allocation14 + $0x2a8] sm:$0xff]
        %v2277 = vld [vmem:[#allocation14 + $0x2b0] sm:$0xff]
        %v2278 = vld [vmem:[#allocation14 + $0x2b8] sm:$0xff]
        %v2279 = vld [vmem:[#allocation14 + $0x2c0] sm:$0xff]
        %v2280 = vld [vmem:[#allocation14 + $0x2c8] sm:$0xff]
        %v2281 = vld [vmem:[#allocation14 + $0x2d0] sm:$0xff]
        %v2282 = vld [vmem:[#allocation14 + $0x2d8] sm:$0xff]
        %v2283 = vld [vmem:[#allocation14 + $0x2e0] sm:$0xff]
        %v2284 = vld [vmem:[#allocation14 + $0x2e8] sm:$0xff]
        %v2285 = vld [vmem:[#allocation14 + $0x2f0] sm:$0xff]
        %v2286 = vld [vmem:[#allocation14 + $0x2f8] sm:$0xff]
        %v2287 = vld [vmem:[%s13] sm:$0x3f]
        %v2289 = vlaneseq
        %v2290 = vshrl.u32 %v2289, 7
        %v2291 = vsub.s32 0, %v2290
        %v2292 = vrot.slane %v2287, %v2291
        %v2293 = vlaneseq
        %v2294 = vshrl.u32 %v2293, 7
        %v2295 = vsub.s32 1, %v2294
        %v2296 = vrot.slane %v2287, %v2295
        %v2297 = vlaneseq
        %v2298 = vshrl.u32 %v2297, 7
        %v2299 = vsub.s32 2, %v2298
        %v2300 = vrot.slane %v2287, %v2299
        %v2301 = vlaneseq
        %v2302 = vshrl.u32 %v2301, 7
        %v2303 = vsub.s32 3, %v2302
        %v2304 = vrot.slane %v2287, %v2303
        %v2305 = vlaneseq
        %v2306 = vshrl.u32 %v2305, 7
        %v2307 = vsub.s32 4, %v2306
        %v2308 = vrot.slane %v2287, %v2307
        %v2309 = vlaneseq
        %v2310 = vshrl.u32 %v2309, 7
        %v2311 = vsub.s32 5, %v2310
        %v2312 = vrot.slane %v2287, %v2311
        %2319 = vmatprep.subr.mxu0 %v2192
        %2320 = vmatpush1.msra.mxu0 %v2191
        %2321 = vmatprep.subr.mxu0 %v2198
        %2322 = vmatpush1.msra.mxu0 %v2197
        %2323 = vmatprep.subr.mxu0 %v2204
        %2324 = vmatpush1.msra.mxu0 %v2203
        %2325 = vmatprep.subr.mxu0 %v2210
        %2326 = vmatpush1.msra.mxu0 %v2209
        %2327 = vmatprep.subr.mxu0 %v2216
        %2328 = vmatpush1.msra.mxu0 %v2215
        %2329 = vmatprep.subr.mxu0 %v2222
        %2330 = vmatpush1.msra.mxu0 %v2221
        %2331 = vmatprep.subr.mxu0 %v2228
        %2332 = vmatpush1.msra.mxu0 %v2227
        %2333 = vmatprep.subr.mxu0 %v2234
        %2334 = vmatpush1.msra.mxu0 %v2233
        %2335 = vmatprep.subr.mxu0 %v2240
        %2336 = vmatpush1.msra.mxu0 %v2239
        %2337 = vmatprep.subr.mxu0 %v2246
        %2338 = vmatpush1.msra.mxu0 %v2245
        %2339 = vmatprep.subr.mxu0 %v2252
        %2340 = vmatpush1.msra.mxu0 %v2251
        %2341 = vmatprep.subr.mxu0 %v2258
        %2342 = vmatpush1.msra.mxu0 %v2257
        %2343 = vmatprep.subr.mxu0 %v2264
        %2344 = vmatpush1.msra.mxu0 %v2263
        %2345 = vmatprep.subr.mxu0 %v2270
        %2346 = vmatpush1.msra.mxu0 %v2269
        %2347 = vmatprep.subr.mxu0 %v2276
        %2348 = vmatpush1.msra.mxu0 %v2275
        %2349 = vmatprep.subr.mxu0 %v2282
        %2350 = vmatpush1.msra.mxu0 %v2281
        %2351 = vmatprep.subr.mxu0 0.0
        %2352 = vmatpush1.msra.mxu0 0.0
        %2353 = vmatprep.subr.mxu0 0.0
        %2354 = vmatpush1.msra.mxu0 0.0
        %2355 = vmatprep.subr.mxu0 0.0
        %2356 = vmatpush1.msra.mxu0 0.0
        %2357 = vmatprep.subr.mxu0 0.0
        %2358 = vmatpush1.msra.mxu0 0.0
        %2359 = vmatprep.subr.mxu0 0.0
        %2360 = vmatpush1.msra.mxu0 0.0
        %2361 = vmatprep.subr.mxu0 0.0
        %2362 = vmatpush1.msra.mxu0 0.0
        %2363 = vmatprep.subr.mxu0 0.0
        %2364 = vmatpush1.msra.mxu0 0.0
        %2365 = vmatprep.subr.mxu0 0.0
        %2366 = vmatpush1.msra.mxu0 0.0
        %2367 = vmatprep.subr.mxu0 0.0
        %2368 = vmatpush1.msra.mxu0 0.0
        %2369 = vmatprep.subr.mxu0 0.0
        %2370 = vmatpush1.msra.mxu0 0.0
        %2371 = vmatprep.subr.mxu0 0.0
        %2372 = vmatpush1.msra.mxu0 0.0
        %2373 = vmatprep.subr.mxu0 0.0
        %2374 = vmatpush1.msra.mxu0 0.0
        %2375 = vmatprep.subr.mxu0 0.0
        %2376 = vmatpush1.msra.mxu0 0.0
        %2377 = vmatprep.subr.mxu0 0.0
        %2378 = vmatpush1.msra.mxu0 0.0
        %2379 = vmatprep.subr.mxu0 0.0
        %2380 = vmatpush1.msra.mxu0 0.0
        %2381 = vmatprep.subr.mxu0 0.0
        %2382 = vmatpush1.msra.mxu0 0.0
        %2383 = vmatprep.mubr.f32.mxu0 0.0
        %2384 = vmatmul.mubr.f32.gmra.mrb[0].mxu0 %v2175
        %v2385 = vpop.f32.mrb[0].mxu0
        %v2386 = vadd.f32 %v2292, %v2385
        %v2387 = vpop.f32.mrb[0].mxu0
        %v2388 = vadd.f32 %v2296, %v2387
        %2389 = vmatprep.mubr.f32.mxu0 0.0
        %2390 = vmatmul.mubr.f32.gmra.mrb[0].mxu0 %v2176
        %v2391 = vpop.f32.mrb[0].mxu0
        %v2392 = vadd.f32 %v2292, %v2391
        %v2393 = vpop.f32.mrb[0].mxu0
        %v2394 = vadd.f32 %v2296, %v2393
        %2395 = vmatprep.mubr.f32.mxu0 0.0
        %2396 = vmatmul.mubr.f32.gmra.mrb[0].mxu0 %v2177
        %v2397 = vpop.f32.mrb[0].mxu0
        %v2398 = vadd.f32 %v2292, %v2397
        %v2399 = vpop.f32.mrb[0].mxu0
        %v2400 = vadd.f32 %v2296, %v2399
        %2401 = vmatprep.mubr.f32.mxu0 0.0
        %2402 = vmatmul.mubr.f32.gmra.mrb[0].mxu0 %v2178
        %v2403 = vpop.f32.mrb[0].mxu0
        %v2404 = vadd.f32 %v2292, %v2403
        %v2405 = vpop.f32.mrb[0].mxu0
        %v2406 = vadd.f32 %v2296, %v2405
        %2407 = vmatprep.mubr.f32.mxu0 0.0
        %2408 = vmatmul.mubr.f32.gmra.mrb[0].mxu0 %v2179
        %v2409 = vpop.f32.mrb[0].mxu0
        %v2410 = vadd.f32 %v2292, %v2409
        %v2411 = vpop.f32.mrb[0].mxu0
        %v2412 = vadd.f32 %v2296, %v2411
        %2413 = vmatprep.mubr.f32.mxu0 0.0
        %2414 = vmatmul.mubr.f32.gmra.mrb[0].mxu0 %v2180
        %v2415 = vpop.f32.mrb[0].mxu0
        %v2416 = vadd.f32 %v2292, %v2415
        %v2417 = vpop.f32.mrb[0].mxu0
        %v2418 = vadd.f32 %v2296, %v2417
        %2419 = vmatprep.mubr.f32.mxu0 0.0
        %2420 = vmatmul.mubr.f32.gmra.mrb[0].mxu0 %v2181
        %v2421 = vpop.f32.mrb[0].mxu0
        %v2422 = vadd.f32 %v2292, %v2421
        %v2423 = vpop.f32.mrb[0].mxu0
        %v2424 = vadd.f32 %v2296, %v2423
        %2425 = vmatprep.mubr.f32.mxu0 0.0
        %2426 = vmatmul.mubr.f32.gmra.mrb[0].mxu0 %v2182
        %v2427 = vpop.f32.mrb[0].mxu0
        %v2428 = vadd.f32 %v2292, %v2427
        %v2429 = vpop.f32.mrb[0].mxu0
        %v2430 = vadd.f32 %v2296, %v2429
        %2431 = vmatprep.mubr.f32.mxu0 0.0
        %2432 = vmatmul.mubr.f32.gmra.mrb[0].mxu0 %v2183
        %v2433 = vpop.f32.mrb[0].mxu0
        %v2434 = vadd.f32 %v2292, %v2433
        %v2435 = vpop.f32.mrb[0].mxu0
        %v2436 = vadd.f32 %v2296, %v2435
        %2437 = vmatprep.mubr.f32.mxu0 0.0
        %2438 = vmatmul.mubr.f32.gmra.mrb[0].mxu0 %v2184
        %v2439 = vpop.f32.mrb[0].mxu0
        %v2440 = vadd.f32 %v2292, %v2439
        %v2441 = vpop.f32.mrb[0].mxu0
        %v2442 = vadd.f32 %v2296, %v2441
        %2443 = vmatprep.mubr.f32.mxu0 0.0
        %2444 = vmatmul.mubr.f32.gmra.mrb[0].mxu0 %v2185
        %v2445 = vpop.f32.mrb[0].mxu0
        %v2446 = vadd.f32 %v2292, %v2445
        %v2447 = vpop.f32.mrb[0].mxu0
        %v2448 = vadd.f32 %v2296, %v2447
        %2449 = vmatprep.mubr.f32.mxu0 0.0
        %2450 = vmatmul.mubr.f32.gmra.mrb[0].mxu0 %v2186
        %v2451 = vpop.f32.mrb[0].mxu0
        %v2452 = vadd.f32 %v2292, %v2451
        %v2453 = vpop.f32.mrb[0].mxu0
        %v2454 = vadd.f32 %v2296, %v2453
        %2455 = vmatprep.mubr.f32.mxu0 0.0
        %2456 = vmatmul.mubr.f32.gmra.mrb[0].mxu0 %v2187
        %v2457 = vpop.f32.mrb[0].mxu0
        %v2458 = vadd.f32 %v2292, %v2457
        %v2459 = vpop.f32.mrb[0].mxu0
        %v2460 = vadd.f32 %v2296, %v2459
        %2461 = vmatprep.mubr.f32.mxu0 0.0
        %2462 = vmatmul.mubr.f32.gmra.mrb[0].mxu0 %v2188
        %v2463 = vpop.f32.mrb[0].mxu0
        %v2464 = vadd.f32 %v2292, %v2463
        %v2465 = vpop.f32.mrb[0].mxu0
        %v2466 = vadd.f32 %v2296, %v2465
        %2467 = vmatprep.mubr.f32.mxu0 0.0
        %2468 = vmatmul.mubr.f32.gmra.mrb[0].mxu0 %v2189
        %v2469 = vpop.f32.mrb[0].mxu0
        %v2470 = vadd.f32 %v2292, %v2469
        %v2471 = vpop.f32.mrb[0].mxu0
        %v2472 = vadd.f32 %v2296, %v2471
        %2473 = vmatprep.mubr.f32.mxu0 0.0
        %2474 = vmatmul.mubr.f32.gmra.mrb[0].mxu0 %v2190
        %v2475 = vpop.f32.mrb[0].mxu0
        %v2476 = vadd.f32 %v2292, %v2475
        %v2477 = vpop.f32.mrb[0].mxu0
        %v2478 = vadd.f32 %v2296, %v2477
        %2479 = vdwg.mxu0
        %2480 = vmatprep.subr.mxu0 %v2194
        %2481 = vmatpush1.msra.mxu0 %v2193
        %2482 = vmatprep.subr.mxu0 %v2200
        %2483 = vmatpush1.msra.mxu0 %v2199
        %2484 = vmatprep.subr.mxu0 %v2206
        %2485 = vmatpush1.msra.mxu0 %v2205
        %2486 = vmatprep.subr.mxu0 %v2212
        %2487 = vmatpush1.msra.mxu0 %v2211
        %2488 = vmatprep.subr.mxu0 %v2218
        %2489 = vmatpush1.msra.mxu0 %v2217
        %2490 = vmatprep.subr.mxu0 %v2224
        %2491 = vmatpush1.msra.mxu0 %v2223
        %2492 = vmatprep.subr.mxu0 %v2230
        %2493 = vmatpush1.msra.mxu0 %v2229
        %2494 = vmatprep.subr.mxu0 %v2236
        %2495 = vmatpush1.msra.mxu0 %v2235
        %2496 = vmatprep.subr.mxu0 %v2242
        %2497 = vmatpush1.msra.mxu0 %v2241
        %2498 = vmatprep.subr.mxu0 %v2248
        %2499 = vmatpush1.msra.mxu0 %v2247
        %2500 = vmatprep.subr.mxu0 %v2254
        %2501 = vmatpush1.msra.mxu0 %v2253
        %2502 = vmatprep.subr.mxu0 %v2260
        %2503 = vmatpush1.msra.mxu0 %v2259
        %2504 = vmatprep.subr.mxu0 %v2266
        %2505 = vmatpush1.msra.mxu0 %v2265
        %2506 = vmatprep.subr.mxu0 %v2272
        %2507 = vmatpush1.msra.mxu0 %v2271
        %2508 = vmatprep.subr.mxu0 %v2278
        %2509 = vmatpush1.msra.mxu0 %v2277
        %2510 = vmatprep.subr.mxu0 %v2284
        %2511 = vmatpush1.msra.mxu0 %v2283
        %2512 = vmatprep.subr.mxu0 0.0
        %2513 = vmatpush1.msra.mxu0 0.0
        %2514 = vmatprep.subr.mxu0 0.0
        %2515 = vmatpush1.msra.mxu0 0.0
        %2516 = vmatprep.subr.mxu0 0.0
        %2517 = vmatpush1.msra.mxu0 0.0
        %2518 = vmatprep.subr.mxu0 0.0
        %2519 = vmatpush1.msra.mxu0 0.0
        %2520 = vmatprep.subr.mxu0 0.0
        %2521 = vmatpush1.msra.mxu0 0.0
        %2522 = vmatprep.subr.mxu0 0.0
        %2523 = vmatpush1.msra.mxu0 0.0
        %2524 = vmatprep.subr.mxu0 0.0
        %2525 = vmatpush1.msra.mxu0 0.0
        %2526 = vmatprep.subr.mxu0 0.0
        %2527 = vmatpush1.msra.mxu0 0.0
        %2528 = vmatprep.subr.mxu0 0.0
        %2529 = vmatpush1.msra.mxu0 0.0
        %2530 = vmatprep.subr.mxu0 0.0
        %2531 = vmatpush1.msra.mxu0 0.0
        %2532 = vmatprep.subr.mxu0 0.0
        %2533 = vmatpush1.msra.mxu0 0.0
        %2534 = vmatprep.subr.mxu0 0.0
        %2535 = vmatpush1.msra.mxu0 0.0
        %2536 = vmatprep.subr.mxu0 0.0
        %2537 = vmatpush1.msra.mxu0 0.0
        %2538 = vmatprep.subr.mxu0 0.0
        %2539 = vmatpush1.msra.mxu0 0.0
        %2540 = vmatprep.subr.mxu0 0.0
        %2541 = vmatpush1.msra.mxu0 0.0
        %2542 = vmatprep.subr.mxu0 0.0
        %2543 = vmatpush1.msra.mxu0 0.0
        %2544 = vmatprep.mubr.f32.mxu0 0.0
        %2545 = vmatmul.mubr.f32.gmra.mrb[0].mxu0 %v2175
        %v2546 = vpop.f32.mrb[0].mxu0
        %v2547 = vadd.f32 %v2300, %v2546
        %v2548 = vpop.f32.mrb[0].mxu0
        %v2549 = vadd.f32 %v2304, %v2548
        %2550 = vmatprep.mubr.f32.mxu0 0.0
        %2551 = vmatmul.mubr.f32.gmra.mrb[0].mxu0 %v2176
        %v2552 = vpop.f32.mrb[0].mxu0
        %v2553 = vadd.f32 %v2300, %v2552
        %v2554 = vpop.f32.mrb[0].mxu0
        %v2555 = vadd.f32 %v2304, %v2554
        %2556 = vmatprep.mubr.f32.mxu0 0.0
        %2557 = vmatmul.mubr.f32.gmra.mrb[0].mxu0 %v2177
        %v2558 = vpop.f32.mrb[0].mxu0
        %v2559 = vadd.f32 %v2300, %v2558
        %v2560 = vpop.f32.mrb[0].mxu0
        %v2561 = vadd.f32 %v2304, %v2560
        %2562 = vmatprep.mubr.f32.mxu0 0.0
        %2563 = vmatmul.mubr.f32.gmra.mrb[0].mxu0 %v2178
        %v2564 = vpop.f32.mrb[0].mxu0
        %v2565 = vadd.f32 %v2300, %v2564
        %v2566 = vpop.f32.mrb[0].mxu0
        %v2567 = vadd.f32 %v2304, %v2566
        %2568 = vmatprep.mubr.f32.mxu0 0.0
        %2569 = vmatmul.mubr.f32.gmra.mrb[0].mxu0 %v2179
        %v2570 = vpop.f32.mrb[0].mxu0
        %v2571 = vadd.f32 %v2300, %v2570
        %v2572 = vpop.f32.mrb[0].mxu0
        %v2573 = vadd.f32 %v2304, %v2572
        %2574 = vmatprep.mubr.f32.mxu0 0.0
        %2575 = vmatmul.mubr.f32.gmra.mrb[0].mxu0 %v2180
        %v2576 = vpop.f32.mrb[0].mxu0
        %v2577 = vadd.f32 %v2300, %v2576
        %v2578 = vpop.f32.mrb[0].mxu0
        %v2579 = vadd.f32 %v2304, %v2578
        %2580 = vmatprep.mubr.f32.mxu0 0.0
        %2581 = vmatmul.mubr.f32.gmra.mrb[0].mxu0 %v2181
        %v2582 = vpop.f32.mrb[0].mxu0
        %v2583 = vadd.f32 %v2300, %v2582
        %v2584 = vpop.f32.mrb[0].mxu0
        %v2585 = vadd.f32 %v2304, %v2584
        %2586 = vmatprep.mubr.f32.mxu0 0.0
        %2587 = vmatmul.mubr.f32.gmra.mrb[0].mxu0 %v2182
        %v2588 = vpop.f32.mrb[0].mxu0
        %v2589 = vadd.f32 %v2300, %v2588
        %v2590 = vpop.f32.mrb[0].mxu0
        %v2591 = vadd.f32 %v2304, %v2590
        %2592 = vmatprep.mubr.f32.mxu0 0.0
        %2593 = vmatmul.mubr.f32.gmra.mrb[0].mxu0 %v2183
        %v2594 = vpop.f32.mrb[0].mxu0
        %v2595 = vadd.f32 %v2300, %v2594
        %v2596 = vpop.f32.mrb[0].mxu0
        %v2597 = vadd.f32 %v2304, %v2596
        %2598 = vmatprep.mubr.f32.mxu0 0.0
        %2599 = vmatmul.mubr.f32.gmra.mrb[0].mxu0 %v2184
        %v2600 = vpop.f32.mrb[0].mxu0
        %v2601 = vadd.f32 %v2300, %v2600
        %v2602 = vpop.f32.mrb[0].mxu0
        %v2603 = vadd.f32 %v2304, %v2602
        %2604 = vmatprep.mubr.f32.mxu0 0.0
        %2605 = vmatmul.mubr.f32.gmra.mrb[0].mxu0 %v2185
        %v2606 = vpop.f32.mrb[0].mxu0
        %v2607 = vadd.f32 %v2300, %v2606
        %v2608 = vpop.f32.mrb[0].mxu0
        %v2609 = vadd.f32 %v2304, %v2608
        %2610 = vmatprep.mubr.f32.mxu0 0.0
        %2611 = vmatmul.mubr.f32.gmra.mrb[0].mxu0 %v2186
        %v2612 = vpop.f32.mrb[0].mxu0
        %v2613 = vadd.f32 %v2300, %v2612
        %v2614 = vpop.f32.mrb[0].mxu0
        %v2615 = vadd.f32 %v2304, %v2614
        %2616 = vmatprep.mubr.f32.mxu0 0.0
        %2617 = vmatmul.mubr.f32.gmra.mrb[0].mxu0 %v2187
        %v2618 = vpop.f32.mrb[0].mxu0
        %v2619 = vadd.f32 %v2300, %v2618
        %v2620 = vpop.f32.mrb[0].mxu0
        %v2621 = vadd.f32 %v2304, %v2620
        %2622 = vmatprep.mubr.f32.mxu0 0.0
        %2623 = vmatmul.mubr.f32.gmra.mrb[0].mxu0 %v2188
        %v2624 = vpop.f32.mrb[0].mxu0
        %v2625 = vadd.f32 %v2300, %v2624
        %v2626 = vpop.f32.mrb[0].mxu0
        %v2627 = vadd.f32 %v2304, %v2626
        %2628 = vmatprep.mubr.f32.mxu0 0.0
        %2629 = vmatmul.mubr.f32.gmra.mrb[0].mxu0 %v2189
        %v2630 = vpop.f32.mrb[0].mxu0
        %v2631 = vadd.f32 %v2300, %v2630
        %v2632 = vpop.f32.mrb[0].mxu0
        %v2633 = vadd.f32 %v2304, %v2632
        %2634 = vmatprep.mubr.f32.mxu0 0.0
        %2635 = vmatmul.mubr.f32.gmra.mrb[0].mxu0 %v2190
        %v2636 = vpop.f32.mrb[0].mxu0
        %v2637 = vadd.f32 %v2300, %v2636
        %v2638 = vpop.f32.mrb[0].mxu0
        %v2639 = vadd.f32 %v2304, %v2638
        %2640 = vdwg.mxu0
        %2641 = vmatprep.subr.mxu0 %v2196
        %2642 = vmatpush1.msra.mxu0 %v2195
        %2643 = vmatprep.subr.mxu0 %v2202
        %2644 = vmatpush1.msra.mxu0 %v2201
        %2645 = vmatprep.subr.mxu0 %v2208
        %2646 = vmatpush1.msra.mxu0 %v2207
        %2647 = vmatprep.subr.mxu0 %v2214
        %2648 = vmatpush1.msra.mxu0 %v2213
        %2649 = vmatprep.subr.mxu0 %v2220
        %2650 = vmatpush1.msra.mxu0 %v2219
        %2651 = vmatprep.subr.mxu0 %v2226
        %2652 = vmatpush1.msra.mxu0 %v2225
        %2653 = vmatprep.subr.mxu0 %v2232
        %2654 = vmatpush1.msra.mxu0 %v2231
        %2655 = vmatprep.subr.mxu0 %v2238
        %2656 = vmatpush1.msra.mxu0 %v2237
        %2657 = vmatprep.subr.mxu0 %v2244
        %2658 = vmatpush1.msra.mxu0 %v2243
        %2659 = vmatprep.subr.mxu0 %v2250
        %2660 = vmatpush1.msra.mxu0 %v2249
        %2661 = vmatprep.subr.mxu0 %v2256
        %2662 = vmatpush1.msra.mxu0 %v2255
        %2663 = vmatprep.subr.mxu0 %v2262
        %2664 = vmatpush1.msra.mxu0 %v2261
        %2665 = vmatprep.subr.mxu0 %v2268
        %2666 = vmatpush1.msra.mxu0 %v2267
        %2667 = vmatprep.subr.mxu0 %v2274
        %2668 = vmatpush1.msra.mxu0 %v2273
        %2669 = vmatprep.subr.mxu0 %v2280
        %2670 = vmatpush1.msra.mxu0 %v2279
        %2671 = vmatprep.subr.mxu0 %v2286
        %2672 = vmatpush1.msra.mxu0 %v2285
        %2673 = vmatprep.subr.mxu0 0.0
        %2674 = vmatpush1.msra.mxu0 0.0
        %2675 = vmatprep.subr.mxu0 0.0
        %2676 = vmatpush1.msra.mxu0 0.0
        %2677 = vmatprep.subr.mxu0 0.0
        %2678 = vmatpush1.msra.mxu0 0.0
        %2679 = vmatprep.subr.mxu0 0.0
        %2680 = vmatpush1.msra.mxu0 0.0
        %2681 = vmatprep.subr.mxu0 0.0
        %2682 = vmatpush1.msra.mxu0 0.0
        %2683 = vmatprep.subr.mxu0 0.0
        %2684 = vmatpush1.msra.mxu0 0.0
        %2685 = vmatprep.subr.mxu0 0.0
        %2686 = vmatpush1.msra.mxu0 0.0
        %2687 = vmatprep.subr.mxu0 0.0
        %2688 = vmatpush1.msra.mxu0 0.0
        %2689 = vmatprep.subr.mxu0 0.0
        %2690 = vmatpush1.msra.mxu0 0.0
        %2691 = vmatprep.subr.mxu0 0.0
        %2692 = vmatpush1.msra.mxu0 0.0
        %2693 = vmatprep.subr.mxu0 0.0
        %2694 = vmatpush1.msra.mxu0 0.0
        %2695 = vmatprep.subr.mxu0 0.0
        %2696 = vmatpush1.msra.mxu0 0.0
        %2697 = vmatprep.subr.mxu0 0.0
        %2698 = vmatpush1.msra.mxu0 0.0
        %2699 = vmatprep.subr.mxu0 0.0
        %2700 = vmatpush1.msra.mxu0 0.0
        %2701 = vmatprep.subr.mxu0 0.0
        %2702 = vmatpush1.msra.mxu0 0.0
        %2703 = vmatprep.subr.mxu0 0.0
        %2704 = vmatpush1.msra.mxu0 0.0
        %2705 = vmatprep.mubr.f32.mxu0 0.0
        %2706 = vmatmul.mubr.f32.gmra.mrb[0].mxu0 %v2175
        %v2707 = vpop.f32.mrb[0].mxu0
        %v2708 = vadd.f32 %v2308, %v2707
        %v2709 = vpop.f32.mrb[0].mxu0
        %v2710 = vadd.f32 %v2312, %v2709
        %2711 = vmatprep.mubr.f32.mxu0 0.0
        %2712 = vmatmul.mubr.f32.gmra.mrb[0].mxu0 %v2176
        %v2713 = vpop.f32.mrb[0].mxu0
        %v2714 = vadd.f32 %v2308, %v2713
        %v2715 = vpop.f32.mrb[0].mxu0
        %v2716 = vadd.f32 %v2312, %v2715
        %2717 = vmatprep.mubr.f32.mxu0 0.0
        %2718 = vmatmul.mubr.f32.gmra.mrb[0].mxu0 %v2177
        %v2719 = vpop.f32.mrb[0].mxu0
        %v2720 = vadd.f32 %v2308, %v2719
        %v2721 = vpop.f32.mrb[0].mxu0
        %v2722 = vadd.f32 %v2312, %v2721
        %2723 = vmatprep.mubr.f32.mxu0 0.0
        %2724 = vmatmul.mubr.f32.gmra.mrb[0].mxu0 %v2178
        %v2725 = vpop.f32.mrb[0].mxu0
        %v2726 = vadd.f32 %v2308, %v2725
        %v2727 = vpop.f32.mrb[0].mxu0
        %v2728 = vadd.f32 %v2312, %v2727
        %2729 = vmatprep.mubr.f32.mxu0 0.0
        %2730 = vmatmul.mubr.f32.gmra.mrb[0].mxu0 %v2179
        %v2731 = vpop.f32.mrb[0].mxu0
        %v2732 = vadd.f32 %v2308, %v2731
        %v2733 = vpop.f32.mrb[0].mxu0
        %v2734 = vadd.f32 %v2312, %v2733
        %2735 = vmatprep.mubr.f32.mxu0 0.0
        %2736 = vmatmul.mubr.f32.gmra.mrb[0].mxu0 %v2180
        %v2737 = vpop.f32.mrb[0].mxu0
        %v2738 = vadd.f32 %v2308, %v2737
        %v2739 = vpop.f32.mrb[0].mxu0
        %v2740 = vadd.f32 %v2312, %v2739
        %2741 = vmatprep.mubr.f32.mxu0 0.0
        %2742 = vmatmul.mubr.f32.gmra.mrb[0].mxu0 %v2181
        %v2743 = vpop.f32.mrb[0].mxu0
        %v2744 = vadd.f32 %v2308, %v2743
        %v2745 = vpop.f32.mrb[0].mxu0
        %v2746 = vadd.f32 %v2312, %v2745
        %2747 = vmatprep.mubr.f32.mxu0 0.0
        %2748 = vmatmul.mubr.f32.gmra.mrb[0].mxu0 %v2182
        %v2749 = vpop.f32.mrb[0].mxu0
        %v2750 = vadd.f32 %v2308, %v2749
        %v2751 = vpop.f32.mrb[0].mxu0
        %v2752 = vadd.f32 %v2312, %v2751
        %2753 = vmatprep.mubr.f32.mxu0 0.0
        %2754 = vmatmul.mubr.f32.gmra.mrb[0].mxu0 %v2183
        %v2755 = vpop.f32.mrb[0].mxu0
        %v2756 = vadd.f32 %v2308, %v2755
        %v2757 = vpop.f32.mrb[0].mxu0
        %v2758 = vadd.f32 %v2312, %v2757
        %2759 = vmatprep.mubr.f32.mxu0 0.0
        %2760 = vmatmul.mubr.f32.gmra.mrb[0].mxu0 %v2184
        %v2761 = vpop.f32.mrb[0].mxu0
        %v2762 = vadd.f32 %v2308, %v2761
        %v2763 = vpop.f32.mrb[0].mxu0
        %v2764 = vadd.f32 %v2312, %v2763
        %2765 = vmatprep.mubr.f32.mxu0 0.0
        %2766 = vmatmul.mubr.f32.gmra.mrb[0].mxu0 %v2185
        %v2767 = vpop.f32.mrb[0].mxu0
        %v2768 = vadd.f32 %v2308, %v2767
        %v2769 = vpop.f32.mrb[0].mxu0
        %v2770 = vadd.f32 %v2312, %v2769
        %2771 = vmatprep.mubr.f32.mxu0 0.0
        %2772 = vmatmul.mubr.f32.gmra.mrb[0].mxu0 %v2186
        %v2773 = vpop.f32.mrb[0].mxu0
        %v2774 = vadd.f32 %v2308, %v2773
        %v2775 = vpop.f32.mrb[0].mxu0
        %v2776 = vadd.f32 %v2312, %v2775
        %2777 = vmatprep.mubr.f32.mxu0 0.0
        %2778 = vmatmul.mubr.f32.gmra.mrb[0].mxu0 %v2187
        %v2779 = vpop.f32.mrb[0].mxu0
        %v2780 = vadd.f32 %v2308, %v2779
        %v2781 = vpop.f32.mrb[0].mxu0
        %v2782 = vadd.f32 %v2312, %v2781
        %2783 = vmatprep.mubr.f32.mxu0 0.0
        %2784 = vmatmul.mubr.f32.gmra.mrb[0].mxu0 %v2188
        %v2785 = vpop.f32.mrb[0].mxu0
        %v2786 = vadd.f32 %v2308, %v2785
        %v2787 = vpop.f32.mrb[0].mxu0
        %v2788 = vadd.f32 %v2312, %v2787
        %2789 = vmatprep.mubr.f32.mxu0 0.0
        %2790 = vmatmul.mubr.f32.gmra.mrb[0].mxu0 %v2189
        %v2791 = vpop.f32.mrb[0].mxu0
        %v2792 = vadd.f32 %v2308, %v2791
        %v2793 = vpop.f32.mrb[0].mxu0
        %v2794 = vadd.f32 %v2312, %v2793
        %2795 = vmatprep.mubr.f32.mxu0 0.0
        %2796 = vmatmul.mubr.f32.gmra.mrb[0].mxu0 %v2190
        %v2797 = vpop.f32.mrb[0].mxu0
        %v2798 = vadd.f32 %v2308, %v2797
        %v2799 = vpop.f32.mrb[0].mxu0
        %v2800 = vadd.f32 %v2312, %v2799
        %2801 = vdwg.mxu0
        %v2802 = vxor.u32 %v2386, 2147483648
        %v2803 = vxor.u32 %v2388, 2147483648
        %v2804 = vxor.u32 %v2547, 2147483648
        %v2805 = vxor.u32 %v2549, 2147483648
        %v2806 = vxor.u32 %v2708, 2147483648
        %v2807 = vxor.u32 %v2710, 2147483648
        %v2808 = vxor.u32 %v2392, 2147483648
        %v2809 = vxor.u32 %v2394, 2147483648
        %v2810 = vxor.u32 %v2553, 2147483648
        %v2811 = vxor.u32 %v2555, 2147483648
        %v2812 = vxor.u32 %v2714, 2147483648
        %v2813 = vxor.u32 %v2716, 2147483648
        %v2814 = vxor.u32 %v2398, 2147483648
        %v2815 = vxor.u32 %v2400, 2147483648
        %v2816 = vxor.u32 %v2559, 2147483648
        %v2817 = vxor.u32 %v2561, 2147483648
        %v2818 = vxor.u32 %v2720, 2147483648
        %v2819 = vxor.u32 %v2722, 2147483648
        %v2820 = vxor.u32 %v2404, 2147483648
        %v2821 = vxor.u32 %v2406, 2147483648
        %v2822 = vxor.u32 %v2565, 2147483648
        %v2823 = vxor.u32 %v2567, 2147483648
        %v2824 = vxor.u32 %v2726, 2147483648
        %v2825 = vxor.u32 %v2728, 2147483648
        %v2826 = vxor.u32 %v2410, 2147483648
        %v2827 = vxor.u32 %v2412, 2147483648
        %v2828 = vxor.u32 %v2571, 2147483648
        %v2829 = vxor.u32 %v2573, 2147483648
        %v2830 = vxor.u32 %v2732, 2147483648
        %v2831 = vxor.u32 %v2734, 2147483648
        %v2832 = vxor.u32 %v2416, 2147483648
        %v2833 = vxor.u32 %v2418, 2147483648
        %v2834 = vxor.u32 %v2577, 2147483648
        %v2835 = vxor.u32 %v2579, 2147483648
        %v2836 = vxor.u32 %v2738, 2147483648
        %v2837 = vxor.u32 %v2740, 2147483648
        %v2838 = vxor.u32 %v2422, 2147483648
        %v2839 = vxor.u32 %v2424, 2147483648
        %v2840 = vxor.u32 %v2583, 2147483648
        %v2841 = vxor.u32 %v2585, 2147483648
        %v2842 = vxor.u32 %v2744, 2147483648
        %v2843 = vxor.u32 %v2746, 2147483648
        %v2844 = vxor.u32 %v2428, 2147483648
        %v2845 = vxor.u32 %v2430, 2147483648
        %v2846 = vxor.u32 %v2589, 2147483648
        %v2847 = vxor.u32 %v2591, 2147483648
        %v2848 = vxor.u32 %v2750, 2147483648
        %v2849 = vxor.u32 %v2752, 2147483648
        %v2850 = vxor.u32 %v2434, 2147483648
        %v2851 = vxor.u32 %v2436, 2147483648
        %v2852 = vxor.u32 %v2595, 2147483648
        %v2853 = vxor.u32 %v2597, 2147483648
        %v2854 = vxor.u32 %v2756, 2147483648
        %v2855 = vxor.u32 %v2758, 2147483648
        %v2856 = vxor.u32 %v2440, 2147483648
        %v2857 = vxor.u32 %v2442, 2147483648
        %v2858 = vxor.u32 %v2601, 2147483648
        %v2859 = vxor.u32 %v2603, 2147483648
        %v2860 = vxor.u32 %v2762, 2147483648
        %v2861 = vxor.u32 %v2764, 2147483648
        %v2862 = vxor.u32 %v2446, 2147483648
        %v2863 = vxor.u32 %v2448, 2147483648
        %v2864 = vxor.u32 %v2607, 2147483648
        %v2865 = vxor.u32 %v2609, 2147483648
        %v2866 = vxor.u32 %v2768, 2147483648
        %v2867 = vxor.u32 %v2770, 2147483648
        %v2868 = vxor.u32 %v2452, 2147483648
        %v2869 = vxor.u32 %v2454, 2147483648
        %v2870 = vxor.u32 %v2613, 2147483648
        %v2871 = vxor.u32 %v2615, 2147483648
        %v2872 = vxor.u32 %v2774, 2147483648
        %v2873 = vxor.u32 %v2776, 2147483648
        %v2874 = vxor.u32 %v2458, 2147483648
        %v2875 = vxor.u32 %v2460, 2147483648
        %v2876 = vxor.u32 %v2619, 2147483648
        %v2877 = vxor.u32 %v2621, 2147483648
        %v2878 = vxor.u32 %v2780, 2147483648
        %v2879 = vxor.u32 %v2782, 2147483648
        %v2880 = vxor.u32 %v2464, 2147483648
        %v2881 = vxor.u32 %v2466, 2147483648
        %v2882 = vxor.u32 %v2625, 2147483648
        %v2883 = vxor.u32 %v2627, 2147483648
        %v2884 = vxor.u32 %v2786, 2147483648
        %v2885 = vxor.u32 %v2788, 2147483648
        %v2886 = vxor.u32 %v2470, 2147483648
        %v2887 = vxor.u32 %v2472, 2147483648
        %v2888 = vxor.u32 %v2631, 2147483648
        %v2889 = vxor.u32 %v2633, 2147483648
        %v2890 = vxor.u32 %v2792, 2147483648
        %v2891 = vxor.u32 %v2794, 2147483648
        %v2892 = vxor.u32 %v2476, 2147483648
        %v2893 = vxor.u32 %v2478, 2147483648
        %v2894 = vxor.u32 %v2637, 2147483648
        %v2895 = vxor.u32 %v2639, 2147483648
        %v2896 = vxor.u32 %v2798, 2147483648
        %v2897 = vxor.u32 %v2800, 2147483648
        %v2898 = vmul.f32 %v2802, 1.442695
        %v2899 = vpow.pop %v2898
        %v2900 = vmul.f32 %v2803, 1.442695
        %v2901 = vpow.pop %v2900
        %v2902 = vmul.f32 %v2804, 1.442695
        %v2903 = vpow.pop %v2902
        %v2904 = vmul.f32 %v2805, 1.442695
        %v2905 = vpow.pop %v2904
        %v2906 = vmul.f32 %v2806, 1.442695
        %v2907 = vpow.pop %v2906
        %v2908 = vmul.f32 %v2807, 1.442695
        %v2909 = vpow.pop %v2908
        %v2910 = vmul.f32 %v2808, 1.442695
        %v2911 = vpow.pop %v2910
        %v2912 = vmul.f32 %v2809, 1.442695
        %v2913 = vpow.pop %v2912
        %v2914 = vmul.f32 %v2810, 1.442695
        %v2915 = vpow.pop %v2914
        %v2916 = vmul.f32 %v2811, 1.442695
        %v2917 = vpow.pop %v2916
        %v2918 = vmul.f32 %v2812, 1.442695
        %v2919 = vpow.pop %v2918
        %v2920 = vmul.f32 %v2813, 1.442695
        %v2921 = vpow.pop %v2920
        %v2922 = vmul.f32 %v2814, 1.442695
        %v2923 = vpow.pop %v2922
        %v2924 = vmul.f32 %v2815, 1.442695
        %v2925 = vpow.pop %v2924
        %v2926 = vmul.f32 %v2816, 1.442695
        %v2927 = vpow.pop %v2926
        %v2928 = vmul.f32 %v2817, 1.442695
        %v2929 = vpow.pop %v2928
        %v2930 = vmul.f32 %v2818, 1.442695
        %v2931 = vpow.pop %v2930
        %v2932 = vmul.f32 %v2819, 1.442695
        %v2933 = vpow.pop %v2932
        %v2934 = vmul.f32 %v2820, 1.442695
        %v2935 = vpow.pop %v2934
        %v2936 = vmul.f32 %v2821, 1.442695
        %v2937 = vpow.pop %v2936
        %v2938 = vmul.f32 %v2822, 1.442695
        %v2939 = vpow.pop %v2938
        %v2940 = vmul.f32 %v2823, 1.442695
        %v2941 = vpow.pop %v2940
        %v2942 = vmul.f32 %v2824, 1.442695
        %v2943 = vpow.pop %v2942
        %v2944 = vmul.f32 %v2825, 1.442695
        %v2945 = vpow.pop %v2944
        %v2946 = vmul.f32 %v2826, 1.442695
        %v2947 = vpow.pop %v2946
        %v2948 = vmul.f32 %v2827, 1.442695
        %v2949 = vpow.pop %v2948
        %v2950 = vmul.f32 %v2828, 1.442695
        %v2951 = vpow.pop %v2950
        %v2952 = vmul.f32 %v2829, 1.442695
        %v2953 = vpow.pop %v2952
        %v2954 = vmul.f32 %v2830, 1.442695
        %v2955 = vpow.pop %v2954
        %v2956 = vmul.f32 %v2831, 1.442695
        %v2957 = vpow.pop %v2956
        %v2958 = vmul.f32 %v2832, 1.442695
        %v2959 = vpow.pop %v2958
        %v2960 = vmul.f32 %v2833, 1.442695
        %v2961 = vpow.pop %v2960
        %v2962 = vmul.f32 %v2834, 1.442695
        %v2963 = vpow.pop %v2962
        %v2964 = vmul.f32 %v2835, 1.442695
        %v2965 = vpow.pop %v2964
        %v2966 = vmul.f32 %v2836, 1.442695
        %v2967 = vpow.pop %v2966
        %v2968 = vmul.f32 %v2837, 1.442695
        %v2969 = vpow.pop %v2968
        %v2970 = vmul.f32 %v2838, 1.442695
        %v2971 = vpow.pop %v2970
        %v2972 = vmul.f32 %v2839, 1.442695
        %v2973 = vpow.pop %v2972
        %v2974 = vmul.f32 %v2840, 1.442695
        %v2975 = vpow.pop %v2974
        %v2976 = vmul.f32 %v2841, 1.442695
        %v2977 = vpow.pop %v2976
        %v2978 = vmul.f32 %v2842, 1.442695
        %v2979 = vpow.pop %v2978
        %v2980 = vmul.f32 %v2843, 1.442695
        %v2981 = vpow.pop %v2980
        %v2982 = vmul.f32 %v2844, 1.442695
        %v2983 = vpow.pop %v2982
        %v2984 = vmul.f32 %v2845, 1.442695
        %v2985 = vpow.pop %v2984
        %v2986 = vmul.f32 %v2846, 1.442695
        %v2987 = vpow.pop %v2986
        %v2988 = vmul.f32 %v2847, 1.442695
        %v2989 = vpow.pop %v2988
        %v2990 = vmul.f32 %v2848, 1.442695
        %v2991 = vpow.pop %v2990
        %v2992 = vmul.f32 %v2849, 1.442695
        %v2993 = vpow.pop %v2992
        %v2994 = vmul.f32 %v2850, 1.442695
        %v2995 = vpow.pop %v2994
        %v2996 = vmul.f32 %v2851, 1.442695
        %v2997 = vpow.pop %v2996
        %v2998 = vmul.f32 %v2852, 1.442695
        %v2999 = vpow.pop %v2998
        %v3000 = vmul.f32 %v2853, 1.442695
        %v3001 = vpow.pop %v3000
        %v3002 = vmul.f32 %v2854, 1.442695
        %v3003 = vpow.pop %v3002
        %v3004 = vmul.f32 %v2855, 1.442695
        %v3005 = vpow.pop %v3004
        %v3006 = vmul.f32 %v2856, 1.442695
        %v3007 = vpow.pop %v3006
        %v3008 = vmul.f32 %v2857, 1.442695
        %v3009 = vpow.pop %v3008
        %v3010 = vmul.f32 %v2858, 1.442695
        %v3011 = vpow.pop %v3010
        %v3012 = vmul.f32 %v2859, 1.442695
        %v3013 = vpow.pop %v3012
        %v3014 = vmul.f32 %v2860, 1.442695
        %v3015 = vpow.pop %v3014
        %v3016 = vmul.f32 %v2861, 1.442695
        %v3017 = vpow.pop %v3016
        %v3018 = vmul.f32 %v2862, 1.442695
        %v3019 = vpow.pop %v3018
        %v3020 = vmul.f32 %v2863, 1.442695
        %v3021 = vpow.pop %v3020
        %v3022 = vmul.f32 %v2864, 1.442695
        %v3023 = vpow.pop %v3022
        %v3024 = vmul.f32 %v2865, 1.442695
        %v3025 = vpow.pop %v3024
        %v3026 = vmul.f32 %v2866, 1.442695
        %v3027 = vpow.pop %v3026
        %v3028 = vmul.f32 %v2867, 1.442695
        %v3029 = vpow.pop %v3028
        %v3030 = vmul.f32 %v2868, 1.442695
        %v3031 = vpow.pop %v3030
        %v3032 = vmul.f32 %v2869, 1.442695
        %v3033 = vpow.pop %v3032
        %v3034 = vmul.f32 %v2870, 1.442695
        %v3035 = vpow.pop %v3034
        %v3036 = vmul.f32 %v2871, 1.442695
        %v3037 = vpow.pop %v3036
        %v3038 = vmul.f32 %v2872, 1.442695
        %v3039 = vpow.pop %v3038
        %v3040 = vmul.f32 %v2873, 1.442695
        %v3041 = vpow.pop %v3040
        %v3042 = vmul.f32 %v2874, 1.442695
        %v3043 = vpow.pop %v3042
        %v3044 = vmul.f32 %v2875, 1.442695
        %v3045 = vpow.pop %v3044
        %v3046 = vmul.f32 %v2876, 1.442695
        %v3047 = vpow.pop %v3046
        %v3048 = vmul.f32 %v2877, 1.442695
        %v3049 = vpow.pop %v3048
        %v3050 = vmul.f32 %v2878, 1.442695
        %v3051 = vpow.pop %v3050
        %v3052 = vmul.f32 %v2879, 1.442695
        %v3053 = vpow.pop %v3052
        %v3054 = vmul.f32 %v2880, 1.442695
        %v3055 = vpow.pop %v3054
        %v3056 = vmul.f32 %v2881, 1.442695
        %v3057 = vpow.pop %v3056
        %v3058 = vmul.f32 %v2882, 1.442695
        %v3059 = vpow.pop %v3058
        %v3060 = vmul.f32 %v2883, 1.442695
        %v3061 = vpow.pop %v3060
        %v3062 = vmul.f32 %v2884, 1.442695
        %v3063 = vpow.pop %v3062
        %v3064 = vmul.f32 %v2885, 1.442695
        %v3065 = vpow.pop %v3064
        %v3066 = vmul.f32 %v2886, 1.442695
        %v3067 = vpow.pop %v3066
        %v3068 = vmul.f32 %v2887, 1.442695
        %v3069 = vpow.pop %v3068
        %v3070 = vmul.f32 %v2888, 1.442695
        %v3071 = vpow.pop %v3070
        %v3072 = vmul.f32 %v2889, 1.442695
        %v3073 = vpow.pop %v3072
        %v3074 = vmul.f32 %v2890, 1.442695
        %v3075 = vpow.pop %v3074
        %v3076 = vmul.f32 %v2891, 1.442695
        %v3077 = vpow.pop %v3076
        %v3078 = vmul.f32 %v2892, 1.442695
        %v3079 = vpow.pop %v3078
        %v3080 = vmul.f32 %v2893, 1.442695
        %v3081 = vpow.pop %v3080
        %v3082 = vmul.f32 %v2894, 1.442695
        %v3083 = vpow.pop %v3082
        %v3084 = vmul.f32 %v2895, 1.442695
        %v3085 = vpow.pop %v3084
        %v3086 = vmul.f32 %v2896, 1.442695
        %v3087 = vpow.pop %v3086
        %v3088 = vmul.f32 %v2897, 1.442695
        %v3089 = vpow.pop %v3088
        %v3090 = vadd.f32 %v2899, 1.0
        %v3091 = vadd.f32 %v2901, 1.0
        %v3092 = vadd.f32 %v2903, 1.0
        %v3093 = vadd.f32 %v2905, 1.0
        %v3094 = vadd.f32 %v2907, 1.0
        %v3095 = vadd.f32 %v2909, 1.0
        %v3096 = vadd.f32 %v2911, 1.0
        %v3097 = vadd.f32 %v2913, 1.0
        %v3098 = vadd.f32 %v2915, 1.0
        %v3099 = vadd.f32 %v2917, 1.0
        %v3100 = vadd.f32 %v2919, 1.0
        %v3101 = vadd.f32 %v2921, 1.0
        %v3102 = vadd.f32 %v2923, 1.0
        %v3103 = vadd.f32 %v2925, 1.0
        %v3104 = vadd.f32 %v2927, 1.0
        %v3105 = vadd.f32 %v2929, 1.0
        %v3106 = vadd.f32 %v2931, 1.0
        %v3107 = vadd.f32 %v2933, 1.0
        %v3108 = vadd.f32 %v2935, 1.0
        %v3109 = vadd.f32 %v2937, 1.0
        %v3110 = vadd.f32 %v2939, 1.0
        %v3111 = vadd.f32 %v2941, 1.0
        %v3112 = vadd.f32 %v2943, 1.0
        %v3113 = vadd.f32 %v2945, 1.0
        %v3114 = vadd.f32 %v2947, 1.0
        %v3115 = vadd.f32 %v2949, 1.0
        %v3116 = vadd.f32 %v2951, 1.0
        %v3117 = vadd.f32 %v2953, 1.0
        %v3118 = vadd.f32 %v2955, 1.0
        %v3119 = vadd.f32 %v2957, 1.0
        %v3120 = vadd.f32 %v2959, 1.0
        %v3121 = vadd.f32 %v2961, 1.0
        %v3122 = vadd.f32 %v2963, 1.0
        %v3123 = vadd.f32 %v2965, 1.0
        %v3124 = vadd.f32 %v2967, 1.0
        %v3125 = vadd.f32 %v2969, 1.0
        %v3126 = vadd.f32 %v2971, 1.0
        %v3127 = vadd.f32 %v2973, 1.0
        %v3128 = vadd.f32 %v2975, 1.0
        %v3129 = vadd.f32 %v2977, 1.0
        %v3130 = vadd.f32 %v2979, 1.0
        %v3131 = vadd.f32 %v2981, 1.0
        %v3132 = vadd.f32 %v2983, 1.0
        %v3133 = vadd.f32 %v2985, 1.0
        %v3134 = vadd.f32 %v2987, 1.0
        %v3135 = vadd.f32 %v2989, 1.0
        %v3136 = vadd.f32 %v2991, 1.0
        %v3137 = vadd.f32 %v2993, 1.0
        %v3138 = vadd.f32 %v2995, 1.0
        %v3139 = vadd.f32 %v2997, 1.0
        %v3140 = vadd.f32 %v2999, 1.0
        %v3141 = vadd.f32 %v3001, 1.0
        %v3142 = vadd.f32 %v3003, 1.0
        %v3143 = vadd.f32 %v3005, 1.0
        %v3144 = vadd.f32 %v3007, 1.0
        %v3145 = vadd.f32 %v3009, 1.0
        %v3146 = vadd.f32 %v3011, 1.0
        %v3147 = vadd.f32 %v3013, 1.0
        %v3148 = vadd.f32 %v3015, 1.0
        %v3149 = vadd.f32 %v3017, 1.0
        %v3150 = vadd.f32 %v3019, 1.0
        %v3151 = vadd.f32 %v3021, 1.0
        %v3152 = vadd.f32 %v3023, 1.0
        %v3153 = vadd.f32 %v3025, 1.0
        %v3154 = vadd.f32 %v3027, 1.0
        %v3155 = vadd.f32 %v3029, 1.0
        %v3156 = vadd.f32 %v3031, 1.0
        %v3157 = vadd.f32 %v3033, 1.0
        %v3158 = vadd.f32 %v3035, 1.0
        %v3159 = vadd.f32 %v3037, 1.0
        %v3160 = vadd.f32 %v3039, 1.0
        %v3161 = vadd.f32 %v3041, 1.0
        %v3162 = vadd.f32 %v3043, 1.0
        %v3163 = vadd.f32 %v3045, 1.0
        %v3164 = vadd.f32 %v3047, 1.0
        %v3165 = vadd.f32 %v3049, 1.0
        %v3166 = vadd.f32 %v3051, 1.0
        %v3167 = vadd.f32 %v3053, 1.0
        %v3168 = vadd.f32 %v3055, 1.0
        %v3169 = vadd.f32 %v3057, 1.0
        %v3170 = vadd.f32 %v3059, 1.0
        %v3171 = vadd.f32 %v3061, 1.0
        %v3172 = vadd.f32 %v3063, 1.0
        %v3173 = vadd.f32 %v3065, 1.0
        %v3174 = vadd.f32 %v3067, 1.0
        %v3175 = vadd.f32 %v3069, 1.0
        %v3176 = vadd.f32 %v3071, 1.0
        %v3177 = vadd.f32 %v3073, 1.0
        %v3178 = vadd.f32 %v3075, 1.0
        %v3179 = vadd.f32 %v3077, 1.0
        %v3180 = vadd.f32 %v3079, 1.0
        %v3181 = vadd.f32 %v3081, 1.0
        %v3182 = vadd.f32 %v3083, 1.0
        %v3183 = vadd.f32 %v3085, 1.0
        %v3184 = vadd.f32 %v3087, 1.0
        %v3185 = vadd.f32 %v3089, 1.0
        %v3186 = vrcp.pop %v3090
        %v3187 = vmul.f32 1.0, %v3186
        %v3188 = vrcp.pop %v3091
        %v3189 = vmul.f32 1.0, %v3188
        %v3190 = vrcp.pop %v3092
        %v3191 = vmul.f32 1.0, %v3190
        %v3192 = vrcp.pop %v3093
        %v3193 = vmul.f32 1.0, %v3192
        %v3194 = vrcp.pop %v3094
        %v3195 = vmul.f32 1.0, %v3194
        %v3196 = vrcp.pop %v3095
        %v3197 = vmul.f32 1.0, %v3196
        %v3198 = vrcp.pop %v3096
        %v3199 = vmul.f32 1.0, %v3198
        %v3200 = vrcp.pop %v3097
        %v3201 = vmul.f32 1.0, %v3200
        %v3202 = vrcp.pop %v3098
        %v3203 = vmul.f32 1.0, %v3202
        %v3204 = vrcp.pop %v3099
        %v3205 = vmul.f32 1.0, %v3204
        %v3206 = vrcp.pop %v3100
        %v3207 = vmul.f32 1.0, %v3206
        %v3208 = vrcp.pop %v3101
        %v3209 = vmul.f32 1.0, %v3208
        %v3210 = vrcp.pop %v3102
        %v3211 = vmul.f32 1.0, %v3210
        %v3212 = vrcp.pop %v3103
        %v3213 = vmul.f32 1.0, %v3212
        %v3214 = vrcp.pop %v3104
        %v3215 = vmul.f32 1.0, %v3214
        %v3216 = vrcp.pop %v3105
        %v3217 = vmul.f32 1.0, %v3216
        %v3218 = vrcp.pop %v3106
        %v3219 = vmul.f32 1.0, %v3218
        %v3220 = vrcp.pop %v3107
        %v3221 = vmul.f32 1.0, %v3220
        %v3222 = vrcp.pop %v3108
        %v3223 = vmul.f32 1.0, %v3222
        %v3224 = vrcp.pop %v3109
        %v3225 = vmul.f32 1.0, %v3224
        %v3226 = vrcp.pop %v3110
        %v3227 = vmul.f32 1.0, %v3226
        %v3228 = vrcp.pop %v3111
        %v3229 = vmul.f32 1.0, %v3228
        %v3230 = vrcp.pop %v3112
        %v3231 = vmul.f32 1.0, %v3230
        %v3232 = vrcp.pop %v3113
        %v3233 = vmul.f32 1.0, %v3232
        %v3234 = vrcp.pop %v3114
        %v3235 = vmul.f32 1.0, %v3234
        %v3236 = vrcp.pop %v3115
        %v3237 = vmul.f32 1.0, %v3236
        %v3238 = vrcp.pop %v3116
        %v3239 = vmul.f32 1.0, %v3238
        %v3240 = vrcp.pop %v3117
        %v3241 = vmul.f32 1.0, %v3240
        %v3242 = vrcp.pop %v3118
        %v3243 = vmul.f32 1.0, %v3242
        %v3244 = vrcp.pop %v3119
        %v3245 = vmul.f32 1.0, %v3244
        %v3246 = vrcp.pop %v3120
        %v3247 = vmul.f32 1.0, %v3246
        %v3248 = vrcp.pop %v3121
        %v3249 = vmul.f32 1.0, %v3248
        %v3250 = vrcp.pop %v3122
        %v3251 = vmul.f32 1.0, %v3250
        %v3252 = vrcp.pop %v3123
        %v3253 = vmul.f32 1.0, %v3252
        %v3254 = vrcp.pop %v3124
        %v3255 = vmul.f32 1.0, %v3254
        %v3256 = vrcp.pop %v3125
        %v3257 = vmul.f32 1.0, %v3256
        %v3258 = vrcp.pop %v3126
        %v3259 = vmul.f32 1.0, %v3258
        %v3260 = vrcp.pop %v3127
        %v3261 = vmul.f32 1.0, %v3260
        %v3262 = vrcp.pop %v3128
        %v3263 = vmul.f32 1.0, %v3262
        %v3264 = vrcp.pop %v3129
        %v3265 = vmul.f32 1.0, %v3264
        %v3266 = vrcp.pop %v3130
        %v3267 = vmul.f32 1.0, %v3266
        %v3268 = vrcp.pop %v3131
        %v3269 = vmul.f32 1.0, %v3268
        %v3270 = vrcp.pop %v3132
        %v3271 = vmul.f32 1.0, %v3270
        %v3272 = vrcp.pop %v3133
        %v3273 = vmul.f32 1.0, %v3272
        %v3274 = vrcp.pop %v3134
        %v3275 = vmul.f32 1.0, %v3274
        %v3276 = vrcp.pop %v3135
        %v3277 = vmul.f32 1.0, %v3276
        %v3278 = vrcp.pop %v3136
        %v3279 = vmul.f32 1.0, %v3278
        %v3280 = vrcp.pop %v3137
        %v3281 = vmul.f32 1.0, %v3280
        %v3282 = vrcp.pop %v3138
        %v3283 = vmul.f32 1.0, %v3282
        %v3284 = vrcp.pop %v3139
        %v3285 = vmul.f32 1.0, %v3284
        %v3286 = vrcp.pop %v3140
        %v3287 = vmul.f32 1.0, %v3286
        %v3288 = vrcp.pop %v3141
        %v3289 = vmul.f32 1.0, %v3288
        %v3290 = vrcp.pop %v3142
        %v3291 = vmul.f32 1.0, %v3290
        %v3292 = vrcp.pop %v3143
        %v3293 = vmul.f32 1.0, %v3292
        %v3294 = vrcp.pop %v3144
        %v3295 = vmul.f32 1.0, %v3294
        %v3296 = vrcp.pop %v3145
        %v3297 = vmul.f32 1.0, %v3296
        %v3298 = vrcp.pop %v3146
        %v3299 = vmul.f32 1.0, %v3298
        %v3300 = vrcp.pop %v3147
        %v3301 = vmul.f32 1.0, %v3300
        %v3302 = vrcp.pop %v3148
        %v3303 = vmul.f32 1.0, %v3302
        %v3304 = vrcp.pop %v3149
        %v3305 = vmul.f32 1.0, %v3304
        %v3306 = vrcp.pop %v3150
        %v3307 = vmul.f32 1.0, %v3306
        %v3308 = vrcp.pop %v3151
        %v3309 = vmul.f32 1.0, %v3308
        %v3310 = vrcp.pop %v3152
        %v3311 = vmul.f32 1.0, %v3310
        %v3312 = vrcp.pop %v3153
        %v3313 = vmul.f32 1.0, %v3312
        %v3314 = vrcp.pop %v3154
        %v3315 = vmul.f32 1.0, %v3314
        %v3316 = vrcp.pop %v3155
        %v3317 = vmul.f32 1.0, %v3316
        %v3318 = vrcp.pop %v3156
        %v3319 = vmul.f32 1.0, %v3318
        %v3320 = vrcp.pop %v3157
        %v3321 = vmul.f32 1.0, %v3320
        %v3322 = vrcp.pop %v3158
        %v3323 = vmul.f32 1.0, %v3322
        %v3324 = vrcp.pop %v3159
        %v3325 = vmul.f32 1.0, %v3324
        %v3326 = vrcp.pop %v3160
        %v3327 = vmul.f32 1.0, %v3326
        %v3328 = vrcp.pop %v3161
        %v3329 = vmul.f32 1.0, %v3328
        %v3330 = vrcp.pop %v3162
        %v3331 = vmul.f32 1.0, %v3330
        %v3332 = vrcp.pop %v3163
        %v3333 = vmul.f32 1.0, %v3332
        %v3334 = vrcp.pop %v3164
        %v3335 = vmul.f32 1.0, %v3334
        %v3336 = vrcp.pop %v3165
        %v3337 = vmul.f32 1.0, %v3336
        %v3338 = vrcp.pop %v3166
        %v3339 = vmul.f32 1.0, %v3338
        %v3340 = vrcp.pop %v3167
        %v3341 = vmul.f32 1.0, %v3340
        %v3342 = vrcp.pop %v3168
        %v3343 = vmul.f32 1.0, %v3342
        %v3344 = vrcp.pop %v3169
        %v3345 = vmul.f32 1.0, %v3344
        %v3346 = vrcp.pop %v3170
        %v3347 = vmul.f32 1.0, %v3346
        %v3348 = vrcp.pop %v3171
        %v3349 = vmul.f32 1.0, %v3348
        %v3350 = vrcp.pop %v3172
        %v3351 = vmul.f32 1.0, %v3350
        %v3352 = vrcp.pop %v3173
        %v3353 = vmul.f32 1.0, %v3352
        %v3354 = vrcp.pop %v3174
        %v3355 = vmul.f32 1.0, %v3354
        %v3356 = vrcp.pop %v3175
        %v3357 = vmul.f32 1.0, %v3356
        %v3358 = vrcp.pop %v3176
        %v3359 = vmul.f32 1.0, %v3358
        %v3360 = vrcp.pop %v3177
        %v3361 = vmul.f32 1.0, %v3360
        %v3362 = vrcp.pop %v3178
        %v3363 = vmul.f32 1.0, %v3362
        %v3364 = vrcp.pop %v3179
        %v3365 = vmul.f32 1.0, %v3364
        %v3366 = vrcp.pop %v3180
        %v3367 = vmul.f32 1.0, %v3366
        %v3368 = vrcp.pop %v3181
        %v3369 = vmul.f32 1.0, %v3368
        %v3370 = vrcp.pop %v3182
        %v3371 = vmul.f32 1.0, %v3370
        %v3372 = vrcp.pop %v3183
        %v3373 = vmul.f32 1.0, %v3372
        %v3374 = vrcp.pop %v3184
        %v3375 = vmul.f32 1.0, %v3374
        %v3376 = vrcp.pop %v3185
        %v3377 = vmul.f32 1.0, %v3376
        %3378 = vst [vmem:[%s644] sm:$0xff] %v3187
        %3379 = vst [vmem:[%s644 + $0x8] sm:$0xff] %v3189
        %3380 = vst [vmem:[%s644 + $0x10] sm:$0xff] %v3191
        %3381 = vst [vmem:[%s644 + $0x18] sm:$0xff] %v3193
        %3382 = vst [vmem:[%s644 + $0x20] sm:$0xff] %v3195
        %3383 = vst [vmem:[%s644 + $0x28] sm:$0xff] %v3197
        %3384 = vst [vmem:[%s644 + $0x30] sm:$0xff] %v3199
        %3385 = vst [vmem:[%s644 + $0x38] sm:$0xff] %v3201
        %3386 = vst [vmem:[%s644 + $0x40] sm:$0xff] %v3203
        %3387 = vst [vmem:[%s644 + $0x48] sm:$0xff] %v3205
        %3388 = vst [vmem:[%s644 + $0x50] sm:$0xff] %v3207
        %3389 = vst [vmem:[%s644 + $0x58] sm:$0xff] %v3209
        %3390 = vst [vmem:[%s644 + $0x60] sm:$0xff] %v3211
        %3391 = vst [vmem:[%s644 + $0x68] sm:$0xff] %v3213
        %3392 = vst [vmem:[%s644 + $0x70] sm:$0xff] %v3215
        %3393 = vst [vmem:[%s644 + $0x78] sm:$0xff] %v3217
        %3394 = vst [vmem:[%s644 + $0x80] sm:$0xff] %v3219
        %3395 = vst [vmem:[%s644 + $0x88] sm:$0xff] %v3221
        %3396 = vst [vmem:[%s644 + $0x90] sm:$0xff] %v3223
        %3397 = vst [vmem:[%s644 + $0x98] sm:$0xff] %v3225
        %3398 = vst [vmem:[%s644 + $0xa0] sm:$0xff] %v3227
        %3399 = vst [vmem:[%s644 + $0xa8] sm:$0xff] %v3229
        %3400 = vst [vmem:[%s644 + $0xb0] sm:$0xff] %v3231
        %3401 = vst [vmem:[%s644 + $0xb8] sm:$0xff] %v3233
        %3402 = vst [vmem:[%s644 + $0xc0] sm:$0xff] %v3235
        %3403 = vst [vmem:[%s644 + $0xc8] sm:$0xff] %v3237
        %3404 = vst [vmem:[%s644 + $0xd0] sm:$0xff] %v3239
        %3405 = vst [vmem:[%s644 + $0xd8] sm:$0xff] %v3241
        %3406 = vst [vmem:[%s644 + $0xe0] sm:$0xff] %v3243
        %3407 = vst [vmem:[%s644 + $0xe8] sm:$0xff] %v3245
        %3408 = vst [vmem:[%s644 + $0xf0] sm:$0xff] %v3247
        %3409 = vst [vmem:[%s644 + $0xf8] sm:$0xff] %v3249
        %3410 = vst [vmem:[%s644 + $0x100] sm:$0xff] %v3251
        %3411 = vst [vmem:[%s644 + $0x108] sm:$0xff] %v3253
        %3412 = vst [vmem:[%s644 + $0x110] sm:$0xff] %v3255
        %3413 = vst [vmem:[%s644 + $0x118] sm:$0xff] %v3257
        %3414 = vst [vmem:[%s644 + $0x120] sm:$0xff] %v3259
        %3415 = vst [vmem:[%s644 + $0x128] sm:$0xff] %v3261
        %3416 = vst [vmem:[%s644 + $0x130] sm:$0xff] %v3263
        %3417 = vst [vmem:[%s644 + $0x138] sm:$0xff] %v3265
        %3418 = vst [vmem:[%s644 + $0x140] sm:$0xff] %v3267
        %3419 = vst [vmem:[%s644 + $0x148] sm:$0xff] %v3269
        %3420 = vst [vmem:[%s644 + $0x150] sm:$0xff] %v3271
        %3421 = vst [vmem:[%s644 + $0x158] sm:$0xff] %v3273
        %3422 = vst [vmem:[%s644 + $0x160] sm:$0xff] %v3275
        %3423 = vst [vmem:[%s644 + $0x168] sm:$0xff] %v3277
        %3424 = vst [vmem:[%s644 + $0x170] sm:$0xff] %v3279
        %3425 = vst [vmem:[%s644 + $0x178] sm:$0xff] %v3281
        %3426 = vst [vmem:[%s644 + $0x180] sm:$0xff] %v3283
        %3427 = vst [vmem:[%s644 + $0x188] sm:$0xff] %v3285
        %3428 = vst [vmem:[%s644 + $0x190] sm:$0xff] %v3287
        %3429 = vst [vmem:[%s644 + $0x198] sm:$0xff] %v3289
        %3430 = vst [vmem:[%s644 + $0x1a0] sm:$0xff] %v3291
        %3431 = vst [vmem:[%s644 + $0x1a8] sm:$0xff] %v3293
        %3432 = vst [vmem:[%s644 + $0x1b0] sm:$0xff] %v3295
        %3433 = vst [vmem:[%s644 + $0x1b8] sm:$0xff] %v3297
        %3434 = vst [vmem:[%s644 + $0x1c0] sm:$0xff] %v3299
        %3435 = vst [vmem:[%s644 + $0x1c8] sm:$0xff] %v3301
        %3436 = vst [vmem:[%s644 + $0x1d0] sm:$0xff] %v3303
        %3437 = vst [vmem:[%s644 + $0x1d8] sm:$0xff] %v3305
        %3438 = vst [vmem:[%s644 + $0x1e0] sm:$0xff] %v3307
        %3439 = vst [vmem:[%s644 + $0x1e8] sm:$0xff] %v3309
        %3440 = vst [vmem:[%s644 + $0x1f0] sm:$0xff] %v3311
        %3441 = vst [vmem:[%s644 + $0x1f8] sm:$0xff] %v3313
        %3442 = vst [vmem:[%s644 + $0x200] sm:$0xff] %v3315
        %3443 = vst [vmem:[%s644 + $0x208] sm:$0xff] %v3317
        %3444 = vst [vmem:[%s644 + $0x210] sm:$0xff] %v3319
        %3445 = vst [vmem:[%s644 + $0x218] sm:$0xff] %v3321
        %3446 = vst [vmem:[%s644 + $0x220] sm:$0xff] %v3323
        %3447 = vst [vmem:[%s644 + $0x228] sm:$0xff] %v3325
        %3448 = vst [vmem:[%s644 + $0x230] sm:$0xff] %v3327
        %3449 = vst [vmem:[%s644 + $0x238] sm:$0xff] %v3329
        %3450 = vst [vmem:[%s644 + $0x240] sm:$0xff] %v3331
        %3451 = vst [vmem:[%s644 + $0x248] sm:$0xff] %v3333
        %3452 = vst [vmem:[%s644 + $0x250] sm:$0xff] %v3335
        %3453 = vst [vmem:[%s644 + $0x258] sm:$0xff] %v3337
        %3454 = vst [vmem:[%s644 + $0x260] sm:$0xff] %v3339
        %3455 = vst [vmem:[%s644 + $0x268] sm:$0xff] %v3341
        %3456 = vst [vmem:[%s644 + $0x270] sm:$0xff] %v3343
        %3457 = vst [vmem:[%s644 + $0x278] sm:$0xff] %v3345
        %3458 = vst [vmem:[%s644 + $0x280] sm:$0xff] %v3347
        %3459 = vst [vmem:[%s644 + $0x288] sm:$0xff] %v3349
        %3460 = vst [vmem:[%s644 + $0x290] sm:$0xff] %v3351
        %3461 = vst [vmem:[%s644 + $0x298] sm:$0xff] %v3353
        %3462 = vst [vmem:[%s644 + $0x2a0] sm:$0xff] %v3355
        %3463 = vst [vmem:[%s644 + $0x2a8] sm:$0xff] %v3357
        %3464 = vst [vmem:[%s644 + $0x2b0] sm:$0xff] %v3359
        %3465 = vst [vmem:[%s644 + $0x2b8] sm:$0xff] %v3361
        %3466 = vst [vmem:[%s644 + $0x2c0] sm:$0xff] %v3363
        %3467 = vst [vmem:[%s644 + $0x2c8] sm:$0xff] %v3365
        %3468 = vst [vmem:[%s644 + $0x2d0] sm:$0xff] %v3367
        %3469 = vst [vmem:[%s644 + $0x2d8] sm:$0xff] %v3369
        %3470 = vst [vmem:[%s644 + $0x2e0] sm:$0xff] %v3371
        %3471 = vst [vmem:[%s644 + $0x2e8] sm:$0xff] %v3373
        %3472 = vst [vmem:[%s644 + $0x2f0] sm:$0xff] %v3375
        %3473 = vst [vmem:[%s644 + $0x2f8] sm:$0xff] %v3377
        %s3474 = sand.u32 %s354, 1
        %s3475 = scalar_lea.sflag [#allocation4], %s3474
        %s3476 = sand.u32 %s354, 1
        %s3477 = smul.addr %s3476, 768
        %s3478 = scalar_lea.vmem [#allocation16], %s3477
        %s3479 = sand.u32 %s380, 1
        %s3480 = scalar_lea.sflag [#allocation18], %s3479
        %s3481 = sand.u32 %s380, 1
        %s3482 = smul.addr %s3481, 256
        %s3483 = scalar_lea.vmem [#allocation17], %s3482
        // Predicated region
        $region109: #{tpu_custom_call.1} parent=75 // pred_check
          %p3484 = pneg %p364
        $region110: #{tpu_custom_call.1} parent=75 // pred_check_branch
          %3486 = sbr.rel (%p3484) target = $region112
        $region111: #{tpu_custom_call.1} parent=75 // pred_region
          %s3487 = smul.u32 16, %s42
          %s3489 = ssub.s32 12288, 12288
          %3490 = vsyncadd %s3475, %s3489
          %s3491 = smul.addr %s3487, 6
          %s3492 = smul.addr %s3491, 128
          %s3493 = scalar_lea.hbm %s14, %s3492
          %s3494 = sshll.u32 %s3478, 4
          %s3495 = int_to_ptr.vmem [resolvable:$true] %s3494
          %3500 = dma.vmem_to_hbm [thread:$0]  %s3495, 12288, %s3493, %s3475, 768, 768, 48
        $region112: #{tpu_custom_call.1} parent=75 // pred_fallthru
          _
        // Predicated region
        $region113: #{tpu_custom_call.1} parent=75 // pred_check
          %p3501 = pneg %p390
        $region114: #{tpu_custom_call.1} parent=75 // pred_check_branch
          %3503 = sbr.rel (%p3501) target = $region116
        $region115: #{tpu_custom_call.1} parent=75 // pred_region
          %s3504 = smul.u32 16, %s42
          %s3506 = ssub.s32 4096, 4096
          %3507 = vsyncadd %s3480, %s3506
          %s3508 = smul.addr %s3504, 2
          %s3509 = smul.addr %s3508, 128
          %s3510 = scalar_lea.hbm %s15, %s3509
          %s3511 = sshll.u32 %s3483, 4
          %s3512 = int_to_ptr.vmem [resolvable:$true] %s3511
          %3517 = dma.vmem_to_hbm [thread:$0]  %s3512, 4096, %s3510, %s3480, 256, 256, 16
        $region116: #{tpu_custom_call.1} parent=75 // pred_fallthru
          _
      $region76: #{tpu_custom_call.1} parent=5 // pred_fallthru
        _
      %p3518 = scmp.le.s32.totalorder 2, %s37
      // Predicated region
      $region117: #{tpu_custom_call.1} parent=5 // pred_check
        %p3519 = pneg %p3518
      $region118: #{tpu_custom_call.1} parent=5 // pred_check_branch
        %3521 = sbr.rel (%p3519) target = $region120
      $region119: #{tpu_custom_call.1} parent=5 // pred_region
        %s3522 = ssub.s32 %s37, 2
        // Predicated region
        $region121: #{tpu_custom_call.1} parent=119 // pred_check
          %p3523 = pneg %p370
        $region122: #{tpu_custom_call.1} parent=119 // pred_check_branch
          %3525 = sbr.rel (%p3523) target = $region124
        $region123: #{tpu_custom_call.1} parent=119 // pred_region
          %s3526 = sand.u32 %s355, 1
          %s3527 = scalar_lea.sflag [#allocation4], %s3526
          %s3528 = sand.u32 %s355, 1
          %s3529 = smul.addr %s3528, 768
          %s3530 = scalar_lea.vmem [#allocation16], %s3529
          %3531 = dma.done %s3527, 12288
        $region124: #{tpu_custom_call.1} parent=119 // pred_fallthru
          _
        // Predicated region
        $region125: #{tpu_custom_call.1} parent=119 // pred_check
          %p3532 = pneg %p396
        $region126: #{tpu_custom_call.1} parent=119 // pred_check_branch
          %3534 = sbr.rel (%p3532) target = $region128
        $region127: #{tpu_custom_call.1} parent=119 // pred_region
          %s3535 = sand.u32 %s381, 1
          %s3536 = scalar_lea.sflag [#allocation18], %s3535
          %s3537 = sand.u32 %s381, 1
          %s3538 = smul.addr %s3537, 256
          %s3539 = scalar_lea.vmem [#allocation17], %s3538
          %3540 = dma.done %s3536, 4096
        $region128: #{tpu_custom_call.1} parent=119 // pred_fallthru
          _
      $region120: #{tpu_custom_call.1} parent=5 // pred_fallthru
        _
    $region6: #{tpu_custom_call.1} parent=1 // loop_footer
      %s41 = sadd.s32 1, %s37
    $region7: #{tpu_custom_call.1} parent=1 // loop_footer_branch
      %36 = sbr.rel target = $region3
    $region8: #{tpu_custom_call.1} parent=1 // loop_exit
      _
    %3541 = vsyncpa [#allocation3], 1
    %s3542 = scalar_lea.sflag [#allocation3], 1
    %3543 = vsyncpa %s3542, 1
    %3544 = vsyncpa [#allocation6], 1
    %s3545 = scalar_lea.sflag [#allocation6], 1
    %3546 = vsyncpa %s3545, 1
    %3547 = vsyncpa [#allocation9], 1
    %3548 = vsyncpa [#allocation12], 1
    %3549 = vsyncpa [#allocation15], 1
    %3550 = vsyncpa [#allocation4], 1
    %s3551 = scalar_lea.sflag [#allocation4], 1
    %3552 = vsyncpa %s3551, 1
    %3553 = vsyncpa [#allocation18], 1
    %s3554 = scalar_lea.sflag [#allocation18], 1
    %3555 = vsyncpa %s3554, 1

// kernel: tpu_custom_call.1
$region0: #{tpu_custom_call.1}
  #allocation0 [shape = 'u32[]', space=smem, size = 0x4, offset = 0x4, fixed_abs, tag = 'smem constant byte address 0x4 - core index']
  #allocation1 [shape = 'u32[144,128]{1,0:T(1,128)}', space=vmem, size = 0x12000, scoped, tag = 'internal scratch']
  %s0 = inlined_call_operand.hbm [shape: f32[256,768], index: 0, kind: input, shape index: {}]
  %s1 = inlined_call_operand.hbm [shape: f32[256,128], index: 1, kind: input, shape index: {}]
  %s2 = inlined_call_operand.hbm [shape: f32[768,128], index: 2, kind: input, shape index: {}]
  %s3 = inlined_call_operand.vmem [shape: f32[1,128], index: 3, kind: input, shape index: {}]
  %s4 = inlined_call_operand.hbm [shape: f32[128,128], index: 4, kind: input, shape index: {}]
  %s5 = inlined_call_operand.vmem [shape: f32[1,128], index: 5, kind: input, shape index: {}]
  %s6 = inlined_call_operand.hbm [shape: f32[128,256], index: 6, kind: input, shape index: {}]
  %s7 = inlined_call_operand.vmem [shape: f32[1,256], index: 7, kind: input, shape index: {}]
  %s8 = inlined_call_operand.hbm [shape: f32[128,128], index: 8, kind: input, shape index: {}]
  %s9 = inlined_call_operand.vmem [shape: f32[1,128], index: 9, kind: input, shape index: {}]
  %s10 = inlined_call_operand.hbm [shape: f32[128,128], index: 10, kind: input, shape index: {}]
  %s11 = inlined_call_operand.vmem [shape: f32[1,128], index: 11, kind: input, shape index: {}]
  %s12 = inlined_call_operand.hbm [shape: f32[128,768], index: 12, kind: input, shape index: {}]
  %s13 = inlined_call_operand.vmem [shape: f32[1,768], index: 13, kind: input, shape index: {}]
  %s14 = inlined_call_operand.hbm [shape: f32[256,768], index: 14, kind: output, shape index: {0}]
  %s15 = inlined_call_operand.hbm [shape: f32[256,256], index: 15, kind: output, shape index: {1}]
  %16 = xla_tuple %s14, %s15
  %s17 = sld [smem:[#allocation0]]
  $region129: #{tpu_custom_call.1} parent=0
    _
  %s19 = ssub.s32 1, %s17
  %s20 = scalar_select 0, %s19, %s17
  $region1: #{tpu_custom_call.1} parent=0
    #allocation2 [shape = 'u8[786432]{0}', space=vmem, size = 0xc0000, scoped, tag = 'input window, operand 0']
    #allocation3 [shape = 's32[2]{0}', space=sflag, size = 0x8, scoped, tag = 'scoped memory for tpu_custom_call.1']
    #allocation4 [shape = 's32[2]{0}', space=sflag, size = 0x8, scoped, tag = 'scoped memory for tpu_custom_call.1']
    #allocation5 [shape = 'u8[131072]{0}', space=vmem, size = 0x20000, scoped, tag = 'input window, operand 1']
    #allocation6 [shape = 's32[2]{0}', space=sflag, size = 0x8, scoped, tag = 'scoped memory for tpu_custom_call.1']
    #allocation7 [shape = 'u8[393216]{0}', space=vmem, size = 0x60000, scoped, tag = 'input window, operand 2, single buffered']
    #allocation8 [shape = 'u8[65536]{0}', space=vmem, size = 0x10000, scoped, tag = 'input window, operand 4, single buffered']
    #allocation9 [shape = 's32[1]{0}', space=sflag, size = 0x4, scoped, tag = 'scoped memory for tpu_custom_call.1']
    #allocation10 [shape = 'u8[131072]{0}', space=vmem, size = 0x20000, scoped, tag = 'input window, operand 6, single buffered']
    #allocation11 [shape = 'u8[65536]{0}', space=vmem, size = 0x10000, scoped, tag = 'input window, operand 8, single buffered']
    #allocation12 [shape = 's32[1]{0}', space=sflag, size = 0x4, scoped, tag = 'scoped memory for tpu_custom_call.1']
    #allocation13 [shape = 'u8[65536]{0}', space=vmem, size = 0x10000, scoped, tag = 'input window, operand 10, single buffered']
    #allocation14 [shape = 'u8[393216]{0}', space=vmem, size = 0x60000, scoped, tag = 'input window, operand 12, single buffered']
    #allocation15 [shape = 's32[1]{0}', space=sflag, size = 0x4, scoped, tag = 'scoped memory for tpu_custom_call.1']
    #allocation16 [shape = 'u8[786432]{0}', space=vmem, size = 0xc0000, scoped, tag = 'output window, operand 0']
    #allocation17 [shape = 'u8[262144]{0}', space=vmem, size = 0x40000, scoped, tag = 'output window, operand 1']
    #allocation18 [shape = 's32[2]{0}', space=sflag, size = 0x8, scoped, tag = 'scoped memory for tpu_custom_call.1']
    %21 = vsyncpa [#allocation3], 0
    %s22 = scalar_lea.sflag [#allocation3], 1
    %23 = vsyncpa %s22, 0
    %24 = vsyncpa [#allocation6], 0
    %s25 = scalar_lea.sflag [#allocation6], 1
    %26 = vsyncpa %s25, 0
    %27 = vsyncpa [#allocation9], 0
    %28 = vsyncpa [#allocation12], 0
    %29 = vsyncpa [#allocation15], 0
    %30 = vsyncpa [#allocation4], 0
    %s31 = scalar_lea.sflag [#allocation4], 1
    %32 = vsyncpa %s31, 0
    %33 = vsyncpa [#allocation18], 0
    %s34 = scalar_lea.sflag [#allocation18], 1
    %35 = vsyncpa %s34, 0
    loop: start=0, step=1, limit=4
    $region2: #{tpu_custom_call.1} parent=1 // loop_pre_header
      _
    $region3: #{tpu_custom_call.1} parent=1 // loop_header
      %s37 = sphi 0, %s41
      %p38 = scmp.ge.s32.totalorder %s37, 4
      %s47 = sphi 0, %s49
      %s50 = sphi 0, %s47
      %s51 = sphi 0, %s50
      %s67 = sphi 0, %s51
      %s73 = sphi 0, %s75
      %s76 = sphi 0, %s73
      %s77 = sphi 0, %s76
      %s93 = sphi 0, %s77
      %s97 = sphi 0, %s97
      %s99 = sphi 0, %s97
      %s100 = sphi 0, %s99
      %s114 = sphi 0, %s100
      %s118 = sphi 0, %s118
      %s120 = sphi 0, %s118
      %s121 = sphi 0, %s120
      %s135 = sphi 0, %s121
      %s139 = sphi 0, %s139
      %s141 = sphi 0, %s139
      %s142 = sphi 0, %s141
      %s156 = sphi 0, %s142
      %s160 = sphi 0, %s160
      %s162 = sphi 0, %s160
      %s163 = sphi 0, %s162
      %s177 = sphi 0, %s163
      %s181 = sphi 0, %s181
      %s183 = sphi 0, %s181
      %s184 = sphi 0, %s183
      %s198 = sphi 0, %s184
      %s202 = sphi 0, %s202
      %s204 = sphi 0, %s202
      %s205 = sphi 0, %s204
      %s219 = sphi 0, %s205
      %s223 = sphi 0, %s223
      %s225 = sphi 0, %s223
      %s226 = sphi 0, %s225
      %s240 = sphi 0, %s226
      %s244 = sphi 0, %s244
      %s246 = sphi 0, %s244
      %s247 = sphi 0, %s246
      %s261 = sphi 0, %s247
      %s265 = sphi 0, %s265
      %s267 = sphi 0, %s265
      %s268 = sphi 0, %s267
      %s282 = sphi 0, %s268
      %s286 = sphi 0, %s286
      %s288 = sphi 0, %s286
      %s289 = sphi 0, %s288
      %s303 = sphi 0, %s289
      %s307 = sphi 0, %s307
      %s309 = sphi 0, %s307
      %s310 = sphi 0, %s309
      %s324 = sphi 0, %s310
      %s328 = sphi 0, %s328
      %s330 = sphi 0, %s328
      %s331 = sphi 0, %s330
      %s345 = sphi 0, %s331
      %s351 = sphi 0, %s353
      %s354 = sphi 0, %s351
      %s355 = sphi 0, %s354
      %s371 = sphi 0, %s355
      %s377 = sphi 0, %s379
      %s380 = sphi 0, %s377
      %s381 = sphi 0, %s380
      %s397 = sphi 0, %s381
    $region4: #{tpu_custom_call.1} parent=1 // loop_header_branch
      %40 = sbr.rel (%p38) target = $region8
    $region5: #{tpu_custom_call.1} parent=1 // loop_body
      %s42 = ssub.s32 %s37, 1
      %s43 = ssub.s32 %s37, 2
      %s44 = sadd.s32 %s37, 1
      %s45 = ssub.s32 %s37, %s44
      %p46 = scmp.eq.s32.totalorder %s45, 0
      %s48 = sadd.s32 %s47, 1
      %s49 = scalar_select %p46, %s47, %s48
      %p52 = pneg %p46
      %p53 = scmp.eq.s32.totalorder %s37, 1
      %p54 = por %p52, %p53
      %p55 = scmp.ne.s32.totalorder %s47, %s50
      %p56 = scmp.eq.s32.totalorder %s37, 0
      %p57 = por %p55, %p56
      %p58 = scmp.ne.s32.totalorder %s47, %s50
      %p59 = scmp.eq.s32.totalorder %s42, 1
      %p60 = por %p58, %p59
      %p61 = scmp.ne.s32.totalorder %s50, %s51
      %p62 = scmp.eq.s32.totalorder %s42, 0
      %p63 = por %p61, %p62
      %p64 = scmp.ne.s32.totalorder %s50, %s51
      %p65 = scmp.eq.s32.totalorder %s43, 1
      %p66 = por %p64, %p65
      %p68 = scmp.ne.s32.totalorder %s51, %s67
      %p69 = scmp.eq.s32.totalorder %s43, 0
      %p70 = por %p68, %p69
      %s71 = ssub.s32 %s37, %s44
      %p72 = scmp.eq.s32.totalorder %s71, 0
      %s74 = sadd.s32 %s73, 1
      %s75 = scalar_select %p72, %s73, %s74
      %p78 = pneg %p72
      %p79 = scmp.eq.s32.totalorder %s37, 1
      %p80 = por %p78, %p79
      %p81 = scmp.ne.s32.totalorder %s73, %s76
      %p82 = scmp.eq.s32.totalorder %s37, 0
      %p83 = por %p81, %p82
      %p84 = scmp.ne.s32.totalorder %s73, %s76
      %p85 = scmp.eq.s32.totalorder %s42, 1
      %p86 = por %p84, %p85
      %p87 = scmp.ne.s32.totalorder %s76, %s77
      %p88 = scmp.eq.s32.totalorder %s42, 0
      %p89 = por %p87, %p88
      %p90 = scmp.ne.s32.totalorder %s76, %s77
      %p91 = scmp.eq.s32.totalorder %s43, 1
      %p92 = por %p90, %p91
      %p94 = scmp.ne.s32.totalorder %s77, %s93
      %p95 = scmp.eq.s32.totalorder %s43, 0
      %p96 = por %p94, %p95
      %s98 = sadd.s32 %s97, 1
      %p101 = scmp.eq.s32.totalorder %s37, 1
      %p102 = scmp.ne.s32.totalorder %s97, %s99
      %p103 = scmp.eq.s32.totalorder %s37, 0
      %p104 = por %p102, %p103
      %p105 = scmp.ne.s32.totalorder %s97, %s99
      %p106 = scmp.eq.s32.totalorder %s42, 1
      %p107 = por %p105, %p106
      %p108 = scmp.ne.s32.totalorder %s99, %s100
      %p109 = scmp.eq.s32.totalorder %s42, 0
      %p110 = por %p108, %p109
      %p111 = scmp.ne.s32.totalorder %s99, %s100
      %p112 = scmp.eq.s32.totalorder %s43, 1
      %p113 = por %p111, %p112
      %p115 = scmp.ne.s32.totalorder %s100, %s114
      %p116 = scmp.eq.s32.totalorder %s43, 0
      %p117 = por %p115, %p116
      %s119 = sadd.s32 %s118, 1
      %p122 = scmp.eq.s32.totalorder %s37, 1
      %p123 = scmp.ne.s32.totalorder %s118, %s120
      %p124 = scmp.eq.s32.totalorder %s37, 0
      %p125 = por %p123, %p124
      %p126 = scmp.ne.s32.totalorder %s118, %s120
      %p127 = scmp.eq.s32.totalorder %s42, 1
      %p128 = por %p126, %p127
      %p129 = scmp.ne.s32.totalorder %s120, %s121
      %p130 = scmp.eq.s32.totalorder %s42, 0
      %p131 = por %p129, %p130
      %p132 = scmp.ne.s32.totalorder %s120, %s121
      %p133 = scmp.eq.s32.totalorder %s43, 1
      %p134 = por %p132, %p133
      %p136 = scmp.ne.s32.totalorder %s121, %s135
      %p137 = scmp.eq.s32.totalorder %s43, 0
      %p138 = por %p136, %p137
      %s140 = sadd.s32 %s139, 1
      %p143 = scmp.eq.s32.totalorder %s37, 1
      %p144 = scmp.ne.s32.totalorder %s139, %s141
      %p145 = scmp.eq.s32.totalorder %s37, 0
      %p146 = por %p144, %p145
      %p147 = scmp.ne.s32.totalorder %s139, %s141
      %p148 = scmp.eq.s32.totalorder %s42, 1
      %p149 = por %p147, %p148
      %p150 = scmp.ne.s32.totalorder %s141, %s142
      %p151 = scmp.eq.s32.totalorder %s42, 0
      %p152 = por %p150, %p151
      %p153 = scmp.ne.s32.totalorder %s141, %s142
      %p154 = scmp.eq.s32.totalorder %s43, 1
      %p155 = por %p153, %p154
      %p157 = scmp.ne.s32.totalorder %s142, %s156
      %p158 = scmp.eq.s32.totalorder %s43, 0
      %p159 = por %p157, %p158
      %s161 = sadd.s32 %s160, 1
      %p164 = scmp.eq.s32.totalorder %s37, 1
      %p165 = scmp.ne.s32.totalorder %s160, %s162
      %p166 = scmp.eq.s32.totalorder %s37, 0
      %p167 = por %p165, %p166
      %p168 = scmp.ne.s32.totalorder %s160, %s162
      %p169 = scmp.eq.s32.totalorder %s42, 1
      %p170 = por %p168, %p169
      %p171 = scmp.ne.s32.totalorder %s162, %s163
      %p172 = scmp.eq.s32.totalorder %s42, 0
      %p173 = por %p171, %p172
      %p174 = scmp.ne.s32.totalorder %s162, %s163
      %p175 = scmp.eq.s32.totalorder %s43, 1
      %p176 = por %p174, %p175
      %p178 = scmp.ne.s32.totalorder %s163, %s177
      %p179 = scmp.eq.s32.totalorder %s43, 0
      %p180 = por %p178, %p179
      %s182 = sadd.s32 %s181, 1
      %p185 = scmp.eq.s32.totalorder %s37, 1
      %p186 = scmp.ne.s32.totalorder %s181, %s183
      %p187 = scmp.eq.s32.totalorder %s37, 0
      %p188 = por %p186, %p187
      %p189 = scmp.ne.s32.totalorder %s181, %s183
      %p190 = scmp.eq.s32.totalorder %s42, 1
      %p191 = por %p189, %p190
      %p192 = scmp.ne.s32.totalorder %s183, %s184
      %p193 = scmp.eq.s32.totalorder %s42, 0
      %p194 = por %p192, %p193
      %p195 = scmp.ne.s32.totalorder %s183, %s184
      %p196 = scmp.eq.s32.totalorder %s43, 1
      %p197 = por %p195, %p196
      %p199 = scmp.ne.s32.totalorder %s184, %s198
      %p200 = scmp.eq.s32.totalorder %s43, 0
      %p201 = por %p199, %p200
      %s203 = sadd.s32 %s202, 1
      %p206 = scmp.eq.s32.totalorder %s37, 1
      %p207 = scmp.ne.s32.totalorder %s202, %s204
      %p208 = scmp.eq.s32.totalorder %s37, 0
      %p209 = por %p207, %p208
      %p210 = scmp.ne.s32.totalorder %s202, %s204
      %p211 = scmp.eq.s32.totalorder %s42, 1
      %p212 = por %p210, %p211
      %p213 = scmp.ne.s32.totalorder %s204, %s205
      %p214 = scmp.eq.s32.totalorder %s42, 0
      %p215 = por %p213, %p214
      %p216 = scmp.ne.s32.totalorder %s204, %s205
      %p217 = scmp.eq.s32.totalorder %s43, 1
      %p218 = por %p216, %p217
      %p220 = scmp.ne.s32.totalorder %s205, %s219
      %p221 = scmp.eq.s32.totalorder %s43, 0
      %p222 = por %p220, %p221
      %s224 = sadd.s32 %s223, 1
      %p227 = scmp.eq.s32.totalorder %s37, 1
      %p228 = scmp.ne.s32.totalorder %s223, %s225
      %p229 = scmp.eq.s32.totalorder %s37, 0
      %p230 = por %p228, %p229
      %p231 = scmp.ne.s32.totalorder %s223, %s225
      %p232 = scmp.eq.s32.totalorder %s42, 1
      %p233 = por %p231, %p232
      %p234 = scmp.ne.s32.totalorder %s225, %s226
      %p235 = scmp.eq.s32.totalorder %s42, 0
      %p236 = por %p234, %p235
      %p237 = scmp.ne.s32.totalorder %s225, %s226
      %p238 = scmp.eq.s32.totalorder %s43, 1
      %p239 = por %p237, %p238
      %p241 = scmp.ne.s32.totalorder %s226, %s240
      %p242 = scmp.eq.s32.totalorder %s43, 0
      %p243 = por %p241, %p242
      %s245 = sadd.s32 %s244, 1
      %p248 = scmp.eq.s32.totalorder %s37, 1
      %p249 = scmp.ne.s32.totalorder %s244, %s246
      %p250 = scmp.eq.s32.totalorder %s37, 0
      %p251 = por %p249, %p250
      %p252 = scmp.ne.s32.totalorder %s244, %s246
      %p253 = scmp.eq.s32.totalorder %s42, 1
      %p254 = por %p252, %p253
      %p255 = scmp.ne.s32.totalorder %s246, %s247
      %p256 = scmp.eq.s32.totalorder %s42, 0
      %p257 = por %p255, %p256
      %p258 = scmp.ne.s32.totalorder %s246, %s247
      %p259 = scmp.eq.s32.totalorder %s43, 1
      %p260 = por %p258, %p259
      %p262 = scmp.ne.s32.totalorder %s247, %s261
      %p263 = scmp.eq.s32.totalorder %s43, 0
      %p264 = por %p262, %p263
      %s266 = sadd.s32 %s265, 1
      %p269 = scmp.eq.s32.totalorder %s37, 1
      %p270 = scmp.ne.s32.totalorder %s265, %s267
      %p271 = scmp.eq.s32.totalorder %s37, 0
      %p272 = por %p270, %p271
      %p273 = scmp.ne.s32.totalorder %s265, %s267
      %p274 = scmp.eq.s32.totalorder %s42, 1
      %p275 = por %p273, %p274
      %p276 = scmp.ne.s32.totalorder %s267, %s268
      %p277 = scmp.eq.s32.totalorder %s42, 0
      %p278 = por %p276, %p277
      %p279 = scmp.ne.s32.totalorder %s267, %s268
      %p280 = scmp.eq.s32.totalorder %s43, 1
      %p281 = por %p279, %p280
      %p283 = scmp.ne.s32.totalorder %s268, %s282
      %p284 = scmp.eq.s32.totalorder %s43, 0
      %p285 = por %p283, %p284
      %s287 = sadd.s32 %s286, 1
      %p290 = scmp.eq.s32.totalorder %s37, 1
      %p291 = scmp.ne.s32.totalorder %s286, %s288
      %p292 = scmp.eq.s32.totalorder %s37, 0
      %p293 = por %p291, %p292
      %p294 = scmp.ne.s32.totalorder %s286, %s288
      %p295 = scmp.eq.s32.totalorder %s42, 1
      %p296 = por %p294, %p295
      %p297 = scmp.ne.s32.totalorder %s288, %s289
      %p298 = scmp.eq.s32.totalorder %s42, 0
      %p299 = por %p297, %p298
      %p300 = scmp.ne.s32.totalorder %s288, %s289
      %p301 = scmp.eq.s32.totalorder %s43, 1
      %p302 = por %p300, %p301
      %p304 = scmp.ne.s32.totalorder %s289, %s303
      %p305 = scmp.eq.s32.totalorder %s43, 0
      %p306 = por %p304, %p305
      %s308 = sadd.s32 %s307, 1
      %p311 = scmp.eq.s32.totalorder %s37, 1
      %p312 = scmp.ne.s32.totalorder %s307, %s309
      %p313 = scmp.eq.s32.totalorder %s37, 0
      %p314 = por %p312, %p313
      %p315 = scmp.ne.s32.totalorder %s307, %s309
      %p316 = scmp.eq.s32.totalorder %s42, 1
      %p317 = por %p315, %p316
      %p318 = scmp.ne.s32.totalorder %s309, %s310
      %p319 = scmp.eq.s32.totalorder %s42, 0
      %p320 = por %p318, %p319
      %p321 = scmp.ne.s32.totalorder %s309, %s310
      %p322 = scmp.eq.s32.totalorder %s43, 1
      %p323 = por %p321, %p322
      %p325 = scmp.ne.s32.totalorder %s310, %s324
      %p326 = scmp.eq.s32.totalorder %s43, 0
      %p327 = por %p325, %p326
      %s329 = sadd.s32 %s328, 1
      %p332 = scmp.eq.s32.totalorder %s37, 1
      %p333 = scmp.ne.s32.totalorder %s328, %s330
      %p334 = scmp.eq.s32.totalorder %s37, 0
      %p335 = por %p333, %p334
      %p336 = scmp.ne.s32.totalorder %s328, %s330
      %p337 = scmp.eq.s32.totalorder %s42, 1
      %p338 = por %p336, %p337
      %p339 = scmp.ne.s32.totalorder %s330, %s331
      %p340 = scmp.eq.s32.totalorder %s42, 0
      %p341 = por %p339, %p340
      %p342 = scmp.ne.s32.totalorder %s330, %s331
      %p343 = scmp.eq.s32.totalorder %s43, 1
      %p344 = por %p342, %p343
      %p346 = scmp.ne.s32.totalorder %s331, %s345
      %p347 = scmp.eq.s32.totalorder %s43, 0
      %p348 = por %p346, %p347
      %s349 = ssub.s32 %s37, %s44
      %p350 = scmp.eq.s32.totalorder %s349, 0
      %s352 = sadd.s32 %s351, 1
      %s353 = scalar_select %p350, %s351, %s352
      %p356 = pneg %p350
      %p357 = scmp.eq.s32.totalorder %s37, 1
      %p358 = por %p356, %p357
      %p359 = scmp.ne.s32.totalorder %s351, %s354
      %p360 = scmp.eq.s32.totalorder %s37, 0
      %p361 = por %p359, %p360
      %p362 = scmp.ne.s32.totalorder %s351, %s354
      %p363 = scmp.eq.s32.totalorder %s42, 1
      %p364 = por %p362, %p363
      %p365 = scmp.ne.s32.totalorder %s354, %s355
      %p366 = scmp.eq.s32.totalorder %s42, 0
      %p367 = por %p365, %p366
      %p368 = scmp.ne.s32.totalorder %s354, %s355
      %p369 = scmp.eq.s32.totalorder %s43, 1
      %p370 = por %p368, %p369
      %p372 = scmp.ne.s32.totalorder %s355, %s371
      %p373 = scmp.eq.s32.totalorder %s43, 0
      %p374 = por %p372, %p373
      %s375 = ssub.s32 %s37, %s44
      %p376 = scmp.eq.s32.totalorder %s375, 0
      %s378 = sadd.s32 %s377, 1
      %s379 = scalar_select %p376, %s377, %s378
      %p382 = pneg %p376
      %p383 = scmp.eq.s32.totalorder %s37, 1
      %p384 = por %p382, %p383
      %p385 = scmp.ne.s32.totalorder %s377, %s380
      %p386 = scmp.eq.s32.totalorder %s37, 0
      %p387 = por %p385, %p386
      %p388 = scmp.ne.s32.totalorder %s377, %s380
      %p389 = scmp.eq.s32.totalorder %s42, 1
      %p390 = por %p388, %p389
      %p391 = scmp.ne.s32.totalorder %s380, %s381
      %p392 = scmp.eq.s32.totalorder %s42, 0
      %p393 = por %p391, %p392
      %p394 = scmp.ne.s32.totalorder %s380, %s381
      %p395 = scmp.eq.s32.totalorder %s43, 1
      %p396 = por %p394, %p395
      %p398 = scmp.ne.s32.totalorder %s381, %s397
      %p399 = scmp.eq.s32.totalorder %s43, 0
      %p400 = por %p398, %p399
      %p401 = scmp.le.s32.totalorder 1, %s37
      %p402 = scmp.lt.s32.totalorder %s37, 3
      %p403 = pnand %p401, %p402
      %p404 = pneg %p403
      // Predicated region
      $region9: #{tpu_custom_call.1} parent=5 // pred_check
        _
      $region10: #{tpu_custom_call.1} parent=5 // pred_check_branch
        %406 = sbr.rel (%p403) target = $region12
      $region11: #{tpu_custom_call.1} parent=5 // pred_region
        %s407 = ssub.s32 %s37, 1
        // Predicated region
        $region13: #{tpu_custom_call.1} parent=11 // pred_check
          %p408 = pneg %p110
        $region14: #{tpu_custom_call.1} parent=11 // pred_check_branch
          %410 = sbr.rel (%p408) target = $region16
        $region15: #{tpu_custom_call.1} parent=11 // pred_region
          %s412 = ssub.s32 12288, 12288
          %413 = vsyncadd [#allocation6], %s412
          %s414 = sshll.u32 [#allocation7], 4
          %s415 = int_to_ptr.vmem [resolvable:$true] %s414
          %420 = dma.hbm_to_vmem [thread:$0]  %s2, 12288, %s415, [#allocation6], 128, 128, 8
        $region16: #{tpu_custom_call.1} parent=11 // pred_fallthru
          _
        // Predicated region
        $region17: #{tpu_custom_call.1} parent=11 // pred_check
          %p421 = pneg %p131
        $region18: #{tpu_custom_call.1} parent=11 // pred_check_branch
          %423 = sbr.rel (%p421) target = $region20
        $region19: #{tpu_custom_call.1} parent=11 // pred_region
          _
        $region20: #{tpu_custom_call.1} parent=11 // pred_fallthru
          _
        // Predicated region
        $region21: #{tpu_custom_call.1} parent=11 // pred_check
          %p424 = pneg %p152
        $region22: #{tpu_custom_call.1} parent=11 // pred_check_branch
          %426 = sbr.rel (%p424) target = $region24
        $region23: #{tpu_custom_call.1} parent=11 // pred_region
          %s428 = ssub.s32 2048, 2048
          %429 = vsyncadd [#allocation9], %s428
          %s430 = sshll.u32 [#allocation8], 4
          %s431 = int_to_ptr.vmem [resolvable:$true] %s430
          %436 = dma.hbm_to_vmem [thread:$0]  %s4, 2048, %s431, [#allocation9], 128, 128, 8
        $region24: #{tpu_custom_call.1} parent=11 // pred_fallthru
          _
        // Predicated region
        $region25: #{tpu_custom_call.1} parent=11 // pred_check
          %p437 = pneg %p173
        $region26: #{tpu_custom_call.1} parent=11 // pred_check_branch
          %439 = sbr.rel (%p437) target = $region28
        $region27: #{tpu_custom_call.1} parent=11 // pred_region
          _
        $region28: #{tpu_custom_call.1} parent=11 // pred_fallthru
          _
        // Predicated region
        $region29: #{tpu_custom_call.1} parent=11 // pred_check
          %p440 = pneg %p194
        $region30: #{tpu_custom_call.1} parent=11 // pred_check_branch
          %442 = sbr.rel (%p440) target = $region32
        $region31: #{tpu_custom_call.1} parent=11 // pred_region
          %s444 = ssub.s32 4096, 4096
          %445 = vsyncadd [#allocation9], %s444
          %s446 = sshll.u32 [#allocation10], 4
          %s447 = int_to_ptr.vmem [resolvable:$true] %s446
          %452 = dma.hbm_to_vmem [thread:$0]  %s6, 4096, %s447, [#allocation9], 256, 256, 16
        $region32: #{tpu_custom_call.1} parent=11 // pred_fallthru
          _
        // Predicated region
        $region33: #{tpu_custom_call.1} parent=11 // pred_check
          %p453 = pneg %p215
        $region34: #{tpu_custom_call.1} parent=11 // pred_check_branch
          %455 = sbr.rel (%p453) target = $region36
        $region35: #{tpu_custom_call.1} parent=11 // pred_region
          _
        $region36: #{tpu_custom_call.1} parent=11 // pred_fallthru
          _
        // Predicated region
        $region37: #{tpu_custom_call.1} parent=11 // pred_check
          %p456 = pneg %p236
        $region38: #{tpu_custom_call.1} parent=11 // pred_check_branch
          %458 = sbr.rel (%p456) target = $region40
        $region39: #{tpu_custom_call.1} parent=11 // pred_region
          %s460 = ssub.s32 2048, 2048
          %461 = vsyncadd [#allocation12], %s460
          %s462 = sshll.u32 [#allocation11], 4
          %s463 = int_to_ptr.vmem [resolvable:$true] %s462
          %468 = dma.hbm_to_vmem [thread:$0]  %s8, 2048, %s463, [#allocation12], 128, 128, 8
        $region40: #{tpu_custom_call.1} parent=11 // pred_fallthru
          _
        // Predicated region
        $region41: #{tpu_custom_call.1} parent=11 // pred_check
          %p469 = pneg %p257
        $region42: #{tpu_custom_call.1} parent=11 // pred_check_branch
          %471 = sbr.rel (%p469) target = $region44
        $region43: #{tpu_custom_call.1} parent=11 // pred_region
          _
        $region44: #{tpu_custom_call.1} parent=11 // pred_fallthru
          _
        // Predicated region
        $region45: #{tpu_custom_call.1} parent=11 // pred_check
          %p472 = pneg %p278
        $region46: #{tpu_custom_call.1} parent=11 // pred_check_branch
          %474 = sbr.rel (%p472) target = $region48
        $region47: #{tpu_custom_call.1} parent=11 // pred_region
          %s476 = ssub.s32 2048, 2048
          %477 = vsyncadd [#allocation12], %s476
          %s478 = sshll.u32 [#allocation13], 4
          %s479 = int_to_ptr.vmem [resolvable:$true] %s478
          %484 = dma.hbm_to_vmem [thread:$0]  %s10, 2048, %s479, [#allocation12], 128, 128, 8
        $region48: #{tpu_custom_call.1} parent=11 // pred_fallthru
          _
        // Predicated region
        $region49: #{tpu_custom_call.1} parent=11 // pred_check
          %p485 = pneg %p299
        $region50: #{tpu_custom_call.1} parent=11 // pred_check_branch
          %487 = sbr.rel (%p485) target = $region52
        $region51: #{tpu_custom_call.1} parent=11 // pred_region
          _
        $region52: #{tpu_custom_call.1} parent=11 // pred_fallthru
          _
        // Predicated region
        $region53: #{tpu_custom_call.1} parent=11 // pred_check
          %p488 = pneg %p320
        $region54: #{tpu_custom_call.1} parent=11 // pred_check_branch
          %490 = sbr.rel (%p488) target = $region56
        $region55: #{tpu_custom_call.1} parent=11 // pred_region
          %s492 = ssub.s32 12288, 12288
          %493 = vsyncadd [#allocation15], %s492
          %s494 = sshll.u32 [#allocation14], 4
          %s495 = int_to_ptr.vmem [resolvable:$true] %s494
          %500 = dma.hbm_to_vmem [thread:$0]  %s12, 12288, %s495, [#allocation15], 768, 768, 48
        $region56: #{tpu_custom_call.1} parent=11 // pred_fallthru
          _
        // Predicated region
        $region57: #{tpu_custom_call.1} parent=11 // pred_check
          %p501 = pneg %p341
        $region58: #{tpu_custom_call.1} parent=11 // pred_check_branch
          %503 = sbr.rel (%p501) target = $region60
        $region59: #{tpu_custom_call.1} parent=11 // pred_region
          _
        $region60: #{tpu_custom_call.1} parent=11 // pred_fallthru
          _
      $region12: #{tpu_custom_call.1} parent=5 // pred_fallthru
        _
      %p504 = scmp.lt.s32.totalorder %s37, 2
      // Predicated region
      $region61: #{tpu_custom_call.1} parent=5 // pred_check
        %p505 = pneg %p504
      $region62: #{tpu_custom_call.1} parent=5 // pred_check_branch
        %507 = sbr.rel (%p505) target = $region64
      $region63: #{tpu_custom_call.1} parent=5 // pred_region
        // Predicated region
        $region65: #{tpu_custom_call.1} parent=63 // pred_check
          %p508 = pneg %p57
        $region66: #{tpu_custom_call.1} parent=63 // pred_check_branch
          %510 = sbr.rel (%p508) target = $region68
        $region67: #{tpu_custom_call.1} parent=63 // pred_region
          %s511 = sand.u32 %s47, 1
          %s512 = scalar_lea.sflag [#allocation3], %s511
          %s513 = sand.u32 %s47, 1
          %s514 = smul.addr %s513, 768
          %s515 = scalar_lea.vmem [#allocation2], %s514
          %s516 = smul.u32 16, %s37
          %s518 = ssub.s32 12288, 12288
          %519 = vsyncadd %s512, %s518
          %s520 = smul.addr %s516, 6
          %s521 = smul.addr %s520, 128
          %s522 = scalar_lea.hbm %s0, %s521
          %s523 = sshll.u32 %s515, 4
          %s524 = int_to_ptr.vmem [resolvable:$true] %s523
          %529 = dma.hbm_to_vmem [thread:$0]  %s522, 12288, %s524, %s512, 768, 768, 48
        $region68: #{tpu_custom_call.1} parent=63 // pred_fallthru
          _
        // Predicated region
        $region69: #{tpu_custom_call.1} parent=63 // pred_check
          %p530 = pneg %p83
        $region70: #{tpu_custom_call.1} parent=63 // pred_check_branch
          %532 = sbr.rel (%p530) target = $region72
        $region71: #{tpu_custom_call.1} parent=63 // pred_region
          %s533 = sand.u32 %s37, 1
          %s534 = scalar_lea.sflag [#allocation6], %s533
          %s535 = sand.u32 %s73, 1
          %s536 = smul.addr %s535, 128
          %s537 = scalar_lea.vmem [#allocation5], %s536
          %s538 = smul.u32 16, %s37
          %s540 = ssub.s32 2048, 2048
          %541 = vsyncadd %s534, %s540
          %s542 = smul.addr %s538, 128
          %s543 = scalar_lea.hbm %s1, %s542
          %s544 = sshll.u32 %s537, 4
          %s545 = int_to_ptr.vmem [resolvable:$true] %s544
          %550 = dma.hbm_to_vmem [thread:$0]  %s543, 2048, %s545, %s534, 128, 128, 8
        $region72: #{tpu_custom_call.1} parent=63 // pred_fallthru
          _
      $region64: #{tpu_custom_call.1} parent=5 // pred_fallthru
        _
      %p551 = scmp.le.s32.totalorder 1, %s37
      %p552 = scmp.lt.s32.totalorder %s37, 3
      %p553 = pnand %p551, %p552
      %p554 = pneg %p553
      // Predicated region
      $region73: #{tpu_custom_call.1} parent=5 // pred_check
        _
      $region74: #{tpu_custom_call.1} parent=5 // pred_check_branch
        %556 = sbr.rel (%p553) target = $region76
      $region75: #{tpu_custom_call.1} parent=5 // pred_region
        %s557 = ssub.s32 %s37, 1
        %s558 = sand.u32 %s50, 1
        %s559 = scalar_lea.sflag [#allocation3], %s558
        %s560 = sand.u32 %s50, 1
        %s561 = smul.addr %s560, 768
        %s562 = scalar_lea.vmem [#allocation2], %s561
        // Predicated region
        $region77: #{tpu_custom_call.1} parent=75 // pred_check
          %p563 = pneg %p63
        $region78: #{tpu_custom_call.1} parent=75 // pred_check_branch
          %565 = sbr.rel (%p563) target = $region80
        $region79: #{tpu_custom_call.1} parent=75 // pred_region
          %566 = dma.done %s559, 12288
        $region80: #{tpu_custom_call.1} parent=75 // pred_fallthru
          _
        %s567 = sand.u32 %s42, 1
        %s568 = scalar_lea.sflag [#allocation6], %s567
        %s569 = sand.u32 %s76, 1
        %s570 = smul.addr %s569, 128
        %s571 = scalar_lea.vmem [#allocation5], %s570
        // Predicated region
        $region81: #{tpu_custom_call.1} parent=75 // pred_check
          %p572 = pneg %p89
        $region82: #{tpu_custom_call.1} parent=75 // pred_check_branch
          %574 = sbr.rel (%p572) target = $region84
        $region83: #{tpu_custom_call.1} parent=75 // pred_region
          %575 = dma.done %s568, 2048
        $region84: #{tpu_custom_call.1} parent=75 // pred_fallthru
          _
        // Predicated region
        $region85: #{tpu_custom_call.1} parent=75 // pred_check
          %p576 = pneg %p110
        $region86: #{tpu_custom_call.1} parent=75 // pred_check_branch
          %578 = sbr.rel (%p576) target = $region88
        $region87: #{tpu_custom_call.1} parent=75 // pred_region
          %579 = dma.done [#allocation6], 12288
        $region88: #{tpu_custom_call.1} parent=75 // pred_fallthru
          _
        // Predicated region
        $region89: #{tpu_custom_call.1} parent=75 // pred_check
          %p580 = pneg %p152
        $region90: #{tpu_custom_call.1} parent=75 // pred_check_branch
          %582 = sbr.rel (%p580) target = $region92
        $region91: #{tpu_custom_call.1} parent=75 // pred_region
          %583 = dma.done [#allocation9], 2048
        $region92: #{tpu_custom_call.1} parent=75 // pred_fallthru
          _
        // Predicated region
        $region93: #{tpu_custom_call.1} parent=75 // pred_check
          %p584 = pneg %p194
        $region94: #{tpu_custom_call.1} parent=75 // pred_check_branch
          %586 = sbr.rel (%p584) target = $region96
        $region95: #{tpu_custom_call.1} parent=75 // pred_region
          %587 = dma.done [#allocation9], 4096
        $region96: #{tpu_custom_call.1} parent=75 // pred_fallthru
          _
        // Predicated region
        $region97: #{tpu_custom_call.1} parent=75 // pred_check
          %p588 = pneg %p236
        $region98: #{tpu_custom_call.1} parent=75 // pred_check_branch
          %590 = sbr.rel (%p588) target = $region100
        $region99: #{tpu_custom_call.1} parent=75 // pred_region
          %591 = dma.done [#allocation12], 2048
        $region100: #{tpu_custom_call.1} parent=75 // pred_fallthru
          _
        // Predicated region
        $region101: #{tpu_custom_call.1} parent=75 // pred_check
          %p592 = pneg %p278
        $region102: #{tpu_custom_call.1} parent=75 // pred_check_branch
          %594 = sbr.rel (%p592) target = $region104
        $region103: #{tpu_custom_call.1} parent=75 // pred_region
          %595 = dma.done [#allocation12], 2048
        $region104: #{tpu_custom_call.1} parent=75 // pred_fallthru
          _
        // Predicated region
        $region105: #{tpu_custom_call.1} parent=75 // pred_check
          %p596 = pneg %p320
        $region106: #{tpu_custom_call.1} parent=75 // pred_check_branch
          %598 = sbr.rel (%p596) target = $region108
        $region107: #{tpu_custom_call.1} parent=75 // pred_region
          %599 = dma.done [#allocation15], 12288
        $region108: #{tpu_custom_call.1} parent=75 // pred_fallthru
          _
        %s600 = sand.u32 %s50, 1
        %s601 = scalar_lea.sflag [#allocation3], %s600
        %s602 = sand.u32 %s50, 1
        %s603 = smul.addr %s602, 768
        %s604 = scalar_lea.vmem [#allocation2], %s603
        %p605 = pneg %p63
        %p606 = pneg %p60
        %s607 = sand.u32 %s42, 1
        %s608 = scalar_lea.sflag [#allocation6], %s607
        %s609 = sand.u32 %s76, 1
        %s610 = smul.addr %s609, 128
        %s611 = scalar_lea.vmem [#allocation5], %s610
        %p612 = pneg %p89
        %p613 = pneg %p86
        %p614 = pneg %p110
        %p615 = pneg %p107
        %p616 = pneg %p131
        %p617 = pneg %p128
        %p618 = pneg %p152
        %p619 = pneg %p149
        %p620 = pneg %p173
        %p621 = pneg %p170
        %p622 = pneg %p194
        %p623 = pneg %p191
        %p624 = pneg %p215
        %p625 = pneg %p212
        %p626 = pneg %p236
        %p627 = pneg %p233
        %p628 = pneg %p257
        %p629 = pneg %p254
        %p630 = pneg %p278
        %p631 = pneg %p275
        %p632 = pneg %p299
        %p633 = pneg %p296
        %p634 = pneg %p320
        %p635 = pneg %p317
        %p636 = pneg %p341
        %p637 = pneg %p338
        %p638 = pneg %p367
        %p639 = pneg %p364
        %s640 = sand.u32 %s354, 1
        %s641 = scalar_lea.sflag [#allocation4], %s640
        %s642 = sand.u32 %s354, 1
        %s643 = smul.addr %s642, 768
        %s644 = scalar_lea.vmem [#allocation16], %s643
        %p645 = pneg %p393
        %p646 = pneg %p390
        %s647 = sand.u32 %s380, 1
        %s648 = scalar_lea.sflag [#allocation18], %s647
        %s649 = sand.u32 %s380, 1
        %s650 = smul.addr %s649, 256
        %s651 = scalar_lea.vmem [#allocation17], %s650
        %s652 = smul.u32 16, %s42
        %s653 = smul.u32 16, %s42
        %s654 = smul.u32 16, %s42
        %s655 = smul.u32 16, %s42
        %v656 = vld [vmem:[%s562] sm:$0xff]
        %v657 = vld [vmem:[%s562 + $0x8] sm:$0xff]
        %v658 = vld [vmem:[%s562 + $0x10] sm:$0xff]
        %v659 = vld [vmem:[%s562 + $0x18] sm:$0xff]
        %v660 = vld [vmem:[%s562 + $0x20] sm:$0xff]
        %v661 = vld [vmem:[%s562 + $0x28] sm:$0xff]
        %v662 = vld [vmem:[%s562 + $0x30] sm:$0xff]
        %v663 = vld [vmem:[%s562 + $0x38] sm:$0xff]
        %v664 = vld [vmem:[%s562 + $0x40] sm:$0xff]
        %v665 = vld [vmem:[%s562 + $0x48] sm:$0xff]
        %v666 = vld [vmem:[%s562 + $0x50] sm:$0xff]
        %v667 = vld [vmem:[%s562 + $0x58] sm:$0xff]
        %v668 = vld [vmem:[%s562 + $0x60] sm:$0xff]
        %v669 = vld [vmem:[%s562 + $0x68] sm:$0xff]
        %v670 = vld [vmem:[%s562 + $0x70] sm:$0xff]
        %v671 = vld [vmem:[%s562 + $0x78] sm:$0xff]
        %v672 = vld [vmem:[%s562 + $0x80] sm:$0xff]
        %v673 = vld [vmem:[%s562 + $0x88] sm:$0xff]
        %v674 = vld [vmem:[%s562 + $0x90] sm:$0xff]
        %v675 = vld [vmem:[%s562 + $0x98] sm:$0xff]
        %v676 = vld [vmem:[%s562 + $0xa0] sm:$0xff]
        %v677 = vld [vmem:[%s562 + $0xa8] sm:$0xff]
        %v678 = vld [vmem:[%s562 + $0xb0] sm:$0xff]
        %v679 = vld [vmem:[%s562 + $0xb8] sm:$0xff]
        %v680 = vld [vmem:[%s562 + $0xc0] sm:$0xff]
        %v681 = vld [vmem:[%s562 + $0xc8] sm:$0xff]
        %v682 = vld [vmem:[%s562 + $0xd0] sm:$0xff]
        %v683 = vld [vmem:[%s562 + $0xd8] sm:$0xff]
        %v684 = vld [vmem:[%s562 + $0xe0] sm:$0xff]
        %v685 = vld [vmem:[%s562 + $0xe8] sm:$0xff]
        %v686 = vld [vmem:[%s562 + $0xf0] sm:$0xff]
        %v687 = vld [vmem:[%s562 + $0xf8] sm:$0xff]
        %v688 = vld [vmem:[%s562 + $0x100] sm:$0xff]
        %v689 = vld [vmem:[%s562 + $0x108] sm:$0xff]
        %v690 = vld [vmem:[%s562 + $0x110] sm:$0xff]
        %v691 = vld [vmem:[%s562 + $0x118] sm:$0xff]
        %v692 = vld [vmem:[%s562 + $0x120] sm:$0xff]
        %v693 = vld [vmem:[%s562 + $0x128] sm:$0xff]
        %v694 = vld [vmem:[%s562 + $0x130] sm:$0xff]
        %v695 = vld [vmem:[%s562 + $0x138] sm:$0xff]
        %v696 = vld [vmem:[%s562 + $0x140] sm:$0xff]
        %v697 = vld [vmem:[%s562 + $0x148] sm:$0xff]
        %v698 = vld [vmem:[%s562 + $0x150] sm:$0xff]
        %v699 = vld [vmem:[%s562 + $0x158] sm:$0xff]
        %v700 = vld [vmem:[%s562 + $0x160] sm:$0xff]
        %v701 = vld [vmem:[%s562 + $0x168] sm:$0xff]
        %v702 = vld [vmem:[%s562 + $0x170] sm:$0xff]
        %v703 = vld [vmem:[%s562 + $0x178] sm:$0xff]
        %v704 = vld [vmem:[%s562 + $0x180] sm:$0xff]
        %v705 = vld [vmem:[%s562 + $0x188] sm:$0xff]
        %v706 = vld [vmem:[%s562 + $0x190] sm:$0xff]
        %v707 = vld [vmem:[%s562 + $0x198] sm:$0xff]
        %v708 = vld [vmem:[%s562 + $0x1a0] sm:$0xff]
        %v709 = vld [vmem:[%s562 + $0x1a8] sm:$0xff]
        %v710 = vld [vmem:[%s562 + $0x1b0] sm:$0xff]
        %v711 = vld [vmem:[%s562 + $0x1b8] sm:$0xff]
        %v712 = vld [vmem:[%s562 + $0x1c0] sm:$0xff]
        %v713 = vld [vmem:[%s562 + $0x1c8] sm:$0xff]
        %v714 = vld [vmem:[%s562 + $0x1d0] sm:$0xff]
        %v715 = vld [vmem:[%s562 + $0x1d8] sm:$0xff]
        %v716 = vld [vmem:[%s562 + $0x1e0] sm:$0xff]
        %v717 = vld [vmem:[%s562 + $0x1e8] sm:$0xff]
        %v718 = vld [vmem:[%s562 + $0x1f0] sm:$0xff]
        %v719 = vld [vmem:[%s562 + $0x1f8] sm:$0xff]
        %v720 = vld [vmem:[%s562 + $0x200] sm:$0xff]
        %v721 = vld [vmem:[%s562 + $0x208] sm:$0xff]
        %v722 = vld [vmem:[%s562 + $0x210] sm:$0xff]
        %v723 = vld [vmem:[%s562 + $0x218] sm:$0xff]
        %v724 = vld [vmem:[%s562 + $0x220] sm:$0xff]
        %v725 = vld [vmem:[%s562 + $0x228] sm:$0xff]
        %v726 = vld [vmem:[%s562 + $0x230] sm:$0xff]
        %v727 = vld [vmem:[%s562 + $0x238] sm:$0xff]
        %v728 = vld [vmem:[%s562 + $0x240] sm:$0xff]
        %v729 = vld [vmem:[%s562 + $0x248] sm:$0xff]
        %v730 = vld [vmem:[%s562 + $0x250] sm:$0xff]
        %v731 = vld [vmem:[%s562 + $0x258] sm:$0xff]
        %v732 = vld [vmem:[%s562 + $0x260] sm:$0xff]
        %v733 = vld [vmem:[%s562 + $0x268] sm:$0xff]
        %v734 = vld [vmem:[%s562 + $0x270] sm:$0xff]
        %v735 = vld [vmem:[%s562 + $0x278] sm:$0xff]
        %v736 = vld [vmem:[%s562 + $0x280] sm:$0xff]
        %v737 = vld [vmem:[%s562 + $0x288] sm:$0xff]
        %v738 = vld [vmem:[%s562 + $0x290] sm:$0xff]
        %v739 = vld [vmem:[%s562 + $0x298] sm:$0xff]
        %v740 = vld [vmem:[%s562 + $0x2a0] sm:$0xff]
        %v741 = vld [vmem:[%s562 + $0x2a8] sm:$0xff]
        %v742 = vld [vmem:[%s562 + $0x2b0] sm:$0xff]
        %v743 = vld [vmem:[%s562 + $0x2b8] sm:$0xff]
        %v744 = vld [vmem:[%s562 + $0x2c0] sm:$0xff]
        %v745 = vld [vmem:[%s562 + $0x2c8] sm:$0xff]
        %v746 = vld [vmem:[%s562 + $0x2d0] sm:$0xff]
        %v747 = vld [vmem:[%s562 + $0x2d8] sm:$0xff]
        %v748 = vld [vmem:[%s562 + $0x2e0] sm:$0xff]
        %v749 = vld [vmem:[%s562 + $0x2e8] sm:$0xff]
        %v750 = vld [vmem:[%s562 + $0x2f0] sm:$0xff]
        %v751 = vld [vmem:[%s562 + $0x2f8] sm:$0xff]
        %v752 = vld [vmem:[#allocation7] sm:$0xff]
        %v753 = vld [vmem:[#allocation7 + $0x8] sm:$0xff]
        %v754 = vld [vmem:[#allocation7 + $0x10] sm:$0xff]
        %v755 = vld [vmem:[#allocation7 + $0x18] sm:$0xff]
        %v756 = vld [vmem:[#allocation7 + $0x20] sm:$0xff]
        %v757 = vld [vmem:[#allocation7 + $0x28] sm:$0xff]
        %v758 = vld [vmem:[#allocation7 + $0x30] sm:$0xff]
        %v759 = vld [vmem:[#allocation7 + $0x38] sm:$0xff]
        %v760 = vld [vmem:[#allocation7 + $0x40] sm:$0xff]
        %v761 = vld [vmem:[#allocation7 + $0x48] sm:$0xff]
        %v762 = vld [vmem:[#allocation7 + $0x50] sm:$0xff]
        %v763 = vld [vmem:[#allocation7 + $0x58] sm:$0xff]
        %v764 = vld [vmem:[#allocation7 + $0x60] sm:$0xff]
        %v765 = vld [vmem:[#allocation7 + $0x68] sm:$0xff]
        %v766 = vld [vmem:[#allocation7 + $0x70] sm:$0xff]
        %v767 = vld [vmem:[#allocation7 + $0x78] sm:$0xff]
        %v768 = vld [vmem:[#allocation7 + $0x80] sm:$0xff]
        %v769 = vld [vmem:[#allocation7 + $0x88] sm:$0xff]
        %v770 = vld [vmem:[#allocation7 + $0x90] sm:$0xff]
        %v771 = vld [vmem:[#allocation7 + $0x98] sm:$0xff]
        %v772 = vld [vmem:[#allocation7 + $0xa0] sm:$0xff]
        %v773 = vld [vmem:[#allocation7 + $0xa8] sm:$0xff]
        %v774 = vld [vmem:[#allocation7 + $0xb0] sm:$0xff]
        %v775 = vld [vmem:[#allocation7 + $0xb8] sm:$0xff]
        %v776 = vld [vmem:[#allocation7 + $0xc0] sm:$0xff]
        %v777 = vld [vmem:[#allocation7 + $0xc8] sm:$0xff]
        %v778 = vld [vmem:[#allocation7 + $0xd0] sm:$0xff]
        %v779 = vld [vmem:[#allocation7 + $0xd8] sm:$0xff]
        %v780 = vld [vmem:[#allocation7 + $0xe0] sm:$0xff]
        %v781 = vld [vmem:[#allocation7 + $0xe8] sm:$0xff]
        %v782 = vld [vmem:[#allocation7 + $0xf0] sm:$0xff]
        %v783 = vld [vmem:[#allocation7 + $0xf8] sm:$0xff]
        %v784 = vld [vmem:[#allocation7 + $0x100] sm:$0xff]
        %v785 = vld [vmem:[#allocation7 + $0x108] sm:$0xff]
        %v786 = vld [vmem:[#allocation7 + $0x110] sm:$0xff]
        %v787 = vld [vmem:[#allocation7 + $0x118] sm:$0xff]
        %v788 = vld [vmem:[#allocation7 + $0x120] sm:$0xff]
        %v789 = vld [vmem:[#allocation7 + $0x128] sm:$0xff]
        %v790 = vld [vmem:[#allocation7 + $0x130] sm:$0xff]
        %v791 = vld [vmem:[#allocation7 + $0x138] sm:$0xff]
        %v792 = vld [vmem:[#allocation7 + $0x140] sm:$0xff]
        %v793 = vld [vmem:[#allocation7 + $0x148] sm:$0xff]
        %v794 = vld [vmem:[#allocation7 + $0x150] sm:$0xff]
        %v795 = vld [vmem:[#allocation7 + $0x158] sm:$0xff]
        %v796 = vld [vmem:[#allocation7 + $0x160] sm:$0xff]
        %v797 = vld [vmem:[#allocation7 + $0x168] sm:$0xff]
        %v798 = vld [vmem:[#allocation7 + $0x170] sm:$0xff]
        %v799 = vld [vmem:[#allocation7 + $0x178] sm:$0xff]
        %v800 = vld [vmem:[#allocation7 + $0x180] sm:$0xff]
        %v801 = vld [vmem:[#allocation7 + $0x188] sm:$0xff]
        %v802 = vld [vmem:[#allocation7 + $0x190] sm:$0xff]
        %v803 = vld [vmem:[#allocation7 + $0x198] sm:$0xff]
        %v804 = vld [vmem:[#allocation7 + $0x1a0] sm:$0xff]
        %v805 = vld [vmem:[#allocation7 + $0x1a8] sm:$0xff]
        %v806 = vld [vmem:[#allocation7 + $0x1b0] sm:$0xff]
        %v807 = vld [vmem:[#allocation7 + $0x1b8] sm:$0xff]
        %v808 = vld [vmem:[#allocation7 + $0x1c0] sm:$0xff]
        %v809 = vld [vmem:[#allocation7 + $0x1c8] sm:$0xff]
        %v810 = vld [vmem:[#allocation7 + $0x1d0] sm:$0xff]
        %v811 = vld [vmem:[#allocation7 + $0x1d8] sm:$0xff]
        %v812 = vld [vmem:[#allocation7 + $0x1e0] sm:$0xff]
        %v813 = vld [vmem:[#allocation7 + $0x1e8] sm:$0xff]
        %v814 = vld [vmem:[#allocation7 + $0x1f0] sm:$0xff]
        %v815 = vld [vmem:[#allocation7 + $0x1f8] sm:$0xff]
        %v816 = vld [vmem:[#allocation7 + $0x200] sm:$0xff]
        %v817 = vld [vmem:[#allocation7 + $0x208] sm:$0xff]
        %v818 = vld [vmem:[#allocation7 + $0x210] sm:$0xff]
        %v819 = vld [vmem:[#allocation7 + $0x218] sm:$0xff]
        %v820 = vld [vmem:[#allocation7 + $0x220] sm:$0xff]
        %v821 = vld [vmem:[#allocation7 + $0x228] sm:$0xff]
        %v822 = vld [vmem:[#allocation7 + $0x230] sm:$0xff]
        %v823 = vld [vmem:[#allocation7 + $0x238] sm:$0xff]
        %v824 = vld [vmem:[#allocation7 + $0x240] sm:$0xff]
        %v825 = vld [vmem:[#allocation7 + $0x248] sm:$0xff]
        %v826 = vld [vmem:[#allocation7 + $0x250] sm:$0xff]
        %v827 = vld [vmem:[#allocation7 + $0x258] sm:$0xff]
        %v828 = vld [vmem:[#allocation7 + $0x260] sm:$0xff]
        %v829 = vld [vmem:[#allocation7 + $0x268] sm:$0xff]
        %v830 = vld [vmem:[#allocation7 + $0x270] sm:$0xff]
        %v831 = vld [vmem:[#allocation7 + $0x278] sm:$0xff]
        %v832 = vld [vmem:[#allocation7 + $0x280] sm:$0xff]
        %v833 = vld [vmem:[#allocation7 + $0x288] sm:$0xff]
        %v834 = vld [vmem:[#allocation7 + $0x290] sm:$0xff]
        %v835 = vld [vmem:[#allocation7 + $0x298] sm:$0xff]
        %v836 = vld [vmem:[#allocation7 + $0x2a0] sm:$0xff]
        %v837 = vld [vmem:[#allocation7 + $0x2a8] sm:$0xff]
        %v838 = vld [vmem:[#allocation7 + $0x2b0] sm:$0xff]
        %v839 = vld [vmem:[#allocation7 + $0x2b8] sm:$0xff]
        %v840 = vld [vmem:[#allocation7 + $0x2c0] sm:$0xff]
        %v841 = vld [vmem:[#allocation7 + $0x2c8] sm:$0xff]
        %v842 = vld [vmem:[#allocation7 + $0x2d0] sm:$0xff]
        %v843 = vld [vmem:[#allocation7 + $0x2d8] sm:$0xff]
        %v844 = vld [vmem:[#allocation7 + $0x2e0] sm:$0xff]
        %v845 = vld [vmem:[#allocation7 + $0x2e8] sm:$0xff]
        %v846 = vld [vmem:[#allocation7 + $0x2f0] sm:$0xff]
        %v847 = vld [vmem:[#allocation7 + $0x2f8] sm:$0xff]
        %v848 = vld [vmem:[%s3] sm:$0x1]
        %v850 = vlaneseq
        %v851 = vshrl.u32 %v850, 7
        %v852 = vsub.s32 0, %v851
        %v853 = vrot.slane %v848, %v852
        %855 = vmatprep.subr.mxu0 0.0
        %856 = vmatpush1.msra.mxu0 %v752
        %857 = vmatprep.subr.mxu0 0.0
        %858 = vmatpush1.msra.mxu0 %v753
        %859 = vmatprep.subr.mxu0 0.0
        %860 = vmatpush1.msra.mxu0 %v754
        %861 = vmatprep.subr.mxu0 0.0
        %862 = vmatpush1.msra.mxu0 %v755
        %863 = vmatprep.subr.mxu0 0.0
        %864 = vmatpush1.msra.mxu0 %v756
        %865 = vmatprep.subr.mxu0 0.0
        %866 = vmatpush1.msra.mxu0 %v757
        %867 = vmatprep.subr.mxu0 0.0
        %868 = vmatpush1.msra.mxu0 %v758
        %869 = vmatprep.subr.mxu0 0.0
        %870 = vmatpush1.msra.mxu0 %v759
        %871 = vmatprep.subr.mxu0 0.0
        %872 = vmatpush1.msra.mxu0 %v760
        %873 = vmatprep.subr.mxu0 0.0
        %874 = vmatpush1.msra.mxu0 %v761
        %875 = vmatprep.subr.mxu0 0.0
        %876 = vmatpush1.msra.mxu0 %v762
        %877 = vmatprep.subr.mxu0 0.0
        %878 = vmatpush1.msra.mxu0 %v763
        %879 = vmatprep.subr.mxu0 0.0
        %880 = vmatpush1.msra.mxu0 %v764
        %881 = vmatprep.subr.mxu0 0.0
        %882 = vmatpush1.msra.mxu0 %v765
        %883 = vmatprep.subr.mxu0 0.0
        %884 = vmatpush1.msra.mxu0 %v766
        %885 = vmatprep.subr.mxu0 0.0
        %886 = vmatpush1.msra.mxu0 %v767
        %887 = vmatprep.subr.mxu0 0.0
        %888 = vmatpush1.msra.mxu0 %v768
        %889 = vmatprep.subr.mxu0 0.0
        %890 = vmatpush1.msra.mxu0 %v769
        %891 = vmatprep.subr.mxu0 0.0
        %892 = vmatpush1.msra.mxu0 %v770
        %893 = vmatprep.subr.mxu0 0.0
        %894 = vmatpush1.msra.mxu0 %v771
        %895 = vmatprep.subr.mxu0 0.0
        %896 = vmatpush1.msra.mxu0 %v772
        %897 = vmatprep.subr.mxu0 0.0
        %898 = vmatpush1.msra.mxu0 %v773
        %899 = vmatprep.subr.mxu0 0.0
        %900 = vmatpush1.msra.mxu0 %v774
        %901 = vmatprep.subr.mxu0 0.0
        %902 = vmatpush1.msra.mxu0 %v775
        %903 = vmatprep.subr.mxu0 0.0
        %904 = vmatpush1.msra.mxu0 %v776
        %905 = vmatprep.subr.mxu0 0.0
        %906 = vmatpush1.msra.mxu0 %v777
        %907 = vmatprep.subr.mxu0 0.0
        %908 = vmatpush1.msra.mxu0 %v778
        %909 = vmatprep.subr.mxu0 0.0
        %910 = vmatpush1.msra.mxu0 %v779
        %911 = vmatprep.subr.mxu0 0.0
        %912 = vmatpush1.msra.mxu0 %v780
        %913 = vmatprep.subr.mxu0 0.0
        %914 = vmatpush1.msra.mxu0 %v781
        %915 = vmatprep.subr.mxu0 0.0
        %916 = vmatpush1.msra.mxu0 %v782
        %917 = vmatprep.subr.mxu0 0.0
        %918 = vmatpush1.msra.mxu0 %v783
        %919 = vmatprep.mubr.f32.mxu0 %v657
        %920 = vmatmul.mubr.f32.gmra.mrb[0].mxu0 %v656
        %v921 = vpop.f32.mrb[0].mxu0
        %v922 = vadd.f32 %v853, %v921
        %v923 = vpop.f32.mrb[0].mxu0
        %924 = vmatprep.mubr.f32.mxu0 %v663
        %925 = vmatmul.mubr.f32.gmra.mrb[0].mxu0 %v662
        %v926 = vpop.f32.mrb[0].mxu0
        %v927 = vadd.f32 %v853, %v926
        %v928 = vpop.f32.mrb[0].mxu0
        %929 = vmatprep.mubr.f32.mxu0 %v669
        %930 = vmatmul.mubr.f32.gmra.mrb[0].mxu0 %v668
        %v931 = vpop.f32.mrb[0].mxu0
        %v932 = vadd.f32 %v853, %v931
        %v933 = vpop.f32.mrb[0].mxu0
        %934 = vmatprep.mubr.f32.mxu0 %v675
        %935 = vmatmul.mubr.f32.gmra.mrb[0].mxu0 %v674
        %v936 = vpop.f32.mrb[0].mxu0
        %v937 = vadd.f32 %v853, %v936
        %v938 = vpop.f32.mrb[0].mxu0
        %939 = vmatprep.mubr.f32.mxu0 %v681
        %940 = vmatmul.mubr.f32.gmra.mrb[0].mxu0 %v680
        %v941 = vpop.f32.mrb[0].mxu0
        %v942 = vadd.f32 %v853, %v941
        %v943 = vpop.f32.mrb[0].mxu0
        %944 = vmatprep.mubr.f32.mxu0 %v687
        %945 = vmatmul.mubr.f32.gmra.mrb[0].mxu0 %v686
        %v946 = vpop.f32.mrb[0].mxu0
        %v947 = vadd.f32 %v853, %v946
        %v948 = vpop.f32.mrb[0].mxu0
        %949 = vmatprep.mubr.f32.mxu0 %v693
        %950 = vmatmul.mubr.f32.gmra.mrb[0].mxu0 %v692
        %v951 = vpop.f32.mrb[0].mxu0
        %v952 = vadd.f32 %v853, %v951
        %v953 = vpop.f32.mrb[0].mxu0
        %954 = vmatprep.mubr.f32.mxu0 %v699
        %955 = vmatmul.mubr.f32.gmra.mrb[0].mxu0 %v698
        %v956 = vpop.f32.mrb[0].mxu0
        %v957 = vadd.f32 %v853, %v956
        %v958 = vpop.f32.mrb[0].mxu0
        %959 = vmatprep.mubr.f32.mxu0 %v705
        %960 = vmatmul.mubr.f32.gmra.mrb[0].mxu0 %v704
        %v961 = vpop.f32.mrb[0].mxu0
        %v962 = vadd.f32 %v853, %v961
        %v963 = vpop.f32.mrb[0].mxu0
        %964 = vmatprep.mubr.f32.mxu0 %v711
        %965 = vmatmul.mubr.f32.gmra.mrb[0].mxu0 %v710
        %v966 = vpop.f32.mrb[0].mxu0
        %v967 = vadd.f32 %v853, %v966
        %v968 = vpop.f32.mrb[0].mxu0
        %969 = vmatprep.mubr.f32.mxu0 %v717
        %970 = vmatmul.mubr.f32.gmra.mrb[0].mxu0 %v716
        %v971 = vpop.f32.mrb[0].mxu0
        %v972 = vadd.f32 %v853, %v971
        %v973 = vpop.f32.mrb[0].mxu0
        %974 = vmatprep.mubr.f32.mxu0 %v723
        %975 = vmatmul.mubr.f32.gmra.mrb[0].mxu0 %v722
        %v976 = vpop.f32.mrb[0].mxu0
        %v977 = vadd.f32 %v853, %v976
        %v978 = vpop.f32.mrb[0].mxu0
        %979 = vmatprep.mubr.f32.mxu0 %v729
        %980 = vmatmul.mubr.f32.gmra.mrb[0].mxu0 %v728
        %v981 = vpop.f32.mrb[0].mxu0
        %v982 = vadd.f32 %v853, %v981
        %v983 = vpop.f32.mrb[0].mxu0
        %984 = vmatprep.mubr.f32.mxu0 %v735
        %985 = vmatmul.mubr.f32.gmra.mrb[0].mxu0 %v734
        %v986 = vpop.f32.mrb[0].mxu0
        %v987 = vadd.f32 %v853, %v986
        %v988 = vpop.f32.mrb[0].mxu0
        %989 = vmatprep.mubr.f32.mxu0 %v741
        %990 = vmatmul.mubr.f32.gmra.mrb[0].mxu0 %v740
        %v991 = vpop.f32.mrb[0].mxu0
        %v992 = vadd.f32 %v853, %v991
        %v993 = vpop.f32.mrb[0].mxu0
        %994 = vmatprep.mubr.f32.mxu0 %v747
        %995 = vmatmul.mubr.f32.gmra.mrb[0].mxu0 %v746
        %v996 = vpop.f32.mrb[0].mxu0
        %v997 = vadd.f32 %v853, %v996
        %v998 = vpop.f32.mrb[0].mxu0
        %999 = vdwg.mxu0
        %1000 = vmatprep.subr.mxu0 0.0
        %1001 = vmatpush1.msra.mxu0 %v784
        %1002 = vmatprep.subr.mxu0 0.0
        %1003 = vmatpush1.msra.mxu0 %v785
        %1004 = vmatprep.subr.mxu0 0.0
        %1005 = vmatpush1.msra.mxu0 %v786
        %1006 = vmatprep.subr.mxu0 0.0
        %1007 = vmatpush1.msra.mxu0 %v787
        %1008 = vmatprep.subr.mxu0 0.0
        %1009 = vmatpush1.msra.mxu0 %v788
        %1010 = vmatprep.subr.mxu0 0.0
        %1011 = vmatpush1.msra.mxu0 %v789
        %1012 = vmatprep.subr.mxu0 0.0
        %1013 = vmatpush1.msra.mxu0 %v790
        %1014 = vmatprep.subr.mxu0 0.0
        %1015 = vmatpush1.msra.mxu0 %v791
        %1016 = vmatprep.subr.mxu0 0.0
        %1017 = vmatpush1.msra.mxu0 %v792
        %1018 = vmatprep.subr.mxu0 0.0
        %1019 = vmatpush1.msra.mxu0 %v793
        %1020 = vmatprep.subr.mxu0 0.0
        %1021 = vmatpush1.msra.mxu0 %v794
        %1022 = vmatprep.subr.mxu0 0.0
        %1023 = vmatpush1.msra.mxu0 %v795
        %1024 = vmatprep.subr.mxu0 0.0
        %1025 = vmatpush1.msra.mxu0 %v796
        %1026 = vmatprep.subr.mxu0 0.0
        %1027 = vmatpush1.msra.mxu0 %v797
        %1028 = vmatprep.subr.mxu0 0.0
        %1029 = vmatpush1.msra.mxu0 %v798
        %1030 = vmatprep.subr.mxu0 0.0
        %1031 = vmatpush1.msra.mxu0 %v799
        %1032 = vmatprep.subr.mxu0 0.0
        %1033 = vmatpush1.msra.mxu0 %v800
        %1034 = vmatprep.subr.mxu0 0.0
        %1035 = vmatpush1.msra.mxu0 %v801
        %1036 = vmatprep.subr.mxu0 0.0
        %1037 = vmatpush1.msra.mxu0 %v802
        %1038 = vmatprep.subr.mxu0 0.0
        %1039 = vmatpush1.msra.mxu0 %v803
        %1040 = vmatprep.subr.mxu0 0.0
        %1041 = vmatpush1.msra.mxu0 %v804
        %1042 = vmatprep.subr.mxu0 0.0
        %1043 = vmatpush1.msra.mxu0 %v805
        %1044 = vmatprep.subr.mxu0 0.0
        %1045 = vmatpush1.msra.mxu0 %v806
        %1046 = vmatprep.subr.mxu0 0.0
        %1047 = vmatpush1.msra.mxu0 %v807
        %1048 = vmatprep.subr.mxu0 0.0
        %1049 = vmatpush1.msra.mxu0 %v808
        %1050 = vmatprep.subr.mxu0 0.0
        %1051 = vmatpush1.msra.mxu0 %v809
        %1052 = vmatprep.subr.mxu0 0.0
        %1053 = vmatpush1.msra.mxu0 %v810
        %1054 = vmatprep.subr.mxu0 0.0
        %1055 = vmatpush1.msra.mxu0 %v811
        %1056 = vmatprep.subr.mxu0 0.0
        %1057 = vmatpush1.msra.mxu0 %v812
        %1058 = vmatprep.subr.mxu0 0.0
        %1059 = vmatpush1.msra.mxu0 %v813
        %1060 = vmatprep.subr.mxu0 0.0
        %1061 = vmatpush1.msra.mxu0 %v814
        %1062 = vmatprep.subr.mxu0 0.0
        %1063 = vmatpush1.msra.mxu0 %v815
        %1064 = vmatprep.mubr.f32.mxu0 %v659
        %1065 = vmatmul.mubr.f32.gmra.mrb[0].mxu0 %v658
        %v1066 = vpop.f32.mrb[0].mxu0
        %v1067 = vadd.f32 %v922, %v1066
        %v1068 = vpop.f32.mrb[0].mxu0
        %1069 = vmatprep.mubr.f32.mxu0 %v665
        %1070 = vmatmul.mubr.f32.gmra.mrb[0].mxu0 %v664
        %v1071 = vpop.f32.mrb[0].mxu0
        %v1072 = vadd.f32 %v927, %v1071
        %v1073 = vpop.f32.mrb[0].mxu0
        %1074 = vmatprep.mubr.f32.mxu0 %v671
        %1075 = vmatmul.mubr.f32.gmra.mrb[0].mxu0 %v670
        %v1076 = vpop.f32.mrb[0].mxu0
        %v1077 = vadd.f32 %v932, %v1076
        %v1078 = vpop.f32.mrb[0].mxu0
        %1079 = vmatprep.mubr.f32.mxu0 %v677
        %1080 = vmatmul.mubr.f32.gmra.mrb[0].mxu0 %v676
        %v1081 = vpop.f32.mrb[0].mxu0
        %v1082 = vadd.f32 %v937, %v1081
        %v1083 = vpop.f32.mrb[0].mxu0
        %1084 = vmatprep.mubr.f32.mxu0 %v683
        %1085 = vmatmul.mubr.f32.gmra.mrb[0].mxu0 %v682
        %v1086 = vpop.f32.mrb[0].mxu0
        %v1087 = vadd.f32 %v942, %v1086
        %v1088 = vpop.f32.mrb[0].mxu0
        %1089 = vmatprep.mubr.f32.mxu0 %v689
        %1090 = vmatmul.mubr.f32.gmra.mrb[0].mxu0 %v688
        %v1091 = vpop.f32.mrb[0].mxu0
        %v1092 = vadd.f32 %v947, %v1091
        %v1093 = vpop.f32.mrb[0].mxu0
        %1094 = vmatprep.mubr.f32.mxu0 %v695
        %1095 = vmatmul.mubr.f32.gmra.mrb[0].mxu0 %v694
        %v1096 = vpop.f32.mrb[0].mxu0
        %v1097 = vadd.f32 %v952, %v1096
        %v1098 = vpop.f32.mrb[0].mxu0
        %1099 = vmatprep.mubr.f32.mxu0 %v701
        %1100 = vmatmul.mubr.f32.gmra.mrb[0].mxu0 %v700
        %v1101 = vpop.f32.mrb[0].mxu0
        %v1102 = vadd.f32 %v957, %v1101
        %v1103 = vpop.f32.mrb[0].mxu0
        %1104 = vmatprep.mubr.f32.mxu0 %v707
        %1105 = vmatmul.mubr.f32.gmra.mrb[0].mxu0 %v706
        %v1106 = vpop.f32.mrb[0].mxu0
        %v1107 = vadd.f32 %v962, %v1106
        %v1108 = vpop.f32.mrb[0].mxu0
        %1109 = vmatprep.mubr.f32.mxu0 %v713
        %1110 = vmatmul.mubr.f32.gmra.mrb[0].mxu0 %v712
        %v1111 = vpop.f32.mrb[0].mxu0
        %v1112 = vadd.f32 %v967, %v1111
        %v1113 = vpop.f32.mrb[0].mxu0
        %1114 = vmatprep.mubr.f32.mxu0 %v719
        %1115 = vmatmul.mubr.f32.gmra.mrb[0].mxu0 %v718
        %v1116 = vpop.f32.mrb[0].mxu0
        %v1117 = vadd.f32 %v972, %v1116
        %v1118 = vpop.f32.mrb[0].mxu0
        %1119 = vmatprep.mubr.f32.mxu0 %v725
        %1120 = vmatmul.mubr.f32.gmra.mrb[0].mxu0 %v724
        %v1121 = vpop.f32.mrb[0].mxu0
        %v1122 = vadd.f32 %v977, %v1121
        %v1123 = vpop.f32.mrb[0].mxu0
        %1124 = vmatprep.mubr.f32.mxu0 %v731
        %1125 = vmatmul.mubr.f32.gmra.mrb[0].mxu0 %v730
        %v1126 = vpop.f32.mrb[0].mxu0
        %v1127 = vadd.f32 %v982, %v1126
        %v1128 = vpop.f32.mrb[0].mxu0
        %1129 = vmatprep.mubr.f32.mxu0 %v737
        %1130 = vmatmul.mubr.f32.gmra.mrb[0].mxu0 %v736
        %v1131 = vpop.f32.mrb[0].mxu0
        %v1132 = vadd.f32 %v987, %v1131
        %v1133 = vpop.f32.mrb[0].mxu0
        %1134 = vmatprep.mubr.f32.mxu0 %v743
        %1135 = vmatmul.mubr.f32.gmra.mrb[0].mxu0 %v742
        %v1136 = vpop.f32.mrb[0].mxu0
        %v1137 = vadd.f32 %v992, %v1136
        %v1138 = vpop.f32.mrb[0].mxu0
        %1139 = vmatprep.mubr.f32.mxu0 %v749
        %1140 = vmatmul.mubr.f32.gmra.mrb[0].mxu0 %v748
        %v1141 = vpop.f32.mrb[0].mxu0
        %v1142 = vadd.f32 %v997, %v1141
        %v1143 = vpop.f32.mrb[0].mxu0
        %1144 = vdwg.mxu0
        %1145 = vmatprep.subr.mxu0 0.0
        %1146 = vmatpush1.msra.mxu0 %v816
        %1147 = vmatprep.subr.mxu0 0.0
        %1148 = vmatpush1.msra.mxu0 %v817
        %1149 = vmatprep.subr.mxu0 0.0
        %1150 = vmatpush1.msra.mxu0 %v818
        %1151 = vmatprep.subr.mxu0 0.0
        %1152 = vmatpush1.msra.mxu0 %v819
        %1153 = vmatprep.subr.mxu0 0.0
        %1154 = vmatpush1.msra.mxu0 %v820
        %1155 = vmatprep.subr.mxu0 0.0
        %1156 = vmatpush1.msra.mxu0 %v821
        %1157 = vmatprep.subr.mxu0 0.0
        %1158 = vmatpush1.msra.mxu0 %v822
        %1159 = vmatprep.subr.mxu0 0.0
        %1160 = vmatpush1.msra.mxu0 %v823
        %1161 = vmatprep.subr.mxu0 0.0
        %1162 = vmatpush1.msra.mxu0 %v824
        %1163 = vmatprep.subr.mxu0 0.0
        %1164 = vmatpush1.msra.mxu0 %v825
        %1165 = vmatprep.subr.mxu0 0.0
        %1166 = vmatpush1.msra.mxu0 %v826
        %1167 = vmatprep.subr.mxu0 0.0
        %1168 = vmatpush1.msra.mxu0 %v827
        %1169 = vmatprep.subr.mxu0 0.0
        %1170 = vmatpush1.msra.mxu0 %v828
        %1171 = vmatprep.subr.mxu0 0.0
        %1172 = vmatpush1.msra.mxu0 %v829
        %1173 = vmatprep.subr.mxu0 0.0
        %1174 = vmatpush1.msra.mxu0 %v830
        %1175 = vmatprep.subr.mxu0 0.0
        %1176 = vmatpush1.msra.mxu0 %v831
        %1177 = vmatprep.subr.mxu0 0.0
        %1178 = vmatpush1.msra.mxu0 %v832
        %1179 = vmatprep.subr.mxu0 0.0
        %1180 = vmatpush1.msra.mxu0 %v833
        %1181 = vmatprep.subr.mxu0 0.0
        %1182 = vmatpush1.msra.mxu0 %v834
        %1183 = vmatprep.subr.mxu0 0.0
        %1184 = vmatpush1.msra.mxu0 %v835
        %1185 = vmatprep.subr.mxu0 0.0
        %1186 = vmatpush1.msra.mxu0 %v836
        %1187 = vmatprep.subr.mxu0 0.0
        %1188 = vmatpush1.msra.mxu0 %v837
        %1189 = vmatprep.subr.mxu0 0.0
        %1190 = vmatpush1.msra.mxu0 %v838
        %1191 = vmatprep.subr.mxu0 0.0
        %1192 = vmatpush1.msra.mxu0 %v839
        %1193 = vmatprep.subr.mxu0 0.0
        %1194 = vmatpush1.msra.mxu0 %v840
        %1195 = vmatprep.subr.mxu0 0.0
        %1196 = vmatpush1.msra.mxu0 %v841
        %1197 = vmatprep.subr.mxu0 0.0
        %1198 = vmatpush1.msra.mxu0 %v842
        %1199 = vmatprep.subr.mxu0 0.0
        %1200 = vmatpush1.msra.mxu0 %v843
        %1201 = vmatprep.subr.mxu0 0.0
        %1202 = vmatpush1.msra.mxu0 %v844
        %1203 = vmatprep.subr.mxu0 0.0
        %1204 = vmatpush1.msra.mxu0 %v845
        %1205 = vmatprep.subr.mxu0 0.0
        %1206 = vmatpush1.msra.mxu0 %v846
        %1207 = vmatprep.subr.mxu0 0.0
        %1208 = vmatpush1.msra.mxu0 %v847
        %1209 = vmatprep.mubr.f32.mxu0 %v661
        %1210 = vmatmul.mubr.f32.gmra.mrb[0].mxu0 %v660
        %v1211 = vpop.f32.mrb[0].mxu0
        %v1212 = vadd.f32 %v1067, %v1211
        %v1213 = vpop.f32.mrb[0].mxu0
        %1214 = vmatprep.mubr.f32.mxu0 %v667
        %1215 = vmatmul.mubr.f32.gmra.mrb[0].mxu0 %v666
        %v1216 = vpop.f32.mrb[0].mxu0
        %v1217 = vadd.f32 %v1072, %v1216
        %v1218 = vpop.f32.mrb[0].mxu0
        %1219 = vmatprep.mubr.f32.mxu0 %v673
        %1220 = vmatmul.mubr.f32.gmra.mrb[0].mxu0 %v672
        %v1221 = vpop.f32.mrb[0].mxu0
        %v1222 = vadd.f32 %v1077, %v1221
        %v1223 = vpop.f32.mrb[0].mxu0
        %1224 = vmatprep.mubr.f32.mxu0 %v679
        %1225 = vmatmul.mubr.f32.gmra.mrb[0].mxu0 %v678
        %v1226 = vpop.f32.mrb[0].mxu0
        %v1227 = vadd.f32 %v1082, %v1226
        %v1228 = vpop.f32.mrb[0].mxu0
        %1229 = vmatprep.mubr.f32.mxu0 %v685
        %1230 = vmatmul.mubr.f32.gmra.mrb[0].mxu0 %v684
        %v1231 = vpop.f32.mrb[0].mxu0
        %v1232 = vadd.f32 %v1087, %v1231
        %v1233 = vpop.f32.mrb[0].mxu0
        %1234 = vmatprep.mubr.f32.mxu0 %v691
        %1235 = vmatmul.mubr.f32.gmra.mrb[0].mxu0 %v690
        %v1236 = vpop.f32.mrb[0].mxu0
        %v1237 = vadd.f32 %v1092, %v1236
        %v1238 = vpop.f32.mrb[0].mxu0
        %1239 = vmatprep.mubr.f32.mxu0 %v697
        %1240 = vmatmul.mubr.f32.gmra.mrb[0].mxu0 %v696
        %v1241 = vpop.f32.mrb[0].mxu0
        %v1242 = vadd.f32 %v1097, %v1241
        %v1243 = vpop.f32.mrb[0].mxu0
        %1244 = vmatprep.mubr.f32.mxu0 %v703
        %1245 = vmatmul.mubr.f32.gmra.mrb[0].mxu0 %v702
        %v1246 = vpop.f32.mrb[0].mxu0
        %v1247 = vadd.f32 %v1102, %v1246
        %v1248 = vpop.f32.mrb[0].mxu0
        %1249 = vmatprep.mubr.f32.mxu0 %v709
        %1250 = vmatmul.mubr.f32.gmra.mrb[0].mxu0 %v708
        %v1251 = vpop.f32.mrb[0].mxu0
        %v1252 = vadd.f32 %v1107, %v1251
        %v1253 = vpop.f32.mrb[0].mxu0
        %1254 = vmatprep.mubr.f32.mxu0 %v715
        %1255 = vmatmul.mubr.f32.gmra.mrb[0].mxu0 %v714
        %v1256 = vpop.f32.mrb[0].mxu0
        %v1257 = vadd.f32 %v1112, %v1256
        %v1258 = vpop.f32.mrb[0].mxu0
        %1259 = vmatprep.mubr.f32.mxu0 %v721
        %1260 = vmatmul.mubr.f32.gmra.mrb[0].mxu0 %v720
        %v1261 = vpop.f32.mrb[0].mxu0
        %v1262 = vadd.f32 %v1117, %v1261
        %v1263 = vpop.f32.mrb[0].mxu0
        %1264 = vmatprep.mubr.f32.mxu0 %v727
        %1265 = vmatmul.mubr.f32.gmra.mrb[0].mxu0 %v726
        %v1266 = vpop.f32.mrb[0].mxu0
        %v1267 = vadd.f32 %v1122, %v1266
        %v1268 = vpop.f32.mrb[0].mxu0
        %1269 = vmatprep.mubr.f32.mxu0 %v733
        %1270 = vmatmul.mubr.f32.gmra.mrb[0].mxu0 %v732
        %v1271 = vpop.f32.mrb[0].mxu0
        %v1272 = vadd.f32 %v1127, %v1271
        %v1273 = vpop.f32.mrb[0].mxu0
        %1274 = vmatprep.mubr.f32.mxu0 %v739
        %1275 = vmatmul.mubr.f32.gmra.mrb[0].mxu0 %v738
        %v1276 = vpop.f32.mrb[0].mxu0
        %v1277 = vadd.f32 %v1132, %v1276
        %v1278 = vpop.f32.mrb[0].mxu0
        %1279 = vmatprep.mubr.f32.mxu0 %v745
        %1280 = vmatmul.mubr.f32.gmra.mrb[0].mxu0 %v744
        %v1281 = vpop.f32.mrb[0].mxu0
        %v1282 = vadd.f32 %v1137, %v1281
        %v1283 = vpop.f32.mrb[0].mxu0
        %1284 = vmatprep.mubr.f32.mxu0 %v751
        %1285 = vmatmul.mubr.f32.gmra.mrb[0].mxu0 %v750
        %v1286 = vpop.f32.mrb[0].mxu0
        %v1287 = vadd.f32 %v1142, %v1286
        %v1288 = vpop.f32.mrb[0].mxu0
        %1289 = vdwg.mxu0
        %v1290 = vmax.f32 %v1212, 0.0
        %v1291 = vmax.f32 %v1217, 0.0
        %v1292 = vmax.f32 %v1222, 0.0
        %v1293 = vmax.f32 %v1227, 0.0
        %v1294 = vmax.f32 %v1232, 0.0
        %v1295 = vmax.f32 %v1237, 0.0
        %v1296 = vmax.f32 %v1242, 0.0
        %v1297 = vmax.f32 %v1247, 0.0
        %v1298 = vmax.f32 %v1252, 0.0
        %v1299 = vmax.f32 %v1257, 0.0
        %v1300 = vmax.f32 %v1262, 0.0
        %v1301 = vmax.f32 %v1267, 0.0
        %v1302 = vmax.f32 %v1272, 0.0
        %v1303 = vmax.f32 %v1277, 0.0
        %v1304 = vmax.f32 %v1282, 0.0
        %v1305 = vmax.f32 %v1287, 0.0
        %v1306 = vld [vmem:[#allocation8] sm:$0xff]
        %v1307 = vld [vmem:[#allocation8 + $0x8] sm:$0xff]
        %v1308 = vld [vmem:[#allocation8 + $0x10] sm:$0xff]
        %v1309 = vld [vmem:[#allocation8 + $0x18] sm:$0xff]
        %v1310 = vld [vmem:[#allocation8 + $0x20] sm:$0xff]
        %v1311 = vld [vmem:[#allocation8 + $0x28] sm:$0xff]
        %v1312 = vld [vmem:[#allocation8 + $0x30] sm:$0xff]
        %v1313 = vld [vmem:[#allocation8 + $0x38] sm:$0xff]
        %v1314 = vld [vmem:[#allocation8 + $0x40] sm:$0xff]
        %v1315 = vld [vmem:[#allocation8 + $0x48] sm:$0xff]
        %v1316 = vld [vmem:[#allocation8 + $0x50] sm:$0xff]
        %v1317 = vld [vmem:[#allocation8 + $0x58] sm:$0xff]
        %v1318 = vld [vmem:[#allocation8 + $0x60] sm:$0xff]
        %v1319 = vld [vmem:[#allocation8 + $0x68] sm:$0xff]
        %v1320 = vld [vmem:[#allocation8 + $0x70] sm:$0xff]
        %v1321 = vld [vmem:[#allocation8 + $0x78] sm:$0xff]
        %v1322 = vld [vmem:[%s5] sm:$0x1]
        %v1324 = vlaneseq
        %v1325 = vshrl.u32 %v1324, 7
        %v1326 = vsub.s32 0, %v1325
        %v1327 = vrot.slane %v1322, %v1326
        %1329 = vmatprep.subr.mxu0 0.0
        %1330 = vmatpush1.msra.mxu0 %v1306
        %1331 = vmatprep.subr.mxu0 0.0
        %1332 = vmatpush1.msra.mxu0 %v1307
        %1333 = vmatprep.subr.mxu0 0.0
        %1334 = vmatpush1.msra.mxu0 %v1308
        %1335 = vmatprep.subr.mxu0 0.0
        %1336 = vmatpush1.msra.mxu0 %v1309
        %1337 = vmatprep.subr.mxu0 0.0
        %1338 = vmatpush1.msra.mxu0 %v1310
        %1339 = vmatprep.subr.mxu0 0.0
        %1340 = vmatpush1.msra.mxu0 %v1311
        %1341 = vmatprep.subr.mxu0 0.0
        %1342 = vmatpush1.msra.mxu0 %v1312
        %1343 = vmatprep.subr.mxu0 0.0
        %1344 = vmatpush1.msra.mxu0 %v1313
        %1345 = vmatprep.subr.mxu0 0.0
        %1346 = vmatpush1.msra.mxu0 %v1314
        %1347 = vmatprep.subr.mxu0 0.0
        %1348 = vmatpush1.msra.mxu0 %v1315
        %1349 = vmatprep.subr.mxu0 0.0
        %1350 = vmatpush1.msra.mxu0 %v1316
        %1351 = vmatprep.subr.mxu0 0.0
        %1352 = vmatpush1.msra.mxu0 %v1317
        %1353 = vmatprep.subr.mxu0 0.0
        %1354 = vmatpush1.msra.mxu0 %v1318
        %1355 = vmatprep.subr.mxu0 0.0
        %1356 = vmatpush1.msra.mxu0 %v1319
        %1357 = vmatprep.subr.mxu0 0.0
        %1358 = vmatpush1.msra.mxu0 %v1320
        %1359 = vmatprep.subr.mxu0 0.0
        %1360 = vmatpush1.msra.mxu0 %v1321
        %1361 = vmatprep.subr.mxu0 0.0
        %1362 = vmatpush1.msra.mxu0 0.0
        %1363 = vmatprep.subr.mxu0 0.0
        %1364 = vmatpush1.msra.mxu0 0.0
        %1365 = vmatprep.subr.mxu0 0.0
        %1366 = vmatpush1.msra.mxu0 0.0
        %1367 = vmatprep.subr.mxu0 0.0
        %1368 = vmatpush1.msra.mxu0 0.0
        %1369 = vmatprep.subr.mxu0 0.0
        %1370 = vmatpush1.msra.mxu0 0.0
        %1371 = vmatprep.subr.mxu0 0.0
        %1372 = vmatpush1.msra.mxu0 0.0
        %1373 = vmatprep.subr.mxu0 0.0
        %1374 = vmatpush1.msra.mxu0 0.0
        %1375 = vmatprep.subr.mxu0 0.0
        %1376 = vmatpush1.msra.mxu0 0.0
        %1377 = vmatprep.subr.mxu0 0.0
        %1378 = vmatpush1.msra.mxu0 0.0
        %1379 = vmatprep.subr.mxu0 0.0
        %1380 = vmatpush1.msra.mxu0 0.0
        %1381 = vmatprep.subr.mxu0 0.0
        %1382 = vmatpush1.msra.mxu0 0.0
        %1383 = vmatprep.subr.mxu0 0.0
        %1384 = vmatpush1.msra.mxu0 0.0
        %1385 = vmatprep.subr.mxu0 0.0
        %1386 = vmatpush1.msra.mxu0 0.0
        %1387 = vmatprep.subr.mxu0 0.0
        %1388 = vmatpush1.msra.mxu0 0.0
        %1389 = vmatprep.subr.mxu0 0.0
        %1390 = vmatpush1.msra.mxu0 0.0
        %1391 = vmatprep.subr.mxu0 0.0
        %1392 = vmatpush1.msra.mxu0 0.0
        %1393 = vmatprep.mubr.f32.mxu0 0.0
        %1394 = vmatmul.mubr.f32.gmra.mrb[0].mxu0 %v1290
        %v1395 = vpop.f32.mrb[0].mxu0
        %v1396 = vadd.f32 %v1327, %v1395
        %v1397 = vpop.f32.mrb[0].mxu0
        %1398 = vmatprep.mubr.f32.mxu0 0.0
        %1399 = vmatmul.mubr.f32.gmra.mrb[0].mxu0 %v1291
        %v1400 = vpop.f32.mrb[0].mxu0
        %v1401 = vadd.f32 %v1327, %v1400
        %v1402 = vpop.f32.mrb[0].mxu0
        %1403 = vmatprep.mubr.f32.mxu0 0.0
        %1404 = vmatmul.mubr.f32.gmra.mrb[0].mxu0 %v1292
        %v1405 = vpop.f32.mrb[0].mxu0
        %v1406 = vadd.f32 %v1327, %v1405
        %v1407 = vpop.f32.mrb[0].mxu0
        %1408 = vmatprep.mubr.f32.mxu0 0.0
        %1409 = vmatmul.mubr.f32.gmra.mrb[0].mxu0 %v1293
        %v1410 = vpop.f32.mrb[0].mxu0
        %v1411 = vadd.f32 %v1327, %v1410
        %v1412 = vpop.f32.mrb[0].mxu0
        %1413 = vmatprep.mubr.f32.mxu0 0.0
        %1414 = vmatmul.mubr.f32.gmra.mrb[0].mxu0 %v1294
        %v1415 = vpop.f32.mrb[0].mxu0
        %v1416 = vadd.f32 %v1327, %v1415
        %v1417 = vpop.f32.mrb[0].mxu0
        %1418 = vmatprep.mubr.f32.mxu0 0.0
        %1419 = vmatmul.mubr.f32.gmra.mrb[0].mxu0 %v1295
        %v1420 = vpop.f32.mrb[0].mxu0
        %v1421 = vadd.f32 %v1327, %v1420
        %v1422 = vpop.f32.mrb[0].mxu0
        %1423 = vmatprep.mubr.f32.mxu0 0.0
        %1424 = vmatmul.mubr.f32.gmra.mrb[0].mxu0 %v1296
        %v1425 = vpop.f32.mrb[0].mxu0
        %v1426 = vadd.f32 %v1327, %v1425
        %v1427 = vpop.f32.mrb[0].mxu0
        %1428 = vmatprep.mubr.f32.mxu0 0.0
        %1429 = vmatmul.mubr.f32.gmra.mrb[0].mxu0 %v1297
        %v1430 = vpop.f32.mrb[0].mxu0
        %v1431 = vadd.f32 %v1327, %v1430
        %v1432 = vpop.f32.mrb[0].mxu0
        %1433 = vmatprep.mubr.f32.mxu0 0.0
        %1434 = vmatmul.mubr.f32.gmra.mrb[0].mxu0 %v1298
        %v1435 = vpop.f32.mrb[0].mxu0
        %v1436 = vadd.f32 %v1327, %v1435
        %v1437 = vpop.f32.mrb[0].mxu0
        %1438 = vmatprep.mubr.f32.mxu0 0.0
        %1439 = vmatmul.mubr.f32.gmra.mrb[0].mxu0 %v1299
        %v1440 = vpop.f32.mrb[0].mxu0
        %v1441 = vadd.f32 %v1327, %v1440
        %v1442 = vpop.f32.mrb[0].mxu0
        %1443 = vmatprep.mubr.f32.mxu0 0.0
        %1444 = vmatmul.mubr.f32.gmra.mrb[0].mxu0 %v1300
        %v1445 = vpop.f32.mrb[0].mxu0
        %v1446 = vadd.f32 %v1327, %v1445
        %v1447 = vpop.f32.mrb[0].mxu0
        %1448 = vmatprep.mubr.f32.mxu0 0.0
        %1449 = vmatmul.mubr.f32.gmra.mrb[0].mxu0 %v1301
        %v1450 = vpop.f32.mrb[0].mxu0
        %v1451 = vadd.f32 %v1327, %v1450
        %v1452 = vpop.f32.mrb[0].mxu0
        %1453 = vmatprep.mubr.f32.mxu0 0.0
        %1454 = vmatmul.mubr.f32.gmra.mrb[0].mxu0 %v1302
        %v1455 = vpop.f32.mrb[0].mxu0
        %v1456 = vadd.f32 %v1327, %v1455
        %v1457 = vpop.f32.mrb[0].mxu0
        %1458 = vmatprep.mubr.f32.mxu0 0.0
        %1459 = vmatmul.mubr.f32.gmra.mrb[0].mxu0 %v1303
        %v1460 = vpop.f32.mrb[0].mxu0
        %v1461 = vadd.f32 %v1327, %v1460
        %v1462 = vpop.f32.mrb[0].mxu0
        %1463 = vmatprep.mubr.f32.mxu0 0.0
        %1464 = vmatmul.mubr.f32.gmra.mrb[0].mxu0 %v1304
        %v1465 = vpop.f32.mrb[0].mxu0
        %v1466 = vadd.f32 %v1327, %v1465
        %v1467 = vpop.f32.mrb[0].mxu0
        %1468 = vmatprep.mubr.f32.mxu0 0.0
        %1469 = vmatmul.mubr.f32.gmra.mrb[0].mxu0 %v1305
        %v1470 = vpop.f32.mrb[0].mxu0
        %v1471 = vadd.f32 %v1327, %v1470
        %v1472 = vpop.f32.mrb[0].mxu0
        %1473 = vdwg.mxu0
        %v1474 = vmax.f32 %v1396, 0.0
        %v1475 = vmax.f32 %v1401, 0.0
        %v1476 = vmax.f32 %v1406, 0.0
        %v1477 = vmax.f32 %v1411, 0.0
        %v1478 = vmax.f32 %v1416, 0.0
        %v1479 = vmax.f32 %v1421, 0.0
        %v1480 = vmax.f32 %v1426, 0.0
        %v1481 = vmax.f32 %v1431, 0.0
        %v1482 = vmax.f32 %v1436, 0.0
        %v1483 = vmax.f32 %v1441, 0.0
        %v1484 = vmax.f32 %v1446, 0.0
        %v1485 = vmax.f32 %v1451, 0.0
        %v1486 = vmax.f32 %v1456, 0.0
        %v1487 = vmax.f32 %v1461, 0.0
        %v1488 = vmax.f32 %v1466, 0.0
        %v1489 = vmax.f32 %v1471, 0.0
        %v1490 = vld [vmem:[#allocation10] sm:$0xff]
        %v1491 = vld [vmem:[#allocation10 + $0x8] sm:$0xff]
        %v1492 = vld [vmem:[#allocation10 + $0x10] sm:$0xff]
        %v1493 = vld [vmem:[#allocation10 + $0x18] sm:$0xff]
        %v1494 = vld [vmem:[#allocation10 + $0x20] sm:$0xff]
        %v1495 = vld [vmem:[#allocation10 + $0x28] sm:$0xff]
        %v1496 = vld [vmem:[#allocation10 + $0x30] sm:$0xff]
        %v1497 = vld [vmem:[#allocation10 + $0x38] sm:$0xff]
        %v1498 = vld [vmem:[#allocation10 + $0x40] sm:$0xff]
        %v1499 = vld [vmem:[#allocation10 + $0x48] sm:$0xff]
        %v1500 = vld [vmem:[#allocation10 + $0x50] sm:$0xff]
        %v1501 = vld [vmem:[#allocation10 + $0x58] sm:$0xff]
        %v1502 = vld [vmem:[#allocation10 + $0x60] sm:$0xff]
        %v1503 = vld [vmem:[#allocation10 + $0x68] sm:$0xff]
        %v1504 = vld [vmem:[#allocation10 + $0x70] sm:$0xff]
        %v1505 = vld [vmem:[#allocation10 + $0x78] sm:$0xff]
        %v1506 = vld [vmem:[#allocation10 + $0x80] sm:$0xff]
        %v1507 = vld [vmem:[#allocation10 + $0x88] sm:$0xff]
        %v1508 = vld [vmem:[#allocation10 + $0x90] sm:$0xff]
        %v1509 = vld [vmem:[#allocation10 + $0x98] sm:$0xff]
        %v1510 = vld [vmem:[#allocation10 + $0xa0] sm:$0xff]
        %v1511 = vld [vmem:[#allocation10 + $0xa8] sm:$0xff]
        %v1512 = vld [vmem:[#allocation10 + $0xb0] sm:$0xff]
        %v1513 = vld [vmem:[#allocation10 + $0xb8] sm:$0xff]
        %v1514 = vld [vmem:[#allocation10 + $0xc0] sm:$0xff]
        %v1515 = vld [vmem:[#allocation10 + $0xc8] sm:$0xff]
        %v1516 = vld [vmem:[#allocation10 + $0xd0] sm:$0xff]
        %v1517 = vld [vmem:[#allocation10 + $0xd8] sm:$0xff]
        %v1518 = vld [vmem:[#allocation10 + $0xe0] sm:$0xff]
        %v1519 = vld [vmem:[#allocation10 + $0xe8] sm:$0xff]
        %v1520 = vld [vmem:[#allocation10 + $0xf0] sm:$0xff]
        %v1521 = vld [vmem:[#allocation10 + $0xf8] sm:$0xff]
        %v1522 = vld [vmem:[%s7] sm:$0x3]
        %v1524 = vlaneseq
        %v1525 = vshrl.u32 %v1524, 7
        %v1526 = vsub.s32 0, %v1525
        %v1527 = vrot.slane %v1522, %v1526
        %v1528 = vlaneseq
        %v1529 = vshrl.u32 %v1528, 7
        %v1530 = vsub.s32 1, %v1529
        %v1531 = vrot.slane %v1522, %v1530
        %1534 = vmatprep.subr.mxu0 %v1491
        %1535 = vmatpush1.msra.mxu0 %v1490
        %1536 = vmatprep.subr.mxu0 %v1493
        %1537 = vmatpush1.msra.mxu0 %v1492
        %1538 = vmatprep.subr.mxu0 %v1495
        %1539 = vmatpush1.msra.mxu0 %v1494
        %1540 = vmatprep.subr.mxu0 %v1497
        %1541 = vmatpush1.msra.mxu0 %v1496
        %1542 = vmatprep.subr.mxu0 %v1499
        %1543 = vmatpush1.msra.mxu0 %v1498
        %1544 = vmatprep.subr.mxu0 %v1501
        %1545 = vmatpush1.msra.mxu0 %v1500
        %1546 = vmatprep.subr.mxu0 %v1503
        %1547 = vmatpush1.msra.mxu0 %v1502
        %1548 = vmatprep.subr.mxu0 %v1505
        %1549 = vmatpush1.msra.mxu0 %v1504
        %1550 = vmatprep.subr.mxu0 %v1507
        %1551 = vmatpush1.msra.mxu0 %v1506
        %1552 = vmatprep.subr.mxu0 %v1509
        %1553 = vmatpush1.msra.mxu0 %v1508
        %1554 = vmatprep.subr.mxu0 %v1511
        %1555 = vmatpush1.msra.mxu0 %v1510
        %1556 = vmatprep.subr.mxu0 %v1513
        %1557 = vmatpush1.msra.mxu0 %v1512
        %1558 = vmatprep.subr.mxu0 %v1515
        %1559 = vmatpush1.msra.mxu0 %v1514
        %1560 = vmatprep.subr.mxu0 %v1517
        %1561 = vmatpush1.msra.mxu0 %v1516
        %1562 = vmatprep.subr.mxu0 %v1519
        %1563 = vmatpush1.msra.mxu0 %v1518
        %1564 = vmatprep.subr.mxu0 %v1521
        %1565 = vmatpush1.msra.mxu0 %v1520
        %1566 = vmatprep.subr.mxu0 0.0
        %1567 = vmatpush1.msra.mxu0 0.0
        %1568 = vmatprep.subr.mxu0 0.0
        %1569 = vmatpush1.msra.mxu0 0.0
        %1570 = vmatprep.subr.mxu0 0.0
        %1571 = vmatpush1.msra.mxu0 0.0
        %1572 = vmatprep.subr.mxu0 0.0
        %1573 = vmatpush1.msra.mxu0 0.0
        %1574 = vmatprep.subr.mxu0 0.0
        %1575 = vmatpush1.msra.mxu0 0.0
        %1576 = vmatprep.subr.mxu0 0.0
        %1577 = vmatpush1.msra.mxu0 0.0
        %1578 = vmatprep.subr.mxu0 0.0
        %1579 = vmatpush1.msra.mxu0 0.0
        %1580 = vmatprep.subr.mxu0 0.0
        %1581 = vmatpush1.msra.mxu0 0.0
        %1582 = vmatprep.subr.mxu0 0.0
        %1583 = vmatpush1.msra.mxu0 0.0
        %1584 = vmatprep.subr.mxu0 0.0
        %1585 = vmatpush1.msra.mxu0 0.0
        %1586 = vmatprep.subr.mxu0 0.0
        %1587 = vmatpush1.msra.mxu0 0.0
        %1588 = vmatprep.subr.mxu0 0.0
        %1589 = vmatpush1.msra.mxu0 0.0
        %1590 = vmatprep.subr.mxu0 0.0
        %1591 = vmatpush1.msra.mxu0 0.0
        %1592 = vmatprep.subr.mxu0 0.0
        %1593 = vmatpush1.msra.mxu0 0.0
        %1594 = vmatprep.subr.mxu0 0.0
        %1595 = vmatpush1.msra.mxu0 0.0
        %1596 = vmatprep.subr.mxu0 0.0
        %1597 = vmatpush1.msra.mxu0 0.0
        %1598 = vmatprep.mubr.f32.mxu0 0.0
        %1599 = vmatmul.mubr.f32.gmra.mrb[0].mxu0 %v1474
        %v1600 = vpop.f32.mrb[0].mxu0
        %v1601 = vadd.f32 %v1527, %v1600
        %v1602 = vpop.f32.mrb[0].mxu0
        %v1603 = vadd.f32 %v1531, %v1602
        %1604 = vmatprep.mubr.f32.mxu0 0.0
        %1605 = vmatmul.mubr.f32.gmra.mrb[0].mxu0 %v1475
        %v1606 = vpop.f32.mrb[0].mxu0
        %v1607 = vadd.f32 %v1527, %v1606
        %v1608 = vpop.f32.mrb[0].mxu0
        %v1609 = vadd.f32 %v1531, %v1608
        %1610 = vmatprep.mubr.f32.mxu0 0.0
        %1611 = vmatmul.mubr.f32.gmra.mrb[0].mxu0 %v1476
        %v1612 = vpop.f32.mrb[0].mxu0
        %v1613 = vadd.f32 %v1527, %v1612
        %v1614 = vpop.f32.mrb[0].mxu0
        %v1615 = vadd.f32 %v1531, %v1614
        %1616 = vmatprep.mubr.f32.mxu0 0.0
        %1617 = vmatmul.mubr.f32.gmra.mrb[0].mxu0 %v1477
        %v1618 = vpop.f32.mrb[0].mxu0
        %v1619 = vadd.f32 %v1527, %v1618
        %v1620 = vpop.f32.mrb[0].mxu0
        %v1621 = vadd.f32 %v1531, %v1620
        %1622 = vmatprep.mubr.f32.mxu0 0.0
        %1623 = vmatmul.mubr.f32.gmra.mrb[0].mxu0 %v1478
        %v1624 = vpop.f32.mrb[0].mxu0
        %v1625 = vadd.f32 %v1527, %v1624
        %v1626 = vpop.f32.mrb[0].mxu0
        %v1627 = vadd.f32 %v1531, %v1626
        %1628 = vmatprep.mubr.f32.mxu0 0.0
        %1629 = vmatmul.mubr.f32.gmra.mrb[0].mxu0 %v1479
        %v1630 = vpop.f32.mrb[0].mxu0
        %v1631 = vadd.f32 %v1527, %v1630
        %v1632 = vpop.f32.mrb[0].mxu0
        %v1633 = vadd.f32 %v1531, %v1632
        %1634 = vmatprep.mubr.f32.mxu0 0.0
        %1635 = vmatmul.mubr.f32.gmra.mrb[0].mxu0 %v1480
        %v1636 = vpop.f32.mrb[0].mxu0
        %v1637 = vadd.f32 %v1527, %v1636
        %v1638 = vpop.f32.mrb[0].mxu0
        %v1639 = vadd.f32 %v1531, %v1638
        %1640 = vmatprep.mubr.f32.mxu0 0.0
        %1641 = vmatmul.mubr.f32.gmra.mrb[0].mxu0 %v1481
        %v1642 = vpop.f32.mrb[0].mxu0
        %v1643 = vadd.f32 %v1527, %v1642
        %v1644 = vpop.f32.mrb[0].mxu0
        %v1645 = vadd.f32 %v1531, %v1644
        %1646 = vmatprep.mubr.f32.mxu0 0.0
        %1647 = vmatmul.mubr.f32.gmra.mrb[0].mxu0 %v1482
        %v1648 = vpop.f32.mrb[0].mxu0
        %v1649 = vadd.f32 %v1527, %v1648
        %v1650 = vpop.f32.mrb[0].mxu0
        %v1651 = vadd.f32 %v1531, %v1650
        %1652 = vmatprep.mubr.f32.mxu0 0.0
        %1653 = vmatmul.mubr.f32.gmra.mrb[0].mxu0 %v1483
        %v1654 = vpop.f32.mrb[0].mxu0
        %v1655 = vadd.f32 %v1527, %v1654
        %v1656 = vpop.f32.mrb[0].mxu0
        %v1657 = vadd.f32 %v1531, %v1656
        %1658 = vmatprep.mubr.f32.mxu0 0.0
        %1659 = vmatmul.mubr.f32.gmra.mrb[0].mxu0 %v1484
        %v1660 = vpop.f32.mrb[0].mxu0
        %v1661 = vadd.f32 %v1527, %v1660
        %v1662 = vpop.f32.mrb[0].mxu0
        %v1663 = vadd.f32 %v1531, %v1662
        %1664 = vmatprep.mubr.f32.mxu0 0.0
        %1665 = vmatmul.mubr.f32.gmra.mrb[0].mxu0 %v1485
        %v1666 = vpop.f32.mrb[0].mxu0
        %v1667 = vadd.f32 %v1527, %v1666
        %v1668 = vpop.f32.mrb[0].mxu0
        %v1669 = vadd.f32 %v1531, %v1668
        %1670 = vmatprep.mubr.f32.mxu0 0.0
        %1671 = vmatmul.mubr.f32.gmra.mrb[0].mxu0 %v1486
        %v1672 = vpop.f32.mrb[0].mxu0
        %v1673 = vadd.f32 %v1527, %v1672
        %v1674 = vpop.f32.mrb[0].mxu0
        %v1675 = vadd.f32 %v1531, %v1674
        %1676 = vmatprep.mubr.f32.mxu0 0.0
        %1677 = vmatmul.mubr.f32.gmra.mrb[0].mxu0 %v1487
        %v1678 = vpop.f32.mrb[0].mxu0
        %v1679 = vadd.f32 %v1527, %v1678
        %v1680 = vpop.f32.mrb[0].mxu0
        %v1681 = vadd.f32 %v1531, %v1680
        %1682 = vmatprep.mubr.f32.mxu0 0.0
        %1683 = vmatmul.mubr.f32.gmra.mrb[0].mxu0 %v1488
        %v1684 = vpop.f32.mrb[0].mxu0
        %v1685 = vadd.f32 %v1527, %v1684
        %v1686 = vpop.f32.mrb[0].mxu0
        %v1687 = vadd.f32 %v1531, %v1686
        %1688 = vmatprep.mubr.f32.mxu0 0.0
        %1689 = vmatmul.mubr.f32.gmra.mrb[0].mxu0 %v1489
        %v1690 = vpop.f32.mrb[0].mxu0
        %v1691 = vadd.f32 %v1527, %v1690
        %v1692 = vpop.f32.mrb[0].mxu0
        %v1693 = vadd.f32 %v1531, %v1692
        %1694 = vdwg.mxu0
        %1695 = vst [vmem:[%s651] sm:$0xff] %v1601
        %1696 = vst [vmem:[%s651 + $0x8] sm:$0xff] %v1603
        %1697 = vst [vmem:[%s651 + $0x10] sm:$0xff] %v1607
        %1698 = vst [vmem:[%s651 + $0x18] sm:$0xff] %v1609
        %1699 = vst [vmem:[%s651 + $0x20] sm:$0xff] %v1613
        %1700 = vst [vmem:[%s651 + $0x28] sm:$0xff] %v1615
        %1701 = vst [vmem:[%s651 + $0x30] sm:$0xff] %v1619
        %1702 = vst [vmem:[%s651 + $0x38] sm:$0xff] %v1621
        %1703 = vst [vmem:[%s651 + $0x40] sm:$0xff] %v1625
        %1704 = vst [vmem:[%s651 + $0x48] sm:$0xff] %v1627
        %1705 = vst [vmem:[%s651 + $0x50] sm:$0xff] %v1631
        %1706 = vst [vmem:[%s651 + $0x58] sm:$0xff] %v1633
        %1707 = vst [vmem:[%s651 + $0x60] sm:$0xff] %v1637
        %1708 = vst [vmem:[%s651 + $0x68] sm:$0xff] %v1639
        %1709 = vst [vmem:[%s651 + $0x70] sm:$0xff] %v1643
        %1710 = vst [vmem:[%s651 + $0x78] sm:$0xff] %v1645
        %1711 = vst [vmem:[%s651 + $0x80] sm:$0xff] %v1649
        %1712 = vst [vmem:[%s651 + $0x88] sm:$0xff] %v1651
        %1713 = vst [vmem:[%s651 + $0x90] sm:$0xff] %v1655
        %1714 = vst [vmem:[%s651 + $0x98] sm:$0xff] %v1657
        %1715 = vst [vmem:[%s651 + $0xa0] sm:$0xff] %v1661
        %1716 = vst [vmem:[%s651 + $0xa8] sm:$0xff] %v1663
        %1717 = vst [vmem:[%s651 + $0xb0] sm:$0xff] %v1667
        %1718 = vst [vmem:[%s651 + $0xb8] sm:$0xff] %v1669
        %1719 = vst [vmem:[%s651 + $0xc0] sm:$0xff] %v1673
        %1720 = vst [vmem:[%s651 + $0xc8] sm:$0xff] %v1675
        %1721 = vst [vmem:[%s651 + $0xd0] sm:$0xff] %v1679
        %1722 = vst [vmem:[%s651 + $0xd8] sm:$0xff] %v1681
        %1723 = vst [vmem:[%s651 + $0xe0] sm:$0xff] %v1685
        %1724 = vst [vmem:[%s651 + $0xe8] sm:$0xff] %v1687
        %1725 = vst [vmem:[%s651 + $0xf0] sm:$0xff] %v1691
        %1726 = vst [vmem:[%s651 + $0xf8] sm:$0xff] %v1693
        %v1727 = vld [vmem:[%s571] sm:$0xff]
        %v1728 = vld [vmem:[%s571 + $0x8] sm:$0xff]
        %v1729 = vld [vmem:[%s571 + $0x10] sm:$0xff]
        %v1730 = vld [vmem:[%s571 + $0x18] sm:$0xff]
        %v1731 = vld [vmem:[%s571 + $0x20] sm:$0xff]
        %v1732 = vld [vmem:[%s571 + $0x28] sm:$0xff]
        %v1733 = vld [vmem:[%s571 + $0x30] sm:$0xff]
        %v1734 = vld [vmem:[%s571 + $0x38] sm:$0xff]
        %v1735 = vld [vmem:[%s571 + $0x40] sm:$0xff]
        %v1736 = vld [vmem:[%s571 + $0x48] sm:$0xff]
        %v1737 = vld [vmem:[%s571 + $0x50] sm:$0xff]
        %v1738 = vld [vmem:[%s571 + $0x58] sm:$0xff]
        %v1739 = vld [vmem:[%s571 + $0x60] sm:$0xff]
        %v1740 = vld [vmem:[%s571 + $0x68] sm:$0xff]
        %v1741 = vld [vmem:[%s571 + $0x70] sm:$0xff]
        %v1742 = vld [vmem:[%s571 + $0x78] sm:$0xff]
        %v1743 = vmul.f32 %v1603, 0.5
        %v1744 = vmul.f32 %v1609, 0.5
        %v1745 = vmul.f32 %v1615, 0.5
        %v1746 = vmul.f32 %v1621, 0.5
        %v1747 = vmul.f32 %v1627, 0.5
        %v1748 = vmul.f32 %v1633, 0.5
        %v1749 = vmul.f32 %v1639, 0.5
        %v1750 = vmul.f32 %v1645, 0.5
        %v1751 = vmul.f32 %v1651, 0.5
        %v1752 = vmul.f32 %v1657, 0.5
        %v1753 = vmul.f32 %v1663, 0.5
        %v1754 = vmul.f32 %v1669, 0.5
        %v1755 = vmul.f32 %v1675, 0.5
        %v1756 = vmul.f32 %v1681, 0.5
        %v1757 = vmul.f32 %v1687, 0.5
        %v1758 = vmul.f32 %v1693, 0.5
        %v1759 = vmul.f32 %v1743, 1.442695
        %v1760 = vpow.pop %v1759
        %v1761 = vmul.f32 %v1744, 1.442695
        %v1762 = vpow.pop %v1761
        %v1763 = vmul.f32 %v1745, 1.442695
        %v1764 = vpow.pop %v1763
        %v1765 = vmul.f32 %v1746, 1.442695
        %v1766 = vpow.pop %v1765
        %v1767 = vmul.f32 %v1747, 1.442695
        %v1768 = vpow.pop %v1767
        %v1769 = vmul.f32 %v1748, 1.442695
        %v1770 = vpow.pop %v1769
        %v1771 = vmul.f32 %v1749, 1.442695
        %v1772 = vpow.pop %v1771
        %v1773 = vmul.f32 %v1750, 1.442695
        %v1774 = vpow.pop %v1773
        %v1775 = vmul.f32 %v1751, 1.442695
        %v1776 = vpow.pop %v1775
        %v1777 = vmul.f32 %v1752, 1.442695
        %v1778 = vpow.pop %v1777
        %v1779 = vmul.f32 %v1753, 1.442695
        %v1780 = vpow.pop %v1779
        %v1781 = vmul.f32 %v1754, 1.442695
        %v1782 = vpow.pop %v1781
        %v1783 = vmul.f32 %v1755, 1.442695
        %v1784 = vpow.pop %v1783
        %v1785 = vmul.f32 %v1756, 1.442695
        %v1786 = vpow.pop %v1785
        %v1787 = vmul.f32 %v1757, 1.442695
        %v1788 = vpow.pop %v1787
        %v1789 = vmul.f32 %v1758, 1.442695
        %v1790 = vpow.pop %v1789
        %v1791 = vmul.f32 %v1727, %v1760
        %v1792 = vmul.f32 %v1728, %v1762
        %v1793 = vmul.f32 %v1729, %v1764
        %v1794 = vmul.f32 %v1730, %v1766
        %v1795 = vmul.f32 %v1731, %v1768
        %v1796 = vmul.f32 %v1732, %v1770
        %v1797 = vmul.f32 %v1733, %v1772
        %v1798 = vmul.f32 %v1734, %v1774
        %v1799 = vmul.f32 %v1735, %v1776
        %v1800 = vmul.f32 %v1736, %v1778
        %v1801 = vmul.f32 %v1737, %v1780
        %v1802 = vmul.f32 %v1738, %v1782
        %v1803 = vmul.f32 %v1739, %v1784
        %v1804 = vmul.f32 %v1740, %v1786
        %v1805 = vmul.f32 %v1741, %v1788
        %v1806 = vmul.f32 %v1742, %v1790
        %v1807 = vadd.f32 %v1791, %v1601
        %v1808 = vadd.f32 %v1792, %v1607
        %v1809 = vadd.f32 %v1793, %v1613
        %v1810 = vadd.f32 %v1794, %v1619
        %v1811 = vadd.f32 %v1795, %v1625
        %v1812 = vadd.f32 %v1796, %v1631
        %v1813 = vadd.f32 %v1797, %v1637
        %v1814 = vadd.f32 %v1798, %v1643
        %v1815 = vadd.f32 %v1799, %v1649
        %v1816 = vadd.f32 %v1800, %v1655
        %v1817 = vadd.f32 %v1801, %v1661
        %v1818 = vadd.f32 %v1802, %v1667
        %v1819 = vadd.f32 %v1803, %v1673
        %v1820 = vadd.f32 %v1804, %v1679
        %v1821 = vadd.f32 %v1805, %v1685
        %v1822 = vadd.f32 %v1806, %v1691
        %v1823 = vld [vmem:[#allocation11] sm:$0xff]
        %v1824 = vld [vmem:[#allocation11 + $0x8] sm:$0xff]
        %v1825 = vld [vmem:[#allocation11 + $0x10] sm:$0xff]
        %v1826 = vld [vmem:[#allocation11 + $0x18] sm:$0xff]
        %v1827 = vld [vmem:[#allocation11 + $0x20] sm:$0xff]
        %v1828 = vld [vmem:[#allocation11 + $0x28] sm:$0xff]
        %v1829 = vld [vmem:[#allocation11 + $0x30] sm:$0xff]
        %v1830 = vld [vmem:[#allocation11 + $0x38] sm:$0xff]
        %v1831 = vld [vmem:[#allocation11 + $0x40] sm:$0xff]
        %v1832 = vld [vmem:[#allocation11 + $0x48] sm:$0xff]
        %v1833 = vld [vmem:[#allocation11 + $0x50] sm:$0xff]
        %v1834 = vld [vmem:[#allocation11 + $0x58] sm:$0xff]
        %v1835 = vld [vmem:[#allocation11 + $0x60] sm:$0xff]
        %v1836 = vld [vmem:[#allocation11 + $0x68] sm:$0xff]
        %v1837 = vld [vmem:[#allocation11 + $0x70] sm:$0xff]
        %v1838 = vld [vmem:[#allocation11 + $0x78] sm:$0xff]
        %v1839 = vld [vmem:[%s9] sm:$0x1]
        %v1841 = vlaneseq
        %v1842 = vshrl.u32 %v1841, 7
        %v1843 = vsub.s32 0, %v1842
        %v1844 = vrot.slane %v1839, %v1843
        %1846 = vmatprep.subr.mxu0 0.0
        %1847 = vmatpush1.msra.mxu0 %v1823
        %1848 = vmatprep.subr.mxu0 0.0
        %1849 = vmatpush1.msra.mxu0 %v1824
        %1850 = vmatprep.subr.mxu0 0.0
        %1851 = vmatpush1.msra.mxu0 %v1825
        %1852 = vmatprep.subr.mxu0 0.0
        %1853 = vmatpush1.msra.mxu0 %v1826
        %1854 = vmatprep.subr.mxu0 0.0
        %1855 = vmatpush1.msra.mxu0 %v1827
        %1856 = vmatprep.subr.mxu0 0.0
        %1857 = vmatpush1.msra.mxu0 %v1828
        %1858 = vmatprep.subr.mxu0 0.0
        %1859 = vmatpush1.msra.mxu0 %v1829
        %1860 = vmatprep.subr.mxu0 0.0
        %1861 = vmatpush1.msra.mxu0 %v1830
        %1862 = vmatprep.subr.mxu0 0.0
        %1863 = vmatpush1.msra.mxu0 %v1831
        %1864 = vmatprep.subr.mxu0 0.0
        %1865 = vmatpush1.msra.mxu0 %v1832
        %1866 = vmatprep.subr.mxu0 0.0
        %1867 = vmatpush1.msra.mxu0 %v1833
        %1868 = vmatprep.subr.mxu0 0.0
        %1869 = vmatpush1.msra.mxu0 %v1834
        %1870 = vmatprep.subr.mxu0 0.0
        %1871 = vmatpush1.msra.mxu0 %v1835
        %1872 = vmatprep.subr.mxu0 0.0
        %1873 = vmatpush1.msra.mxu0 %v1836
        %1874 = vmatprep.subr.mxu0 0.0
        %1875 = vmatpush1.msra.mxu0 %v1837
        %1876 = vmatprep.subr.mxu0 0.0
        %1877 = vmatpush1.msra.mxu0 %v1838
        %1878 = vmatprep.subr.mxu0 0.0
        %1879 = vmatpush1.msra.mxu0 0.0
        %1880 = vmatprep.subr.mxu0 0.0
        %1881 = vmatpush1.msra.mxu0 0.0
        %1882 = vmatprep.subr.mxu0 0.0
        %1883 = vmatpush1.msra.mxu0 0.0
        %1884 = vmatprep.subr.mxu0 0.0
        %1885 = vmatpush1.msra.mxu0 0.0
        %1886 = vmatprep.subr.mxu0 0.0
        %1887 = vmatpush1.msra.mxu0 0.0
        %1888 = vmatprep.subr.mxu0 0.0
        %1889 = vmatpush1.msra.mxu0 0.0
        %1890 = vmatprep.subr.mxu0 0.0
        %1891 = vmatpush1.msra.mxu0 0.0
        %1892 = vmatprep.subr.mxu0 0.0
        %1893 = vmatpush1.msra.mxu0 0.0
        %1894 = vmatprep.subr.mxu0 0.0
        %1895 = vmatpush1.msra.mxu0 0.0
        %1896 = vmatprep.subr.mxu0 0.0
        %1897 = vmatpush1.msra.mxu0 0.0
        %1898 = vmatprep.subr.mxu0 0.0
        %1899 = vmatpush1.msra.mxu0 0.0
        %1900 = vmatprep.subr.mxu0 0.0
        %1901 = vmatpush1.msra.mxu0 0.0
        %1902 = vmatprep.subr.mxu0 0.0
        %1903 = vmatpush1.msra.mxu0 0.0
        %1904 = vmatprep.subr.mxu0 0.0
        %1905 = vmatpush1.msra.mxu0 0.0
        %1906 = vmatprep.subr.mxu0 0.0
        %1907 = vmatpush1.msra.mxu0 0.0
        %1908 = vmatprep.subr.mxu0 0.0
        %1909 = vmatpush1.msra.mxu0 0.0
        %1910 = vmatprep.mubr.f32.mxu0 0.0
        %1911 = vmatmul.mubr.f32.gmra.mrb[0].mxu0 %v1807
        %v1912 = vpop.f32.mrb[0].mxu0
        %v1913 = vadd.f32 %v1844, %v1912
        %v1914 = vpop.f32.mrb[0].mxu0
        %1915 = vmatprep.mubr.f32.mxu0 0.0
        %1916 = vmatmul.mubr.f32.gmra.mrb[0].mxu0 %v1808
        %v1917 = vpop.f32.mrb[0].mxu0
        %v1918 = vadd.f32 %v1844, %v1917
        %v1919 = vpop.f32.mrb[0].mxu0
        %1920 = vmatprep.mubr.f32.mxu0 0.0
        %1921 = vmatmul.mubr.f32.gmra.mrb[0].mxu0 %v1809
        %v1922 = vpop.f32.mrb[0].mxu0
        %v1923 = vadd.f32 %v1844, %v1922
        %v1924 = vpop.f32.mrb[0].mxu0
        %1925 = vmatprep.mubr.f32.mxu0 0.0
        %1926 = vmatmul.mubr.f32.gmra.mrb[0].mxu0 %v1810
        %v1927 = vpop.f32.mrb[0].mxu0
        %v1928 = vadd.f32 %v1844, %v1927
        %v1929 = vpop.f32.mrb[0].mxu0
        %1930 = vmatprep.mubr.f32.mxu0 0.0
        %1931 = vmatmul.mubr.f32.gmra.mrb[0].mxu0 %v1811
        %v1932 = vpop.f32.mrb[0].mxu0
        %v1933 = vadd.f32 %v1844, %v1932
        %v1934 = vpop.f32.mrb[0].mxu0
        %1935 = vmatprep.mubr.f32.mxu0 0.0
        %1936 = vmatmul.mubr.f32.gmra.mrb[0].mxu0 %v1812
        %v1937 = vpop.f32.mrb[0].mxu0
        %v1938 = vadd.f32 %v1844, %v1937
        %v1939 = vpop.f32.mrb[0].mxu0
        %1940 = vmatprep.mubr.f32.mxu0 0.0
        %1941 = vmatmul.mubr.f32.gmra.mrb[0].mxu0 %v1813
        %v1942 = vpop.f32.mrb[0].mxu0
        %v1943 = vadd.f32 %v1844, %v1942
        %v1944 = vpop.f32.mrb[0].mxu0
        %1945 = vmatprep.mubr.f32.mxu0 0.0
        %1946 = vmatmul.mubr.f32.gmra.mrb[0].mxu0 %v1814
        %v1947 = vpop.f32.mrb[0].mxu0
        %v1948 = vadd.f32 %v1844, %v1947
        %v1949 = vpop.f32.mrb[0].mxu0
        %1950 = vmatprep.mubr.f32.mxu0 0.0
        %1951 = vmatmul.mubr.f32.gmra.mrb[0].mxu0 %v1815
        %v1952 = vpop.f32.mrb[0].mxu0
        %v1953 = vadd.f32 %v1844, %v1952
        %v1954 = vpop.f32.mrb[0].mxu0
        %1955 = vmatprep.mubr.f32.mxu0 0.0
        %1956 = vmatmul.mubr.f32.gmra.mrb[0].mxu0 %v1816
        %v1957 = vpop.f32.mrb[0].mxu0
        %v1958 = vadd.f32 %v1844, %v1957
        %v1959 = vpop.f32.mrb[0].mxu0
        %1960 = vmatprep.mubr.f32.mxu0 0.0
        %1961 = vmatmul.mubr.f32.gmra.mrb[0].mxu0 %v1817
        %v1962 = vpop.f32.mrb[0].mxu0
        %v1963 = vadd.f32 %v1844, %v1962
        %v1964 = vpop.f32.mrb[0].mxu0
        %1965 = vmatprep.mubr.f32.mxu0 0.0
        %1966 = vmatmul.mubr.f32.gmra.mrb[0].mxu0 %v1818
        %v1967 = vpop.f32.mrb[0].mxu0
        %v1968 = vadd.f32 %v1844, %v1967
        %v1969 = vpop.f32.mrb[0].mxu0
        %1970 = vmatprep.mubr.f32.mxu0 0.0
        %1971 = vmatmul.mubr.f32.gmra.mrb[0].mxu0 %v1819
        %v1972 = vpop.f32.mrb[0].mxu0
        %v1973 = vadd.f32 %v1844, %v1972
        %v1974 = vpop.f32.mrb[0].mxu0
        %1975 = vmatprep.mubr.f32.mxu0 0.0
        %1976 = vmatmul.mubr.f32.gmra.mrb[0].mxu0 %v1820
        %v1977 = vpop.f32.mrb[0].mxu0
        %v1978 = vadd.f32 %v1844, %v1977
        %v1979 = vpop.f32.mrb[0].mxu0
        %1980 = vmatprep.mubr.f32.mxu0 0.0
        %1981 = vmatmul.mubr.f32.gmra.mrb[0].mxu0 %v1821
        %v1982 = vpop.f32.mrb[0].mxu0
        %v1983 = vadd.f32 %v1844, %v1982
        %v1984 = vpop.f32.mrb[0].mxu0
        %1985 = vmatprep.mubr.f32.mxu0 0.0
        %1986 = vmatmul.mubr.f32.gmra.mrb[0].mxu0 %v1822
        %v1987 = vpop.f32.mrb[0].mxu0
        %v1988 = vadd.f32 %v1844, %v1987
        %v1989 = vpop.f32.mrb[0].mxu0
        %1990 = vdwg.mxu0
        %v1991 = vmax.f32 %v1913, 0.0
        %v1992 = vmax.f32 %v1918, 0.0
        %v1993 = vmax.f32 %v1923, 0.0
        %v1994 = vmax.f32 %v1928, 0.0
        %v1995 = vmax.f32 %v1933, 0.0
        %v1996 = vmax.f32 %v1938, 0.0
        %v1997 = vmax.f32 %v1943, 0.0
        %v1998 = vmax.f32 %v1948, 0.0
        %v1999 = vmax.f32 %v1953, 0.0
        %v2000 = vmax.f32 %v1958, 0.0
        %v2001 = vmax.f32 %v1963, 0.0
        %v2002 = vmax.f32 %v1968, 0.0
        %v2003 = vmax.f32 %v1973, 0.0
        %v2004 = vmax.f32 %v1978, 0.0
        %v2005 = vmax.f32 %v1983, 0.0
        %v2006 = vmax.f32 %v1988, 0.0
        %v2007 = vld [vmem:[#allocation13] sm:$0xff]
        %v2008 = vld [vmem:[#allocation13 + $0x8] sm:$0xff]
        %v2009 = vld [vmem:[#allocation13 + $0x10] sm:$0xff]
        %v2010 = vld [vmem:[#allocation13 + $0x18] sm:$0xff]
        %v2011 = vld [vmem:[#allocation13 + $0x20] sm:$0xff]
        %v2012 = vld [vmem:[#allocation13 + $0x28] sm:$0xff]
        %v2013 = vld [vmem:[#allocation13 + $0x30] sm:$0xff]
        %v2014 = vld [vmem:[#allocation13 + $0x38] sm:$0xff]
        %v2015 = vld [vmem:[#allocation13 + $0x40] sm:$0xff]
        %v2016 = vld [vmem:[#allocation13 + $0x48] sm:$0xff]
        %v2017 = vld [vmem:[#allocation13 + $0x50] sm:$0xff]
        %v2018 = vld [vmem:[#allocation13 + $0x58] sm:$0xff]
        %v2019 = vld [vmem:[#allocation13 + $0x60] sm:$0xff]
        %v2020 = vld [vmem:[#allocation13 + $0x68] sm:$0xff]
        %v2021 = vld [vmem:[#allocation13 + $0x70] sm:$0xff]
        %v2022 = vld [vmem:[#allocation13 + $0x78] sm:$0xff]
        %v2023 = vld [vmem:[%s11] sm:$0x1]
        %v2025 = vlaneseq
        %v2026 = vshrl.u32 %v2025, 7
        %v2027 = vsub.s32 0, %v2026
        %v2028 = vrot.slane %v2023, %v2027
        %2030 = vmatprep.subr.mxu0 0.0
        %2031 = vmatpush1.msra.mxu0 %v2007
        %2032 = vmatprep.subr.mxu0 0.0
        %2033 = vmatpush1.msra.mxu0 %v2008
        %2034 = vmatprep.subr.mxu0 0.0
        %2035 = vmatpush1.msra.mxu0 %v2009
        %2036 = vmatprep.subr.mxu0 0.0
        %2037 = vmatpush1.msra.mxu0 %v2010
        %2038 = vmatprep.subr.mxu0 0.0
        %2039 = vmatpush1.msra.mxu0 %v2011
        %2040 = vmatprep.subr.mxu0 0.0
        %2041 = vmatpush1.msra.mxu0 %v2012
        %2042 = vmatprep.subr.mxu0 0.0
        %2043 = vmatpush1.msra.mxu0 %v2013
        %2044 = vmatprep.subr.mxu0 0.0
        %2045 = vmatpush1.msra.mxu0 %v2014
        %2046 = vmatprep.subr.mxu0 0.0
        %2047 = vmatpush1.msra.mxu0 %v2015
        %2048 = vmatprep.subr.mxu0 0.0
        %2049 = vmatpush1.msra.mxu0 %v2016
        %2050 = vmatprep.subr.mxu0 0.0
        %2051 = vmatpush1.msra.mxu0 %v2017
        %2052 = vmatprep.subr.mxu0 0.0
        %2053 = vmatpush1.msra.mxu0 %v2018
        %2054 = vmatprep.subr.mxu0 0.0
        %2055 = vmatpush1.msra.mxu0 %v2019
        %2056 = vmatprep.subr.mxu0 0.0
        %2057 = vmatpush1.msra.mxu0 %v2020
        %2058 = vmatprep.subr.mxu0 0.0
        %2059 = vmatpush1.msra.mxu0 %v2021
        %2060 = vmatprep.subr.mxu0 0.0
        %2061 = vmatpush1.msra.mxu0 %v2022
        %2062 = vmatprep.subr.mxu0 0.0
        %2063 = vmatpush1.msra.mxu0 0.0
        %2064 = vmatprep.subr.mxu0 0.0
        %2065 = vmatpush1.msra.mxu0 0.0
        %2066 = vmatprep.subr.mxu0 0.0
        %2067 = vmatpush1.msra.mxu0 0.0
        %2068 = vmatprep.subr.mxu0 0.0
        %2069 = vmatpush1.msra.mxu0 0.0
        %2070 = vmatprep.subr.mxu0 0.0
        %2071 = vmatpush1.msra.mxu0 0.0
        %2072 = vmatprep.subr.mxu0 0.0
        %2073 = vmatpush1.msra.mxu0 0.0
        %2074 = vmatprep.subr.mxu0 0.0
        %2075 = vmatpush1.msra.mxu0 0.0
        %2076 = vmatprep.subr.mxu0 0.0
        %2077 = vmatpush1.msra.mxu0 0.0
        %2078 = vmatprep.subr.mxu0 0.0
        %2079 = vmatpush1.msra.mxu0 0.0
        %2080 = vmatprep.subr.mxu0 0.0
        %2081 = vmatpush1.msra.mxu0 0.0
        %2082 = vmatprep.subr.mxu0 0.0
        %2083 = vmatpush1.msra.mxu0 0.0
        %2084 = vmatprep.subr.mxu0 0.0
        %2085 = vmatpush1.msra.mxu0 0.0
        %2086 = vmatprep.subr.mxu0 0.0
        %2087 = vmatpush1.msra.mxu0 0.0
        %2088 = vmatprep.subr.mxu0 0.0
        %2089 = vmatpush1.msra.mxu0 0.0
        %2090 = vmatprep.subr.mxu0 0.0
        %2091 = vmatpush1.msra.mxu0 0.0
        %2092 = vmatprep.subr.mxu0 0.0
        %2093 = vmatpush1.msra.mxu0 0.0
        %2094 = vmatprep.mubr.f32.mxu0 0.0
        %2095 = vmatmul.mubr.f32.gmra.mrb[0].mxu0 %v1991
        %v2096 = vpop.f32.mrb[0].mxu0
        %v2097 = vadd.f32 %v2028, %v2096
        %v2098 = vpop.f32.mrb[0].mxu0
        %2099 = vmatprep.mubr.f32.mxu0 0.0
        %2100 = vmatmul.mubr.f32.gmra.mrb[0].mxu0 %v1992
        %v2101 = vpop.f32.mrb[0].mxu0
        %v2102 = vadd.f32 %v2028, %v2101
        %v2103 = vpop.f32.mrb[0].mxu0
        %2104 = vmatprep.mubr.f32.mxu0 0.0
        %2105 = vmatmul.mubr.f32.gmra.mrb[0].mxu0 %v1993
        %v2106 = vpop.f32.mrb[0].mxu0
        %v2107 = vadd.f32 %v2028, %v2106
        %v2108 = vpop.f32.mrb[0].mxu0
        %2109 = vmatprep.mubr.f32.mxu0 0.0
        %2110 = vmatmul.mubr.f32.gmra.mrb[0].mxu0 %v1994
        %v2111 = vpop.f32.mrb[0].mxu0
        %v2112 = vadd.f32 %v2028, %v2111
        %v2113 = vpop.f32.mrb[0].mxu0
        %2114 = vmatprep.mubr.f32.mxu0 0.0
        %2115 = vmatmul.mubr.f32.gmra.mrb[0].mxu0 %v1995
        %v2116 = vpop.f32.mrb[0].mxu0
        %v2117 = vadd.f32 %v2028, %v2116
        %v2118 = vpop.f32.mrb[0].mxu0
        %2119 = vmatprep.mubr.f32.mxu0 0.0
        %2120 = vmatmul.mubr.f32.gmra.mrb[0].mxu0 %v1996
        %v2121 = vpop.f32.mrb[0].mxu0
        %v2122 = vadd.f32 %v2028, %v2121
        %v2123 = vpop.f32.mrb[0].mxu0
        %2124 = vmatprep.mubr.f32.mxu0 0.0
        %2125 = vmatmul.mubr.f32.gmra.mrb[0].mxu0 %v1997
        %v2126 = vpop.f32.mrb[0].mxu0
        %v2127 = vadd.f32 %v2028, %v2126
        %v2128 = vpop.f32.mrb[0].mxu0
        %2129 = vmatprep.mubr.f32.mxu0 0.0
        %2130 = vmatmul.mubr.f32.gmra.mrb[0].mxu0 %v1998
        %v2131 = vpop.f32.mrb[0].mxu0
        %v2132 = vadd.f32 %v2028, %v2131
        %v2133 = vpop.f32.mrb[0].mxu0
        %2134 = vmatprep.mubr.f32.mxu0 0.0
        %2135 = vmatmul.mubr.f32.gmra.mrb[0].mxu0 %v1999
        %v2136 = vpop.f32.mrb[0].mxu0
        %v2137 = vadd.f32 %v2028, %v2136
        %v2138 = vpop.f32.mrb[0].mxu0
        %2139 = vmatprep.mubr.f32.mxu0 0.0
        %2140 = vmatmul.mubr.f32.gmra.mrb[0].mxu0 %v2000
        %v2141 = vpop.f32.mrb[0].mxu0
        %v2142 = vadd.f32 %v2028, %v2141
        %v2143 = vpop.f32.mrb[0].mxu0
        %2144 = vmatprep.mubr.f32.mxu0 0.0
        %2145 = vmatmul.mubr.f32.gmra.mrb[0].mxu0 %v2001
        %v2146 = vpop.f32.mrb[0].mxu0
        %v2147 = vadd.f32 %v2028, %v2146
        %v2148 = vpop.f32.mrb[0].mxu0
        %2149 = vmatprep.mubr.f32.mxu0 0.0
        %2150 = vmatmul.mubr.f32.gmra.mrb[0].mxu0 %v2002
        %v2151 = vpop.f32.mrb[0].mxu0
        %v2152 = vadd.f32 %v2028, %v2151
        %v2153 = vpop.f32.mrb[0].mxu0
        %2154 = vmatprep.mubr.f32.mxu0 0.0
        %2155 = vmatmul.mubr.f32.gmra.mrb[0].mxu0 %v2003
        %v2156 = vpop.f32.mrb[0].mxu0
        %v2157 = vadd.f32 %v2028, %v2156
        %v2158 = vpop.f32.mrb[0].mxu0
        %2159 = vmatprep.mubr.f32.mxu0 0.0
        %2160 = vmatmul.mubr.f32.gmra.mrb[0].mxu0 %v2004
        %v2161 = vpop.f32.mrb[0].mxu0
        %v2162 = vadd.f32 %v2028, %v2161
        %v2163 = vpop.f32.mrb[0].mxu0
        %2164 = vmatprep.mubr.f32.mxu0 0.0
        %2165 = vmatmul.mubr.f32.gmra.mrb[0].mxu0 %v2005
        %v2166 = vpop.f32.mrb[0].mxu0
        %v2167 = vadd.f32 %v2028, %v2166
        %v2168 = vpop.f32.mrb[0].mxu0
        %2169 = vmatprep.mubr.f32.mxu0 0.0
        %2170 = vmatmul.mubr.f32.gmra.mrb[0].mxu0 %v2006
        %v2171 = vpop.f32.mrb[0].mxu0
        %v2172 = vadd.f32 %v2028, %v2171
        %v2173 = vpop.f32.mrb[0].mxu0
        %2174 = vdwg.mxu0
        %v2175 = vmax.f32 %v2097, 0.0
        %v2176 = vmax.f32 %v2102, 0.0
        %v2177 = vmax.f32 %v2107, 0.0
        %v2178 = vmax.f32 %v2112, 0.0
        %v2179 = vmax.f32 %v2117, 0.0
        %v2180 = vmax.f32 %v2122, 0.0
        %v2181 = vmax.f32 %v2127, 0.0
        %v2182 = vmax.f32 %v2132, 0.0
        %v2183 = vmax.f32 %v2137, 0.0
        %v2184 = vmax.f32 %v2142, 0.0
        %v2185 = vmax.f32 %v2147, 0.0
        %v2186 = vmax.f32 %v2152, 0.0
        %v2187 = vmax.f32 %v2157, 0.0
        %v2188 = vmax.f32 %v2162, 0.0
        %v2189 = vmax.f32 %v2167, 0.0
        %v2190 = vmax.f32 %v2172, 0.0
        %v2191 = vld [vmem:[#allocation14] sm:$0xff]
        %v2192 = vld [vmem:[#allocation14 + $0x8] sm:$0xff]
        %v2193 = vld [vmem:[#allocation14 + $0x10] sm:$0xff]
        %v2194 = vld [vmem:[#allocation14 + $0x18] sm:$0xff]
        %v2195 = vld [vmem:[#allocation14 + $0x20] sm:$0xff]
        %v2196 = vld [vmem:[#allocation14 + $0x28] sm:$0xff]
        %v2197 = vld [vmem:[#allocation14 + $0x30] sm:$0xff]
        %v2198 = vld [vmem:[#allocation14 + $0x38] sm:$0xff]
        %v2199 = vld [vmem:[#allocation14 + $0x40] sm:$0xff]
        %v2200 = vld [vmem:[#allocation14 + $0x48] sm:$0xff]
        %v2201 = vld [vmem:[#allocation14 + $0x50] sm:$0xff]
        %v2202 = vld [vmem:[#allocation14 + $0x58] sm:$0xff]
        %v2203 = vld [vmem:[#allocation14 + $0x60] sm:$0xff]
        %v2204 = vld [vmem:[#allocation14 + $0x68] sm:$0xff]
        %v2205 = vld [vmem:[#allocation14 + $0x70] sm:$0xff]
        %v2206 = vld [vmem:[#allocation14 + $0x78] sm:$0xff]
        %v2207 = vld [vmem:[#allocation14 + $0x80] sm:$0xff]
        %v2208 = vld [vmem:[#allocation14 + $0x88] sm:$0xff]
        %v2209 = vld [vmem:[#allocation14 + $0x90] sm:$0xff]
        %v2210 = vld [vmem:[#allocation14 + $0x98] sm:$0xff]
        %v2211 = vld [vmem:[#allocation14 + $0xa0] sm:$0xff]
        %v2212 = vld [vmem:[#allocation14 + $0xa8] sm:$0xff]
        %v2213 = vld [vmem:[#allocation14 + $0xb0] sm:$0xff]
        %v2214 = vld [vmem:[#allocation14 + $0xb8] sm:$0xff]
        %v2215 = vld [vmem:[#allocation14 + $0xc0] sm:$0xff]
        %v2216 = vld [vmem:[#allocation14 + $0xc8] sm:$0xff]
        %v2217 = vld [vmem:[#allocation14 + $0xd0] sm:$0xff]
        %v2218 = vld [vmem:[#allocation14 + $0xd8] sm:$0xff]
        %v2219 = vld [vmem:[#allocation14 + $0xe0] sm:$0xff]
        %v2220 = vld [vmem:[#allocation14 + $0xe8] sm:$0xff]
        %v2221 = vld [vmem:[#allocation14 + $0xf0] sm:$0xff]
        %v2222 = vld [vmem:[#allocation14 + $0xf8] sm:$0xff]
        %v2223 = vld [vmem:[#allocation14 + $0x100] sm:$0xff]
        %v2224 = vld [vmem:[#allocation14 + $0x108] sm:$0xff]
        %v2225 = vld [vmem:[#allocation14 + $0x110] sm:$0xff]
        %v2226 = vld [vmem:[#allocation14 + $0x118] sm:$0xff]
        %v2227 = vld [vmem:[#allocation14 + $0x120] sm:$0xff]
        %v2228 = vld [vmem:[#allocation14 + $0x128] sm:$0xff]
        %v2229 = vld [vmem:[#allocation14 + $0x130] sm:$0xff]
        %v2230 = vld [vmem:[#allocation14 + $0x138] sm:$0xff]
        %v2231 = vld [vmem:[#allocation14 + $0x140] sm:$0xff]
        %v2232 = vld [vmem:[#allocation14 + $0x148] sm:$0xff]
        %v2233 = vld [vmem:[#allocation14 + $0x150] sm:$0xff]
        %v2234 = vld [vmem:[#allocation14 + $0x158] sm:$0xff]
        %v2235 = vld [vmem:[#allocation14 + $0x160] sm:$0xff]
        %v2236 = vld [vmem:[#allocation14 + $0x168] sm:$0xff]
        %v2237 = vld [vmem:[#allocation14 + $0x170] sm:$0xff]
        %v2238 = vld [vmem:[#allocation14 + $0x178] sm:$0xff]
        %v2239 = vld [vmem:[#allocation14 + $0x180] sm:$0xff]
        %v2240 = vld [vmem:[#allocation14 + $0x188] sm:$0xff]
        %v2241 = vld [vmem:[#allocation14 + $0x190] sm:$0xff]
        %v2242 = vld [vmem:[#allocation14 + $0x198] sm:$0xff]
        %v2243 = vld [vmem:[#allocation14 + $0x1a0] sm:$0xff]
        %v2244 = vld [vmem:[#allocation14 + $0x1a8] sm:$0xff]
        %v2245 = vld [vmem:[#allocation14 + $0x1b0] sm:$0xff]
        %v2246 = vld [vmem:[#allocation14 + $0x1b8] sm:$0xff]
        %v2247 = vld [vmem:[#allocation14 + $0x1c0] sm:$0xff]
        %v2248 = vld [vmem:[#allocation14 + $0x1c8] sm:$0xff]
        %v2249 = vld [vmem:[#allocation14 + $0x1d0] sm:$0xff]
        %v2250 = vld [vmem:[#allocation14 + $0x1d8] sm:$0xff]
        %v2251 = vld [vmem:[#allocation14 + $0x1e0] sm:$0xff]
        %v2252 = vld [vmem:[#allocation14 + $0x1e8] sm:$0xff]
        %v2253 = vld [vmem:[#allocation14 + $0x1f0] sm:$0xff]
        %v2254 = vld [vmem:[#allocation14 + $0x1f8] sm:$0xff]
        %v2255 = vld [vmem:[#allocation14 + $0x200] sm:$0xff]
        %v2256 = vld [vmem:[#allocation14 + $0x208] sm:$0xff]
        %v2257 = vld [vmem:[#allocation14 + $0x210] sm:$0xff]
        %v2258 = vld [vmem:[#allocation14 + $0x218] sm:$0xff]
        %v2259 = vld [vmem:[#allocation14 + $0x220] sm:$0xff]
        %v2260 = vld [vmem:[#allocation14 + $0x228] sm:$0xff]
        %v2261 = vld [vmem:[#allocation14 + $0x230] sm:$0xff]
        %v2262 = vld [vmem:[#allocation14 + $0x238] sm:$0xff]
        %v2263 = vld [vmem:[#allocation14 + $0x240] sm:$0xff]
        %v2264 = vld [vmem:[#allocation14 + $0x248] sm:$0xff]
        %v2265 = vld [vmem:[#allocation14 + $0x250] sm:$0xff]
        %v2266 = vld [vmem:[#allocation14 + $0x258] sm:$0xff]
        %v2267 = vld [vmem:[#allocation14 + $0x260] sm:$0xff]
        %v2268 = vld [vmem:[#allocation14 + $0x268] sm:$0xff]
        %v2269 = vld [vmem:[#allocation14 + $0x270] sm:$0xff]
        %v2270 = vld [vmem:[#allocation14 + $0x278] sm:$0xff]
        %v2271 = vld [vmem:[#allocation14 + $0x280] sm:$0xff]
        %v2272 = vld [vmem:[#allocation14 + $0x288] sm:$0xff]
        %v2273 = vld [vmem:[#allocation14 + $0x290] sm:$0xff]
        %v2274 = vld [vmem:[#allocation14 + $0x298] sm:$0xff]
        %v2275 = vld [vmem:[#allocation14 + $0x2a0] sm:$0xff]
        %v2276 = vld [vmem:[#allocation14 + $0x2a8] sm:$0xff]
        %v2277 = vld [vmem:[#allocation14 + $0x2b0] sm:$0xff]
        %v2278 = vld [vmem:[#allocation14 + $0x2b8] sm:$0xff]
        %v2279 = vld [vmem:[#allocation14 + $0x2c0] sm:$0xff]
        %v2280 = vld [vmem:[#allocation14 + $0x2c8] sm:$0xff]
        %v2281 = vld [vmem:[#allocation14 + $0x2d0] sm:$0xff]
        %v2282 = vld [vmem:[#allocation14 + $0x2d8] sm:$0xff]
        %v2283 = vld [vmem:[#allocation14 + $0x2e0] sm:$0xff]
        %v2284 = vld [vmem:[#allocation14 + $0x2e8] sm:$0xff]
        %v2285 = vld [vmem:[#allocation14 + $0x2f0] sm:$0xff]
        %v2286 = vld [vmem:[#allocation14 + $0x2f8] sm:$0xff]
        %v2287 = vld [vmem:[%s13] sm:$0x3f]
        %v2289 = vlaneseq
        %v2290 = vshrl.u32 %v2289, 7
        %v2291 = vsub.s32 0, %v2290
        %v2292 = vrot.slane %v2287, %v2291
        %v2293 = vlaneseq
        %v2294 = vshrl.u32 %v2293, 7
        %v2295 = vsub.s32 1, %v2294
        %v2296 = vrot.slane %v2287, %v2295
        %v2297 = vlaneseq
        %v2298 = vshrl.u32 %v2297, 7
        %v2299 = vsub.s32 2, %v2298
        %v2300 = vrot.slane %v2287, %v2299
        %v2301 = vlaneseq
        %v2302 = vshrl.u32 %v2301, 7
        %v2303 = vsub.s32 3, %v2302
        %v2304 = vrot.slane %v2287, %v2303
        %v2305 = vlaneseq
        %v2306 = vshrl.u32 %v2305, 7
        %v2307 = vsub.s32 4, %v2306
        %v2308 = vrot.slane %v2287, %v2307
        %v2309 = vlaneseq
        %v2310 = vshrl.u32 %v2309, 7
        %v2311 = vsub.s32 5, %v2310
        %v2312 = vrot.slane %v2287, %v2311
        %2319 = vmatprep.subr.mxu0 %v2192
        %2320 = vmatpush1.msra.mxu0 %v2191
        %2321 = vmatprep.subr.mxu0 %v2198
        %2322 = vmatpush1.msra.mxu0 %v2197
        %2323 = vmatprep.subr.mxu0 %v2204
        %2324 = vmatpush1.msra.mxu0 %v2203
        %2325 = vmatprep.subr.mxu0 %v2210
        %2326 = vmatpush1.msra.mxu0 %v2209
        %2327 = vmatprep.subr.mxu0 %v2216
        %2328 = vmatpush1.msra.mxu0 %v2215
        %2329 = vmatprep.subr.mxu0 %v2222
        %2330 = vmatpush1.msra.mxu0 %v2221
        %2331 = vmatprep.subr.mxu0 %v2228
        %2332 = vmatpush1.msra.mxu0 %v2227
        %2333 = vmatprep.subr.mxu0 %v2234
        %2334 = vmatpush1.msra.mxu0 %v2233
        %2335 = vmatprep.subr.mxu0 %v2240
        %2336 = vmatpush1.msra.mxu0 %v2239
        %2337 = vmatprep.subr.mxu0 %v2246
        %2338 = vmatpush1.msra.mxu0 %v2245
        %2339 = vmatprep.subr.mxu0 %v2252
        %2340 = vmatpush1.msra.mxu0 %v2251
        %2341 = vmatprep.subr.mxu0 %v2258
        %2342 = vmatpush1.msra.mxu0 %v2257
        %2343 = vmatprep.subr.mxu0 %v2264
        %2344 = vmatpush1.msra.mxu0 %v2263
        %2345 = vmatprep.subr.mxu0 %v2270
        %2346 = vmatpush1.msra.mxu0 %v2269
        %2347 = vmatprep.subr.mxu0 %v2276
        %2348 = vmatpush1.msra.mxu0 %v2275
        %2349 = vmatprep.subr.mxu0 %v2282
        %2350 = vmatpush1.msra.mxu0 %v2281
        %2351 = vmatprep.subr.mxu0 0.0
        %2352 = vmatpush1.msra.mxu0 0.0
        %2353 = vmatprep.subr.mxu0 0.0
        %2354 = vmatpush1.msra.mxu0 0.0
        %2355 = vmatprep.subr.mxu0 0.0
        %2356 = vmatpush1.msra.mxu0 0.0
        %2357 = vmatprep.subr.mxu0 0.0
        %2358 = vmatpush1.msra.mxu0 0.0
        %2359 = vmatprep.subr.mxu0 0.0
        %2360 = vmatpush1.msra.mxu0 0.0
        %2361 = vmatprep.subr.mxu0 0.0
        %2362 = vmatpush1.msra.mxu0 0.0
        %2363 = vmatprep.subr.mxu0 0.0
        %2364 = vmatpush1.msra.mxu0 0.0
        %2365 = vmatprep.subr.mxu0 0.0
        %2366 = vmatpush1.msra.mxu0 0.0
        %2367 = vmatprep.subr.mxu0 0.0
        %2368 = vmatpush1.msra.mxu0 0.0
        %2369 = vmatprep.subr.mxu0 0.0
        %2370 = vmatpush1.msra.mxu0 0.0
        %2371 = vmatprep.subr.mxu0 0.0
        %2372 = vmatpush1.msra.mxu0 0.0
        %2373 = vmatprep.subr.mxu0 0.0
        %2374 = vmatpush1.msra.mxu0 0.0
        %2375 = vmatprep.subr.mxu0 0.0
        %2376 = vmatpush1.msra.mxu0 0.0
        %2377 = vmatprep.subr.mxu0 0.0
        %2378 = vmatpush1.msra.mxu0 0.0
        %2379 = vmatprep.subr.mxu0 0.0
        %2380 = vmatpush1.msra.mxu0 0.0
        %2381 = vmatprep.subr.mxu0 0.0
        %2382 = vmatpush1.msra.mxu0 0.0
        %2383 = vmatprep.mubr.f32.mxu0 0.0
        %2384 = vmatmul.mubr.f32.gmra.mrb[0].mxu0 %v2175
        %v2385 = vpop.f32.mrb[0].mxu0
        %v2386 = vadd.f32 %v2292, %v2385
        %v2387 = vpop.f32.mrb[0].mxu0
        %v2388 = vadd.f32 %v2296, %v2387
        %2389 = vmatprep.mubr.f32.mxu0 0.0
        %2390 = vmatmul.mubr.f32.gmra.mrb[0].mxu0 %v2176
        %v2391 = vpop.f32.mrb[0].mxu0
        %v2392 = vadd.f32 %v2292, %v2391
        %v2393 = vpop.f32.mrb[0].mxu0
        %v2394 = vadd.f32 %v2296, %v2393
        %2395 = vmatprep.mubr.f32.mxu0 0.0
        %2396 = vmatmul.mubr.f32.gmra.mrb[0].mxu0 %v2177
        %v2397 = vpop.f32.mrb[0].mxu0
        %v2398 = vadd.f32 %v2292, %v2397
        %v2399 = vpop.f32.mrb[0].mxu0
        %v2400 = vadd.f32 %v2296, %v2399
        %2401 = vmatprep.mubr.f32.mxu0 0.0
        %2402 = vmatmul.mubr.f32.gmra.mrb[0].mxu0 %v2178
        %v2403 = vpop.f32.mrb[0].mxu0
        %v2404 = vadd.f32 %v2292, %v2403
        %v2405 = vpop.f32.mrb[0].mxu0
        %v2406 = vadd.f32 %v2296, %v2405
        %2407 = vmatprep.mubr.f32.mxu0 0.0
        %2408 = vmatmul.mubr.f32.gmra.mrb[0].mxu0 %v2179
        %v2409 = vpop.f32.mrb[0].mxu0
        %v2410 = vadd.f32 %v2292, %v2409
        %v2411 = vpop.f32.mrb[0].mxu0
        %v2412 = vadd.f32 %v2296, %v2411
        %2413 = vmatprep.mubr.f32.mxu0 0.0
        %2414 = vmatmul.mubr.f32.gmra.mrb[0].mxu0 %v2180
        %v2415 = vpop.f32.mrb[0].mxu0
        %v2416 = vadd.f32 %v2292, %v2415
        %v2417 = vpop.f32.mrb[0].mxu0
        %v2418 = vadd.f32 %v2296, %v2417
        %2419 = vmatprep.mubr.f32.mxu0 0.0
        %2420 = vmatmul.mubr.f32.gmra.mrb[0].mxu0 %v2181
        %v2421 = vpop.f32.mrb[0].mxu0
        %v2422 = vadd.f32 %v2292, %v2421
        %v2423 = vpop.f32.mrb[0].mxu0
        %v2424 = vadd.f32 %v2296, %v2423
        %2425 = vmatprep.mubr.f32.mxu0 0.0
        %2426 = vmatmul.mubr.f32.gmra.mrb[0].mxu0 %v2182
        %v2427 = vpop.f32.mrb[0].mxu0
        %v2428 = vadd.f32 %v2292, %v2427
        %v2429 = vpop.f32.mrb[0].mxu0
        %v2430 = vadd.f32 %v2296, %v2429
        %2431 = vmatprep.mubr.f32.mxu0 0.0
        %2432 = vmatmul.mubr.f32.gmra.mrb[0].mxu0 %v2183
        %v2433 = vpop.f32.mrb[0].mxu0
        %v2434 = vadd.f32 %v2292, %v2433
        %v2435 = vpop.f32.mrb[0].mxu0
        %v2436 = vadd.f32 %v2296, %v2435
        %2437 = vmatprep.mubr.f32.mxu0 0.0
        %2438 = vmatmul.mubr.f32.gmra.mrb[0].mxu0 %v2184
        %v2439 = vpop.f32.mrb[0].mxu0
        %v2440 = vadd.f32 %v2292, %v2439
        %v2441 = vpop.f32.mrb[0].mxu0
        %v2442 = vadd.f32 %v2296, %v2441
        %2443 = vmatprep.mubr.f32.mxu0 0.0
        %2444 = vmatmul.mubr.f32.gmra.mrb[0].mxu0 %v2185
        %v2445 = vpop.f32.mrb[0].mxu0
        %v2446 = vadd.f32 %v2292, %v2445
        %v2447 = vpop.f32.mrb[0].mxu0
        %v2448 = vadd.f32 %v2296, %v2447
        %2449 = vmatprep.mubr.f32.mxu0 0.0
        %2450 = vmatmul.mubr.f32.gmra.mrb[0].mxu0 %v2186
        %v2451 = vpop.f32.mrb[0].mxu0
        %v2452 = vadd.f32 %v2292, %v2451
        %v2453 = vpop.f32.mrb[0].mxu0
        %v2454 = vadd.f32 %v2296, %v2453
        %2455 = vmatprep.mubr.f32.mxu0 0.0
        %2456 = vmatmul.mubr.f32.gmra.mrb[0].mxu0 %v2187
        %v2457 = vpop.f32.mrb[0].mxu0
        %v2458 = vadd.f32 %v2292, %v2457
        %v2459 = vpop.f32.mrb[0].mxu0
        %v2460 = vadd.f32 %v2296, %v2459
        %2461 = vmatprep.mubr.f32.mxu0 0.0
        %2462 = vmatmul.mubr.f32.gmra.mrb[0].mxu0 %v2188
        %v2463 = vpop.f32.mrb[0].mxu0
        %v2464 = vadd.f32 %v2292, %v2463
        %v2465 = vpop.f32.mrb[0].mxu0
        %v2466 = vadd.f32 %v2296, %v2465
        %2467 = vmatprep.mubr.f32.mxu0 0.0
        %2468 = vmatmul.mubr.f32.gmra.mrb[0].mxu0 %v2189
        %v2469 = vpop.f32.mrb[0].mxu0
        %v2470 = vadd.f32 %v2292, %v2469
        %v2471 = vpop.f32.mrb[0].mxu0
        %v2472 = vadd.f32 %v2296, %v2471
        %2473 = vmatprep.mubr.f32.mxu0 0.0
        %2474 = vmatmul.mubr.f32.gmra.mrb[0].mxu0 %v2190
        %v2475 = vpop.f32.mrb[0].mxu0
        %v2476 = vadd.f32 %v2292, %v2475
        %v2477 = vpop.f32.mrb[0].mxu0
        %v2478 = vadd.f32 %v2296, %v2477
        %2479 = vdwg.mxu0
        %2480 = vmatprep.subr.mxu0 %v2194
        %2481 = vmatpush1.msra.mxu0 %v2193
        %2482 = vmatprep.subr.mxu0 %v2200
        %2483 = vmatpush1.msra.mxu0 %v2199
        %2484 = vmatprep.subr.mxu0 %v2206
        %2485 = vmatpush1.msra.mxu0 %v2205
        %2486 = vmatprep.subr.mxu0 %v2212
        %2487 = vmatpush1.msra.mxu0 %v2211
        %2488 = vmatprep.subr.mxu0 %v2218
        %2489 = vmatpush1.msra.mxu0 %v2217
        %2490 = vmatprep.subr.mxu0 %v2224
        %2491 = vmatpush1.msra.mxu0 %v2223
        %2492 = vmatprep.subr.mxu0 %v2230
        %2493 = vmatpush1.msra.mxu0 %v2229
        %2494 = vmatprep.subr.mxu0 %v2236
        %2495 = vmatpush1.msra.mxu0 %v2235
        %2496 = vmatprep.subr.mxu0 %v2242
        %2497 = vmatpush1.msra.mxu0 %v2241
        %2498 = vmatprep.subr.mxu0 %v2248
        %2499 = vmatpush1.msra.mxu0 %v2247
        %2500 = vmatprep.subr.mxu0 %v2254
        %2501 = vmatpush1.msra.mxu0 %v2253
        %2502 = vmatprep.subr.mxu0 %v2260
        %2503 = vmatpush1.msra.mxu0 %v2259
        %2504 = vmatprep.subr.mxu0 %v2266
        %2505 = vmatpush1.msra.mxu0 %v2265
        %2506 = vmatprep.subr.mxu0 %v2272
        %2507 = vmatpush1.msra.mxu0 %v2271
        %2508 = vmatprep.subr.mxu0 %v2278
        %2509 = vmatpush1.msra.mxu0 %v2277
        %2510 = vmatprep.subr.mxu0 %v2284
        %2511 = vmatpush1.msra.mxu0 %v2283
        %2512 = vmatprep.subr.mxu0 0.0
        %2513 = vmatpush1.msra.mxu0 0.0
        %2514 = vmatprep.subr.mxu0 0.0
        %2515 = vmatpush1.msra.mxu0 0.0
        %2516 = vmatprep.subr.mxu0 0.0
        %2517 = vmatpush1.msra.mxu0 0.0
        %2518 = vmatprep.subr.mxu0 0.0
        %2519 = vmatpush1.msra.mxu0 0.0
        %2520 = vmatprep.subr.mxu0 0.0
        %2521 = vmatpush1.msra.mxu0 0.0
        %2522 = vmatprep.subr.mxu0 0.0
        %2523 = vmatpush1.msra.mxu0 0.0
        %2524 = vmatprep.subr.mxu0 0.0
        %2525 = vmatpush1.msra.mxu0 0.0
        %2526 = vmatprep.subr.mxu0 0.0
        %2527 = vmatpush1.msra.mxu0 0.0
        %2528 = vmatprep.subr.mxu0 0.0
        %2529 = vmatpush1.msra.mxu0 0.0
        %2530 = vmatprep.subr.mxu0 0.0
        %2531 = vmatpush1.msra.mxu0 0.0
        %2532 = vmatprep.subr.mxu0 0.0
        %2533 = vmatpush1.msra.mxu0 0.0
        %2534 = vmatprep.subr.mxu0 0.0
        %2535 = vmatpush1.msra.mxu0 0.0
        %2536 = vmatprep.subr.mxu0 0.0
        %2537 = vmatpush1.msra.mxu0 0.0
        %2538 = vmatprep.subr.mxu0 0.0
        %2539 = vmatpush1.msra.mxu0 0.0
        %2540 = vmatprep.subr.mxu0 0.0
        %2541 = vmatpush1.msra.mxu0 0.0
        %2542 = vmatprep.subr.mxu0 0.0
        %2543 = vmatpush1.msra.mxu0 0.0
        %2544 = vmatprep.mubr.f32.mxu0 0.0
        %2545 = vmatmul.mubr.f32.gmra.mrb[0].mxu0 %v2175
        %v2546 = vpop.f32.mrb[0].mxu0
        %v2547 = vadd.f32 %v2300, %v2546
        %v2548 = vpop.f32.mrb[0].mxu0
        %v2549 = vadd.f32 %v2304, %v2548
        %2550 = vmatprep.mubr.f32.mxu0 0.0
        %2551 = vmatmul.mubr.f32.gmra.mrb[0].mxu0 %v2176
        %v2552 = vpop.f32.mrb[0].mxu0
        %v2553 = vadd.f32 %v2300, %v2552
        %v2554 = vpop.f32.mrb[0].mxu0
        %v2555 = vadd.f32 %v2304, %v2554
        %2556 = vmatprep.mubr.f32.mxu0 0.0
        %2557 = vmatmul.mubr.f32.gmra.mrb[0].mxu0 %v2177
        %v2558 = vpop.f32.mrb[0].mxu0
        %v2559 = vadd.f32 %v2300, %v2558
        %v2560 = vpop.f32.mrb[0].mxu0
        %v2561 = vadd.f32 %v2304, %v2560
        %2562 = vmatprep.mubr.f32.mxu0 0.0
        %2563 = vmatmul.mubr.f32.gmra.mrb[0].mxu0 %v2178
        %v2564 = vpop.f32.mrb[0].mxu0
        %v2565 = vadd.f32 %v2300, %v2564
        %v2566 = vpop.f32.mrb[0].mxu0
        %v2567 = vadd.f32 %v2304, %v2566
        %2568 = vmatprep.mubr.f32.mxu0 0.0
        %2569 = vmatmul.mubr.f32.gmra.mrb[0].mxu0 %v2179
        %v2570 = vpop.f32.mrb[0].mxu0
        %v2571 = vadd.f32 %v2300, %v2570
        %v2572 = vpop.f32.mrb[0].mxu0
        %v2573 = vadd.f32 %v2304, %v2572
        %2574 = vmatprep.mubr.f32.mxu0 0.0
        %2575 = vmatmul.mubr.f32.gmra.mrb[0].mxu0 %v2180
        %v2576 = vpop.f32.mrb[0].mxu0
        %v2577 = vadd.f32 %v2300, %v2576
        %v2578 = vpop.f32.mrb[0].mxu0
        %v2579 = vadd.f32 %v2304, %v2578
        %2580 = vmatprep.mubr.f32.mxu0 0.0
        %2581 = vmatmul.mubr.f32.gmra.mrb[0].mxu0 %v2181
        %v2582 = vpop.f32.mrb[0].mxu0
        %v2583 = vadd.f32 %v2300, %v2582
        %v2584 = vpop.f32.mrb[0].mxu0
        %v2585 = vadd.f32 %v2304, %v2584
        %2586 = vmatprep.mubr.f32.mxu0 0.0
        %2587 = vmatmul.mubr.f32.gmra.mrb[0].mxu0 %v2182
        %v2588 = vpop.f32.mrb[0].mxu0
        %v2589 = vadd.f32 %v2300, %v2588
        %v2590 = vpop.f32.mrb[0].mxu0
        %v2591 = vadd.f32 %v2304, %v2590
        %2592 = vmatprep.mubr.f32.mxu0 0.0
        %2593 = vmatmul.mubr.f32.gmra.mrb[0].mxu0 %v2183
        %v2594 = vpop.f32.mrb[0].mxu0
        %v2595 = vadd.f32 %v2300, %v2594
        %v2596 = vpop.f32.mrb[0].mxu0
        %v2597 = vadd.f32 %v2304, %v2596
        %2598 = vmatprep.mubr.f32.mxu0 0.0
        %2599 = vmatmul.mubr.f32.gmra.mrb[0].mxu0 %v2184
        %v2600 = vpop.f32.mrb[0].mxu0
        %v2601 = vadd.f32 %v2300, %v2600
        %v2602 = vpop.f32.mrb[0].mxu0
        %v2603 = vadd.f32 %v2304, %v2602
        %2604 = vmatprep.mubr.f32.mxu0 0.0
        %2605 = vmatmul.mubr.f32.gmra.mrb[0].mxu0 %v2185
        %v2606 = vpop.f32.mrb[0].mxu0
        %v2607 = vadd.f32 %v2300, %v2606
        %v2608 = vpop.f32.mrb[0].mxu0
        %v2609 = vadd.f32 %v2304, %v2608
        %2610 = vmatprep.mubr.f32.mxu0 0.0
        %2611 = vmatmul.mubr.f32.gmra.mrb[0].mxu0 %v2186
        %v2612 = vpop.f32.mrb[0].mxu0
        %v2613 = vadd.f32 %v2300, %v2612
        %v2614 = vpop.f32.mrb[0].mxu0
        %v2615 = vadd.f32 %v2304, %v2614
        %2616 = vmatprep.mubr.f32.mxu0 0.0
        %2617 = vmatmul.mubr.f32.gmra.mrb[0].mxu0 %v2187
        %v2618 = vpop.f32.mrb[0].mxu0
        %v2619 = vadd.f32 %v2300, %v2618
        %v2620 = vpop.f32.mrb[0].mxu0
        %v2621 = vadd.f32 %v2304, %v2620
        %2622 = vmatprep.mubr.f32.mxu0 0.0
        %2623 = vmatmul.mubr.f32.gmra.mrb[0].mxu0 %v2188
        %v2624 = vpop.f32.mrb[0].mxu0
        %v2625 = vadd.f32 %v2300, %v2624
        %v2626 = vpop.f32.mrb[0].mxu0
        %v2627 = vadd.f32 %v2304, %v2626
        %2628 = vmatprep.mubr.f32.mxu0 0.0
        %2629 = vmatmul.mubr.f32.gmra.mrb[0].mxu0 %v2189
        %v2630 = vpop.f32.mrb[0].mxu0
        %v2631 = vadd.f32 %v2300, %v2630
        %v2632 = vpop.f32.mrb[0].mxu0
        %v2633 = vadd.f32 %v2304, %v2632
        %2634 = vmatprep.mubr.f32.mxu0 0.0
        %2635 = vmatmul.mubr.f32.gmra.mrb[0].mxu0 %v2190
        %v2636 = vpop.f32.mrb[0].mxu0
        %v2637 = vadd.f32 %v2300, %v2636
        %v2638 = vpop.f32.mrb[0].mxu0
        %v2639 = vadd.f32 %v2304, %v2638
        %2640 = vdwg.mxu0
        %2641 = vmatprep.subr.mxu0 %v2196
        %2642 = vmatpush1.msra.mxu0 %v2195
        %2643 = vmatprep.subr.mxu0 %v2202
        %2644 = vmatpush1.msra.mxu0 %v2201
        %2645 = vmatprep.subr.mxu0 %v2208
        %2646 = vmatpush1.msra.mxu0 %v2207
        %2647 = vmatprep.subr.mxu0 %v2214
        %2648 = vmatpush1.msra.mxu0 %v2213
        %2649 = vmatprep.subr.mxu0 %v2220
        %2650 = vmatpush1.msra.mxu0 %v2219
        %2651 = vmatprep.subr.mxu0 %v2226
        %2652 = vmatpush1.msra.mxu0 %v2225
        %2653 = vmatprep.subr.mxu0 %v2232
        %2654 = vmatpush1.msra.mxu0 %v2231
        %2655 = vmatprep.subr.mxu0 %v2238
        %2656 = vmatpush1.msra.mxu0 %v2237
        %2657 = vmatprep.subr.mxu0 %v2244
        %2658 = vmatpush1.msra.mxu0 %v2243
        %2659 = vmatprep.subr.mxu0 %v2250
        %2660 = vmatpush1.msra.mxu0 %v2249
        %2661 = vmatprep.subr.mxu0 %v2256
        %2662 = vmatpush1.msra.mxu0 %v2255
        %2663 = vmatprep.subr.mxu0 %v2262
        %2664 = vmatpush1.msra.mxu0 %v2261
        %2665 = vmatprep.subr.mxu0 %v2268
        %2666 = vmatpush1.msra.mxu0 %v2267
        %2667 = vmatprep.subr.mxu0 %v2274
        %2668 = vmatpush1.msra.mxu0 %v2273
        %2669 = vmatprep.subr.mxu0 %v2280
        %2670 = vmatpush1.msra.mxu0 %v2279
        %2671 = vmatprep.subr.mxu0 %v2286
        %2672 = vmatpush1.msra.mxu0 %v2285
        %2673 = vmatprep.subr.mxu0 0.0
        %2674 = vmatpush1.msra.mxu0 0.0
        %2675 = vmatprep.subr.mxu0 0.0
        %2676 = vmatpush1.msra.mxu0 0.0
        %2677 = vmatprep.subr.mxu0 0.0
        %2678 = vmatpush1.msra.mxu0 0.0
        %2679 = vmatprep.subr.mxu0 0.0
        %2680 = vmatpush1.msra.mxu0 0.0
        %2681 = vmatprep.subr.mxu0 0.0
        %2682 = vmatpush1.msra.mxu0 0.0
        %2683 = vmatprep.subr.mxu0 0.0
        %2684 = vmatpush1.msra.mxu0 0.0
        %2685 = vmatprep.subr.mxu0 0.0
        %2686 = vmatpush1.msra.mxu0 0.0
        %2687 = vmatprep.subr.mxu0 0.0
        %2688 = vmatpush1.msra.mxu0 0.0
        %2689 = vmatprep.subr.mxu0 0.0
        %2690 = vmatpush1.msra.mxu0 0.0
        %2691 = vmatprep.subr.mxu0 0.0
        %2692 = vmatpush1.msra.mxu0 0.0
        %2693 = vmatprep.subr.mxu0 0.0
        %2694 = vmatpush1.msra.mxu0 0.0
        %2695 = vmatprep.subr.mxu0 0.0
        %2696 = vmatpush1.msra.mxu0 0.0
        %2697 = vmatprep.subr.mxu0 0.0
        %2698 = vmatpush1.msra.mxu0 0.0
        %2699 = vmatprep.subr.mxu0 0.0
        %2700 = vmatpush1.msra.mxu0 0.0
        %2701 = vmatprep.subr.mxu0 0.0
        %2702 = vmatpush1.msra.mxu0 0.0
        %2703 = vmatprep.subr.mxu0 0.0
        %2704 = vmatpush1.msra.mxu0 0.0
        %2705 = vmatprep.mubr.f32.mxu0 0.0
        %2706 = vmatmul.mubr.f32.gmra.mrb[0].mxu0 %v2175
        %v2707 = vpop.f32.mrb[0].mxu0
        %v2708 = vadd.f32 %v2308, %v2707
        %v2709 = vpop.f32.mrb[0].mxu0
        %v2710 = vadd.f32 %v2312, %v2709
        %2711 = vmatprep.mubr.f32.mxu0 0.0
        %2712 = vmatmul.mubr.f32.gmra.mrb[0].mxu0 %v2176
        %v2713 = vpop.f32.mrb[0].mxu0
        %v2714 = vadd.f32 %v2308, %v2713
        %v2715 = vpop.f32.mrb[0].mxu0
        %v2716 = vadd.f32 %v2312, %v2715
        %2717 = vmatprep.mubr.f32.mxu0 0.0
        %2718 = vmatmul.mubr.f32.gmra.mrb[0].mxu0 %v2177
        %v2719 = vpop.f32.mrb[0].mxu0
        %v2720 = vadd.f32 %v2308, %v2719
        %v2721 = vpop.f32.mrb[0].mxu0
        %v2722 = vadd.f32 %v2312, %v2721
        %2723 = vmatprep.mubr.f32.mxu0 0.0
        %2724 = vmatmul.mubr.f32.gmra.mrb[0].mxu0 %v2178
        %v2725 = vpop.f32.mrb[0].mxu0
        %v2726 = vadd.f32 %v2308, %v2725
        %v2727 = vpop.f32.mrb[0].mxu0
        %v2728 = vadd.f32 %v2312, %v2727
        %2729 = vmatprep.mubr.f32.mxu0 0.0
        %2730 = vmatmul.mubr.f32.gmra.mrb[0].mxu0 %v2179
        %v2731 = vpop.f32.mrb[0].mxu0
        %v2732 = vadd.f32 %v2308, %v2731
        %v2733 = vpop.f32.mrb[0].mxu0
        %v2734 = vadd.f32 %v2312, %v2733
        %2735 = vmatprep.mubr.f32.mxu0 0.0
        %2736 = vmatmul.mubr.f32.gmra.mrb[0].mxu0 %v2180
        %v2737 = vpop.f32.mrb[0].mxu0
        %v2738 = vadd.f32 %v2308, %v2737
        %v2739 = vpop.f32.mrb[0].mxu0
        %v2740 = vadd.f32 %v2312, %v2739
        %2741 = vmatprep.mubr.f32.mxu0 0.0
        %2742 = vmatmul.mubr.f32.gmra.mrb[0].mxu0 %v2181
        %v2743 = vpop.f32.mrb[0].mxu0
        %v2744 = vadd.f32 %v2308, %v2743
        %v2745 = vpop.f32.mrb[0].mxu0
        %v2746 = vadd.f32 %v2312, %v2745
        %2747 = vmatprep.mubr.f32.mxu0 0.0
        %2748 = vmatmul.mubr.f32.gmra.mrb[0].mxu0 %v2182
        %v2749 = vpop.f32.mrb[0].mxu0
        %v2750 = vadd.f32 %v2308, %v2749
        %v2751 = vpop.f32.mrb[0].mxu0
        %v2752 = vadd.f32 %v2312, %v2751
        %2753 = vmatprep.mubr.f32.mxu0 0.0
        %2754 = vmatmul.mubr.f32.gmra.mrb[0].mxu0 %v2183
        %v2755 = vpop.f32.mrb[0].mxu0
        %v2756 = vadd.f32 %v2308, %v2755
        %v2757 = vpop.f32.mrb[0].mxu0
        %v2758 = vadd.f32 %v2312, %v2757
        %2759 = vmatprep.mubr.f32.mxu0 0.0
        %2760 = vmatmul.mubr.f32.gmra.mrb[0].mxu0 %v2184
        %v2761 = vpop.f32.mrb[0].mxu0
        %v2762 = vadd.f32 %v2308, %v2761
        %v2763 = vpop.f32.mrb[0].mxu0
        %v2764 = vadd.f32 %v2312, %v2763
        %2765 = vmatprep.mubr.f32.mxu0 0.0
        %2766 = vmatmul.mubr.f32.gmra.mrb[0].mxu0 %v2185
        %v2767 = vpop.f32.mrb[0].mxu0
        %v2768 = vadd.f32 %v2308, %v2767
        %v2769 = vpop.f32.mrb[0].mxu0
        %v2770 = vadd.f32 %v2312, %v2769
        %2771 = vmatprep.mubr.f32.mxu0 0.0
        %2772 = vmatmul.mubr.f32.gmra.mrb[0].mxu0 %v2186
        %v2773 = vpop.f32.mrb[0].mxu0
        %v2774 = vadd.f32 %v2308, %v2773
        %v2775 = vpop.f32.mrb[0].mxu0
        %v2776 = vadd.f32 %v2312, %v2775
        %2777 = vmatprep.mubr.f32.mxu0 0.0
        %2778 = vmatmul.mubr.f32.gmra.mrb[0].mxu0 %v2187
        %v2779 = vpop.f32.mrb[0].mxu0
        %v2780 = vadd.f32 %v2308, %v2779
        %v2781 = vpop.f32.mrb[0].mxu0
        %v2782 = vadd.f32 %v2312, %v2781
        %2783 = vmatprep.mubr.f32.mxu0 0.0
        %2784 = vmatmul.mubr.f32.gmra.mrb[0].mxu0 %v2188
        %v2785 = vpop.f32.mrb[0].mxu0
        %v2786 = vadd.f32 %v2308, %v2785
        %v2787 = vpop.f32.mrb[0].mxu0
        %v2788 = vadd.f32 %v2312, %v2787
        %2789 = vmatprep.mubr.f32.mxu0 0.0
        %2790 = vmatmul.mubr.f32.gmra.mrb[0].mxu0 %v2189
        %v2791 = vpop.f32.mrb[0].mxu0
        %v2792 = vadd.f32 %v2308, %v2791
        %v2793 = vpop.f32.mrb[0].mxu0
        %v2794 = vadd.f32 %v2312, %v2793
        %2795 = vmatprep.mubr.f32.mxu0 0.0
        %2796 = vmatmul.mubr.f32.gmra.mrb[0].mxu0 %v2190
        %v2797 = vpop.f32.mrb[0].mxu0
        %v2798 = vadd.f32 %v2308, %v2797
        %v2799 = vpop.f32.mrb[0].mxu0
        %v2800 = vadd.f32 %v2312, %v2799
        %2801 = vdwg.mxu0
        %v2802 = vxor.u32 %v2386, 2147483648
        %v2803 = vxor.u32 %v2388, 2147483648
        %v2804 = vxor.u32 %v2547, 2147483648
        %v2805 = vxor.u32 %v2549, 2147483648
        %v2806 = vxor.u32 %v2708, 2147483648
        %v2807 = vxor.u32 %v2710, 2147483648
        %v2808 = vxor.u32 %v2392, 2147483648
        %v2809 = vxor.u32 %v2394, 2147483648
        %v2810 = vxor.u32 %v2553, 2147483648
        %v2811 = vxor.u32 %v2555, 2147483648
        %v2812 = vxor.u32 %v2714, 2147483648
        %v2813 = vxor.u32 %v2716, 2147483648
        %v2814 = vxor.u32 %v2398, 2147483648
        %v2815 = vxor.u32 %v2400, 2147483648
        %v2816 = vxor.u32 %v2559, 2147483648
        %v2817 = vxor.u32 %v2561, 2147483648
        %v2818 = vxor.u32 %v2720, 2147483648
        %v2819 = vxor.u32 %v2722, 2147483648
        %v2820 = vxor.u32 %v2404, 2147483648
        %v2821 = vxor.u32 %v2406, 2147483648
        %v2822 = vxor.u32 %v2565, 2147483648
        %v2823 = vxor.u32 %v2567, 2147483648
        %v2824 = vxor.u32 %v2726, 2147483648
        %v2825 = vxor.u32 %v2728, 2147483648
        %v2826 = vxor.u32 %v2410, 2147483648
        %v2827 = vxor.u32 %v2412, 2147483648
        %v2828 = vxor.u32 %v2571, 2147483648
        %v2829 = vxor.u32 %v2573, 2147483648
        %v2830 = vxor.u32 %v2732, 2147483648
        %v2831 = vxor.u32 %v2734, 2147483648
        %v2832 = vxor.u32 %v2416, 2147483648
        %v2833 = vxor.u32 %v2418, 2147483648
        %v2834 = vxor.u32 %v2577, 2147483648
        %v2835 = vxor.u32 %v2579, 2147483648
        %v2836 = vxor.u32 %v2738, 2147483648
        %v2837 = vxor.u32 %v2740, 2147483648
        %v2838 = vxor.u32 %v2422, 2147483648
        %v2839 = vxor.u32 %v2424, 2147483648
        %v2840 = vxor.u32 %v2583, 2147483648
        %v2841 = vxor.u32 %v2585, 2147483648
        %v2842 = vxor.u32 %v2744, 2147483648
        %v2843 = vxor.u32 %v2746, 2147483648
        %v2844 = vxor.u32 %v2428, 2147483648
        %v2845 = vxor.u32 %v2430, 2147483648
        %v2846 = vxor.u32 %v2589, 2147483648
        %v2847 = vxor.u32 %v2591, 2147483648
        %v2848 = vxor.u32 %v2750, 2147483648
        %v2849 = vxor.u32 %v2752, 2147483648
        %v2850 = vxor.u32 %v2434, 2147483648
        %v2851 = vxor.u32 %v2436, 2147483648
        %v2852 = vxor.u32 %v2595, 2147483648
        %v2853 = vxor.u32 %v2597, 2147483648
        %v2854 = vxor.u32 %v2756, 2147483648
        %v2855 = vxor.u32 %v2758, 2147483648
        %v2856 = vxor.u32 %v2440, 2147483648
        %v2857 = vxor.u32 %v2442, 2147483648
        %v2858 = vxor.u32 %v2601, 2147483648
        %v2859 = vxor.u32 %v2603, 2147483648
        %v2860 = vxor.u32 %v2762, 2147483648
        %v2861 = vxor.u32 %v2764, 2147483648
        %v2862 = vxor.u32 %v2446, 2147483648
        %v2863 = vxor.u32 %v2448, 2147483648
        %v2864 = vxor.u32 %v2607, 2147483648
        %v2865 = vxor.u32 %v2609, 2147483648
        %v2866 = vxor.u32 %v2768, 2147483648
        %v2867 = vxor.u32 %v2770, 2147483648
        %v2868 = vxor.u32 %v2452, 2147483648
        %v2869 = vxor.u32 %v2454, 2147483648
        %v2870 = vxor.u32 %v2613, 2147483648
        %v2871 = vxor.u32 %v2615, 2147483648
        %v2872 = vxor.u32 %v2774, 2147483648
        %v2873 = vxor.u32 %v2776, 2147483648
        %v2874 = vxor.u32 %v2458, 2147483648
        %v2875 = vxor.u32 %v2460, 2147483648
        %v2876 = vxor.u32 %v2619, 2147483648
        %v2877 = vxor.u32 %v2621, 2147483648
        %v2878 = vxor.u32 %v2780, 2147483648
        %v2879 = vxor.u32 %v2782, 2147483648
        %v2880 = vxor.u32 %v2464, 2147483648
        %v2881 = vxor.u32 %v2466, 2147483648
        %v2882 = vxor.u32 %v2625, 2147483648
        %v2883 = vxor.u32 %v2627, 2147483648
        %v2884 = vxor.u32 %v2786, 2147483648
        %v2885 = vxor.u32 %v2788, 2147483648
        %v2886 = vxor.u32 %v2470, 2147483648
        %v2887 = vxor.u32 %v2472, 2147483648
        %v2888 = vxor.u32 %v2631, 2147483648
        %v2889 = vxor.u32 %v2633, 2147483648
        %v2890 = vxor.u32 %v2792, 2147483648
        %v2891 = vxor.u32 %v2794, 2147483648
        %v2892 = vxor.u32 %v2476, 2147483648
        %v2893 = vxor.u32 %v2478, 2147483648
        %v2894 = vxor.u32 %v2637, 2147483648
        %v2895 = vxor.u32 %v2639, 2147483648
        %v2896 = vxor.u32 %v2798, 2147483648
        %v2897 = vxor.u32 %v2800, 2147483648
        %v2898 = vmul.f32 %v2802, 1.442695
        %v2899 = vpow.pop %v2898
        %v2900 = vmul.f32 %v2803, 1.442695
        %v2901 = vpow.pop %v2900
        %v2902 = vmul.f32 %v2804, 1.442695
        %v2903 = vpow.pop %v2902
        %v2904 = vmul.f32 %v2805, 1.442695
        %v2905 = vpow.pop %v2904
        %v2906 = vmul.f32 %v2806, 1.442695
        %v2907 = vpow.pop %v2906
        %v2908 = vmul.f32 %v2807, 1.442695
        %v2909 = vpow.pop %v2908
        %v2910 = vmul.f32 %v2808, 1.442695
        %v2911 = vpow.pop %v2910
        %v2912 = vmul.f32 %v2809, 1.442695
        %v2913 = vpow.pop %v2912
        %v2914 = vmul.f32 %v2810, 1.442695
        %v2915 = vpow.pop %v2914
        %v2916 = vmul.f32 %v2811, 1.442695
        %v2917 = vpow.pop %v2916
        %v2918 = vmul.f32 %v2812, 1.442695
        %v2919 = vpow.pop %v2918
        %v2920 = vmul.f32 %v2813, 1.442695
        %v2921 = vpow.pop %v2920
        %v2922 = vmul.f32 %v2814, 1.442695
        %v2923 = vpow.pop %v2922
        %v2924 = vmul.f32 %v2815, 1.442695
        %v2925 = vpow.pop %v2924
        %v2926 = vmul.f32 %v2816, 1.442695
        %v2927 = vpow.pop %v2926
        %v2928 = vmul.f32 %v2817, 1.442695
        %v2929 = vpow.pop %v2928
        %v2930 = vmul.f32 %v2818, 1.442695
        %v2931 = vpow.pop %v2930
        %v2932 = vmul.f32 %v2819, 1.442695
        %v2933 = vpow.pop %v2932
        %v2934 = vmul.f32 %v2820, 1.442695
        %v2935 = vpow.pop %v2934
        %v2936 = vmul.f32 %v2821, 1.442695
        %v2937 = vpow.pop %v2936
        %v2938 = vmul.f32 %v2822, 1.442695
        %v2939 = vpow.pop %v2938
        %v2940 = vmul.f32 %v2823, 1.442695
        %v2941 = vpow.pop %v2940
        %v2942 = vmul.f32 %v2824, 1.442695
        %v2943 = vpow.pop %v2942
        %v2944 = vmul.f32 %v2825, 1.442695
        %v2945 = vpow.pop %v2944
        %v2946 = vmul.f32 %v2826, 1.442695
        %v2947 = vpow.pop %v2946
        %v2948 = vmul.f32 %v2827, 1.442695
        %v2949 = vpow.pop %v2948
        %v2950 = vmul.f32 %v2828, 1.442695
        %v2951 = vpow.pop %v2950
        %v2952 = vmul.f32 %v2829, 1.442695
        %v2953 = vpow.pop %v2952
        %v2954 = vmul.f32 %v2830, 1.442695
        %v2955 = vpow.pop %v2954
        %v2956 = vmul.f32 %v2831, 1.442695
        %v2957 = vpow.pop %v2956
        %v2958 = vmul.f32 %v2832, 1.442695
        %v2959 = vpow.pop %v2958
        %v2960 = vmul.f32 %v2833, 1.442695
        %v2961 = vpow.pop %v2960
        %v2962 = vmul.f32 %v2834, 1.442695
        %v2963 = vpow.pop %v2962
        %v2964 = vmul.f32 %v2835, 1.442695
        %v2965 = vpow.pop %v2964
        %v2966 = vmul.f32 %v2836, 1.442695
        %v2967 = vpow.pop %v2966
        %v2968 = vmul.f32 %v2837, 1.442695
        %v2969 = vpow.pop %v2968
        %v2970 = vmul.f32 %v2838, 1.442695
        %v2971 = vpow.pop %v2970
        %v2972 = vmul.f32 %v2839, 1.442695
        %v2973 = vpow.pop %v2972
        %v2974 = vmul.f32 %v2840, 1.442695
        %v2975 = vpow.pop %v2974
        %v2976 = vmul.f32 %v2841, 1.442695
        %v2977 = vpow.pop %v2976
        %v2978 = vmul.f32 %v2842, 1.442695
        %v2979 = vpow.pop %v2978
        %v2980 = vmul.f32 %v2843, 1.442695
        %v2981 = vpow.pop %v2980
        %v2982 = vmul.f32 %v2844, 1.442695
        %v2983 = vpow.pop %v2982
        %v2984 = vmul.f32 %v2845, 1.442695
        %v2985 = vpow.pop %v2984
        %v2986 = vmul.f32 %v2846, 1.442695
        %v2987 = vpow.pop %v2986
        %v2988 = vmul.f32 %v2847, 1.442695
        %v2989 = vpow.pop %v2988
        %v2990 = vmul.f32 %v2848, 1.442695
        %v2991 = vpow.pop %v2990
        %v2992 = vmul.f32 %v2849, 1.442695
        %v2993 = vpow.pop %v2992
        %v2994 = vmul.f32 %v2850, 1.442695
        %v2995 = vpow.pop %v2994
        %v2996 = vmul.f32 %v2851, 1.442695
        %v2997 = vpow.pop %v2996
        %v2998 = vmul.f32 %v2852, 1.442695
        %v2999 = vpow.pop %v2998
        %v3000 = vmul.f32 %v2853, 1.442695
        %v3001 = vpow.pop %v3000
        %v3002 = vmul.f32 %v2854, 1.442695
        %v3003 = vpow.pop %v3002
        %v3004 = vmul.f32 %v2855, 1.442695
        %v3005 = vpow.pop %v3004
        %v3006 = vmul.f32 %v2856, 1.442695
        %v3007 = vpow.pop %v3006
        %v3008 = vmul.f32 %v2857, 1.442695
        %v3009 = vpow.pop %v3008
        %v3010 = vmul.f32 %v2858, 1.442695
        %v3011 = vpow.pop %v3010
        %v3012 = vmul.f32 %v2859, 1.442695
        %v3013 = vpow.pop %v3012
        %v3014 = vmul.f32 %v2860, 1.442695
        %v3015 = vpow.pop %v3014
        %v3016 = vmul.f32 %v2861, 1.442695
        %v3017 = vpow.pop %v3016
        %v3018 = vmul.f32 %v2862, 1.442695
        %v3019 = vpow.pop %v3018
        %v3020 = vmul.f32 %v2863, 1.442695
        %v3021 = vpow.pop %v3020
        %v3022 = vmul.f32 %v2864, 1.442695
        %v3023 = vpow.pop %v3022
        %v3024 = vmul.f32 %v2865, 1.442695
        %v3025 = vpow.pop %v3024
        %v3026 = vmul.f32 %v2866, 1.442695
        %v3027 = vpow.pop %v3026
        %v3028 = vmul.f32 %v2867, 1.442695
        %v3029 = vpow.pop %v3028
        %v3030 = vmul.f32 %v2868, 1.442695
        %v3031 = vpow.pop %v3030
        %v3032 = vmul.f32 %v2869, 1.442695
        %v3033 = vpow.pop %v3032
        %v3034 = vmul.f32 %v2870, 1.442695
        %v3035 = vpow.pop %v3034
        %v3036 = vmul.f32 %v2871, 1.442695
        %v3037 = vpow.pop %v3036
        %v3038 = vmul.f32 %v2872, 1.442695
        %v3039 = vpow.pop %v3038
        %v3040 = vmul.f32 %v2873, 1.442695
        %v3041 = vpow.pop %v3040
        %v3042 = vmul.f32 %v2874, 1.442695
        %v3043 = vpow.pop %v3042
        %v3044 = vmul.f32 %v2875, 1.442695
        %v3045 = vpow.pop %v3044
        %v3046 = vmul.f32 %v2876, 1.442695
        %v3047 = vpow.pop %v3046
        %v3048 = vmul.f32 %v2877, 1.442695
        %v3049 = vpow.pop %v3048
        %v3050 = vmul.f32 %v2878, 1.442695
        %v3051 = vpow.pop %v3050
        %v3052 = vmul.f32 %v2879, 1.442695
        %v3053 = vpow.pop %v3052
        %v3054 = vmul.f32 %v2880, 1.442695
        %v3055 = vpow.pop %v3054
        %v3056 = vmul.f32 %v2881, 1.442695
        %v3057 = vpow.pop %v3056
        %v3058 = vmul.f32 %v2882, 1.442695
        %v3059 = vpow.pop %v3058
        %v3060 = vmul.f32 %v2883, 1.442695
        %v3061 = vpow.pop %v3060
        %v3062 = vmul.f32 %v2884, 1.442695
        %v3063 = vpow.pop %v3062
        %v3064 = vmul.f32 %v2885, 1.442695
        %v3065 = vpow.pop %v3064
        %v3066 = vmul.f32 %v2886, 1.442695
        %v3067 = vpow.pop %v3066
        %v3068 = vmul.f32 %v2887, 1.442695
        %v3069 = vpow.pop %v3068
        %v3070 = vmul.f32 %v2888, 1.442695
        %v3071 = vpow.pop %v3070
        %v3072 = vmul.f32 %v2889, 1.442695
        %v3073 = vpow.pop %v3072
        %v3074 = vmul.f32 %v2890, 1.442695
        %v3075 = vpow.pop %v3074
        %v3076 = vmul.f32 %v2891, 1.442695
        %v3077 = vpow.pop %v3076
        %v3078 = vmul.f32 %v2892, 1.442695
        %v3079 = vpow.pop %v3078
        %v3080 = vmul.f32 %v2893, 1.442695
        %v3081 = vpow.pop %v3080
        %v3082 = vmul.f32 %v2894, 1.442695
        %v3083 = vpow.pop %v3082
        %v3084 = vmul.f32 %v2895, 1.442695
        %v3085 = vpow.pop %v3084
        %v3086 = vmul.f32 %v2896, 1.442695
        %v3087 = vpow.pop %v3086
        %v3088 = vmul.f32 %v2897, 1.442695
        %v3089 = vpow.pop %v3088
        %v3090 = vadd.f32 %v2899, 1.0
        %v3091 = vadd.f32 %v2901, 1.0
        %v3092 = vadd.f32 %v2903, 1.0
        %v3093 = vadd.f32 %v2905, 1.0
        %v3094 = vadd.f32 %v2907, 1.0
        %v3095 = vadd.f32 %v2909, 1.0
        %v3096 = vadd.f32 %v2911, 1.0
        %v3097 = vadd.f32 %v2913, 1.0
        %v3098 = vadd.f32 %v2915, 1.0
        %v3099 = vadd.f32 %v2917, 1.0
        %v3100 = vadd.f32 %v2919, 1.0
        %v3101 = vadd.f32 %v2921, 1.0
        %v3102 = vadd.f32 %v2923, 1.0
        %v3103 = vadd.f32 %v2925, 1.0
        %v3104 = vadd.f32 %v2927, 1.0
        %v3105 = vadd.f32 %v2929, 1.0
        %v3106 = vadd.f32 %v2931, 1.0
        %v3107 = vadd.f32 %v2933, 1.0
        %v3108 = vadd.f32 %v2935, 1.0
        %v3109 = vadd.f32 %v2937, 1.0
        %v3110 = vadd.f32 %v2939, 1.0
        %v3111 = vadd.f32 %v2941, 1.0
        %v3112 = vadd.f32 %v2943, 1.0
        %v3113 = vadd.f32 %v2945, 1.0
        %v3114 = vadd.f32 %v2947, 1.0
        %v3115 = vadd.f32 %v2949, 1.0
        %v3116 = vadd.f32 %v2951, 1.0
        %v3117 = vadd.f32 %v2953, 1.0
        %v3118 = vadd.f32 %v2955, 1.0
        %v3119 = vadd.f32 %v2957, 1.0
        %v3120 = vadd.f32 %v2959, 1.0
        %v3121 = vadd.f32 %v2961, 1.0
        %v3122 = vadd.f32 %v2963, 1.0
        %v3123 = vadd.f32 %v2965, 1.0
        %v3124 = vadd.f32 %v2967, 1.0
        %v3125 = vadd.f32 %v2969, 1.0
        %v3126 = vadd.f32 %v2971, 1.0
        %v3127 = vadd.f32 %v2973, 1.0
        %v3128 = vadd.f32 %v2975, 1.0
        %v3129 = vadd.f32 %v2977, 1.0
        %v3130 = vadd.f32 %v2979, 1.0
        %v3131 = vadd.f32 %v2981, 1.0
        %v3132 = vadd.f32 %v2983, 1.0
        %v3133 = vadd.f32 %v2985, 1.0
        %v3134 = vadd.f32 %v2987, 1.0
        %v3135 = vadd.f32 %v2989, 1.0
        %v3136 = vadd.f32 %v2991, 1.0
        %v3137 = vadd.f32 %v2993, 1.0
        %v3138 = vadd.f32 %v2995, 1.0
        %v3139 = vadd.f32 %v2997, 1.0
        %v3140 = vadd.f32 %v2999, 1.0
        %v3141 = vadd.f32 %v3001, 1.0
        %v3142 = vadd.f32 %v3003, 1.0
        %v3143 = vadd.f32 %v3005, 1.0
        %v3144 = vadd.f32 %v3007, 1.0
        %v3145 = vadd.f32 %v3009, 1.0
        %v3146 = vadd.f32 %v3011, 1.0
        %v3147 = vadd.f32 %v3013, 1.0
        %v3148 = vadd.f32 %v3015, 1.0
        %v3149 = vadd.f32 %v3017, 1.0
        %v3150 = vadd.f32 %v3019, 1.0
        %v3151 = vadd.f32 %v3021, 1.0
        %v3152 = vadd.f32 %v3023, 1.0
        %v3153 = vadd.f32 %v3025, 1.0
        %v3154 = vadd.f32 %v3027, 1.0
        %v3155 = vadd.f32 %v3029, 1.0
        %v3156 = vadd.f32 %v3031, 1.0
        %v3157 = vadd.f32 %v3033, 1.0
        %v3158 = vadd.f32 %v3035, 1.0
        %v3159 = vadd.f32 %v3037, 1.0
        %v3160 = vadd.f32 %v3039, 1.0
        %v3161 = vadd.f32 %v3041, 1.0
        %v3162 = vadd.f32 %v3043, 1.0
        %v3163 = vadd.f32 %v3045, 1.0
        %v3164 = vadd.f32 %v3047, 1.0
        %v3165 = vadd.f32 %v3049, 1.0
        %v3166 = vadd.f32 %v3051, 1.0
        %v3167 = vadd.f32 %v3053, 1.0
        %v3168 = vadd.f32 %v3055, 1.0
        %v3169 = vadd.f32 %v3057, 1.0
        %v3170 = vadd.f32 %v3059, 1.0
        %v3171 = vadd.f32 %v3061, 1.0
        %v3172 = vadd.f32 %v3063, 1.0
        %v3173 = vadd.f32 %v3065, 1.0
        %v3174 = vadd.f32 %v3067, 1.0
        %v3175 = vadd.f32 %v3069, 1.0
        %v3176 = vadd.f32 %v3071, 1.0
        %v3177 = vadd.f32 %v3073, 1.0
        %v3178 = vadd.f32 %v3075, 1.0
        %v3179 = vadd.f32 %v3077, 1.0
        %v3180 = vadd.f32 %v3079, 1.0
        %v3181 = vadd.f32 %v3081, 1.0
        %v3182 = vadd.f32 %v3083, 1.0
        %v3183 = vadd.f32 %v3085, 1.0
        %v3184 = vadd.f32 %v3087, 1.0
        %v3185 = vadd.f32 %v3089, 1.0
        %v3186 = vrcp.pop %v3090
        %v3187 = vmul.f32 1.0, %v3186
        %v3188 = vrcp.pop %v3091
        %v3189 = vmul.f32 1.0, %v3188
        %v3190 = vrcp.pop %v3092
        %v3191 = vmul.f32 1.0, %v3190
        %v3192 = vrcp.pop %v3093
        %v3193 = vmul.f32 1.0, %v3192
        %v3194 = vrcp.pop %v3094
        %v3195 = vmul.f32 1.0, %v3194
        %v3196 = vrcp.pop %v3095
        %v3197 = vmul.f32 1.0, %v3196
        %v3198 = vrcp.pop %v3096
        %v3199 = vmul.f32 1.0, %v3198
        %v3200 = vrcp.pop %v3097
        %v3201 = vmul.f32 1.0, %v3200
        %v3202 = vrcp.pop %v3098
        %v3203 = vmul.f32 1.0, %v3202
        %v3204 = vrcp.pop %v3099
        %v3205 = vmul.f32 1.0, %v3204
        %v3206 = vrcp.pop %v3100
        %v3207 = vmul.f32 1.0, %v3206
        %v3208 = vrcp.pop %v3101
        %v3209 = vmul.f32 1.0, %v3208
        %v3210 = vrcp.pop %v3102
        %v3211 = vmul.f32 1.0, %v3210
        %v3212 = vrcp.pop %v3103
        %v3213 = vmul.f32 1.0, %v3212
        %v3214 = vrcp.pop %v3104
        %v3215 = vmul.f32 1.0, %v3214
        %v3216 = vrcp.pop %v3105
        %v3217 = vmul.f32 1.0, %v3216
        %v3218 = vrcp.pop %v3106
        %v3219 = vmul.f32 1.0, %v3218
        %v3220 = vrcp.pop %v3107
        %v3221 = vmul.f32 1.0, %v3220
        %v3222 = vrcp.pop %v3108
        %v3223 = vmul.f32 1.0, %v3222
        %v3224 = vrcp.pop %v3109
        %v3225 = vmul.f32 1.0, %v3224
        %v3226 = vrcp.pop %v3110
        %v3227 = vmul.f32 1.0, %v3226
        %v3228 = vrcp.pop %v3111
        %v3229 = vmul.f32 1.0, %v3228
        %v3230 = vrcp.pop %v3112
        %v3231 = vmul.f32 1.0, %v3230
        %v3232 = vrcp.pop %v3113
        %v3233 = vmul.f32 1.0, %v3232
        %v3234 = vrcp.pop %v3114
        %v3235 = vmul.f32 1.0, %v3234
        %v3236 = vrcp.pop %v3115
        %v3237 = vmul.f32 1.0, %v3236
        %v3238 = vrcp.pop %v3116
        %v3239 = vmul.f32 1.0, %v3238
        %v3240 = vrcp.pop %v3117
        %v3241 = vmul.f32 1.0, %v3240
        %v3242 = vrcp.pop %v3118
        %v3243 = vmul.f32 1.0, %v3242
        %v3244 = vrcp.pop %v3119
        %v3245 = vmul.f32 1.0, %v3244
        %v3246 = vrcp.pop %v3120
        %v3247 = vmul.f32 1.0, %v3246
        %v3248 = vrcp.pop %v3121
        %v3249 = vmul.f32 1.0, %v3248
        %v3250 = vrcp.pop %v3122
        %v3251 = vmul.f32 1.0, %v3250
        %v3252 = vrcp.pop %v3123
        %v3253 = vmul.f32 1.0, %v3252
        %v3254 = vrcp.pop %v3124
        %v3255 = vmul.f32 1.0, %v3254
        %v3256 = vrcp.pop %v3125
        %v3257 = vmul.f32 1.0, %v3256
        %v3258 = vrcp.pop %v3126
        %v3259 = vmul.f32 1.0, %v3258
        %v3260 = vrcp.pop %v3127
        %v3261 = vmul.f32 1.0, %v3260
        %v3262 = vrcp.pop %v3128
        %v3263 = vmul.f32 1.0, %v3262
        %v3264 = vrcp.pop %v3129
        %v3265 = vmul.f32 1.0, %v3264
        %v3266 = vrcp.pop %v3130
        %v3267 = vmul.f32 1.0, %v3266
        %v3268 = vrcp.pop %v3131
        %v3269 = vmul.f32 1.0, %v3268
        %v3270 = vrcp.pop %v3132
        %v3271 = vmul.f32 1.0, %v3270
        %v3272 = vrcp.pop %v3133
        %v3273 = vmul.f32 1.0, %v3272
        %v3274 = vrcp.pop %v3134
        %v3275 = vmul.f32 1.0, %v3274
        %v3276 = vrcp.pop %v3135
        %v3277 = vmul.f32 1.0, %v3276
        %v3278 = vrcp.pop %v3136
        %v3279 = vmul.f32 1.0, %v3278
        %v3280 = vrcp.pop %v3137
        %v3281 = vmul.f32 1.0, %v3280
        %v3282 = vrcp.pop %v3138
        %v3283 = vmul.f32 1.0, %v3282
        %v3284 = vrcp.pop %v3139
        %v3285 = vmul.f32 1.0, %v3284
        %v3286 = vrcp.pop %v3140
        %v3287 = vmul.f32 1.0, %v3286
        %v3288 = vrcp.pop %v3141
        %v3289 = vmul.f32 1.0, %v3288
        %v3290 = vrcp.pop %v3142
        %v3291 = vmul.f32 1.0, %v3290
        %v3292 = vrcp.pop %v3143
        %v3293 = vmul.f32 1.0, %v3292
        %v3294 = vrcp.pop %v3144
        %v3295 = vmul.f32 1.0, %v3294
        %v3296 = vrcp.pop %v3145
        %v3297 = vmul.f32 1.0, %v3296
        %v3298 = vrcp.pop %v3146
        %v3299 = vmul.f32 1.0, %v3298
        %v3300 = vrcp.pop %v3147
        %v3301 = vmul.f32 1.0, %v3300
        %v3302 = vrcp.pop %v3148
        %v3303 = vmul.f32 1.0, %v3302
        %v3304 = vrcp.pop %v3149
        %v3305 = vmul.f32 1.0, %v3304
        %v3306 = vrcp.pop %v3150
        %v3307 = vmul.f32 1.0, %v3306
        %v3308 = vrcp.pop %v3151
        %v3309 = vmul.f32 1.0, %v3308
        %v3310 = vrcp.pop %v3152
        %v3311 = vmul.f32 1.0, %v3310
        %v3312 = vrcp.pop %v3153
        %v3313 = vmul.f32 1.0, %v3312
        %v3314 = vrcp.pop %v3154
        %v3315 = vmul.f32 1.0, %v3314
        %v3316 = vrcp.pop %v3155
        %v3317 = vmul.f32 1.0, %v3316
        %v3318 = vrcp.pop %v3156
        %v3319 = vmul.f32 1.0, %v3318
        %v3320 = vrcp.pop %v3157
        %v3321 = vmul.f32 1.0, %v3320
        %v3322 = vrcp.pop %v3158
        %v3323 = vmul.f32 1.0, %v3322
        %v3324 = vrcp.pop %v3159
        %v3325 = vmul.f32 1.0, %v3324
        %v3326 = vrcp.pop %v3160
        %v3327 = vmul.f32 1.0, %v3326
        %v3328 = vrcp.pop %v3161
        %v3329 = vmul.f32 1.0, %v3328
        %v3330 = vrcp.pop %v3162
        %v3331 = vmul.f32 1.0, %v3330
        %v3332 = vrcp.pop %v3163
        %v3333 = vmul.f32 1.0, %v3332
        %v3334 = vrcp.pop %v3164
        %v3335 = vmul.f32 1.0, %v3334
        %v3336 = vrcp.pop %v3165
        %v3337 = vmul.f32 1.0, %v3336
        %v3338 = vrcp.pop %v3166
        %v3339 = vmul.f32 1.0, %v3338
        %v3340 = vrcp.pop %v3167
        %v3341 = vmul.f32 1.0, %v3340
        %v3342 = vrcp.pop %v3168
        %v3343 = vmul.f32 1.0, %v3342
        %v3344 = vrcp.pop %v3169
        %v3345 = vmul.f32 1.0, %v3344
        %v3346 = vrcp.pop %v3170
        %v3347 = vmul.f32 1.0, %v3346
        %v3348 = vrcp.pop %v3171
        %v3349 = vmul.f32 1.0, %v3348
        %v3350 = vrcp.pop %v3172
        %v3351 = vmul.f32 1.0, %v3350
        %v3352 = vrcp.pop %v3173
        %v3353 = vmul.f32 1.0, %v3352
        %v3354 = vrcp.pop %v3174
        %v3355 = vmul.f32 1.0, %v3354
        %v3356 = vrcp.pop %v3175
        %v3357 = vmul.f32 1.0, %v3356
        %v3358 = vrcp.pop %v3176
        %v3359 = vmul.f32 1.0, %v3358
        %v3360 = vrcp.pop %v3177
        %v3361 = vmul.f32 1.0, %v3360
        %v3362 = vrcp.pop %v3178
        %v3363 = vmul.f32 1.0, %v3362
        %v3364 = vrcp.pop %v3179
        %v3365 = vmul.f32 1.0, %v3364
        %v3366 = vrcp.pop %v3180
        %v3367 = vmul.f32 1.0, %v3366
        %v3368 = vrcp.pop %v3181
        %v3369 = vmul.f32 1.0, %v3368
        %v3370 = vrcp.pop %v3182
        %v3371 = vmul.f32 1.0, %v3370
        %v3372 = vrcp.pop %v3183
        %v3373 = vmul.f32 1.0, %v3372
        %v3374 = vrcp.pop %v3184
        %v3375 = vmul.f32 1.0, %v3374
        %v3376 = vrcp.pop %v3185
        %v3377 = vmul.f32 1.0, %v3376
        %3378 = vst [vmem:[%s644] sm:$0xff] %v3187
        %3379 = vst [vmem:[%s644 + $0x8] sm:$0xff] %v3189
        %3380 = vst [vmem:[%s644 + $0x10] sm:$0xff] %v3191
        %3381 = vst [vmem:[%s644 + $0x18] sm:$0xff] %v3193
        %3382 = vst [vmem:[%s644 + $0x20] sm:$0xff] %v3195
        %3383 = vst [vmem:[%s644 + $0x28] sm:$0xff] %v3197
        %3384 = vst [vmem:[%s644 + $0x30] sm:$0xff] %v3199
        %3385 = vst [vmem:[%s644 + $0x38] sm:$0xff] %v3201
        %3386 = vst [vmem:[%s644 + $0x40] sm:$0xff] %v3203
        %3387 = vst [vmem:[%s644 + $0x48] sm:$0xff] %v3205
        %3388 = vst [vmem:[%s644 + $0x50] sm:$0xff] %v3207
        %3389 = vst [vmem:[%s644 + $0x58] sm:$0xff] %v3209
        %3390 = vst [vmem:[%s644 + $0x60] sm:$0xff] %v3211
        %3391 = vst [vmem:[%s644 + $0x68] sm:$0xff] %v3213
        %3392 = vst [vmem:[%s644 + $0x70] sm:$0xff] %v3215
        %3393 = vst [vmem:[%s644 + $0x78] sm:$0xff] %v3217
        %3394 = vst [vmem:[%s644 + $0x80] sm:$0xff] %v3219
        %3395 = vst [vmem:[%s644 + $0x88] sm:$0xff] %v3221
        %3396 = vst [vmem:[%s644 + $0x90] sm:$0xff] %v3223
        %3397 = vst [vmem:[%s644 + $0x98] sm:$0xff] %v3225
        %3398 = vst [vmem:[%s644 + $0xa0] sm:$0xff] %v3227
        %3399 = vst [vmem:[%s644 + $0xa8] sm:$0xff] %v3229
        %3400 = vst [vmem:[%s644 + $0xb0] sm:$0xff] %v3231
        %3401 = vst [vmem:[%s644 + $0xb8] sm:$0xff] %v3233
        %3402 = vst [vmem:[%s644 + $0xc0] sm:$0xff] %v3235
        %3403 = vst [vmem:[%s644 + $0xc8] sm:$0xff] %v3237
        %3404 = vst [vmem:[%s644 + $0xd0] sm:$0xff] %v3239
        %3405 = vst [vmem:[%s644 + $0xd8] sm:$0xff] %v3241
        %3406 = vst [vmem:[%s644 + $0xe0] sm:$0xff] %v3243
        %3407 = vst [vmem:[%s644 + $0xe8] sm:$0xff] %v3245
        %3408 = vst [vmem:[%s644 + $0xf0] sm:$0xff] %v3247
        %3409 = vst [vmem:[%s644 + $0xf8] sm:$0xff] %v3249
        %3410 = vst [vmem:[%s644 + $0x100] sm:$0xff] %v3251
        %3411 = vst [vmem:[%s644 + $0x108] sm:$0xff] %v3253
        %3412 = vst [vmem:[%s644 + $0x110] sm:$0xff] %v3255
        %3413 = vst [vmem:[%s644 + $0x118] sm:$0xff] %v3257
        %3414 = vst [vmem:[%s644 + $0x120] sm:$0xff] %v3259
        %3415 = vst [vmem:[%s644 + $0x128] sm:$0xff] %v3261
        %3416 = vst [vmem:[%s644 + $0x130] sm:$0xff] %v3263
        %3417 = vst [vmem:[%s644 + $0x138] sm:$0xff] %v3265
        %3418 = vst [vmem:[%s644 + $0x140] sm:$0xff] %v3267
        %3419 = vst [vmem:[%s644 + $0x148] sm:$0xff] %v3269
        %3420 = vst [vmem:[%s644 + $0x150] sm:$0xff] %v3271
        %3421 = vst [vmem:[%s644 + $0x158] sm:$0xff] %v3273
        %3422 = vst [vmem:[%s644 + $0x160] sm:$0xff] %v3275
        %3423 = vst [vmem:[%s644 + $0x168] sm:$0xff] %v3277
        %3424 = vst [vmem:[%s644 + $0x170] sm:$0xff] %v3279
        %3425 = vst [vmem:[%s644 + $0x178] sm:$0xff] %v3281
        %3426 = vst [vmem:[%s644 + $0x180] sm:$0xff] %v3283
        %3427 = vst [vmem:[%s644 + $0x188] sm:$0xff] %v3285
        %3428 = vst [vmem:[%s644 + $0x190] sm:$0xff] %v3287
        %3429 = vst [vmem:[%s644 + $0x198] sm:$0xff] %v3289
        %3430 = vst [vmem:[%s644 + $0x1a0] sm:$0xff] %v3291
        %3431 = vst [vmem:[%s644 + $0x1a8] sm:$0xff] %v3293
        %3432 = vst [vmem:[%s644 + $0x1b0] sm:$0xff] %v3295
        %3433 = vst [vmem:[%s644 + $0x1b8] sm:$0xff] %v3297
        %3434 = vst [vmem:[%s644 + $0x1c0] sm:$0xff] %v3299
        %3435 = vst [vmem:[%s644 + $0x1c8] sm:$0xff] %v3301
        %3436 = vst [vmem:[%s644 + $0x1d0] sm:$0xff] %v3303
        %3437 = vst [vmem:[%s644 + $0x1d8] sm:$0xff] %v3305
        %3438 = vst [vmem:[%s644 + $0x1e0] sm:$0xff] %v3307
        %3439 = vst [vmem:[%s644 + $0x1e8] sm:$0xff] %v3309
        %3440 = vst [vmem:[%s644 + $0x1f0] sm:$0xff] %v3311
        %3441 = vst [vmem:[%s644 + $0x1f8] sm:$0xff] %v3313
        %3442 = vst [vmem:[%s644 + $0x200] sm:$0xff] %v3315
        %3443 = vst [vmem:[%s644 + $0x208] sm:$0xff] %v3317
        %3444 = vst [vmem:[%s644 + $0x210] sm:$0xff] %v3319
        %3445 = vst [vmem:[%s644 + $0x218] sm:$0xff] %v3321
        %3446 = vst [vmem:[%s644 + $0x220] sm:$0xff] %v3323
        %3447 = vst [vmem:[%s644 + $0x228] sm:$0xff] %v3325
        %3448 = vst [vmem:[%s644 + $0x230] sm:$0xff] %v3327
        %3449 = vst [vmem:[%s644 + $0x238] sm:$0xff] %v3329
        %3450 = vst [vmem:[%s644 + $0x240] sm:$0xff] %v3331
        %3451 = vst [vmem:[%s644 + $0x248] sm:$0xff] %v3333
        %3452 = vst [vmem:[%s644 + $0x250] sm:$0xff] %v3335
        %3453 = vst [vmem:[%s644 + $0x258] sm:$0xff] %v3337
        %3454 = vst [vmem:[%s644 + $0x260] sm:$0xff] %v3339
        %3455 = vst [vmem:[%s644 + $0x268] sm:$0xff] %v3341
        %3456 = vst [vmem:[%s644 + $0x270] sm:$0xff] %v3343
        %3457 = vst [vmem:[%s644 + $0x278] sm:$0xff] %v3345
        %3458 = vst [vmem:[%s644 + $0x280] sm:$0xff] %v3347
        %3459 = vst [vmem:[%s644 + $0x288] sm:$0xff] %v3349
        %3460 = vst [vmem:[%s644 + $0x290] sm:$0xff] %v3351
        %3461 = vst [vmem:[%s644 + $0x298] sm:$0xff] %v3353
        %3462 = vst [vmem:[%s644 + $0x2a0] sm:$0xff] %v3355
        %3463 = vst [vmem:[%s644 + $0x2a8] sm:$0xff] %v3357
        %3464 = vst [vmem:[%s644 + $0x2b0] sm:$0xff] %v3359
        %3465 = vst [vmem:[%s644 + $0x2b8] sm:$0xff] %v3361
        %3466 = vst [vmem:[%s644 + $0x2c0] sm:$0xff] %v3363
        %3467 = vst [vmem:[%s644 + $0x2c8] sm:$0xff] %v3365
        %3468 = vst [vmem:[%s644 + $0x2d0] sm:$0xff] %v3367
        %3469 = vst [vmem:[%s644 + $0x2d8] sm:$0xff] %v3369
        %3470 = vst [vmem:[%s644 + $0x2e0] sm:$0xff] %v3371
        %3471 = vst [vmem:[%s644 + $0x2e8] sm:$0xff] %v3373
        %3472 = vst [vmem:[%s644 + $0x2f0] sm:$0xff] %v3375
        %3473 = vst [vmem:[%s644 + $0x2f8] sm:$0xff] %v3377
        %s3474 = sand.u32 %s354, 1
        %s3475 = scalar_lea.sflag [#allocation4], %s3474
        %s3476 = sand.u32 %s354, 1
        %s3477 = smul.addr %s3476, 768
        %s3478 = scalar_lea.vmem [#allocation16], %s3477
        %s3479 = sand.u32 %s380, 1
        %s3480 = scalar_lea.sflag [#allocation18], %s3479
        %s3481 = sand.u32 %s380, 1
        %s3482 = smul.addr %s3481, 256
        %s3483 = scalar_lea.vmem [#allocation17], %s3482
        // Predicated region
        $region109: #{tpu_custom_call.1} parent=75 // pred_check
          %p3484 = pneg %p364
        $region110: #{tpu_custom_call.1} parent=75 // pred_check_branch
          %3486 = sbr.rel (%p3484) target = $region112
        $region111: #{tpu_custom_call.1} parent=75 // pred_region
          %s3487 = smul.u32 16, %s42
          %s3489 = ssub.s32 12288, 12288
          %3490 = vsyncadd %s3475, %s3489
          %s3491 = smul.addr %s3487, 6
          %s3492 = smul.addr %s3491, 128
          %s3493 = scalar_lea.hbm %s14, %s3492
          %s3494 = sshll.u32 %s3478, 4
          %s3495 = int_to_ptr.vmem [resolvable:$true] %s3494
          %3500 = dma.vmem_to_hbm [thread:$0]  %s3495, 12288, %s3493, %s3475, 768, 768, 48
        $region112: #{tpu_custom_call.1} parent=75 // pred_fallthru
          _
        // Predicated region
        $region113: #{tpu_custom_call.1} parent=75 // pred_check
          %p3501 = pneg %p390
        $region114: #{tpu_custom_call.1} parent=75 // pred_check_branch
          %3503 = sbr.rel (%p3501) target = $region116
        $region115: #{tpu_custom_call.1} parent=75 // pred_region
          %s3504 = smul.u32 16, %s42
          %s3506 = ssub.s32 4096, 4096
          %3507 = vsyncadd %s3480, %s3506
          %s3508 = smul.addr %s3504, 2
          %s3509 = smul.addr %s3508, 128
          %s3510 = scalar_lea.hbm %s15, %s3509
          %s3511 = sshll.u32 %s3483, 4
          %s3512 = int_to_ptr.vmem [resolvable:$true] %s3511
          %3517 = dma.vmem_to_hbm [thread:$0]  %s3512, 4096, %s3510, %s3480, 256, 256, 16
        $region116: #{tpu_custom_call.1} parent=75 // pred_fallthru
          _
      $region76: #{tpu_custom_call.1} parent=5 // pred_fallthru
        _
      %p3518 = scmp.le.s32.totalorder 2, %s37
      // Predicated region
      $region117: #{tpu_custom_call.1} parent=5 // pred_check
        %p3519 = pneg %p3518
      $region118: #{tpu_custom_call.1} parent=5 // pred_check_branch
        %3521 = sbr.rel (%p3519) target = $region120
      $region119: #{tpu_custom_call.1} parent=5 // pred_region
        %s3522 = ssub.s32 %s37, 2
        // Predicated region
        $region121: #{tpu_custom_call.1} parent=119 // pred_check
          %p3523 = pneg %p370
        $region122: #{tpu_custom_call.1} parent=119 // pred_check_branch
          %3525 = sbr.rel (%p3523) target = $region124
        $region123: #{tpu_custom_call.1} parent=119 // pred_region
          %s3526 = sand.u32 %s355, 1
          %s3527 = scalar_lea.sflag [#allocation4], %s3526
          %s3528 = sand.u32 %s355, 1
          %s3529 = smul.addr %s3528, 768
          %s3530 = scalar_lea.vmem [#allocation16], %s3529
          %3531 = dma.done %s3527, 12288
        $region124: #{tpu_custom_call.1} parent=119 // pred_fallthru
          _
        // Predicated region
        $region125: #{tpu_custom_call.1} parent=119 // pred_check
          %p3532 = pneg %p396
        $region126: #{tpu_custom_call.1} parent=119 // pred_check_branch
          %3534 = sbr.rel (%p3532) target = $region128
        $region127: #{tpu_custom_call.1} parent=119 // pred_region
          %s3535 = sand.u32 %s381, 1
          %s3536 = scalar_lea.sflag [#allocation18], %s3535
          %s3537 = sand.u32 %s381, 1
          %s3538 = smul.addr %s3537, 256
          %s3539 = scalar_lea.vmem [#allocation17], %s3538
          %3540 = dma.done %s3536, 4096
        $region128: #{tpu_custom_call.1} parent=119 // pred_fallthru
          _
      $region120: #{tpu_custom_call.1} parent=5 // pred_fallthru
        _
    $region6: #{tpu_custom_call.1} parent=1 // loop_footer
      %s41 = sadd.s32 1, %s37
    $region7: #{tpu_custom_call.1} parent=1 // loop_footer_branch
      %36 = sbr.rel target = $region3
    $region8: #{tpu_custom_call.1} parent=1 // loop_exit
      _
    %3541 = vsyncpa [#allocation3], 1
    %s3542 = scalar_lea.sflag [#allocation3], 1
    %3543 = vsyncpa %s3542, 1
    %3544 = vsyncpa [#allocation6], 1
    %s3545 = scalar_lea.sflag [#allocation6], 1
    %3546 = vsyncpa %s3545, 1
    %3547 = vsyncpa [#allocation9], 1
    %3548 = vsyncpa [#allocation12], 1
    %3549 = vsyncpa [#allocation15], 1
    %3550 = vsyncpa [#allocation4], 1
    %s3551 = scalar_lea.sflag [#allocation4], 1
    %3552 = vsyncpa %s3551, 1
    %3553 = vsyncpa [#allocation18], 1
    %s3554 = scalar_lea.sflag [#allocation18], 1
    %3555 = vsyncpa %s3554, 1

</llo_original>
